<compile_context>
chip_gen: v6e
topology: v6e:2x2x1
jax: 0.10.0
libtpu: 0.0.40
codegen_flags: <defaults>
</compile_context>

<pallas_src>
import functools

import numpy as np
import jax
import jax.numpy as jnp
from jax.experimental import pallas as pl
from jax.experimental.pallas import tpu as pltpu

_VMEM = pl.BlockSpec(memory_space=pltpu.MemorySpace.VMEM)
_LANE = 128  # TPU lane width; every gate block is padded to this many lanes.


# -----------------------------------------------------------------------------
# Fused Pallas kernel: encoder BiLSTM -> VAE head -> hidden_decoder -> decoder
# -----------------------------------------------------------------------------
def _fused_bilstm_vae_kernel(
    # ---- inputs ----
    xf_ref,       # (T*B, D)   sentence, time-major (forward direction order)
    xb_ref,       # (T*B, D)   sentence, time-major, time-reversed (backward dir)
    h0_ref,       # (2*B, Hp)  encoder initial hidden, zero-padded to Hp lanes
    c0_ref,       # (2*B, Hp)  encoder initial cell, zero-padded
    gauss_ref,    # (2*B, 1)   gaussian noise (one value per batch elem, tiled over dirs)
    wpf_ref,      # (D, 2*Gp)  fused fwd input->gate weights: cols [encoder | decoder]
    bpf_ref,      # (1, 2*Gp)  fused fwd combined bias (b_ih + b_hh)
    wpb_ref,      # (D, 2*Gp)  fused bwd input->gate weights
    bpb_ref,      # (1, 2*Gp)
    whh_e_ref,    # (2, Hp, Gp) encoder hidden->gate weights, padded, pre-transposed
    whh_d_ref,    # (2, Hp, Gp) decoder hidden->gate weights
    wmv_ref,      # (Hp, 2L)   fused [mean | log_var] weights (padded rows are 0)
    bmv_ref,      # (1, 2L)
    whd_ref,      # (L, Hp)    hidden_decoder weight, pre-transposed, zero-padded
    bhd_ref,      # (1, Hp)
    # ---- outputs ----
    outf_ref,     # (T, B, Hp) decoder forward hiddens (lane-dense)
    outb_ref,     # (T, B, Hp) decoder backward hiddens (lane-dense)
    mv_ref,       # (2*B, 2L)  [mean | log_var]
    hn_ref,       # (2*B, Hp)  encoder final hidden (padded; wrapper slices :H)
    cn_ref,       # (2*B, Hp)  encoder final cell
    # ---- scratch ----
    xw_enc_ref,   # (T, 2B, Gp) encoder hoisted input projections, time-major
    xw_dec_ref,   # (T, 2B, Gp) decoder hoisted input projections, time-major
    *, B, T, L):
  f32 = jnp.float32
  Hp = whh_e_ref.shape[1]           # padded hidden width (128-lane multiple)
  Gp = whh_e_ref.shape[2]           # padded gate width = 4 * Hp

  # --- prologue: hoisted input projections, ONE matmul per direction ---------
  # (both LSTMs fused along lanes: cols [encoder(Gp) | decoder(Gp)])
  pf = jnp.dot(xf_ref[...], wpf_ref[...], preferred_element_type=f32) + bpf_ref[...]
  pb = jnp.dot(xb_ref[...], wpb_ref[...], preferred_element_type=f32) + bpb_ref[...]

  # Scatter into time-major scratch: xw[t, 0:B] = fwd@t, xw[t, B:2B] = bwd@(T-1-t)
  # (xb is already time-reversed), so every serial step needs only ONE contiguous
  # xw_ref[t] slab load.  Static per-t stores are used instead of a
  # (T*B, Gp) -> (T, B, Gp) reshape to avoid a Mosaic sublane relayout; this is
  # one-time prologue work, off the recurrent critical path.
  for t in range(T):
    rf = pf[t * B:(t + 1) * B]      # (B, 2*Gp)
    rb = pb[t * B:(t + 1) * B]      # (B, 2*Gp)
    xw_enc_ref[t, 0:B, :] = rf[:, 0:Gp]
    xw_enc_ref[t, B:2 * B, :] = rb[:, 0:Gp]
    xw_dec_ref[t, 0:B, :] = rf[:, Gp:2 * Gp]
    xw_dec_ref[t, B:2 * B, :] = rb[:, Gp:2 * Gp]

  def run_lstm(whh_ref, h0, c0, xw_ref, outf=None, outb=None):
    # Both directions fused in one time loop; state rows = [fwd b0.., bwd b0..],
    # each padded to Hp lanes.  Padded lanes stay exactly 0 because every padded
    # weight / bias / initial-state column is 0 (padding ownership lives only in
    # make_params and the wrapper; padded gate pre-acts = 0 -> i,f,o=0.5, g=0).
    whh_f = whh_ref[0]              # (Hp, Gp) hoisted out of the loop
    whh_b = whh_ref[1]
    h, c = h0, c0                   # (2B, Hp) register-carried recurrent state
    # T is static and small: the Python loop fully unrolls at trace time, h/c
    # never round-trip VMEM.  (See TODOs at top for long-T / MXU-staging plans.)
    for t in range(T):
      xw = xw_ref[t]                # (2B, Gp): one contiguous slab, no gather
      rec = jnp.concatenate(
          [jnp.dot(h[0:B, :], whh_f, preferred_element_type=f32),
           jnp.dot(h[B:, :], whh_b, preferred_element_type=f32)], axis=0)
      gates = xw + rec              # (2B, Gp); gate blocks packed (i, f, o, g)
      sig = jax.nn.sigmoid(gates[:, 0:3 * Hp])    # i, f, o in one EUP dispatch
      g = jnp.tanh(gates[:, 3 * Hp:4 * Hp])
      c = sig[:, Hp:2 * Hp] * c + sig[:, 0:Hp] * g
      h = sig[:, 2 * Hp:3 * Hp] * jnp.tanh(c)
      if outf is not None:          # decoder only: lane-dense (B, Hp) stores
        outf[t] = h[0:B, :]
        outb[T - 1 - t] = h[B:, :]
    return h, c

  # ------------------------------- encoder -------------------------------
  h_enc, c_enc = run_lstm(whh_e_ref, h0_ref[...], c0_ref[...], xw_enc_ref)
  hn_ref[...] = h_enc
  cn_ref[...] = c_enc

  # ---------------- VAE head (mean & log_var in one matmul) ----------------
  mv = jnp.dot(h_enc, wmv_ref[...], preferred_element_type=f32) + bmv_ref[...]
  mv_ref[...] = mv                  # wrapper splits into mean / log_var
  mean = mv[:, 0:L]
  log_var = mv[:, L:2 * L]
  std = jnp.exp(0.5 * log_var)      # torch calls this "var"; it is the std
  # gauss is (2B, 1): exactly the literal torch broadcast of
  # torch.randn(batch, num_layers=1) against (2, B, L).
  z = gauss_ref[...] * std + mean   # reparameterization trick, (2B, L)

  # hidden_decoder linear; zero-padded weights keep the result a valid Hp-padded
  # LSTM state, used as BOTH h0 and c0 of the decoder (matches the module).
  hd = jnp.dot(z, whd_ref[...], preferred_element_type=f32) + bhd_ref[...]

  # ------------------------------- decoder -------------------------------
  run_lstm(whh_d_ref, hd, hd, xw_dec_ref, outf_ref, outb_ref)


# -----------------------------------------------------------------------------
# Wrapper
# -----------------------------------------------------------------------------
@jax.jit
def bilstm_vae_forward(params, sentence, hidden_states, gauss):
  """forward(sentence, hidden_states) -> (predictions, mean, log_var, hidden_states)."""
  h0, c0 = hidden_states
  B, T, D = sentence.shape
  H = h0.shape[-1]
  Hp = params["whh_enc"].shape[1]
  Gp = params["whh_enc"].shape[2]
  L = params["wmv"].shape[-1] // 2

  # Layout plumbing kept in XLA (tiny tensors, off the kernel's critical path).
  x_tm = jnp.transpose(sentence, (1, 0, 2))          # (T, B, D) time-major
  x_rev = jnp.flip(x_tm, axis=0)                     # backward-direction order
  pad = ((0, 0), (0, Hp - H))
  h0p = jnp.pad(h0.reshape(2 * B, H), pad)           # wrapper owns the zero
  c0p = jnp.pad(c0.reshape(2 * B, H), pad)           # padded-lane invariant
  gauss2 = jnp.tile(gauss.reshape(B, 1), (2, 1))     # rows [fwd b.., bwd b..]

  kernel = functools.partial(_fused_bilstm_vae_kernel, B=B, T=T, L=L)
  outf, outb, mv, hn, cn = pl.pallas_call(
      kernel,
      out_shape=(
          jax.ShapeDtypeStruct((T, B, Hp), jnp.float32),      # decoder fwd hiddens
          jax.ShapeDtypeStruct((T, B, Hp), jnp.float32),      # decoder bwd hiddens
          jax.ShapeDtypeStruct((2 * B, 2 * L), jnp.float32),  # [mean | log_var]
          jax.ShapeDtypeStruct((2 * B, Hp), jnp.float32),     # encoder h_n (padded)
          jax.ShapeDtypeStruct((2 * B, Hp), jnp.float32),     # encoder c_n (padded)
      ),
      in_specs=[_VMEM] * 15,
      out_specs=(_VMEM,) * 5,
      scratch_shapes=[
          pltpu.VMEM((T, 2 * B, Gp), jnp.float32),   # encoder time-major x@W_ih+b
          pltpu.VMEM((T, 2 * B, Gp), jnp.float32),   # decoder time-major x@W_ih+b
      ],
      # Explicit VMEM budget (v5e scoped default is 16 MiB); re-derive before
      # scaling B*T (v7x: 64 MiB physical / 32 MiB scoped default).
      compiler_params=pltpu.CompilerParams(vmem_limit_bytes=32 * 1024 * 1024),
  )(
      x_tm.reshape(T * B, D), x_rev.reshape(T * B, D),
      h0p, c0p, gauss2,
      params["wproj_f"], params["bproj_f"], params["wproj_b"], params["bproj_b"],
      params["whh_enc"], params["whh_dec"],
      params["wmv"], params["bmv"], params["whd"], params["bhd"],
  )

  # Epilogue slice / concat / transpose on tiny data: free in XLA, keeps every
  # kernel store lane-dense (Hp = 128 lanes, unmasked vst).
  predictions = jnp.transpose(
      jnp.concatenate([outf[:, :, :H], outb[:, :, :H]], axis=-1), (1, 0, 2))
  mean = mv[:, :L].reshape(2, B, L)
  log_var = mv[:, L:].reshape(2, B, L)
  h_n = hn[:, :H].reshape(2, B, H)
  c_n = cn[:, :H].reshape(2, B, H)
  return predictions, mean, log_var, (h_n, c_n)


# -----------------------------------------------------------------------------
# Deterministic parameter construction (mirrors the module's shapes / init style,
# pre-transposed, gate-padded, and pre-fused for the kernel).  Padding ownership:
# every padded row/column/lane below is exactly zero (required invariant).
# -----------------------------------------------------------------------------
def _orthogonal(rng, shape):
  n = max(shape)
  a = rng.standard_normal(size=(n, n)).astype(np.float32)
  q, _ = np.linalg.qr(a)
  return q[: shape[0], : shape[1]].astype(np.float32)


_GATE_ORDER = (0, 1, 3, 2)   # pack PyTorch (i, f, g, o) blocks as (i, f, o, g)


def _lstm_params_padded(rng, input_size, H, Hp):
  D, Gp = input_size, 4 * Hp
  wih = np.zeros((2, D, Gp), np.float32)
  whh = np.zeros((2, Hp, Gp), np.float32)
  bias = np.zeros((2, 1, Gp), np.float32)
  for d in range(2):                               # 0 = forward, 1 = reverse
    w_ih = _orthogonal(rng, (4 * H, D))            # PyTorch weight_ih_l0{,_reverse}
    w_hh = _orthogonal(rng, (4 * H, H))            # PyTorch weight_hh_l0{,_reverse}
    b = (rng.standard_normal(4 * H) + rng.standard_normal(4 * H)).astype(np.float32)
    for k, src in enumerate(_GATE_ORDER):          # repack into (i, f, o, g)
      wih[d, :, k * Hp:k * Hp + H] = w_ih[src * H:(src + 1) * H, :].T
      whh[d, :H, k * Hp:k * Hp + H] = w_hh[src * H:(src + 1) * H, :].T
      bias[d, 0, k * Hp:k * Hp + H] = b[src * H:(src + 1) * H]
  return wih, whh, bias


def _linear_params(rng, in_f, out_f):
  bound = 1.0 / np.sqrt(in_f)
  w = rng.uniform(-bound, bound, size=(out_f, in_f)).astype(np.float32)
  b = rng.uniform(-bound, bound, size=(out_f,)).astype(np.float32)
  return w, b


def make_params(hidden_dim, latent_dim, num_layers=1):
  assert num_layers == 1, "reference forward is only shape-consistent for num_layers=1"
  H = hidden_dim // 2
  Hp = -(-H // _LANE) * _LANE                      # pad hidden / gate blocks to lane width
  rng = np.random.default_rng(0)
  wih_e, whh_e, b_e = _lstm_params_padded(rng, hidden_dim, H, Hp)
  wih_d, whh_d, b_d = _lstm_params_padded(rng, hidden_dim, H, Hp)
  wm, bm = _linear_params(rng, H * num_layers, latent_dim)     # self._mean
  wv, bv = _linear_params(rng, H * num_layers, latent_dim)     # self._log_var
  whd, bhd = _linear_params(rng, latent_dim, H * num_layers)   # self._hidden_decoder

  # Fused per-direction input-projection weights / biases: cols = [encoder | decoder].
  wproj_f = np.concatenate([wih_e[0], wih_d[0]], axis=1)       # (D, 2*Gp)
  wproj_b = np.concatenate([wih_e[1], wih_d[1]], axis=1)
  bproj_f = np.concatenate([b_e[0], b_d[0]], axis=1)           # (1, 2*Gp)
  bproj_b = np.concatenate([b_e[1], b_d[1]], axis=1)

  # Fused [mean | log_var] head, zero-padded to Hp input rows.
  wmv = np.zeros((Hp, 2 * latent_dim), np.float32)
  wmv[:H, :latent_dim] = wm.T
  wmv[:H, latent_dim:] = wv.T
  bmv = np.concatenate([bm, bv])[None, :]                      # (1, 2L)
  # hidden_decoder, zero-padded to Hp output lanes (valid padded LSTM state).
  whd_p = np.zeros((latent_dim, Hp), np.float32)
  whd_p[:, :H] = whd.T
  bhd_p = np.zeros((1, Hp), np.float32)
  bhd_p[0, :H] = bhd

  j = jnp.asarray
  return dict(
      wproj_f=j(wproj_f), bproj_f=j(bproj_f),
      wproj_b=j(wproj_b), bproj_b=j(bproj_b),
      whh_enc=j(whh_e), whh_dec=j(whh_d),
      wmv=j(wmv), bmv=j(bmv), whd=j(whd_p), bhd=j(bhd_p),
  )


# -----------------------------------------------------------------------------
if __name__ == "__main__":
  B, T = 2, 8
  hidden_dim = 64
  H = hidden_dim // 2          # 32 per direction
  latent_dim = 32
  num_layers = 1               # see NOTE at top of file

  params = make_params(hidden_dim, latent_dim, num_layers)

  key = jax.random.PRNGKey(0)
  k_x, k_h, k_c, k_g = jax.random.split(key, 4)
  sentence = jax.random.normal(k_x, (B, T, hidden_dim), dtype=jnp.float32)
  h0 = jax.random.normal(k_h, (2 * num_layers, B, H), dtype=jnp.float32)
  c0 = jax.random.normal(k_c, (2 * num_layers, B, H), dtype=jnp.float32)
  # TODO(synk): torch.randn inside encoder() is sampled host-side with jax.random.
  gauss = jax.random.normal(k_g, (B, num_layers), dtype=jnp.float32)

  predictions, mean, log_var, (h_n, c_n) = bilstm_vae_forward(
      params, sentence, (h0, c0), gauss)
  jax.block_until_ready((predictions, mean, log_var, h_n, c_n))

  assert predictions.shape == (B, T, hidden_dim)
  assert mean.shape == (2 * num_layers, B, latent_dim)
  assert log_var.shape == (2 * num_layers, B, latent_dim)
  assert h_n.shape == (2 * num_layers, B, H) and c_n.shape == (2 * num_layers, B, H)
  assert all(bool(jnp.all(jnp.isfinite(a))) for a in
             (predictions, mean, log_var, h_n, c_n))
  print("KERNEL_OK")
</pallas_src>

<mosaic_0001>
module attributes {stable_mosaic.version = 11 : i64} {
  func.func @_fused_bilstm_vae_kernel(%arg0: memref<16x64xf32, #tpu.memory_space<vmem>>, %arg1: memref<16x64xf32, #tpu.memory_space<vmem>>, %arg2: memref<4x128xf32, #tpu.memory_space<vmem>>, %arg3: memref<4x128xf32, #tpu.memory_space<vmem>>, %arg4: memref<4x1xf32, #tpu.memory_space<vmem>>, %arg5: memref<64x1024xf32, #tpu.memory_space<vmem>>, %arg6: memref<1x1024xf32, #tpu.memory_space<vmem>>, %arg7: memref<64x1024xf32, #tpu.memory_space<vmem>>, %arg8: memref<1x1024xf32, #tpu.memory_space<vmem>>, %arg9: memref<2x128x512xf32, #tpu.memory_space<vmem>>, %arg10: memref<2x128x512xf32, #tpu.memory_space<vmem>>, %arg11: memref<128x64xf32, #tpu.memory_space<vmem>>, %arg12: memref<1x64xf32, #tpu.memory_space<vmem>>, %arg13: memref<32x128xf32, #tpu.memory_space<vmem>>, %arg14: memref<1x128xf32, #tpu.memory_space<vmem>>, %arg15: memref<8x2x128xf32, #tpu.memory_space<vmem>>, %arg16: memref<8x2x128xf32, #tpu.memory_space<vmem>>, %arg17: memref<4x64xf32, #tpu.memory_space<vmem>>, %arg18: memref<4x128xf32, #tpu.memory_space<vmem>>, %arg19: memref<4x128xf32, #tpu.memory_space<vmem>>, %arg20: memref<8x4x512xf32, #tpu.memory_space<vmem>>, %arg21: memref<8x4x512xf32, #tpu.memory_space<vmem>>) attributes {dimension_semantics = [], scalar_prefetch = 0 : i64, scratch_operands = 2 : i64, tpu.core_type = #tpu.core_type<tc>} {
    %c0 = arith.constant 0 : index
    %c0_0 = arith.constant 0 : index
    %0 = vector.load %arg0[%c0, %c0_0] : memref<16x64xf32, #tpu.memory_space<vmem>>, vector<16x64xf32>
    %c0_1 = arith.constant 0 : index
    %c0_2 = arith.constant 0 : index
    %1 = vector.load %arg5[%c0_1, %c0_2] : memref<64x1024xf32, #tpu.memory_space<vmem>>, vector<64x1024xf32>
    %cst = arith.constant dense<0.000000e+00> : vector<16x1024xf32>
    %2 = tpu.matmul %0, %1, %cst {dimension_numbers = #tpu.dot_dimension_numbers<[1], [0], [0], [1], [0, 0, 1, 1], [], []>} : vector<16x64xf32>, vector<64x1024xf32>, vector<16x1024xf32> -> vector<16x1024xf32>
    %c0_3 = arith.constant 0 : index
    %c0_4 = arith.constant 0 : index
    %3 = vector.load %arg6[%c0_3, %c0_4] : memref<1x1024xf32, #tpu.memory_space<vmem>>, vector<1x1024xf32>
    %4 = vector.broadcast %3 : vector<1x1024xf32> to vector<16x1024xf32>
    %5 = arith.addf %2, %4 : vector<16x1024xf32>
    %c0_5 = arith.constant 0 : index
    %c0_6 = arith.constant 0 : index
    %6 = vector.load %arg1[%c0_5, %c0_6] : memref<16x64xf32, #tpu.memory_space<vmem>>, vector<16x64xf32>
    %c0_7 = arith.constant 0 : index
    %c0_8 = arith.constant 0 : index
    %7 = vector.load %arg7[%c0_7, %c0_8] : memref<64x1024xf32, #tpu.memory_space<vmem>>, vector<64x1024xf32>
    %cst_9 = arith.constant dense<0.000000e+00> : vector<16x1024xf32>
    %8 = tpu.matmul %6, %7, %cst_9 {dimension_numbers = #tpu.dot_dimension_numbers<[1], [0], [0], [1], [0, 0, 1, 1], [], []>} : vector<16x64xf32>, vector<64x1024xf32>, vector<16x1024xf32> -> vector<16x1024xf32>
    %c0_10 = arith.constant 0 : index
    %c0_11 = arith.constant 0 : index
    %9 = vector.load %arg8[%c0_10, %c0_11] : memref<1x1024xf32, #tpu.memory_space<vmem>>, vector<1x1024xf32>
    %10 = vector.broadcast %9 : vector<1x1024xf32> to vector<16x1024xf32>
    %11 = arith.addf %8, %10 : vector<16x1024xf32>
    %12 = vector.extract_strided_slice %5 {offsets = [0, 0], sizes = [2, 1024], strides = [1, 1]} : vector<16x1024xf32> to vector<2x1024xf32>
    %13 = vector.extract_strided_slice %11 {offsets = [0, 0], sizes = [2, 1024], strides = [1, 1]} : vector<16x1024xf32> to vector<2x1024xf32>
    %14 = vector.extract_strided_slice %12 {offsets = [0, 0], sizes = [2, 512], strides = [1, 1]} : vector<2x1024xf32> to vector<2x512xf32>
    %c0_12 = arith.constant 0 : index
    %c0_13 = arith.constant 0 : index
    %c0_14 = arith.constant 0 : index
    %15 = vector.load %arg20[%c0_12, %c0_13, %c0_14] : memref<8x4x512xf32, #tpu.memory_space<vmem>>, vector<1x2x512xf32>
    %16 = vector.shape_cast %15 : vector<1x2x512xf32> to vector<2x512xf32>
    %17 = vector.shape_cast %14 : vector<2x512xf32> to vector<1x2x512xf32>
    tpu.vector_store %arg20[%c0_12, %c0_13, %c0_14], %17 {strides = array<i32>} : memref<8x4x512xf32, #tpu.memory_space<vmem>>, vector<1x2x512xf32>,
    %18 = vector.extract_strided_slice %13 {offsets = [0, 0], sizes = [2, 512], strides = [1, 1]} : vector<2x1024xf32> to vector<2x512xf32>
    %c0_15 = arith.constant 0 : index
    %c2 = arith.constant 2 : index
    %c0_16 = arith.constant 0 : index
    %19 = vector.load %arg20[%c0_15, %c2, %c0_16] : memref<8x4x512xf32, #tpu.memory_space<vmem>>, vector<1x2x512xf32>
    %20 = vector.shape_cast %19 : vector<1x2x512xf32> to vector<2x512xf32>
    %21 = vector.shape_cast %18 : vector<2x512xf32> to vector<1x2x512xf32>
    tpu.vector_store %arg20[%c0_15, %c2, %c0_16], %21 {strides = array<i32>} : memref<8x4x512xf32, #tpu.memory_space<vmem>>, vector<1x2x512xf32>,
    %22 = vector.extract_strided_slice %12 {offsets = [0, 512], sizes = [2, 512], strides = [1, 1]} : vector<2x1024xf32> to vector<2x512xf32>
    %c0_17 = arith.constant 0 : index
    %c0_18 = arith.constant 0 : index
    %c0_19 = arith.constant 0 : index
    %23 = vector.load %arg21[%c0_17, %c0_18, %c0_19] : memref<8x4x512xf32, #tpu.memory_space<vmem>>, vector<1x2x512xf32>
    %24 = vector.shape_cast %23 : vector<1x2x512xf32> to vector<2x512xf32>
    %25 = vector.shape_cast %22 : vector<2x512xf32> to vector<1x2x512xf32>
    tpu.vector_store %arg21[%c0_17, %c0_18, %c0_19], %25 {strides = array<i32>} : memref<8x4x512xf32, #tpu.memory_space<vmem>>, vector<1x2x512xf32>,
    %26 = vector.extract_strided_slice %13 {offsets = [0, 512], sizes = [2, 512], strides = [1, 1]} : vector<2x1024xf32> to vector<2x512xf32>
    %c0_20 = arith.constant 0 : index
    %c2_21 = arith.constant 2 : index
    %c0_22 = arith.constant 0 : index
    %27 = vector.load %arg21[%c0_20, %c2_21, %c0_22] : memref<8x4x512xf32, #tpu.memory_space<vmem>>, vector<1x2x512xf32>
    %28 = vector.shape_cast %27 : vector<1x2x512xf32> to vector<2x512xf32>
    %29 = vector.shape_cast %26 : vector<2x512xf32> to vector<1x2x512xf32>
    tpu.vector_store %arg21[%c0_20, %c2_21, %c0_22], %29 {strides = array<i32>} : memref<8x4x512xf32, #tpu.memory_space<vmem>>, vector<1x2x512xf32>,
    %30 = vector.extract_strided_slice %5 {offsets = [2, 0], sizes = [2, 1024], strides = [1, 1]} : vector<16x1024xf32> to vector<2x1024xf32>
    %31 = vector.extract_strided_slice %11 {offsets = [2, 0], sizes = [2, 1024], strides = [1, 1]} : vector<16x1024xf32> to vector<2x1024xf32>
    %32 = vector.extract_strided_slice %30 {offsets = [0, 0], sizes = [2, 512], strides = [1, 1]} : vector<2x1024xf32> to vector<2x512xf32>
    %c1 = arith.constant 1 : index
    %c0_23 = arith.constant 0 : index
    %c0_24 = arith.constant 0 : index
    %33 = vector.load %arg20[%c1, %c0_23, %c0_24] : memref<8x4x512xf32, #tpu.memory_space<vmem>>, vector<1x2x512xf32>
    %34 = vector.shape_cast %33 : vector<1x2x512xf32> to vector<2x512xf32>
    %35 = vector.shape_cast %32 : vector<2x512xf32> to vector<1x2x512xf32>
    tpu.vector_store %arg20[%c1, %c0_23, %c0_24], %35 {strides = array<i32>} : memref<8x4x512xf32, #tpu.memory_space<vmem>>, vector<1x2x512xf32>,
    %36 = vector.extract_strided_slice %31 {offsets = [0, 0], sizes = [2, 512], strides = [1, 1]} : vector<2x1024xf32> to vector<2x512xf32>
    %c1_25 = arith.constant 1 : index
    %c2_26 = arith.constant 2 : index
    %c0_27 = arith.constant 0 : index
    %37 = vector.load %arg20[%c1_25, %c2_26, %c0_27] : memref<8x4x512xf32, #tpu.memory_space<vmem>>, vector<1x2x512xf32>
    %38 = vector.shape_cast %37 : vector<1x2x512xf32> to vector<2x512xf32>
    %39 = vector.shape_cast %36 : vector<2x512xf32> to vector<1x2x512xf32>
    tpu.vector_store %arg20[%c1_25, %c2_26, %c0_27], %39 {strides = array<i32>} : memref<8x4x512xf32, #tpu.memory_space<vmem>>, vector<1x2x512xf32>,
    %40 = vector.extract_strided_slice %30 {offsets = [0, 512], sizes = [2, 512], strides = [1, 1]} : vector<2x1024xf32> to vector<2x512xf32>
    %c1_28 = arith.constant 1 : index
    %c0_29 = arith.constant 0 : index
    %c0_30 = arith.constant 0 : index
    %41 = vector.load %arg21[%c1_28, %c0_29, %c0_30] : memref<8x4x512xf32, #tpu.memory_space<vmem>>, vector<1x2x512xf32>
    %42 = vector.shape_cast %41 : vector<1x2x512xf32> to vector<2x512xf32>
    %43 = vector.shape_cast %40 : vector<2x512xf32> to vector<1x2x512xf32>
    tpu.vector_store %arg21[%c1_28, %c0_29, %c0_30], %43 {strides = array<i32>} : memref<8x4x512xf32, #tpu.memory_space<vmem>>, vector<1x2x512xf32>,
    %44 = vector.extract_strided_slice %31 {offsets = [0, 512], sizes = [2, 512], strides = [1, 1]} : vector<2x1024xf32> to vector<2x512xf32>
    %c1_31 = arith.constant 1 : index
    %c2_32 = arith.constant 2 : index
    %c0_33 = arith.constant 0 : index
    %45 = vector.load %arg21[%c1_31, %c2_32, %c0_33] : memref<8x4x512xf32, #tpu.memory_space<vmem>>, vector<1x2x512xf32>
    %46 = vector.shape_cast %45 : vector<1x2x512xf32> to vector<2x512xf32>
    %47 = vector.shape_cast %44 : vector<2x512xf32> to vector<1x2x512xf32>
    tpu.vector_store %arg21[%c1_31, %c2_32, %c0_33], %47 {strides = array<i32>} : memref<8x4x512xf32, #tpu.memory_space<vmem>>, vector<1x2x512xf32>,
    %48 = vector.extract_strided_slice %5 {offsets = [4, 0], sizes = [2, 1024], strides = [1, 1]} : vector<16x1024xf32> to vector<2x1024xf32>
    %49 = vector.extract_strided_slice %11 {offsets = [4, 0], sizes = [2, 1024], strides = [1, 1]} : vector<16x1024xf32> to vector<2x1024xf32>
    %50 = vector.extract_strided_slice %48 {offsets = [0, 0], sizes = [2, 512], strides = [1, 1]} : vector<2x1024xf32> to vector<2x512xf32>
    %c2_34 = arith.constant 2 : index
    %c0_35 = arith.constant 0 : index
    %c0_36 = arith.constant 0 : index
    %51 = vector.load %arg20[%c2_34, %c0_35, %c0_36] : memref<8x4x512xf32, #tpu.memory_space<vmem>>, vector<1x2x512xf32>
    %52 = vector.shape_cast %51 : vector<1x2x512xf32> to vector<2x512xf32>
    %53 = vector.shape_cast %50 : vector<2x512xf32> to vector<1x2x512xf32>
    tpu.vector_store %arg20[%c2_34, %c0_35, %c0_36], %53 {strides = array<i32>} : memref<8x4x512xf32, #tpu.memory_space<vmem>>, vector<1x2x512xf32>,
    %54 = vector.extract_strided_slice %49 {offsets = [0, 0], sizes = [2, 512], strides = [1, 1]} : vector<2x1024xf32> to vector<2x512xf32>
    %c2_37 = arith.constant 2 : index
    %c2_38 = arith.constant 2 : index
    %c0_39 = arith.constant 0 : index
    %55 = vector.load %arg20[%c2_37, %c2_38, %c0_39] : memref<8x4x512xf32, #tpu.memory_space<vmem>>, vector<1x2x512xf32>
    %56 = vector.shape_cast %55 : vector<1x2x512xf32> to vector<2x512xf32>
    %57 = vector.shape_cast %54 : vector<2x512xf32> to vector<1x2x512xf32>
    tpu.vector_store %arg20[%c2_37, %c2_38, %c0_39], %57 {strides = array<i32>} : memref<8x4x512xf32, #tpu.memory_space<vmem>>, vector<1x2x512xf32>,
    %58 = vector.extract_strided_slice %48 {offsets = [0, 512], sizes = [2, 512], strides = [1, 1]} : vector<2x1024xf32> to vector<2x512xf32>
    %c2_40 = arith.constant 2 : index
    %c0_41 = arith.constant 0 : index
    %c0_42 = arith.constant 0 : index
    %59 = vector.load %arg21[%c2_40, %c0_41, %c0_42] : memref<8x4x512xf32, #tpu.memory_space<vmem>>, vector<1x2x512xf32>
    %60 = vector.shape_cast %59 : vector<1x2x512xf32> to vector<2x512xf32>
    %61 = vector.shape_cast %58 : vector<2x512xf32> to vector<1x2x512xf32>
    tpu.vector_store %arg21[%c2_40, %c0_41, %c0_42], %61 {strides = array<i32>} : memref<8x4x512xf32, #tpu.memory_space<vmem>>, vector<1x2x512xf32>,
    %62 = vector.extract_strided_slice %49 {offsets = [0, 512], sizes = [2, 512], strides = [1, 1]} : vector<2x1024xf32> to vector<2x512xf32>
    %c2_43 = arith.constant 2 : index
    %c2_44 = arith.constant 2 : index
    %c0_45 = arith.constant 0 : index
    %63 = vector.load %arg21[%c2_43, %c2_44, %c0_45] : memref<8x4x512xf32, #tpu.memory_space<vmem>>, vector<1x2x512xf32>
    %64 = vector.shape_cast %63 : vector<1x2x512xf32> to vector<2x512xf32>
    %65 = vector.shape_cast %62 : vector<2x512xf32> to vector<1x2x512xf32>
    tpu.vector_store %arg21[%c2_43, %c2_44, %c0_45], %65 {strides = array<i32>} : memref<8x4x512xf32, #tpu.memory_space<vmem>>, vector<1x2x512xf32>,
    %66 = vector.extract_strided_slice %5 {offsets = [6, 0], sizes = [2, 1024], strides = [1, 1]} : vector<16x1024xf32> to vector<2x1024xf32>
    %67 = vector.extract_strided_slice %11 {offsets = [6, 0], sizes = [2, 1024], strides = [1, 1]} : vector<16x1024xf32> to vector<2x1024xf32>
    %68 = vector.extract_strided_slice %66 {offsets = [0, 0], sizes = [2, 512], strides = [1, 1]} : vector<2x1024xf32> to vector<2x512xf32>
    %c3 = arith.constant 3 : index
    %c0_46 = arith.constant 0 : index
    %c0_47 = arith.constant 0 : index
    %69 = vector.load %arg20[%c3, %c0_46, %c0_47] : memref<8x4x512xf32, #tpu.memory_space<vmem>>, vector<1x2x512xf32>
    %70 = vector.shape_cast %69 : vector<1x2x512xf32> to vector<2x512xf32>
    %71 = vector.shape_cast %68 : vector<2x512xf32> to vector<1x2x512xf32>
    tpu.vector_store %arg20[%c3, %c0_46, %c0_47], %71 {strides = array<i32>} : memref<8x4x512xf32, #tpu.memory_space<vmem>>, vector<1x2x512xf32>,
    %72 = vector.extract_strided_slice %67 {offsets = [0, 0], sizes = [2, 512], strides = [1, 1]} : vector<2x1024xf32> to vector<2x512xf32>
    %c3_48 = arith.constant 3 : index
    %c2_49 = arith.constant 2 : index
    %c0_50 = arith.constant 0 : index
    %73 = vector.load %arg20[%c3_48, %c2_49, %c0_50] : memref<8x4x512xf32, #tpu.memory_space<vmem>>, vector<1x2x512xf32>
    %74 = vector.shape_cast %73 : vector<1x2x512xf32> to vector<2x512xf32>
    %75 = vector.shape_cast %72 : vector<2x512xf32> to vector<1x2x512xf32>
    tpu.vector_store %arg20[%c3_48, %c2_49, %c0_50], %75 {strides = array<i32>} : memref<8x4x512xf32, #tpu.memory_space<vmem>>, vector<1x2x512xf32>,
    %76 = vector.extract_strided_slice %66 {offsets = [0, 512], sizes = [2, 512], strides = [1, 1]} : vector<2x1024xf32> to vector<2x512xf32>
    %c3_51 = arith.constant 3 : index
    %c0_52 = arith.constant 0 : index
    %c0_53 = arith.constant 0 : index
    %77 = vector.load %arg21[%c3_51, %c0_52, %c0_53] : memref<8x4x512xf32, #tpu.memory_space<vmem>>, vector<1x2x512xf32>
    %78 = vector.shape_cast %77 : vector<1x2x512xf32> to vector<2x512xf32>
    %79 = vector.shape_cast %76 : vector<2x512xf32> to vector<1x2x512xf32>
    tpu.vector_store %arg21[%c3_51, %c0_52, %c0_53], %79 {strides = array<i32>} : memref<8x4x512xf32, #tpu.memory_space<vmem>>, vector<1x2x512xf32>,
    %80 = vector.extract_strided_slice %67 {offsets = [0, 512], sizes = [2, 512], strides = [1, 1]} : vector<2x1024xf32> to vector<2x512xf32>
    %c3_54 = arith.constant 3 : index
    %c2_55 = arith.constant 2 : index
    %c0_56 = arith.constant 0 : index
    %81 = vector.load %arg21[%c3_54, %c2_55, %c0_56] : memref<8x4x512xf32, #tpu.memory_space<vmem>>, vector<1x2x512xf32>
    %82 = vector.shape_cast %81 : vector<1x2x512xf32> to vector<2x512xf32>
    %83 = vector.shape_cast %80 : vector<2x512xf32> to vector<1x2x512xf32>
    tpu.vector_store %arg21[%c3_54, %c2_55, %c0_56], %83 {strides = array<i32>} : memref<8x4x512xf32, #tpu.memory_space<vmem>>, vector<1x2x512xf32>,
    %84 = vector.extract_strided_slice %5 {offsets = [8, 0], sizes = [2, 1024], strides = [1, 1]} : vector<16x1024xf32> to vector<2x1024xf32>
    %85 = vector.extract_strided_slice %11 {offsets = [8, 0], sizes = [2, 1024], strides = [1, 1]} : vector<16x1024xf32> to vector<2x1024xf32>
    %86 = vector.extract_strided_slice %84 {offsets = [0, 0], sizes = [2, 512], strides = [1, 1]} : vector<2x1024xf32> to vector<2x512xf32>
    %c4 = arith.constant 4 : index
    %c0_57 = arith.constant 0 : index
    %c0_58 = arith.constant 0 : index
    %87 = vector.load %arg20[%c4, %c0_57, %c0_58] : memref<8x4x512xf32, #tpu.memory_space<vmem>>, vector<1x2x512xf32>
    %88 = vector.shape_cast %87 : vector<1x2x512xf32> to vector<2x512xf32>
    %89 = vector.shape_cast %86 : vector<2x512xf32> to vector<1x2x512xf32>
    tpu.vector_store %arg20[%c4, %c0_57, %c0_58], %89 {strides = array<i32>} : memref<8x4x512xf32, #tpu.memory_space<vmem>>, vector<1x2x512xf32>,
    %90 = vector.extract_strided_slice %85 {offsets = [0, 0], sizes = [2, 512], strides = [1, 1]} : vector<2x1024xf32> to vector<2x512xf32>
    %c4_59 = arith.constant 4 : index
    %c2_60 = arith.constant 2 : index
    %c0_61 = arith.constant 0 : index
    %91 = vector.load %arg20[%c4_59, %c2_60, %c0_61] : memref<8x4x512xf32, #tpu.memory_space<vmem>>, vector<1x2x512xf32>
    %92 = vector.shape_cast %91 : vector<1x2x512xf32> to vector<2x512xf32>
    %93 = vector.shape_cast %90 : vector<2x512xf32> to vector<1x2x512xf32>
    tpu.vector_store %arg20[%c4_59, %c2_60, %c0_61], %93 {strides = array<i32>} : memref<8x4x512xf32, #tpu.memory_space<vmem>>, vector<1x2x512xf32>,
    %94 = vector.extract_strided_slice %84 {offsets = [0, 512], sizes = [2, 512], strides = [1, 1]} : vector<2x1024xf32> to vector<2x512xf32>
    %c4_62 = arith.constant 4 : index
    %c0_63 = arith.constant 0 : index
    %c0_64 = arith.constant 0 : index
    %95 = vector.load %arg21[%c4_62, %c0_63, %c0_64] : memref<8x4x512xf32, #tpu.memory_space<vmem>>, vector<1x2x512xf32>
    %96 = vector.shape_cast %95 : vector<1x2x512xf32> to vector<2x512xf32>
    %97 = vector.shape_cast %94 : vector<2x512xf32> to vector<1x2x512xf32>
    tpu.vector_store %arg21[%c4_62, %c0_63, %c0_64], %97 {strides = array<i32>} : memref<8x4x512xf32, #tpu.memory_space<vmem>>, vector<1x2x512xf32>,
    %98 = vector.extract_strided_slice %85 {offsets = [0, 512], sizes = [2, 512], strides = [1, 1]} : vector<2x1024xf32> to vector<2x512xf32>
    %c4_65 = arith.constant 4 : index
    %c2_66 = arith.constant 2 : index
    %c0_67 = arith.constant 0 : index
    %99 = vector.load %arg21[%c4_65, %c2_66, %c0_67] : memref<8x4x512xf32, #tpu.memory_space<vmem>>, vector<1x2x512xf32>
    %100 = vector.shape_cast %99 : vector<1x2x512xf32> to vector<2x512xf32>
    %101 = vector.shape_cast %98 : vector<2x512xf32> to vector<1x2x512xf32>
    tpu.vector_store %arg21[%c4_65, %c2_66, %c0_67], %101 {strides = array<i32>} : memref<8x4x512xf32, #tpu.memory_space<vmem>>, vector<1x2x512xf32>,
    %102 = vector.extract_strided_slice %5 {offsets = [10, 0], sizes = [2, 1024], strides = [1, 1]} : vector<16x1024xf32> to vector<2x1024xf32>
    %103 = vector.extract_strided_slice %11 {offsets = [10, 0], sizes = [2, 1024], strides = [1, 1]} : vector<16x1024xf32> to vector<2x1024xf32>
    %104 = vector.extract_strided_slice %102 {offsets = [0, 0], sizes = [2, 512], strides = [1, 1]} : vector<2x1024xf32> to vector<2x512xf32>
    %c5 = arith.constant 5 : index
    %c0_68 = arith.constant 0 : index
    %c0_69 = arith.constant 0 : index
    %105 = vector.load %arg20[%c5, %c0_68, %c0_69] : memref<8x4x512xf32, #tpu.memory_space<vmem>>, vector<1x2x512xf32>
    %106 = vector.shape_cast %105 : vector<1x2x512xf32> to vector<2x512xf32>
    %107 = vector.shape_cast %104 : vector<2x512xf32> to vector<1x2x512xf32>
    tpu.vector_store %arg20[%c5, %c0_68, %c0_69], %107 {strides = array<i32>} : memref<8x4x512xf32, #tpu.memory_space<vmem>>, vector<1x2x512xf32>,
    %108 = vector.extract_strided_slice %103 {offsets = [0, 0], sizes = [2, 512], strides = [1, 1]} : vector<2x1024xf32> to vector<2x512xf32>
    %c5_70 = arith.constant 5 : index
    %c2_71 = arith.constant 2 : index
    %c0_72 = arith.constant 0 : index
    %109 = vector.load %arg20[%c5_70, %c2_71, %c0_72] : memref<8x4x512xf32, #tpu.memory_space<vmem>>, vector<1x2x512xf32>
    %110 = vector.shape_cast %109 : vector<1x2x512xf32> to vector<2x512xf32>
    %111 = vector.shape_cast %108 : vector<2x512xf32> to vector<1x2x512xf32>
    tpu.vector_store %arg20[%c5_70, %c2_71, %c0_72], %111 {strides = array<i32>} : memref<8x4x512xf32, #tpu.memory_space<vmem>>, vector<1x2x512xf32>,
    %112 = vector.extract_strided_slice %102 {offsets = [0, 512], sizes = [2, 512], strides = [1, 1]} : vector<2x1024xf32> to vector<2x512xf32>
    %c5_73 = arith.constant 5 : index
    %c0_74 = arith.constant 0 : index
    %c0_75 = arith.constant 0 : index
    %113 = vector.load %arg21[%c5_73, %c0_74, %c0_75] : memref<8x4x512xf32, #tpu.memory_space<vmem>>, vector<1x2x512xf32>
    %114 = vector.shape_cast %113 : vector<1x2x512xf32> to vector<2x512xf32>
    %115 = vector.shape_cast %112 : vector<2x512xf32> to vector<1x2x512xf32>
    tpu.vector_store %arg21[%c5_73, %c0_74, %c0_75], %115 {strides = array<i32>} : memref<8x4x512xf32, #tpu.memory_space<vmem>>, vector<1x2x512xf32>,
    %116 = vector.extract_strided_slice %103 {offsets = [0, 512], sizes = [2, 512], strides = [1, 1]} : vector<2x1024xf32> to vector<2x512xf32>
    %c5_76 = arith.constant 5 : index
    %c2_77 = arith.constant 2 : index
    %c0_78 = arith.constant 0 : index
    %117 = vector.load %arg21[%c5_76, %c2_77, %c0_78] : memref<8x4x512xf32, #tpu.memory_space<vmem>>, vector<1x2x512xf32>
    %118 = vector.shape_cast %117 : vector<1x2x512xf32> to vector<2x512xf32>
    %119 = vector.shape_cast %116 : vector<2x512xf32> to vector<1x2x512xf32>
    tpu.vector_store %arg21[%c5_76, %c2_77, %c0_78], %119 {strides = array<i32>} : memref<8x4x512xf32, #tpu.memory_space<vmem>>, vector<1x2x512xf32>,
    %120 = vector.extract_strided_slice %5 {offsets = [12, 0], sizes = [2, 1024], strides = [1, 1]} : vector<16x1024xf32> to vector<2x1024xf32>
    %121 = vector.extract_strided_slice %11 {offsets = [12, 0], sizes = [2, 1024], strides = [1, 1]} : vector<16x1024xf32> to vector<2x1024xf32>
    %122 = vector.extract_strided_slice %120 {offsets = [0, 0], sizes = [2, 512], strides = [1, 1]} : vector<2x1024xf32> to vector<2x512xf32>
    %c6 = arith.constant 6 : index
    %c0_79 = arith.constant 0 : index
    %c0_80 = arith.constant 0 : index
    %123 = vector.load %arg20[%c6, %c0_79, %c0_80] : memref<8x4x512xf32, #tpu.memory_space<vmem>>, vector<1x2x512xf32>
    %124 = vector.shape_cast %123 : vector<1x2x512xf32> to vector<2x512xf32>
    %125 = vector.shape_cast %122 : vector<2x512xf32> to vector<1x2x512xf32>
    tpu.vector_store %arg20[%c6, %c0_79, %c0_80], %125 {strides = array<i32>} : memref<8x4x512xf32, #tpu.memory_space<vmem>>, vector<1x2x512xf32>,
    %126 = vector.extract_strided_slice %121 {offsets = [0, 0], sizes = [2, 512], strides = [1, 1]} : vector<2x1024xf32> to vector<2x512xf32>
    %c6_81 = arith.constant 6 : index
    %c2_82 = arith.constant 2 : index
    %c0_83 = arith.constant 0 : index
    %127 = vector.load %arg20[%c6_81, %c2_82, %c0_83] : memref<8x4x512xf32, #tpu.memory_space<vmem>>, vector<1x2x512xf32>
    %128 = vector.shape_cast %127 : vector<1x2x512xf32> to vector<2x512xf32>
    %129 = vector.shape_cast %126 : vector<2x512xf32> to vector<1x2x512xf32>
    tpu.vector_store %arg20[%c6_81, %c2_82, %c0_83], %129 {strides = array<i32>} : memref<8x4x512xf32, #tpu.memory_space<vmem>>, vector<1x2x512xf32>,
    %130 = vector.extract_strided_slice %120 {offsets = [0, 512], sizes = [2, 512], strides = [1, 1]} : vector<2x1024xf32> to vector<2x512xf32>
    %c6_84 = arith.constant 6 : index
    %c0_85 = arith.constant 0 : index
    %c0_86 = arith.constant 0 : index
    %131 = vector.load %arg21[%c6_84, %c0_85, %c0_86] : memref<8x4x512xf32, #tpu.memory_space<vmem>>, vector<1x2x512xf32>
    %132 = vector.shape_cast %131 : vector<1x2x512xf32> to vector<2x512xf32>
    %133 = vector.shape_cast %130 : vector<2x512xf32> to vector<1x2x512xf32>
    tpu.vector_store %arg21[%c6_84, %c0_85, %c0_86], %133 {strides = array<i32>} : memref<8x4x512xf32, #tpu.memory_space<vmem>>, vector<1x2x512xf32>,
    %134 = vector.extract_strided_slice %121 {offsets = [0, 512], sizes = [2, 512], strides = [1, 1]} : vector<2x1024xf32> to vector<2x512xf32>
    %c6_87 = arith.constant 6 : index
    %c2_88 = arith.constant 2 : index
    %c0_89 = arith.constant 0 : index
    %135 = vector.load %arg21[%c6_87, %c2_88, %c0_89] : memref<8x4x512xf32, #tpu.memory_space<vmem>>, vector<1x2x512xf32>
    %136 = vector.shape_cast %135 : vector<1x2x512xf32> to vector<2x512xf32>
    %137 = vector.shape_cast %134 : vector<2x512xf32> to vector<1x2x512xf32>
    tpu.vector_store %arg21[%c6_87, %c2_88, %c0_89], %137 {strides = array<i32>} : memref<8x4x512xf32, #tpu.memory_space<vmem>>, vector<1x2x512xf32>,
    %138 = vector.extract_strided_slice %5 {offsets = [14, 0], sizes = [2, 1024], strides = [1, 1]} : vector<16x1024xf32> to vector<2x1024xf32>
    %139 = vector.extract_strided_slice %11 {offsets = [14, 0], sizes = [2, 1024], strides = [1, 1]} : vector<16x1024xf32> to vector<2x1024xf32>
    %140 = vector.extract_strided_slice %138 {offsets = [0, 0], sizes = [2, 512], strides = [1, 1]} : vector<2x1024xf32> to vector<2x512xf32>
    %c7 = arith.constant 7 : index
    %c0_90 = arith.constant 0 : index
    %c0_91 = arith.constant 0 : index
    %141 = vector.load %arg20[%c7, %c0_90, %c0_91] : memref<8x4x512xf32, #tpu.memory_space<vmem>>, vector<1x2x512xf32>
    %142 = vector.shape_cast %141 : vector<1x2x512xf32> to vector<2x512xf32>
    %143 = vector.shape_cast %140 : vector<2x512xf32> to vector<1x2x512xf32>
    tpu.vector_store %arg20[%c7, %c0_90, %c0_91], %143 {strides = array<i32>} : memref<8x4x512xf32, #tpu.memory_space<vmem>>, vector<1x2x512xf32>,
    %144 = vector.extract_strided_slice %139 {offsets = [0, 0], sizes = [2, 512], strides = [1, 1]} : vector<2x1024xf32> to vector<2x512xf32>
    %c7_92 = arith.constant 7 : index
    %c2_93 = arith.constant 2 : index
    %c0_94 = arith.constant 0 : index
    %145 = vector.load %arg20[%c7_92, %c2_93, %c0_94] : memref<8x4x512xf32, #tpu.memory_space<vmem>>, vector<1x2x512xf32>
    %146 = vector.shape_cast %145 : vector<1x2x512xf32> to vector<2x512xf32>
    %147 = vector.shape_cast %144 : vector<2x512xf32> to vector<1x2x512xf32>
    tpu.vector_store %arg20[%c7_92, %c2_93, %c0_94], %147 {strides = array<i32>} : memref<8x4x512xf32, #tpu.memory_space<vmem>>, vector<1x2x512xf32>,
    %148 = vector.extract_strided_slice %138 {offsets = [0, 512], sizes = [2, 512], strides = [1, 1]} : vector<2x1024xf32> to vector<2x512xf32>
    %c7_95 = arith.constant 7 : index
    %c0_96 = arith.constant 0 : index
    %c0_97 = arith.constant 0 : index
    %149 = vector.load %arg21[%c7_95, %c0_96, %c0_97] : memref<8x4x512xf32, #tpu.memory_space<vmem>>, vector<1x2x512xf32>
    %150 = vector.shape_cast %149 : vector<1x2x512xf32> to vector<2x512xf32>
    %151 = vector.shape_cast %148 : vector<2x512xf32> to vector<1x2x512xf32>
    tpu.vector_store %arg21[%c7_95, %c0_96, %c0_97], %151 {strides = array<i32>} : memref<8x4x512xf32, #tpu.memory_space<vmem>>, vector<1x2x512xf32>,
    %152 = vector.extract_strided_slice %139 {offsets = [0, 512], sizes = [2, 512], strides = [1, 1]} : vector<2x1024xf32> to vector<2x512xf32>
    %c7_98 = arith.constant 7 : index
    %c2_99 = arith.constant 2 : index
    %c0_100 = arith.constant 0 : index
    %153 = vector.load %arg21[%c7_98, %c2_99, %c0_100] : memref<8x4x512xf32, #tpu.memory_space<vmem>>, vector<1x2x512xf32>
    %154 = vector.shape_cast %153 : vector<1x2x512xf32> to vector<2x512xf32>
    %155 = vector.shape_cast %152 : vector<2x512xf32> to vector<1x2x512xf32>
    tpu.vector_store %arg21[%c7_98, %c2_99, %c0_100], %155 {strides = array<i32>} : memref<8x4x512xf32, #tpu.memory_space<vmem>>, vector<1x2x512xf32>,
    %c0_101 = arith.constant 0 : index
    %c0_102 = arith.constant 0 : index
    %156 = vector.load %arg2[%c0_101, %c0_102] : memref<4x128xf32, #tpu.memory_space<vmem>>, vector<4x128xf32>
    %c0_103 = arith.constant 0 : index
    %c0_104 = arith.constant 0 : index
    %157 = vector.load %arg3[%c0_103, %c0_104] : memref<4x128xf32, #tpu.memory_space<vmem>>, vector<4x128xf32>
    %c0_105 = arith.constant 0 : index
    %c0_106 = arith.constant 0 : index
    %c0_107 = arith.constant 0 : index
    %158 = vector.load %arg9[%c0_105, %c0_106, %c0_107] : memref<2x128x512xf32, #tpu.memory_space<vmem>>, vector<1x128x512xf32>
    %159 = vector.shape_cast %158 : vector<1x128x512xf32> to vector<128x512xf32>
    %c1_108 = arith.constant 1 : index
    %c0_109 = arith.constant 0 : index
    %c0_110 = arith.constant 0 : index
    %160 = vector.load %arg9[%c1_108, %c0_109, %c0_110] : memref<2x128x512xf32, #tpu.memory_space<vmem>>, vector<1x128x512xf32>
    %161 = vector.shape_cast %160 : vector<1x128x512xf32> to vector<128x512xf32>
    %c0_111 = arith.constant 0 : index
    %c0_112 = arith.constant 0 : index
    %c0_113 = arith.constant 0 : index
    %162 = vector.load %arg20[%c0_111, %c0_112, %c0_113] : memref<8x4x512xf32, #tpu.memory_space<vmem>>, vector<1x4x512xf32>
    %163 = vector.shape_cast %162 : vector<1x4x512xf32> to vector<4x512xf32>
    %164 = vector.extract_strided_slice %156 {offsets = [0, 0], sizes = [2, 128], strides = [1, 1]} : vector<4x128xf32> to vector<2x128xf32>
    %cst_114 = arith.constant dense<0.000000e+00> : vector<2x512xf32>
    %165 = tpu.matmul %164, %159, %cst_114 {dimension_numbers = #tpu.dot_dimension_numbers<[1], [0], [0], [1], [0, 0, 1, 1], [], []>} : vector<2x128xf32>, vector<128x512xf32>, vector<2x512xf32> -> vector<2x512xf32>
    %166 = vector.extract_strided_slice %156 {offsets = [2, 0], sizes = [2, 128], strides = [1, 1]} : vector<4x128xf32> to vector<2x128xf32>
    %cst_115 = arith.constant dense<0.000000e+00> : vector<2x512xf32>
    %167 = tpu.matmul %166, %161, %cst_115 {dimension_numbers = #tpu.dot_dimension_numbers<[1], [0], [0], [1], [0, 0, 1, 1], [], []>} : vector<2x128xf32>, vector<128x512xf32>, vector<2x512xf32> -> vector<2x512xf32>
    %168 = tpu.concatenate %165, %167 in 0 : vector<2x512xf32>, vector<2x512xf32> -> vector<4x512xf32>
    %169 = arith.addf %163, %168 : vector<4x512xf32>
    %170 = vector.extract_strided_slice %169 {offsets = [0, 0], sizes = [4, 384], strides = [1, 1]} : vector<4x512xf32> to vector<4x384xf32>
    %171 = arith.negf %170 : vector<4x384xf32>
    %172 = math.exp %171 : vector<4x384xf32>
    %cst_116 = arith.constant 1.000000e+00 : f32
    %173 = vector.broadcast %cst_116 : f32 to vector<4x384xf32>
    %174 = arith.addf %173, %172 : vector<4x384xf32>
    %175 = arith.divf %173, %174 : vector<4x384xf32>
    %176 = vector.extract_strided_slice %169 {offsets = [0, 384], sizes = [4, 128], strides = [1, 1]} : vector<4x512xf32> to vector<4x128xf32>
    %177 = math.tanh %176 : vector<4x128xf32>
    %178 = vector.extract_strided_slice %175 {offsets = [0, 128], sizes = [4, 128], strides = [1, 1]} : vector<4x384xf32> to vector<4x128xf32>
    %179 = arith.mulf %178, %157 : vector<4x128xf32>
    %180 = vector.extract_strided_slice %175 {offsets = [0, 0], sizes = [4, 128], strides = [1, 1]} : vector<4x384xf32> to vector<4x128xf32>
    %181 = arith.mulf %180, %177 : vector<4x128xf32>
    %182 = arith.addf %179, %181 : vector<4x128xf32>
    %183 = vector.extract_strided_slice %175 {offsets = [0, 256], sizes = [4, 128], strides = [1, 1]} : vector<4x384xf32> to vector<4x128xf32>
    %184 = math.tanh %182 : vector<4x128xf32>
    %185 = arith.mulf %183, %184 : vector<4x128xf32>
    %c1_117 = arith.constant 1 : index
    %c0_118 = arith.constant 0 : index
    %c0_119 = arith.constant 0 : index
    %186 = vector.load %arg20[%c1_117, %c0_118, %c0_119] : memref<8x4x512xf32, #tpu.memory_space<vmem>>, vector<1x4x512xf32>
    %187 = vector.shape_cast %186 : vector<1x4x512xf32> to vector<4x512xf32>
    %188 = vector.extract_strided_slice %185 {offsets = [0, 0], sizes = [2, 128], strides = [1, 1]} : vector<4x128xf32> to vector<2x128xf32>
    %cst_120 = arith.constant dense<0.000000e+00> : vector<2x512xf32>
    %189 = tpu.matmul %188, %159, %cst_120 {dimension_numbers = #tpu.dot_dimension_numbers<[1], [0], [0], [1], [0, 0, 1, 1], [], []>} : vector<2x128xf32>, vector<128x512xf32>, vector<2x512xf32> -> vector<2x512xf32>
    %190 = vector.extract_strided_slice %185 {offsets = [2, 0], sizes = [2, 128], strides = [1, 1]} : vector<4x128xf32> to vector<2x128xf32>
    %cst_121 = arith.constant dense<0.000000e+00> : vector<2x512xf32>
    %191 = tpu.matmul %190, %161, %cst_121 {dimension_numbers = #tpu.dot_dimension_numbers<[1], [0], [0], [1], [0, 0, 1, 1], [], []>} : vector<2x128xf32>, vector<128x512xf32>, vector<2x512xf32> -> vector<2x512xf32>
    %192 = tpu.concatenate %189, %191 in 0 : vector<2x512xf32>, vector<2x512xf32> -> vector<4x512xf32>
    %193 = arith.addf %187, %192 : vector<4x512xf32>
    %194 = vector.extract_strided_slice %193 {offsets = [0, 0], sizes = [4, 384], strides = [1, 1]} : vector<4x512xf32> to vector<4x384xf32>
    %195 = arith.negf %194 : vector<4x384xf32>
    %196 = math.exp %195 : vector<4x384xf32>
    %cst_122 = arith.constant 1.000000e+00 : f32
    %197 = vector.broadcast %cst_122 : f32 to vector<4x384xf32>
    %198 = arith.addf %197, %196 : vector<4x384xf32>
    %199 = arith.divf %197, %198 : vector<4x384xf32>
    %200 = vector.extract_strided_slice %193 {offsets = [0, 384], sizes = [4, 128], strides = [1, 1]} : vector<4x512xf32> to vector<4x128xf32>
    %201 = math.tanh %200 : vector<4x128xf32>
    %202 = vector.extract_strided_slice %199 {offsets = [0, 128], sizes = [4, 128], strides = [1, 1]} : vector<4x384xf32> to vector<4x128xf32>
    %203 = arith.mulf %202, %182 : vector<4x128xf32>
    %204 = vector.extract_strided_slice %199 {offsets = [0, 0], sizes = [4, 128], strides = [1, 1]} : vector<4x384xf32> to vector<4x128xf32>
    %205 = arith.mulf %204, %201 : vector<4x128xf32>
    %206 = arith.addf %203, %205 : vector<4x128xf32>
    %207 = vector.extract_strided_slice %199 {offsets = [0, 256], sizes = [4, 128], strides = [1, 1]} : vector<4x384xf32> to vector<4x128xf32>
    %208 = math.tanh %206 : vector<4x128xf32>
    %209 = arith.mulf %207, %208 : vector<4x128xf32>
    %c2_123 = arith.constant 2 : index
    %c0_124 = arith.constant 0 : index
    %c0_125 = arith.constant 0 : index
    %210 = vector.load %arg20[%c2_123, %c0_124, %c0_125] : memref<8x4x512xf32, #tpu.memory_space<vmem>>, vector<1x4x512xf32>
    %211 = vector.shape_cast %210 : vector<1x4x512xf32> to vector<4x512xf32>
    %212 = vector.extract_strided_slice %209 {offsets = [0, 0], sizes = [2, 128], strides = [1, 1]} : vector<4x128xf32> to vector<2x128xf32>
    %cst_126 = arith.constant dense<0.000000e+00> : vector<2x512xf32>
    %213 = tpu.matmul %212, %159, %cst_126 {dimension_numbers = #tpu.dot_dimension_numbers<[1], [0], [0], [1], [0, 0, 1, 1], [], []>} : vector<2x128xf32>, vector<128x512xf32>, vector<2x512xf32> -> vector<2x512xf32>
    %214 = vector.extract_strided_slice %209 {offsets = [2, 0], sizes = [2, 128], strides = [1, 1]} : vector<4x128xf32> to vector<2x128xf32>
    %cst_127 = arith.constant dense<0.000000e+00> : vector<2x512xf32>
    %215 = tpu.matmul %214, %161, %cst_127 {dimension_numbers = #tpu.dot_dimension_numbers<[1], [0], [0], [1], [0, 0, 1, 1], [], []>} : vector<2x128xf32>, vector<128x512xf32>, vector<2x512xf32> -> vector<2x512xf32>
    %216 = tpu.concatenate %213, %215 in 0 : vector<2x512xf32>, vector<2x512xf32> -> vector<4x512xf32>
    %217 = arith.addf %211, %216 : vector<4x512xf32>
    %218 = vector.extract_strided_slice %217 {offsets = [0, 0], sizes = [4, 384], strides = [1, 1]} : vector<4x512xf32> to vector<4x384xf32>
    %219 = arith.negf %218 : vector<4x384xf32>
    %220 = math.exp %219 : vector<4x384xf32>
    %cst_128 = arith.constant 1.000000e+00 : f32
    %221 = vector.broadcast %cst_128 : f32 to vector<4x384xf32>
    %222 = arith.addf %221, %220 : vector<4x384xf32>
    %223 = arith.divf %221, %222 : vector<4x384xf32>
    %224 = vector.extract_strided_slice %217 {offsets = [0, 384], sizes = [4, 128], strides = [1, 1]} : vector<4x512xf32> to vector<4x128xf32>
    %225 = math.tanh %224 : vector<4x128xf32>
    %226 = vector.extract_strided_slice %223 {offsets = [0, 128], sizes = [4, 128], strides = [1, 1]} : vector<4x384xf32> to vector<4x128xf32>
    %227 = arith.mulf %226, %206 : vector<4x128xf32>
    %228 = vector.extract_strided_slice %223 {offsets = [0, 0], sizes = [4, 128], strides = [1, 1]} : vector<4x384xf32> to vector<4x128xf32>
    %229 = arith.mulf %228, %225 : vector<4x128xf32>
    %230 = arith.addf %227, %229 : vector<4x128xf32>
    %231 = vector.extract_strided_slice %223 {offsets = [0, 256], sizes = [4, 128], strides = [1, 1]} : vector<4x384xf32> to vector<4x128xf32>
    %232 = math.tanh %230 : vector<4x128xf32>
    %233 = arith.mulf %231, %232 : vector<4x128xf32>
    %c3_129 = arith.constant 3 : index
    %c0_130 = arith.constant 0 : index
    %c0_131 = arith.constant 0 : index
    %234 = vector.load %arg20[%c3_129, %c0_130, %c0_131] : memref<8x4x512xf32, #tpu.memory_space<vmem>>, vector<1x4x512xf32>
    %235 = vector.shape_cast %234 : vector<1x4x512xf32> to vector<4x512xf32>
    %236 = vector.extract_strided_slice %233 {offsets = [0, 0], sizes = [2, 128], strides = [1, 1]} : vector<4x128xf32> to vector<2x128xf32>
    %cst_132 = arith.constant dense<0.000000e+00> : vector<2x512xf32>
    %237 = tpu.matmul %236, %159, %cst_132 {dimension_numbers = #tpu.dot_dimension_numbers<[1], [0], [0], [1], [0, 0, 1, 1], [], []>} : vector<2x128xf32>, vector<128x512xf32>, vector<2x512xf32> -> vector<2x512xf32>
    %238 = vector.extract_strided_slice %233 {offsets = [2, 0], sizes = [2, 128], strides = [1, 1]} : vector<4x128xf32> to vector<2x128xf32>
    %cst_133 = arith.constant dense<0.000000e+00> : vector<2x512xf32>
    %239 = tpu.matmul %238, %161, %cst_133 {dimension_numbers = #tpu.dot_dimension_numbers<[1], [0], [0], [1], [0, 0, 1, 1], [], []>} : vector<2x128xf32>, vector<128x512xf32>, vector<2x512xf32> -> vector<2x512xf32>
    %240 = tpu.concatenate %237, %239 in 0 : vector<2x512xf32>, vector<2x512xf32> -> vector<4x512xf32>
    %241 = arith.addf %235, %240 : vector<4x512xf32>
    %242 = vector.extract_strided_slice %241 {offsets = [0, 0], sizes = [4, 384], strides = [1, 1]} : vector<4x512xf32> to vector<4x384xf32>
    %243 = arith.negf %242 : vector<4x384xf32>
    %244 = math.exp %243 : vector<4x384xf32>
    %cst_134 = arith.constant 1.000000e+00 : f32
    %245 = vector.broadcast %cst_134 : f32 to vector<4x384xf32>
    %246 = arith.addf %245, %244 : vector<4x384xf32>
    %247 = arith.divf %245, %246 : vector<4x384xf32>
    %248 = vector.extract_strided_slice %241 {offsets = [0, 384], sizes = [4, 128], strides = [1, 1]} : vector<4x512xf32> to vector<4x128xf32>
    %249 = math.tanh %248 : vector<4x128xf32>
    %250 = vector.extract_strided_slice %247 {offsets = [0, 128], sizes = [4, 128], strides = [1, 1]} : vector<4x384xf32> to vector<4x128xf32>
    %251 = arith.mulf %250, %230 : vector<4x128xf32>
    %252 = vector.extract_strided_slice %247 {offsets = [0, 0], sizes = [4, 128], strides = [1, 1]} : vector<4x384xf32> to vector<4x128xf32>
    %253 = arith.mulf %252, %249 : vector<4x128xf32>
    %254 = arith.addf %251, %253 : vector<4x128xf32>
    %255 = vector.extract_strided_slice %247 {offsets = [0, 256], sizes = [4, 128], strides = [1, 1]} : vector<4x384xf32> to vector<4x128xf32>
    %256 = math.tanh %254 : vector<4x128xf32>
    %257 = arith.mulf %255, %256 : vector<4x128xf32>
    %c4_135 = arith.constant 4 : index
    %c0_136 = arith.constant 0 : index
    %c0_137 = arith.constant 0 : index
    %258 = vector.load %arg20[%c4_135, %c0_136, %c0_137] : memref<8x4x512xf32, #tpu.memory_space<vmem>>, vector<1x4x512xf32>
    %259 = vector.shape_cast %258 : vector<1x4x512xf32> to vector<4x512xf32>
    %260 = vector.extract_strided_slice %257 {offsets = [0, 0], sizes = [2, 128], strides = [1, 1]} : vector<4x128xf32> to vector<2x128xf32>
    %cst_138 = arith.constant dense<0.000000e+00> : vector<2x512xf32>
    %261 = tpu.matmul %260, %159, %cst_138 {dimension_numbers = #tpu.dot_dimension_numbers<[1], [0], [0], [1], [0, 0, 1, 1], [], []>} : vector<2x128xf32>, vector<128x512xf32>, vector<2x512xf32> -> vector<2x512xf32>
    %262 = vector.extract_strided_slice %257 {offsets = [2, 0], sizes = [2, 128], strides = [1, 1]} : vector<4x128xf32> to vector<2x128xf32>
    %cst_139 = arith.constant dense<0.000000e+00> : vector<2x512xf32>
    %263 = tpu.matmul %262, %161, %cst_139 {dimension_numbers = #tpu.dot_dimension_numbers<[1], [0], [0], [1], [0, 0, 1, 1], [], []>} : vector<2x128xf32>, vector<128x512xf32>, vector<2x512xf32> -> vector<2x512xf32>
    %264 = tpu.concatenate %261, %263 in 0 : vector<2x512xf32>, vector<2x512xf32> -> vector<4x512xf32>
    %265 = arith.addf %259, %264 : vector<4x512xf32>
    %266 = vector.extract_strided_slice %265 {offsets = [0, 0], sizes = [4, 384], strides = [1, 1]} : vector<4x512xf32> to vector<4x384xf32>
    %267 = arith.negf %266 : vector<4x384xf32>
    %268 = math.exp %267 : vector<4x384xf32>
    %cst_140 = arith.constant 1.000000e+00 : f32
    %269 = vector.broadcast %cst_140 : f32 to vector<4x384xf32>
    %270 = arith.addf %269, %268 : vector<4x384xf32>
    %271 = arith.divf %269, %270 : vector<4x384xf32>
    %272 = vector.extract_strided_slice %265 {offsets = [0, 384], sizes = [4, 128], strides = [1, 1]} : vector<4x512xf32> to vector<4x128xf32>
    %273 = math.tanh %272 : vector<4x128xf32>
    %274 = vector.extract_strided_slice %271 {offsets = [0, 128], sizes = [4, 128], strides = [1, 1]} : vector<4x384xf32> to vector<4x128xf32>
    %275 = arith.mulf %274, %254 : vector<4x128xf32>
    %276 = vector.extract_strided_slice %271 {offsets = [0, 0], sizes = [4, 128], strides = [1, 1]} : vector<4x384xf32> to vector<4x128xf32>
    %277 = arith.mulf %276, %273 : vector<4x128xf32>
    %278 = arith.addf %275, %277 : vector<4x128xf32>
    %279 = vector.extract_strided_slice %271 {offsets = [0, 256], sizes = [4, 128], strides = [1, 1]} : vector<4x384xf32> to vector<4x128xf32>
    %280 = math.tanh %278 : vector<4x128xf32>
    %281 = arith.mulf %279, %280 : vector<4x128xf32>
    %c5_141 = arith.constant 5 : index
    %c0_142 = arith.constant 0 : index
    %c0_143 = arith.constant 0 : index
    %282 = vector.load %arg20[%c5_141, %c0_142, %c0_143] : memref<8x4x512xf32, #tpu.memory_space<vmem>>, vector<1x4x512xf32>
    %283 = vector.shape_cast %282 : vector<1x4x512xf32> to vector<4x512xf32>
    %284 = vector.extract_strided_slice %281 {offsets = [0, 0], sizes = [2, 128], strides = [1, 1]} : vector<4x128xf32> to vector<2x128xf32>
    %cst_144 = arith.constant dense<0.000000e+00> : vector<2x512xf32>
    %285 = tpu.matmul %284, %159, %cst_144 {dimension_numbers = #tpu.dot_dimension_numbers<[1], [0], [0], [1], [0, 0, 1, 1], [], []>} : vector<2x128xf32>, vector<128x512xf32>, vector<2x512xf32> -> vector<2x512xf32>
    %286 = vector.extract_strided_slice %281 {offsets = [2, 0], sizes = [2, 128], strides = [1, 1]} : vector<4x128xf32> to vector<2x128xf32>
    %cst_145 = arith.constant dense<0.000000e+00> : vector<2x512xf32>
    %287 = tpu.matmul %286, %161, %cst_145 {dimension_numbers = #tpu.dot_dimension_numbers<[1], [0], [0], [1], [0, 0, 1, 1], [], []>} : vector<2x128xf32>, vector<128x512xf32>, vector<2x512xf32> -> vector<2x512xf32>
    %288 = tpu.concatenate %285, %287 in 0 : vector<2x512xf32>, vector<2x512xf32> -> vector<4x512xf32>
    %289 = arith.addf %283, %288 : vector<4x512xf32>
    %290 = vector.extract_strided_slice %289 {offsets = [0, 0], sizes = [4, 384], strides = [1, 1]} : vector<4x512xf32> to vector<4x384xf32>
    %291 = arith.negf %290 : vector<4x384xf32>
    %292 = math.exp %291 : vector<4x384xf32>
    %cst_146 = arith.constant 1.000000e+00 : f32
    %293 = vector.broadcast %cst_146 : f32 to vector<4x384xf32>
    %294 = arith.addf %293, %292 : vector<4x384xf32>
    %295 = arith.divf %293, %294 : vector<4x384xf32>
    %296 = vector.extract_strided_slice %289 {offsets = [0, 384], sizes = [4, 128], strides = [1, 1]} : vector<4x512xf32> to vector<4x128xf32>
    %297 = math.tanh %296 : vector<4x128xf32>
    %298 = vector.extract_strided_slice %295 {offsets = [0, 128], sizes = [4, 128], strides = [1, 1]} : vector<4x384xf32> to vector<4x128xf32>
    %299 = arith.mulf %298, %278 : vector<4x128xf32>
    %300 = vector.extract_strided_slice %295 {offsets = [0, 0], sizes = [4, 128], strides = [1, 1]} : vector<4x384xf32> to vector<4x128xf32>
    %301 = arith.mulf %300, %297 : vector<4x128xf32>
    %302 = arith.addf %299, %301 : vector<4x128xf32>
    %303 = vector.extract_strided_slice %295 {offsets = [0, 256], sizes = [4, 128], strides = [1, 1]} : vector<4x384xf32> to vector<4x128xf32>
    %304 = math.tanh %302 : vector<4x128xf32>
    %305 = arith.mulf %303, %304 : vector<4x128xf32>
    %c6_147 = arith.constant 6 : index
    %c0_148 = arith.constant 0 : index
    %c0_149 = arith.constant 0 : index
    %306 = vector.load %arg20[%c6_147, %c0_148, %c0_149] : memref<8x4x512xf32, #tpu.memory_space<vmem>>, vector<1x4x512xf32>
    %307 = vector.shape_cast %306 : vector<1x4x512xf32> to vector<4x512xf32>
    %308 = vector.extract_strided_slice %305 {offsets = [0, 0], sizes = [2, 128], strides = [1, 1]} : vector<4x128xf32> to vector<2x128xf32>
    %cst_150 = arith.constant dense<0.000000e+00> : vector<2x512xf32>
    %309 = tpu.matmul %308, %159, %cst_150 {dimension_numbers = #tpu.dot_dimension_numbers<[1], [0], [0], [1], [0, 0, 1, 1], [], []>} : vector<2x128xf32>, vector<128x512xf32>, vector<2x512xf32> -> vector<2x512xf32>
    %310 = vector.extract_strided_slice %305 {offsets = [2, 0], sizes = [2, 128], strides = [1, 1]} : vector<4x128xf32> to vector<2x128xf32>
    %cst_151 = arith.constant dense<0.000000e+00> : vector<2x512xf32>
    %311 = tpu.matmul %310, %161, %cst_151 {dimension_numbers = #tpu.dot_dimension_numbers<[1], [0], [0], [1], [0, 0, 1, 1], [], []>} : vector<2x128xf32>, vector<128x512xf32>, vector<2x512xf32> -> vector<2x512xf32>
    %312 = tpu.concatenate %309, %311 in 0 : vector<2x512xf32>, vector<2x512xf32> -> vector<4x512xf32>
    %313 = arith.addf %307, %312 : vector<4x512xf32>
    %314 = vector.extract_strided_slice %313 {offsets = [0, 0], sizes = [4, 384], strides = [1, 1]} : vector<4x512xf32> to vector<4x384xf32>
    %315 = arith.negf %314 : vector<4x384xf32>
    %316 = math.exp %315 : vector<4x384xf32>
    %cst_152 = arith.constant 1.000000e+00 : f32
    %317 = vector.broadcast %cst_152 : f32 to vector<4x384xf32>
    %318 = arith.addf %317, %316 : vector<4x384xf32>
    %319 = arith.divf %317, %318 : vector<4x384xf32>
    %320 = vector.extract_strided_slice %313 {offsets = [0, 384], sizes = [4, 128], strides = [1, 1]} : vector<4x512xf32> to vector<4x128xf32>
    %321 = math.tanh %320 : vector<4x128xf32>
    %322 = vector.extract_strided_slice %319 {offsets = [0, 128], sizes = [4, 128], strides = [1, 1]} : vector<4x384xf32> to vector<4x128xf32>
    %323 = arith.mulf %322, %302 : vector<4x128xf32>
    %324 = vector.extract_strided_slice %319 {offsets = [0, 0], sizes = [4, 128], strides = [1, 1]} : vector<4x384xf32> to vector<4x128xf32>
    %325 = arith.mulf %324, %321 : vector<4x128xf32>
    %326 = arith.addf %323, %325 : vector<4x128xf32>
    %327 = vector.extract_strided_slice %319 {offsets = [0, 256], sizes = [4, 128], strides = [1, 1]} : vector<4x384xf32> to vector<4x128xf32>
    %328 = math.tanh %326 : vector<4x128xf32>
    %329 = arith.mulf %327, %328 : vector<4x128xf32>
    %c7_153 = arith.constant 7 : index
    %c0_154 = arith.constant 0 : index
    %c0_155 = arith.constant 0 : index
    %330 = vector.load %arg20[%c7_153, %c0_154, %c0_155] : memref<8x4x512xf32, #tpu.memory_space<vmem>>, vector<1x4x512xf32>
    %331 = vector.shape_cast %330 : vector<1x4x512xf32> to vector<4x512xf32>
    %332 = vector.extract_strided_slice %329 {offsets = [0, 0], sizes = [2, 128], strides = [1, 1]} : vector<4x128xf32> to vector<2x128xf32>
    %cst_156 = arith.constant dense<0.000000e+00> : vector<2x512xf32>
    %333 = tpu.matmul %332, %159, %cst_156 {dimension_numbers = #tpu.dot_dimension_numbers<[1], [0], [0], [1], [0, 0, 1, 1], [], []>} : vector<2x128xf32>, vector<128x512xf32>, vector<2x512xf32> -> vector<2x512xf32>
    %334 = vector.extract_strided_slice %329 {offsets = [2, 0], sizes = [2, 128], strides = [1, 1]} : vector<4x128xf32> to vector<2x128xf32>
    %cst_157 = arith.constant dense<0.000000e+00> : vector<2x512xf32>
    %335 = tpu.matmul %334, %161, %cst_157 {dimension_numbers = #tpu.dot_dimension_numbers<[1], [0], [0], [1], [0, 0, 1, 1], [], []>} : vector<2x128xf32>, vector<128x512xf32>, vector<2x512xf32> -> vector<2x512xf32>
    %336 = tpu.concatenate %333, %335 in 0 : vector<2x512xf32>, vector<2x512xf32> -> vector<4x512xf32>
    %337 = arith.addf %331, %336 : vector<4x512xf32>
    %338 = vector.extract_strided_slice %337 {offsets = [0, 0], sizes = [4, 384], strides = [1, 1]} : vector<4x512xf32> to vector<4x384xf32>
    %339 = arith.negf %338 : vector<4x384xf32>
    %340 = math.exp %339 : vector<4x384xf32>
    %cst_158 = arith.constant 1.000000e+00 : f32
    %341 = vector.broadcast %cst_158 : f32 to vector<4x384xf32>
    %342 = arith.addf %341, %340 : vector<4x384xf32>
    %343 = arith.divf %341, %342 : vector<4x384xf32>
    %344 = vector.extract_strided_slice %337 {offsets = [0, 384], sizes = [4, 128], strides = [1, 1]} : vector<4x512xf32> to vector<4x128xf32>
    %345 = math.tanh %344 : vector<4x128xf32>
    %346 = vector.extract_strided_slice %343 {offsets = [0, 128], sizes = [4, 128], strides = [1, 1]} : vector<4x384xf32> to vector<4x128xf32>
    %347 = arith.mulf %346, %326 : vector<4x128xf32>
    %348 = vector.extract_strided_slice %343 {offsets = [0, 0], sizes = [4, 128], strides = [1, 1]} : vector<4x384xf32> to vector<4x128xf32>
    %349 = arith.mulf %348, %345 : vector<4x128xf32>
    %350 = arith.addf %347, %349 : vector<4x128xf32>
    %351 = vector.extract_strided_slice %343 {offsets = [0, 256], sizes = [4, 128], strides = [1, 1]} : vector<4x384xf32> to vector<4x128xf32>
    %352 = math.tanh %350 : vector<4x128xf32>
    %353 = arith.mulf %351, %352 : vector<4x128xf32>
    %c0_159 = arith.constant 0 : index
    %c0_160 = arith.constant 0 : index
    %354 = vector.load %arg18[%c0_159, %c0_160] : memref<4x128xf32, #tpu.memory_space<vmem>>, vector<4x128xf32>
    tpu.vector_store %arg18[%c0_159, %c0_160], %353 {strides = array<i32>} : memref<4x128xf32, #tpu.memory_space<vmem>>, vector<4x128xf32>,
    %c0_161 = arith.constant 0 : index
    %c0_162 = arith.constant 0 : index
    %355 = vector.load %arg19[%c0_161, %c0_162] : memref<4x128xf32, #tpu.memory_space<vmem>>, vector<4x128xf32>
    tpu.vector_store %arg19[%c0_161, %c0_162], %350 {strides = array<i32>} : memref<4x128xf32, #tpu.memory_space<vmem>>, vector<4x128xf32>,
    %c0_163 = arith.constant 0 : index
    %c0_164 = arith.constant 0 : index
    %356 = vector.load %arg11[%c0_163, %c0_164] : memref<128x64xf32, #tpu.memory_space<vmem>>, vector<128x64xf32>
    %cst_165 = arith.constant dense<0.000000e+00> : vector<4x64xf32>
    %357 = tpu.matmul %353, %356, %cst_165 {dimension_numbers = #tpu.dot_dimension_numbers<[1], [0], [0], [1], [0, 0, 1, 1], [], []>} : vector<4x128xf32>, vector<128x64xf32>, vector<4x64xf32> -> vector<4x64xf32>
    %c0_166 = arith.constant 0 : index
    %c0_167 = arith.constant 0 : index
    %358 = vector.load %arg12[%c0_166, %c0_167] : memref<1x64xf32, #tpu.memory_space<vmem>>, vector<1x64xf32>
    %359 = vector.broadcast %358 : vector<1x64xf32> to vector<4x64xf32>
    %360 = arith.addf %357, %359 : vector<4x64xf32>
    %c0_168 = arith.constant 0 : index
    %c0_169 = arith.constant 0 : index
    %361 = vector.load %arg17[%c0_168, %c0_169] : memref<4x64xf32, #tpu.memory_space<vmem>>, vector<4x64xf32>
    tpu.vector_store %arg17[%c0_168, %c0_169], %360 {strides = array<i32>} : memref<4x64xf32, #tpu.memory_space<vmem>>, vector<4x64xf32>,
    %362 = vector.extract_strided_slice %360 {offsets = [0, 0], sizes = [4, 32], strides = [1, 1]} : vector<4x64xf32> to vector<4x32xf32>
    %363 = vector.extract_strided_slice %360 {offsets = [0, 32], sizes = [4, 32], strides = [1, 1]} : vector<4x64xf32> to vector<4x32xf32>
    %cst_170 = arith.constant 5.000000e-01 : f32
    %364 = vector.broadcast %cst_170 : f32 to vector<4x32xf32>
    %365 = arith.mulf %364, %363 : vector<4x32xf32>
    %366 = math.exp %365 : vector<4x32xf32>
    %c0_171 = arith.constant 0 : index
    %c0_172 = arith.constant 0 : index
    %367 = vector.load %arg4[%c0_171, %c0_172] : memref<4x1xf32, #tpu.memory_space<vmem>>, vector<4x1xf32>
    %368 = vector.broadcast %367 : vector<4x1xf32> to vector<4x32xf32>
    %369 = arith.mulf %368, %366 : vector<4x32xf32>
    %370 = arith.addf %369, %362 : vector<4x32xf32>
    %c0_173 = arith.constant 0 : index
    %c0_174 = arith.constant 0 : index
    %371 = vector.load %arg13[%c0_173, %c0_174] : memref<32x128xf32, #tpu.memory_space<vmem>>, vector<32x128xf32>
    %cst_175 = arith.constant dense<0.000000e+00> : vector<4x128xf32>
    %372 = tpu.matmul %370, %371, %cst_175 {dimension_numbers = #tpu.dot_dimension_numbers<[1], [0], [0], [1], [0, 0, 1, 1], [], []>} : vector<4x32xf32>, vector<32x128xf32>, vector<4x128xf32> -> vector<4x128xf32>
    %c0_176 = arith.constant 0 : index
    %c0_177 = arith.constant 0 : index
    %373 = vector.load %arg14[%c0_176, %c0_177] : memref<1x128xf32, #tpu.memory_space<vmem>>, vector<1x128xf32>
    %374 = vector.broadcast %373 : vector<1x128xf32> to vector<4x128xf32>
    %375 = arith.addf %372, %374 : vector<4x128xf32>
    %c0_178 = arith.constant 0 : index
    %c0_179 = arith.constant 0 : index
    %c0_180 = arith.constant 0 : index
    %376 = vector.load %arg10[%c0_178, %c0_179, %c0_180] : memref<2x128x512xf32, #tpu.memory_space<vmem>>, vector<1x128x512xf32>
    %377 = vector.shape_cast %376 : vector<1x128x512xf32> to vector<128x512xf32>
    %c1_181 = arith.constant 1 : index
    %c0_182 = arith.constant 0 : index
    %c0_183 = arith.constant 0 : index
    %378 = vector.load %arg10[%c1_181, %c0_182, %c0_183] : memref<2x128x512xf32, #tpu.memory_space<vmem>>, vector<1x128x512xf32>
    %379 = vector.shape_cast %378 : vector<1x128x512xf32> to vector<128x512xf32>
    %c0_184 = arith.constant 0 : index
    %c0_185 = arith.constant 0 : index
    %c0_186 = arith.constant 0 : index
    %380 = vector.load %arg21[%c0_184, %c0_185, %c0_186] : memref<8x4x512xf32, #tpu.memory_space<vmem>>, vector<1x4x512xf32>
    %381 = vector.shape_cast %380 : vector<1x4x512xf32> to vector<4x512xf32>
    %382 = vector.extract_strided_slice %375 {offsets = [0, 0], sizes = [2, 128], strides = [1, 1]} : vector<4x128xf32> to vector<2x128xf32>
    %cst_187 = arith.constant dense<0.000000e+00> : vector<2x512xf32>
    %383 = tpu.matmul %382, %377, %cst_187 {dimension_numbers = #tpu.dot_dimension_numbers<[1], [0], [0], [1], [0, 0, 1, 1], [], []>} : vector<2x128xf32>, vector<128x512xf32>, vector<2x512xf32> -> vector<2x512xf32>
    %384 = vector.extract_strided_slice %375 {offsets = [2, 0], sizes = [2, 128], strides = [1, 1]} : vector<4x128xf32> to vector<2x128xf32>
    %cst_188 = arith.constant dense<0.000000e+00> : vector<2x512xf32>
    %385 = tpu.matmul %384, %379, %cst_188 {dimension_numbers = #tpu.dot_dimension_numbers<[1], [0], [0], [1], [0, 0, 1, 1], [], []>} : vector<2x128xf32>, vector<128x512xf32>, vector<2x512xf32> -> vector<2x512xf32>
    %386 = tpu.concatenate %383, %385 in 0 : vector<2x512xf32>, vector<2x512xf32> -> vector<4x512xf32>
    %387 = arith.addf %381, %386 : vector<4x512xf32>
    %388 = vector.extract_strided_slice %387 {offsets = [0, 0], sizes = [4, 384], strides = [1, 1]} : vector<4x512xf32> to vector<4x384xf32>
    %389 = arith.negf %388 : vector<4x384xf32>
    %390 = math.exp %389 : vector<4x384xf32>
    %cst_189 = arith.constant 1.000000e+00 : f32
    %391 = vector.broadcast %cst_189 : f32 to vector<4x384xf32>
    %392 = arith.addf %391, %390 : vector<4x384xf32>
    %393 = arith.divf %391, %392 : vector<4x384xf32>
    %394 = vector.extract_strided_slice %387 {offsets = [0, 384], sizes = [4, 128], strides = [1, 1]} : vector<4x512xf32> to vector<4x128xf32>
    %395 = math.tanh %394 : vector<4x128xf32>
    %396 = vector.extract_strided_slice %393 {offsets = [0, 128], sizes = [4, 128], strides = [1, 1]} : vector<4x384xf32> to vector<4x128xf32>
    %397 = arith.mulf %396, %375 : vector<4x128xf32>
    %398 = vector.extract_strided_slice %393 {offsets = [0, 0], sizes = [4, 128], strides = [1, 1]} : vector<4x384xf32> to vector<4x128xf32>
    %399 = arith.mulf %398, %395 : vector<4x128xf32>
    %400 = arith.addf %397, %399 : vector<4x128xf32>
    %401 = vector.extract_strided_slice %393 {offsets = [0, 256], sizes = [4, 128], strides = [1, 1]} : vector<4x384xf32> to vector<4x128xf32>
    %402 = math.tanh %400 : vector<4x128xf32>
    %403 = arith.mulf %401, %402 : vector<4x128xf32>
    %404 = vector.extract_strided_slice %403 {offsets = [0, 0], sizes = [2, 128], strides = [1, 1]} : vector<4x128xf32> to vector<2x128xf32>
    %c0_190 = arith.constant 0 : index
    %c0_191 = arith.constant 0 : index
    %c0_192 = arith.constant 0 : index
    %405 = vector.load %arg15[%c0_190, %c0_191, %c0_192] : memref<8x2x128xf32, #tpu.memory_space<vmem>>, vector<1x2x128xf32>
    %406 = vector.shape_cast %405 : vector<1x2x128xf32> to vector<2x128xf32>
    %407 = vector.shape_cast %404 : vector<2x128xf32> to vector<1x2x128xf32>
    tpu.vector_store %arg15[%c0_190, %c0_191, %c0_192], %407 {strides = array<i32>} : memref<8x2x128xf32, #tpu.memory_space<vmem>>, vector<1x2x128xf32>,
    %408 = vector.extract_strided_slice %403 {offsets = [2, 0], sizes = [2, 128], strides = [1, 1]} : vector<4x128xf32> to vector<2x128xf32>
    %c7_193 = arith.constant 7 : index
    %c0_194 = arith.constant 0 : index
    %c0_195 = arith.constant 0 : index
    %409 = vector.load %arg16[%c7_193, %c0_194, %c0_195] : memref<8x2x128xf32, #tpu.memory_space<vmem>>, vector<1x2x128xf32>
    %410 = vector.shape_cast %409 : vector<1x2x128xf32> to vector<2x128xf32>
    %411 = vector.shape_cast %408 : vector<2x128xf32> to vector<1x2x128xf32>
    tpu.vector_store %arg16[%c7_193, %c0_194, %c0_195], %411 {strides = array<i32>} : memref<8x2x128xf32, #tpu.memory_space<vmem>>, vector<1x2x128xf32>,
    %c1_196 = arith.constant 1 : index
    %c0_197 = arith.constant 0 : index
    %c0_198 = arith.constant 0 : index
    %412 = vector.load %arg21[%c1_196, %c0_197, %c0_198] : memref<8x4x512xf32, #tpu.memory_space<vmem>>, vector<1x4x512xf32>
    %413 = vector.shape_cast %412 : vector<1x4x512xf32> to vector<4x512xf32>
    %414 = vector.extract_strided_slice %403 {offsets = [0, 0], sizes = [2, 128], strides = [1, 1]} : vector<4x128xf32> to vector<2x128xf32>
    %cst_199 = arith.constant dense<0.000000e+00> : vector<2x512xf32>
    %415 = tpu.matmul %414, %377, %cst_199 {dimension_numbers = #tpu.dot_dimension_numbers<[1], [0], [0], [1], [0, 0, 1, 1], [], []>} : vector<2x128xf32>, vector<128x512xf32>, vector<2x512xf32> -> vector<2x512xf32>
    %416 = vector.extract_strided_slice %403 {offsets = [2, 0], sizes = [2, 128], strides = [1, 1]} : vector<4x128xf32> to vector<2x128xf32>
    %cst_200 = arith.constant dense<0.000000e+00> : vector<2x512xf32>
    %417 = tpu.matmul %416, %379, %cst_200 {dimension_numbers = #tpu.dot_dimension_numbers<[1], [0], [0], [1], [0, 0, 1, 1], [], []>} : vector<2x128xf32>, vector<128x512xf32>, vector<2x512xf32> -> vector<2x512xf32>
    %418 = tpu.concatenate %415, %417 in 0 : vector<2x512xf32>, vector<2x512xf32> -> vector<4x512xf32>
    %419 = arith.addf %413, %418 : vector<4x512xf32>
    %420 = vector.extract_strided_slice %419 {offsets = [0, 0], sizes = [4, 384], strides = [1, 1]} : vector<4x512xf32> to vector<4x384xf32>
    %421 = arith.negf %420 : vector<4x384xf32>
    %422 = math.exp %421 : vector<4x384xf32>
    %cst_201 = arith.constant 1.000000e+00 : f32
    %423 = vector.broadcast %cst_201 : f32 to vector<4x384xf32>
    %424 = arith.addf %423, %422 : vector<4x384xf32>
    %425 = arith.divf %423, %424 : vector<4x384xf32>
    %426 = vector.extract_strided_slice %419 {offsets = [0, 384], sizes = [4, 128], strides = [1, 1]} : vector<4x512xf32> to vector<4x128xf32>
    %427 = math.tanh %426 : vector<4x128xf32>
    %428 = vector.extract_strided_slice %425 {offsets = [0, 128], sizes = [4, 128], strides = [1, 1]} : vector<4x384xf32> to vector<4x128xf32>
    %429 = arith.mulf %428, %400 : vector<4x128xf32>
    %430 = vector.extract_strided_slice %425 {offsets = [0, 0], sizes = [4, 128], strides = [1, 1]} : vector<4x384xf32> to vector<4x128xf32>
    %431 = arith.mulf %430, %427 : vector<4x128xf32>
    %432 = arith.addf %429, %431 : vector<4x128xf32>
    %433 = vector.extract_strided_slice %425 {offsets = [0, 256], sizes = [4, 128], strides = [1, 1]} : vector<4x384xf32> to vector<4x128xf32>
    %434 = math.tanh %432 : vector<4x128xf32>
    %435 = arith.mulf %433, %434 : vector<4x128xf32>
    %436 = vector.extract_strided_slice %435 {offsets = [0, 0], sizes = [2, 128], strides = [1, 1]} : vector<4x128xf32> to vector<2x128xf32>
    %c1_202 = arith.constant 1 : index
    %c0_203 = arith.constant 0 : index
    %c0_204 = arith.constant 0 : index
    %437 = vector.load %arg15[%c1_202, %c0_203, %c0_204] : memref<8x2x128xf32, #tpu.memory_space<vmem>>, vector<1x2x128xf32>
    %438 = vector.shape_cast %437 : vector<1x2x128xf32> to vector<2x128xf32>
    %439 = vector.shape_cast %436 : vector<2x128xf32> to vector<1x2x128xf32>
    tpu.vector_store %arg15[%c1_202, %c0_203, %c0_204], %439 {strides = array<i32>} : memref<8x2x128xf32, #tpu.memory_space<vmem>>, vector<1x2x128xf32>,
    %440 = vector.extract_strided_slice %435 {offsets = [2, 0], sizes = [2, 128], strides = [1, 1]} : vector<4x128xf32> to vector<2x128xf32>
    %c6_205 = arith.constant 6 : index
    %c0_206 = arith.constant 0 : index
    %c0_207 = arith.constant 0 : index
    %441 = vector.load %arg16[%c6_205, %c0_206, %c0_207] : memref<8x2x128xf32, #tpu.memory_space<vmem>>, vector<1x2x128xf32>
    %442 = vector.shape_cast %441 : vector<1x2x128xf32> to vector<2x128xf32>
    %443 = vector.shape_cast %440 : vector<2x128xf32> to vector<1x2x128xf32>
    tpu.vector_store %arg16[%c6_205, %c0_206, %c0_207], %443 {strides = array<i32>} : memref<8x2x128xf32, #tpu.memory_space<vmem>>, vector<1x2x128xf32>,
    %c2_208 = arith.constant 2 : index
    %c0_209 = arith.constant 0 : index
    %c0_210 = arith.constant 0 : index
    %444 = vector.load %arg21[%c2_208, %c0_209, %c0_210] : memref<8x4x512xf32, #tpu.memory_space<vmem>>, vector<1x4x512xf32>
    %445 = vector.shape_cast %444 : vector<1x4x512xf32> to vector<4x512xf32>
    %446 = vector.extract_strided_slice %435 {offsets = [0, 0], sizes = [2, 128], strides = [1, 1]} : vector<4x128xf32> to vector<2x128xf32>
    %cst_211 = arith.constant dense<0.000000e+00> : vector<2x512xf32>
    %447 = tpu.matmul %446, %377, %cst_211 {dimension_numbers = #tpu.dot_dimension_numbers<[1], [0], [0], [1], [0, 0, 1, 1], [], []>} : vector<2x128xf32>, vector<128x512xf32>, vector<2x512xf32> -> vector<2x512xf32>
    %448 = vector.extract_strided_slice %435 {offsets = [2, 0], sizes = [2, 128], strides = [1, 1]} : vector<4x128xf32> to vector<2x128xf32>
    %cst_212 = arith.constant dense<0.000000e+00> : vector<2x512xf32>
    %449 = tpu.matmul %448, %379, %cst_212 {dimension_numbers = #tpu.dot_dimension_numbers<[1], [0], [0], [1], [0, 0, 1, 1], [], []>} : vector<2x128xf32>, vector<128x512xf32>, vector<2x512xf32> -> vector<2x512xf32>
    %450 = tpu.concatenate %447, %449 in 0 : vector<2x512xf32>, vector<2x512xf32> -> vector<4x512xf32>
    %451 = arith.addf %445, %450 : vector<4x512xf32>
    %452 = vector.extract_strided_slice %451 {offsets = [0, 0], sizes = [4, 384], strides = [1, 1]} : vector<4x512xf32> to vector<4x384xf32>
    %453 = arith.negf %452 : vector<4x384xf32>
    %454 = math.exp %453 : vector<4x384xf32>
    %cst_213 = arith.constant 1.000000e+00 : f32
    %455 = vector.broadcast %cst_213 : f32 to vector<4x384xf32>
    %456 = arith.addf %455, %454 : vector<4x384xf32>
    %457 = arith.divf %455, %456 : vector<4x384xf32>
    %458 = vector.extract_strided_slice %451 {offsets = [0, 384], sizes = [4, 128], strides = [1, 1]} : vector<4x512xf32> to vector<4x128xf32>
    %459 = math.tanh %458 : vector<4x128xf32>
    %460 = vector.extract_strided_slice %457 {offsets = [0, 128], sizes = [4, 128], strides = [1, 1]} : vector<4x384xf32> to vector<4x128xf32>
    %461 = arith.mulf %460, %432 : vector<4x128xf32>
    %462 = vector.extract_strided_slice %457 {offsets = [0, 0], sizes = [4, 128], strides = [1, 1]} : vector<4x384xf32> to vector<4x128xf32>
    %463 = arith.mulf %462, %459 : vector<4x128xf32>
    %464 = arith.addf %461, %463 : vector<4x128xf32>
    %465 = vector.extract_strided_slice %457 {offsets = [0, 256], sizes = [4, 128], strides = [1, 1]} : vector<4x384xf32> to vector<4x128xf32>
    %466 = math.tanh %464 : vector<4x128xf32>
    %467 = arith.mulf %465, %466 : vector<4x128xf32>
    %468 = vector.extract_strided_slice %467 {offsets = [0, 0], sizes = [2, 128], strides = [1, 1]} : vector<4x128xf32> to vector<2x128xf32>
    %c2_214 = arith.constant 2 : index
    %c0_215 = arith.constant 0 : index
    %c0_216 = arith.constant 0 : index
    %469 = vector.load %arg15[%c2_214, %c0_215, %c0_216] : memref<8x2x128xf32, #tpu.memory_space<vmem>>, vector<1x2x128xf32>
    %470 = vector.shape_cast %469 : vector<1x2x128xf32> to vector<2x128xf32>
    %471 = vector.shape_cast %468 : vector<2x128xf32> to vector<1x2x128xf32>
    tpu.vector_store %arg15[%c2_214, %c0_215, %c0_216], %471 {strides = array<i32>} : memref<8x2x128xf32, #tpu.memory_space<vmem>>, vector<1x2x128xf32>,
    %472 = vector.extract_strided_slice %467 {offsets = [2, 0], sizes = [2, 128], strides = [1, 1]} : vector<4x128xf32> to vector<2x128xf32>
    %c5_217 = arith.constant 5 : index
    %c0_218 = arith.constant 0 : index
    %c0_219 = arith.constant 0 : index
    %473 = vector.load %arg16[%c5_217, %c0_218, %c0_219] : memref<8x2x128xf32, #tpu.memory_space<vmem>>, vector<1x2x128xf32>
    %474 = vector.shape_cast %473 : vector<1x2x128xf32> to vector<2x128xf32>
    %475 = vector.shape_cast %472 : vector<2x128xf32> to vector<1x2x128xf32>
    tpu.vector_store %arg16[%c5_217, %c0_218, %c0_219], %475 {strides = array<i32>} : memref<8x2x128xf32, #tpu.memory_space<vmem>>, vector<1x2x128xf32>,
    %c3_220 = arith.constant 3 : index
    %c0_221 = arith.constant 0 : index
    %c0_222 = arith.constant 0 : index
    %476 = vector.load %arg21[%c3_220, %c0_221, %c0_222] : memref<8x4x512xf32, #tpu.memory_space<vmem>>, vector<1x4x512xf32>
    %477 = vector.shape_cast %476 : vector<1x4x512xf32> to vector<4x512xf32>
    %478 = vector.extract_strided_slice %467 {offsets = [0, 0], sizes = [2, 128], strides = [1, 1]} : vector<4x128xf32> to vector<2x128xf32>
    %cst_223 = arith.constant dense<0.000000e+00> : vector<2x512xf32>
    %479 = tpu.matmul %478, %377, %cst_223 {dimension_numbers = #tpu.dot_dimension_numbers<[1], [0], [0], [1], [0, 0, 1, 1], [], []>} : vector<2x128xf32>, vector<128x512xf32>, vector<2x512xf32> -> vector<2x512xf32>
    %480 = vector.extract_strided_slice %467 {offsets = [2, 0], sizes = [2, 128], strides = [1, 1]} : vector<4x128xf32> to vector<2x128xf32>
    %cst_224 = arith.constant dense<0.000000e+00> : vector<2x512xf32>
    %481 = tpu.matmul %480, %379, %cst_224 {dimension_numbers = #tpu.dot_dimension_numbers<[1], [0], [0], [1], [0, 0, 1, 1], [], []>} : vector<2x128xf32>, vector<128x512xf32>, vector<2x512xf32> -> vector<2x512xf32>
    %482 = tpu.concatenate %479, %481 in 0 : vector<2x512xf32>, vector<2x512xf32> -> vector<4x512xf32>
    %483 = arith.addf %477, %482 : vector<4x512xf32>
    %484 = vector.extract_strided_slice %483 {offsets = [0, 0], sizes = [4, 384], strides = [1, 1]} : vector<4x512xf32> to vector<4x384xf32>
    %485 = arith.negf %484 : vector<4x384xf32>
    %486 = math.exp %485 : vector<4x384xf32>
    %cst_225 = arith.constant 1.000000e+00 : f32
    %487 = vector.broadcast %cst_225 : f32 to vector<4x384xf32>
    %488 = arith.addf %487, %486 : vector<4x384xf32>
    %489 = arith.divf %487, %488 : vector<4x384xf32>
    %490 = vector.extract_strided_slice %483 {offsets = [0, 384], sizes = [4, 128], strides = [1, 1]} : vector<4x512xf32> to vector<4x128xf32>
    %491 = math.tanh %490 : vector<4x128xf32>
    %492 = vector.extract_strided_slice %489 {offsets = [0, 128], sizes = [4, 128], strides = [1, 1]} : vector<4x384xf32> to vector<4x128xf32>
    %493 = arith.mulf %492, %464 : vector<4x128xf32>
    %494 = vector.extract_strided_slice %489 {offsets = [0, 0], sizes = [4, 128], strides = [1, 1]} : vector<4x384xf32> to vector<4x128xf32>
    %495 = arith.mulf %494, %491 : vector<4x128xf32>
    %496 = arith.addf %493, %495 : vector<4x128xf32>
    %497 = vector.extract_strided_slice %489 {offsets = [0, 256], sizes = [4, 128], strides = [1, 1]} : vector<4x384xf32> to vector<4x128xf32>
    %498 = math.tanh %496 : vector<4x128xf32>
    %499 = arith.mulf %497, %498 : vector<4x128xf32>
    %500 = vector.extract_strided_slice %499 {offsets = [0, 0], sizes = [2, 128], strides = [1, 1]} : vector<4x128xf32> to vector<2x128xf32>
    %c3_226 = arith.constant 3 : index
    %c0_227 = arith.constant 0 : index
    %c0_228 = arith.constant 0 : index
    %501 = vector.load %arg15[%c3_226, %c0_227, %c0_228] : memref<8x2x128xf32, #tpu.memory_space<vmem>>, vector<1x2x128xf32>
    %502 = vector.shape_cast %501 : vector<1x2x128xf32> to vector<2x128xf32>
    %503 = vector.shape_cast %500 : vector<2x128xf32> to vector<1x2x128xf32>
    tpu.vector_store %arg15[%c3_226, %c0_227, %c0_228], %503 {strides = array<i32>} : memref<8x2x128xf32, #tpu.memory_space<vmem>>, vector<1x2x128xf32>,
    %504 = vector.extract_strided_slice %499 {offsets = [2, 0], sizes = [2, 128], strides = [1, 1]} : vector<4x128xf32> to vector<2x128xf32>
    %c4_229 = arith.constant 4 : index
    %c0_230 = arith.constant 0 : index
    %c0_231 = arith.constant 0 : index
    %505 = vector.load %arg16[%c4_229, %c0_230, %c0_231] : memref<8x2x128xf32, #tpu.memory_space<vmem>>, vector<1x2x128xf32>
    %506 = vector.shape_cast %505 : vector<1x2x128xf32> to vector<2x128xf32>
    %507 = vector.shape_cast %504 : vector<2x128xf32> to vector<1x2x128xf32>
    tpu.vector_store %arg16[%c4_229, %c0_230, %c0_231], %507 {strides = array<i32>} : memref<8x2x128xf32, #tpu.memory_space<vmem>>, vector<1x2x128xf32>,
    %c4_232 = arith.constant 4 : index
    %c0_233 = arith.constant 0 : index
    %c0_234 = arith.constant 0 : index
    %508 = vector.load %arg21[%c4_232, %c0_233, %c0_234] : memref<8x4x512xf32, #tpu.memory_space<vmem>>, vector<1x4x512xf32>
    %509 = vector.shape_cast %508 : vector<1x4x512xf32> to vector<4x512xf32>
    %510 = vector.extract_strided_slice %499 {offsets = [0, 0], sizes = [2, 128], strides = [1, 1]} : vector<4x128xf32> to vector<2x128xf32>
    %cst_235 = arith.constant dense<0.000000e+00> : vector<2x512xf32>
    %511 = tpu.matmul %510, %377, %cst_235 {dimension_numbers = #tpu.dot_dimension_numbers<[1], [0], [0], [1], [0, 0, 1, 1], [], []>} : vector<2x128xf32>, vector<128x512xf32>, vector<2x512xf32> -> vector<2x512xf32>
    %512 = vector.extract_strided_slice %499 {offsets = [2, 0], sizes = [2, 128], strides = [1, 1]} : vector<4x128xf32> to vector<2x128xf32>
    %cst_236 = arith.constant dense<0.000000e+00> : vector<2x512xf32>
    %513 = tpu.matmul %512, %379, %cst_236 {dimension_numbers = #tpu.dot_dimension_numbers<[1], [0], [0], [1], [0, 0, 1, 1], [], []>} : vector<2x128xf32>, vector<128x512xf32>, vector<2x512xf32> -> vector<2x512xf32>
    %514 = tpu.concatenate %511, %513 in 0 : vector<2x512xf32>, vector<2x512xf32> -> vector<4x512xf32>
    %515 = arith.addf %509, %514 : vector<4x512xf32>
    %516 = vector.extract_strided_slice %515 {offsets = [0, 0], sizes = [4, 384], strides = [1, 1]} : vector<4x512xf32> to vector<4x384xf32>
    %517 = arith.negf %516 : vector<4x384xf32>
    %518 = math.exp %517 : vector<4x384xf32>
    %cst_237 = arith.constant 1.000000e+00 : f32
    %519 = vector.broadcast %cst_237 : f32 to vector<4x384xf32>
    %520 = arith.addf %519, %518 : vector<4x384xf32>
    %521 = arith.divf %519, %520 : vector<4x384xf32>
    %522 = vector.extract_strided_slice %515 {offsets = [0, 384], sizes = [4, 128], strides = [1, 1]} : vector<4x512xf32> to vector<4x128xf32>
    %523 = math.tanh %522 : vector<4x128xf32>
    %524 = vector.extract_strided_slice %521 {offsets = [0, 128], sizes = [4, 128], strides = [1, 1]} : vector<4x384xf32> to vector<4x128xf32>
    %525 = arith.mulf %524, %496 : vector<4x128xf32>
    %526 = vector.extract_strided_slice %521 {offsets = [0, 0], sizes = [4, 128], strides = [1, 1]} : vector<4x384xf32> to vector<4x128xf32>
    %527 = arith.mulf %526, %523 : vector<4x128xf32>
    %528 = arith.addf %525, %527 : vector<4x128xf32>
    %529 = vector.extract_strided_slice %521 {offsets = [0, 256], sizes = [4, 128], strides = [1, 1]} : vector<4x384xf32> to vector<4x128xf32>
    %530 = math.tanh %528 : vector<4x128xf32>
    %531 = arith.mulf %529, %530 : vector<4x128xf32>
    %532 = vector.extract_strided_slice %531 {offsets = [0, 0], sizes = [2, 128], strides = [1, 1]} : vector<4x128xf32> to vector<2x128xf32>
    %c4_238 = arith.constant 4 : index
    %c0_239 = arith.constant 0 : index
    %c0_240 = arith.constant 0 : index
    %533 = vector.load %arg15[%c4_238, %c0_239, %c0_240] : memref<8x2x128xf32, #tpu.memory_space<vmem>>, vector<1x2x128xf32>
    %534 = vector.shape_cast %533 : vector<1x2x128xf32> to vector<2x128xf32>
    %535 = vector.shape_cast %532 : vector<2x128xf32> to vector<1x2x128xf32>
    tpu.vector_store %arg15[%c4_238, %c0_239, %c0_240], %535 {strides = array<i32>} : memref<8x2x128xf32, #tpu.memory_space<vmem>>, vector<1x2x128xf32>,
    %536 = vector.extract_strided_slice %531 {offsets = [2, 0], sizes = [2, 128], strides = [1, 1]} : vector<4x128xf32> to vector<2x128xf32>
    %c3_241 = arith.constant 3 : index
    %c0_242 = arith.constant 0 : index
    %c0_243 = arith.constant 0 : index
    %537 = vector.load %arg16[%c3_241, %c0_242, %c0_243] : memref<8x2x128xf32, #tpu.memory_space<vmem>>, vector<1x2x128xf32>
    %538 = vector.shape_cast %537 : vector<1x2x128xf32> to vector<2x128xf32>
    %539 = vector.shape_cast %536 : vector<2x128xf32> to vector<1x2x128xf32>
    tpu.vector_store %arg16[%c3_241, %c0_242, %c0_243], %539 {strides = array<i32>} : memref<8x2x128xf32, #tpu.memory_space<vmem>>, vector<1x2x128xf32>,
    %c5_244 = arith.constant 5 : index
    %c0_245 = arith.constant 0 : index
    %c0_246 = arith.constant 0 : index
    %540 = vector.load %arg21[%c5_244, %c0_245, %c0_246] : memref<8x4x512xf32, #tpu.memory_space<vmem>>, vector<1x4x512xf32>
    %541 = vector.shape_cast %540 : vector<1x4x512xf32> to vector<4x512xf32>
    %542 = vector.extract_strided_slice %531 {offsets = [0, 0], sizes = [2, 128], strides = [1, 1]} : vector<4x128xf32> to vector<2x128xf32>
    %cst_247 = arith.constant dense<0.000000e+00> : vector<2x512xf32>
    %543 = tpu.matmul %542, %377, %cst_247 {dimension_numbers = #tpu.dot_dimension_numbers<[1], [0], [0], [1], [0, 0, 1, 1], [], []>} : vector<2x128xf32>, vector<128x512xf32>, vector<2x512xf32> -> vector<2x512xf32>
    %544 = vector.extract_strided_slice %531 {offsets = [2, 0], sizes = [2, 128], strides = [1, 1]} : vector<4x128xf32> to vector<2x128xf32>
    %cst_248 = arith.constant dense<0.000000e+00> : vector<2x512xf32>
    %545 = tpu.matmul %544, %379, %cst_248 {dimension_numbers = #tpu.dot_dimension_numbers<[1], [0], [0], [1], [0, 0, 1, 1], [], []>} : vector<2x128xf32>, vector<128x512xf32>, vector<2x512xf32> -> vector<2x512xf32>
    %546 = tpu.concatenate %543, %545 in 0 : vector<2x512xf32>, vector<2x512xf32> -> vector<4x512xf32>
    %547 = arith.addf %541, %546 : vector<4x512xf32>
    %548 = vector.extract_strided_slice %547 {offsets = [0, 0], sizes = [4, 384], strides = [1, 1]} : vector<4x512xf32> to vector<4x384xf32>
    %549 = arith.negf %548 : vector<4x384xf32>
    %550 = math.exp %549 : vector<4x384xf32>
    %cst_249 = arith.constant 1.000000e+00 : f32
    %551 = vector.broadcast %cst_249 : f32 to vector<4x384xf32>
    %552 = arith.addf %551, %550 : vector<4x384xf32>
    %553 = arith.divf %551, %552 : vector<4x384xf32>
    %554 = vector.extract_strided_slice %547 {offsets = [0, 384], sizes = [4, 128], strides = [1, 1]} : vector<4x512xf32> to vector<4x128xf32>
    %555 = math.tanh %554 : vector<4x128xf32>
    %556 = vector.extract_strided_slice %553 {offsets = [0, 128], sizes = [4, 128], strides = [1, 1]} : vector<4x384xf32> to vector<4x128xf32>
    %557 = arith.mulf %556, %528 : vector<4x128xf32>
    %558 = vector.extract_strided_slice %553 {offsets = [0, 0], sizes = [4, 128], strides = [1, 1]} : vector<4x384xf32> to vector<4x128xf32>
    %559 = arith.mulf %558, %555 : vector<4x128xf32>
    %560 = arith.addf %557, %559 : vector<4x128xf32>
    %561 = vector.extract_strided_slice %553 {offsets = [0, 256], sizes = [4, 128], strides = [1, 1]} : vector<4x384xf32> to vector<4x128xf32>
    %562 = math.tanh %560 : vector<4x128xf32>
    %563 = arith.mulf %561, %562 : vector<4x128xf32>
    %564 = vector.extract_strided_slice %563 {offsets = [0, 0], sizes = [2, 128], strides = [1, 1]} : vector<4x128xf32> to vector<2x128xf32>
    %c5_250 = arith.constant 5 : index
    %c0_251 = arith.constant 0 : index
    %c0_252 = arith.constant 0 : index
    %565 = vector.load %arg15[%c5_250, %c0_251, %c0_252] : memref<8x2x128xf32, #tpu.memory_space<vmem>>, vector<1x2x128xf32>
    %566 = vector.shape_cast %565 : vector<1x2x128xf32> to vector<2x128xf32>
    %567 = vector.shape_cast %564 : vector<2x128xf32> to vector<1x2x128xf32>
    tpu.vector_store %arg15[%c5_250, %c0_251, %c0_252], %567 {strides = array<i32>} : memref<8x2x128xf32, #tpu.memory_space<vmem>>, vector<1x2x128xf32>,
    %568 = vector.extract_strided_slice %563 {offsets = [2, 0], sizes = [2, 128], strides = [1, 1]} : vector<4x128xf32> to vector<2x128xf32>
    %c2_253 = arith.constant 2 : index
    %c0_254 = arith.constant 0 : index
    %c0_255 = arith.constant 0 : index
    %569 = vector.load %arg16[%c2_253, %c0_254, %c0_255] : memref<8x2x128xf32, #tpu.memory_space<vmem>>, vector<1x2x128xf32>
    %570 = vector.shape_cast %569 : vector<1x2x128xf32> to vector<2x128xf32>
    %571 = vector.shape_cast %568 : vector<2x128xf32> to vector<1x2x128xf32>
    tpu.vector_store %arg16[%c2_253, %c0_254, %c0_255], %571 {strides = array<i32>} : memref<8x2x128xf32, #tpu.memory_space<vmem>>, vector<1x2x128xf32>,
    %c6_256 = arith.constant 6 : index
    %c0_257 = arith.constant 0 : index
    %c0_258 = arith.constant 0 : index
    %572 = vector.load %arg21[%c6_256, %c0_257, %c0_258] : memref<8x4x512xf32, #tpu.memory_space<vmem>>, vector<1x4x512xf32>
    %573 = vector.shape_cast %572 : vector<1x4x512xf32> to vector<4x512xf32>
    %574 = vector.extract_strided_slice %563 {offsets = [0, 0], sizes = [2, 128], strides = [1, 1]} : vector<4x128xf32> to vector<2x128xf32>
    %cst_259 = arith.constant dense<0.000000e+00> : vector<2x512xf32>
    %575 = tpu.matmul %574, %377, %cst_259 {dimension_numbers = #tpu.dot_dimension_numbers<[1], [0], [0], [1], [0, 0, 1, 1], [], []>} : vector<2x128xf32>, vector<128x512xf32>, vector<2x512xf32> -> vector<2x512xf32>
    %576 = vector.extract_strided_slice %563 {offsets = [2, 0], sizes = [2, 128], strides = [1, 1]} : vector<4x128xf32> to vector<2x128xf32>
    %cst_260 = arith.constant dense<0.000000e+00> : vector<2x512xf32>
    %577 = tpu.matmul %576, %379, %cst_260 {dimension_numbers = #tpu.dot_dimension_numbers<[1], [0], [0], [1], [0, 0, 1, 1], [], []>} : vector<2x128xf32>, vector<128x512xf32>, vector<2x512xf32> -> vector<2x512xf32>
    %578 = tpu.concatenate %575, %577 in 0 : vector<2x512xf32>, vector<2x512xf32> -> vector<4x512xf32>
    %579 = arith.addf %573, %578 : vector<4x512xf32>
    %580 = vector.extract_strided_slice %579 {offsets = [0, 0], sizes = [4, 384], strides = [1, 1]} : vector<4x512xf32> to vector<4x384xf32>
    %581 = arith.negf %580 : vector<4x384xf32>
    %582 = math.exp %581 : vector<4x384xf32>
    %cst_261 = arith.constant 1.000000e+00 : f32
    %583 = vector.broadcast %cst_261 : f32 to vector<4x384xf32>
    %584 = arith.addf %583, %582 : vector<4x384xf32>
    %585 = arith.divf %583, %584 : vector<4x384xf32>
    %586 = vector.extract_strided_slice %579 {offsets = [0, 384], sizes = [4, 128], strides = [1, 1]} : vector<4x512xf32> to vector<4x128xf32>
    %587 = math.tanh %586 : vector<4x128xf32>
    %588 = vector.extract_strided_slice %585 {offsets = [0, 128], sizes = [4, 128], strides = [1, 1]} : vector<4x384xf32> to vector<4x128xf32>
    %589 = arith.mulf %588, %560 : vector<4x128xf32>
    %590 = vector.extract_strided_slice %585 {offsets = [0, 0], sizes = [4, 128], strides = [1, 1]} : vector<4x384xf32> to vector<4x128xf32>
    %591 = arith.mulf %590, %587 : vector<4x128xf32>
    %592 = arith.addf %589, %591 : vector<4x128xf32>
    %593 = vector.extract_strided_slice %585 {offsets = [0, 256], sizes = [4, 128], strides = [1, 1]} : vector<4x384xf32> to vector<4x128xf32>
    %594 = math.tanh %592 : vector<4x128xf32>
    %595 = arith.mulf %593, %594 : vector<4x128xf32>
    %596 = vector.extract_strided_slice %595 {offsets = [0, 0], sizes = [2, 128], strides = [1, 1]} : vector<4x128xf32> to vector<2x128xf32>
    %c6_262 = arith.constant 6 : index
    %c0_263 = arith.constant 0 : index
    %c0_264 = arith.constant 0 : index
    %597 = vector.load %arg15[%c6_262, %c0_263, %c0_264] : memref<8x2x128xf32, #tpu.memory_space<vmem>>, vector<1x2x128xf32>
    %598 = vector.shape_cast %597 : vector<1x2x128xf32> to vector<2x128xf32>
    %599 = vector.shape_cast %596 : vector<2x128xf32> to vector<1x2x128xf32>
    tpu.vector_store %arg15[%c6_262, %c0_263, %c0_264], %599 {strides = array<i32>} : memref<8x2x128xf32, #tpu.memory_space<vmem>>, vector<1x2x128xf32>,
    %600 = vector.extract_strided_slice %595 {offsets = [2, 0], sizes = [2, 128], strides = [1, 1]} : vector<4x128xf32> to vector<2x128xf32>
    %c1_265 = arith.constant 1 : index
    %c0_266 = arith.constant 0 : index
    %c0_267 = arith.constant 0 : index
    %601 = vector.load %arg16[%c1_265, %c0_266, %c0_267] : memref<8x2x128xf32, #tpu.memory_space<vmem>>, vector<1x2x128xf32>
    %602 = vector.shape_cast %601 : vector<1x2x128xf32> to vector<2x128xf32>
    %603 = vector.shape_cast %600 : vector<2x128xf32> to vector<1x2x128xf32>
    tpu.vector_store %arg16[%c1_265, %c0_266, %c0_267], %603 {strides = array<i32>} : memref<8x2x128xf32, #tpu.memory_space<vmem>>, vector<1x2x128xf32>,
    %c7_268 = arith.constant 7 : index
    %c0_269 = arith.constant 0 : index
    %c0_270 = arith.constant 0 : index
    %604 = vector.load %arg21[%c7_268, %c0_269, %c0_270] : memref<8x4x512xf32, #tpu.memory_space<vmem>>, vector<1x4x512xf32>
    %605 = vector.shape_cast %604 : vector<1x4x512xf32> to vector<4x512xf32>
    %606 = vector.extract_strided_slice %595 {offsets = [0, 0], sizes = [2, 128], strides = [1, 1]} : vector<4x128xf32> to vector<2x128xf32>
    %cst_271 = arith.constant dense<0.000000e+00> : vector<2x512xf32>
    %607 = tpu.matmul %606, %377, %cst_271 {dimension_numbers = #tpu.dot_dimension_numbers<[1], [0], [0], [1], [0, 0, 1, 1], [], []>} : vector<2x128xf32>, vector<128x512xf32>, vector<2x512xf32> -> vector<2x512xf32>
    %608 = vector.extract_strided_slice %595 {offsets = [2, 0], sizes = [2, 128], strides = [1, 1]} : vector<4x128xf32> to vector<2x128xf32>
    %cst_272 = arith.constant dense<0.000000e+00> : vector<2x512xf32>
    %609 = tpu.matmul %608, %379, %cst_272 {dimension_numbers = #tpu.dot_dimension_numbers<[1], [0], [0], [1], [0, 0, 1, 1], [], []>} : vector<2x128xf32>, vector<128x512xf32>, vector<2x512xf32> -> vector<2x512xf32>
    %610 = tpu.concatenate %607, %609 in 0 : vector<2x512xf32>, vector<2x512xf32> -> vector<4x512xf32>
    %611 = arith.addf %605, %610 : vector<4x512xf32>
    %612 = vector.extract_strided_slice %611 {offsets = [0, 0], sizes = [4, 384], strides = [1, 1]} : vector<4x512xf32> to vector<4x384xf32>
    %613 = arith.negf %612 : vector<4x384xf32>
    %614 = math.exp %613 : vector<4x384xf32>
    %cst_273 = arith.constant 1.000000e+00 : f32
    %615 = vector.broadcast %cst_273 : f32 to vector<4x384xf32>
    %616 = arith.addf %615, %614 : vector<4x384xf32>
    %617 = arith.divf %615, %616 : vector<4x384xf32>
    %618 = vector.extract_strided_slice %611 {offsets = [0, 384], sizes = [4, 128], strides = [1, 1]} : vector<4x512xf32> to vector<4x128xf32>
    %619 = math.tanh %618 : vector<4x128xf32>
    %620 = vector.extract_strided_slice %617 {offsets = [0, 128], sizes = [4, 128], strides = [1, 1]} : vector<4x384xf32> to vector<4x128xf32>
    %621 = arith.mulf %620, %592 : vector<4x128xf32>
    %622 = vector.extract_strided_slice %617 {offsets = [0, 0], sizes = [4, 128], strides = [1, 1]} : vector<4x384xf32> to vector<4x128xf32>
    %623 = arith.mulf %622, %619 : vector<4x128xf32>
    %624 = arith.addf %621, %623 : vector<4x128xf32>
    %625 = vector.extract_strided_slice %617 {offsets = [0, 256], sizes = [4, 128], strides = [1, 1]} : vector<4x384xf32> to vector<4x128xf32>
    %626 = math.tanh %624 : vector<4x128xf32>
    %627 = arith.mulf %625, %626 : vector<4x128xf32>
    %628 = vector.extract_strided_slice %627 {offsets = [0, 0], sizes = [2, 128], strides = [1, 1]} : vector<4x128xf32> to vector<2x128xf32>
    %c7_274 = arith.constant 7 : index
    %c0_275 = arith.constant 0 : index
    %c0_276 = arith.constant 0 : index
    %629 = vector.load %arg15[%c7_274, %c0_275, %c0_276] : memref<8x2x128xf32, #tpu.memory_space<vmem>>, vector<1x2x128xf32>
    %630 = vector.shape_cast %629 : vector<1x2x128xf32> to vector<2x128xf32>
    %631 = vector.shape_cast %628 : vector<2x128xf32> to vector<1x2x128xf32>
    tpu.vector_store %arg15[%c7_274, %c0_275, %c0_276], %631 {strides = array<i32>} : memref<8x2x128xf32, #tpu.memory_space<vmem>>, vector<1x2x128xf32>,
    %632 = vector.extract_strided_slice %627 {offsets = [2, 0], sizes = [2, 128], strides = [1, 1]} : vector<4x128xf32> to vector<2x128xf32>
    %c0_277 = arith.constant 0 : index
    %c0_278 = arith.constant 0 : index
    %c0_279 = arith.constant 0 : index
    %633 = vector.load %arg16[%c0_277, %c0_278, %c0_279] : memref<8x2x128xf32, #tpu.memory_space<vmem>>, vector<1x2x128xf32>
    %634 = vector.shape_cast %633 : vector<1x2x128xf32> to vector<2x128xf32>
    %635 = vector.shape_cast %632 : vector<2x128xf32> to vector<1x2x128xf32>
    tpu.vector_store %arg16[%c0_277, %c0_278, %c0_279], %635 {strides = array<i32>} : memref<8x2x128xf32, #tpu.memory_space<vmem>>, vector<1x2x128xf32>,
    return
  }
}

</mosaic_0001>

<llo_original>
// kernel: bilstm_vae_forward.1
$region0: #{bilstm_vae_forward.1}
  #allocation0 [shape = 'u32[]', space=smem, size = 0x4, offset = 0x4, fixed_abs, tag = 'smem constant byte address 0x4 - core index']
  #allocation1 [shape = 'u32[144,128]{1,0:T(1,128)}', space=vmem, size = 0x12000, scoped, tag = 'internal scratch']
  #allocation2 [shape = 'f32[8,4,512]{2,1,0:T(4,128)}', space=vmem, size = 0x10000, scoped, tag = 'scratch operand']
  #allocation3 [shape = 'f32[8,4,512]{2,1,0:T(4,128)}', space=vmem, size = 0x10000, scoped, tag = 'scratch operand']
  %s0 = inlined_call_operand.vmem [shape: f32[16,64], index: 0, kind: input, shape index: {}]
  %s1 = inlined_call_operand.vmem [shape: f32[16,64], index: 1, kind: input, shape index: {}]
  %s2 = inlined_call_operand.vmem [shape: f32[4,128], index: 2, kind: input, shape index: {}]
  %s3 = inlined_call_operand.vmem [shape: f32[4,128], index: 3, kind: input, shape index: {}]
  %s4 = inlined_call_operand.vmem [shape: f32[4,1], index: 4, kind: input, shape index: {}]
  %s5 = inlined_call_operand.hbm [shape: f32[64,1024], index: 5, kind: input, shape index: {}]
  %s6 = inlined_call_operand.vmem [shape: f32[1,1024], index: 6, kind: input, shape index: {}]
  %s7 = inlined_call_operand.hbm [shape: f32[64,1024], index: 7, kind: input, shape index: {}]
  %s8 = inlined_call_operand.vmem [shape: f32[1,1024], index: 8, kind: input, shape index: {}]
  %s9 = inlined_call_operand.hbm [shape: f32[2,128,512], index: 9, kind: input, shape index: {}]
  %s10 = inlined_call_operand.hbm [shape: f32[2,128,512], index: 10, kind: input, shape index: {}]
  %s11 = inlined_call_operand.vmem [shape: f32[128,64], index: 11, kind: input, shape index: {}]
  %s12 = inlined_call_operand.vmem [shape: f32[1,64], index: 12, kind: input, shape index: {}]
  %s13 = inlined_call_operand.vmem [shape: f32[32,128], index: 13, kind: input, shape index: {}]
  %s14 = inlined_call_operand.vmem [shape: f32[1,128], index: 14, kind: input, shape index: {}]
  %s15 = inlined_call_operand.vmem [shape: f32[8,2,128], index: 15, kind: output, shape index: {0}]
  %s16 = inlined_call_operand.vmem [shape: f32[8,2,128], index: 16, kind: output, shape index: {1}]
  %s17 = inlined_call_operand.vmem [shape: f32[4,64], index: 17, kind: output, shape index: {2}]
  %s18 = inlined_call_operand.hbm [shape: f32[4,128], index: 18, kind: output, shape index: {3}]
  %s19 = inlined_call_operand.hbm [shape: f32[4,128], index: 19, kind: output, shape index: {4}]
  %20 = xla_tuple %s15, %s16, %s17, %s18, %s19
  %s21 = sld [smem:[#allocation0]]
  $region118: #{bilstm_vae_forward.1} parent=0
    _
  %s23 = ssub.s32 1, %s21
  %s24 = scalar_select 0, %s23, %s21
  $region1: #{bilstm_vae_forward.1} parent=0
    #allocation4 [shape = 'u8[262144]{0}', space=vmem, size = 0x40000, scoped, tag = 'input window, operand 5, single buffered']
    #allocation5 [shape = 's32[1]{0}', space=sflag, size = 0x4, scoped, tag = 'scoped memory for bilstm_vae_forward.1']
    #allocation6 [shape = 's32[1]{0}', space=sflag, size = 0x4, scoped, tag = 'scoped memory for bilstm_vae_forward.1']
    #allocation7 [shape = 'u8[262144]{0}', space=vmem, size = 0x40000, scoped, tag = 'input window, operand 7, single buffered']
    #allocation8 [shape = 's32[1]{0}', space=sflag, size = 0x4, scoped, tag = 'scoped memory for bilstm_vae_forward.1']
    #allocation9 [shape = 'u8[524288]{0}', space=vmem, size = 0x80000, scoped, tag = 'input window, operand 9, single buffered']
    #allocation10 [shape = 'u8[524288]{0}', space=vmem, size = 0x80000, scoped, tag = 'input window, operand 10, single buffered']
    #allocation11 [shape = 's32[1]{0}', space=sflag, size = 0x4, scoped, tag = 'scoped memory for bilstm_vae_forward.1']
    #allocation12 [shape = 'u8[2048]{0}', space=vmem, size = 0x800, scoped, tag = 'output window, operand 3, single buffered']
    #allocation13 [shape = 'u8[2048]{0}', space=vmem, size = 0x800, scoped, tag = 'output window, operand 4, single buffered']
    #allocation14 [shape = 's32[1]{0}', space=sflag, size = 0x4, scoped, tag = 'scoped memory for bilstm_vae_forward.1']
    %25 = vsyncpa [#allocation5], 0
    %26 = vsyncpa [#allocation8], 0
    %27 = vsyncpa [#allocation11], 0
    %28 = vsyncpa [#allocation6], 0
    %29 = vsyncpa [#allocation14], 0
    // Predicated region
    $region2: #{bilstm_vae_forward.1} parent=1 // pred_check
      _
    $region3: #{bilstm_vae_forward.1} parent=1 // pred_check_branch
      %31 = sbr.rel (0) target = $region5
    $region4: #{bilstm_vae_forward.1} parent=1 // pred_region
      _
    $region5: #{bilstm_vae_forward.1} parent=1 // pred_fallthru
      _
    // Predicated region
    $region6: #{bilstm_vae_forward.1} parent=1 // pred_check
      _
    $region7: #{bilstm_vae_forward.1} parent=1 // pred_check_branch
      %33 = sbr.rel (0) target = $region9
    $region8: #{bilstm_vae_forward.1} parent=1 // pred_region
      _
    $region9: #{bilstm_vae_forward.1} parent=1 // pred_fallthru
      _
    // Predicated region
    $region10: #{bilstm_vae_forward.1} parent=1 // pred_check
      _
    $region11: #{bilstm_vae_forward.1} parent=1 // pred_check_branch
      %35 = sbr.rel (0) target = $region13
    $region12: #{bilstm_vae_forward.1} parent=1 // pred_region
      _
    $region13: #{bilstm_vae_forward.1} parent=1 // pred_fallthru
      _
    // Predicated region
    $region14: #{bilstm_vae_forward.1} parent=1 // pred_check
      _
    $region15: #{bilstm_vae_forward.1} parent=1 // pred_check_branch
      %37 = sbr.rel (0) target = $region17
    $region16: #{bilstm_vae_forward.1} parent=1 // pred_region
      _
    $region17: #{bilstm_vae_forward.1} parent=1 // pred_fallthru
      _
    // Predicated region
    $region18: #{bilstm_vae_forward.1} parent=1 // pred_check
      _
    $region19: #{bilstm_vae_forward.1} parent=1 // pred_check_branch
      %39 = sbr.rel (0) target = $region21
    $region20: #{bilstm_vae_forward.1} parent=1 // pred_region
      _
    $region21: #{bilstm_vae_forward.1} parent=1 // pred_fallthru
      _
    // Predicated region
    $region22: #{bilstm_vae_forward.1} parent=1 // pred_check
      _
    $region23: #{bilstm_vae_forward.1} parent=1 // pred_check_branch
      %41 = sbr.rel (0) target = $region25
    $region24: #{bilstm_vae_forward.1} parent=1 // pred_region
      %s43 = ssub.s32 8192, 8192
      %44 = vsyncadd [#allocation5], %s43
      %s45 = sshll.u32 [#allocation4], 4
      %s46 = int_to_ptr.vmem [resolvable:$true] %s45
      %51 = dma.hbm_to_vmem [thread:$0]  %s5, 8192, %s46, [#allocation5], 1024, 1024, 64
    $region25: #{bilstm_vae_forward.1} parent=1 // pred_fallthru
      _
    // Predicated region
    $region26: #{bilstm_vae_forward.1} parent=1 // pred_check
      _
    $region27: #{bilstm_vae_forward.1} parent=1 // pred_check_branch
      %53 = sbr.rel (0) target = $region29
    $region28: #{bilstm_vae_forward.1} parent=1 // pred_region
      _
    $region29: #{bilstm_vae_forward.1} parent=1 // pred_fallthru
      _
    // Predicated region
    $region30: #{bilstm_vae_forward.1} parent=1 // pred_check
      _
    $region31: #{bilstm_vae_forward.1} parent=1 // pred_check_branch
      %55 = sbr.rel (0) target = $region33
    $region32: #{bilstm_vae_forward.1} parent=1 // pred_region
      %s57 = ssub.s32 8192, 8192
      %58 = vsyncadd [#allocation8], %s57
      %s59 = sshll.u32 [#allocation7], 4
      %s60 = int_to_ptr.vmem [resolvable:$true] %s59
      %65 = dma.hbm_to_vmem [thread:$0]  %s7, 8192, %s60, [#allocation8], 1024, 1024, 64
    $region33: #{bilstm_vae_forward.1} parent=1 // pred_fallthru
      _
    // Predicated region
    $region34: #{bilstm_vae_forward.1} parent=1 // pred_check
      _
    $region35: #{bilstm_vae_forward.1} parent=1 // pred_check_branch
      %67 = sbr.rel (0) target = $region37
    $region36: #{bilstm_vae_forward.1} parent=1 // pred_region
      _
    $region37: #{bilstm_vae_forward.1} parent=1 // pred_fallthru
      _
    // Predicated region
    $region38: #{bilstm_vae_forward.1} parent=1 // pred_check
      _
    $region39: #{bilstm_vae_forward.1} parent=1 // pred_check_branch
      %69 = sbr.rel (0) target = $region41
    $region40: #{bilstm_vae_forward.1} parent=1 // pred_region
      %s71 = ssub.s32 16384, 16384
      %72 = vsyncadd [#allocation8], %s71
      %s73 = sshll.u32 [#allocation9], 4
      %s74 = int_to_ptr.vmem [resolvable:$true] %s73
      %79 = dma.hbm_to_vmem [thread:$0]  %s9, 16384, %s74, [#allocation8], 512, 512, 32
    $region41: #{bilstm_vae_forward.1} parent=1 // pred_fallthru
      _
    // Predicated region
    $region42: #{bilstm_vae_forward.1} parent=1 // pred_check
      _
    $region43: #{bilstm_vae_forward.1} parent=1 // pred_check_branch
      %81 = sbr.rel (0) target = $region45
    $region44: #{bilstm_vae_forward.1} parent=1 // pred_region
      %s83 = ssub.s32 16384, 16384
      %84 = vsyncadd [#allocation11], %s83
      %s85 = sshll.u32 [#allocation10], 4
      %s86 = int_to_ptr.vmem [resolvable:$true] %s85
      %91 = dma.hbm_to_vmem [thread:$0]  %s10, 16384, %s86, [#allocation11], 512, 512, 32
    $region45: #{bilstm_vae_forward.1} parent=1 // pred_fallthru
      _
    // Predicated region
    $region46: #{bilstm_vae_forward.1} parent=1 // pred_check
      _
    $region47: #{bilstm_vae_forward.1} parent=1 // pred_check_branch
      %93 = sbr.rel (0) target = $region49
    $region48: #{bilstm_vae_forward.1} parent=1 // pred_region
      _
    $region49: #{bilstm_vae_forward.1} parent=1 // pred_fallthru
      _
    // Predicated region
    $region50: #{bilstm_vae_forward.1} parent=1 // pred_check
      _
    $region51: #{bilstm_vae_forward.1} parent=1 // pred_check_branch
      %95 = sbr.rel (0) target = $region53
    $region52: #{bilstm_vae_forward.1} parent=1 // pred_region
      _
    $region53: #{bilstm_vae_forward.1} parent=1 // pred_fallthru
      _
    // Predicated region
    $region54: #{bilstm_vae_forward.1} parent=1 // pred_check
      _
    $region55: #{bilstm_vae_forward.1} parent=1 // pred_check_branch
      %97 = sbr.rel (0) target = $region57
    $region56: #{bilstm_vae_forward.1} parent=1 // pred_region
      _
    $region57: #{bilstm_vae_forward.1} parent=1 // pred_fallthru
      _
    // Predicated region
    $region58: #{bilstm_vae_forward.1} parent=1 // pred_check
      _
    $region59: #{bilstm_vae_forward.1} parent=1 // pred_check_branch
      %99 = sbr.rel (0) target = $region61
    $region60: #{bilstm_vae_forward.1} parent=1 // pred_region
      _
    $region61: #{bilstm_vae_forward.1} parent=1 // pred_fallthru
      _
    // Predicated region
    $region62: #{bilstm_vae_forward.1} parent=1 // pred_check
      _
    $region63: #{bilstm_vae_forward.1} parent=1 // pred_check_branch
      %101 = sbr.rel (0) target = $region65
    $region64: #{bilstm_vae_forward.1} parent=1 // pred_region
      %102 = dma.done [#allocation5], 8192
    $region65: #{bilstm_vae_forward.1} parent=1 // pred_fallthru
      _
    // Predicated region
    $region66: #{bilstm_vae_forward.1} parent=1 // pred_check
      _
    $region67: #{bilstm_vae_forward.1} parent=1 // pred_check_branch
      %104 = sbr.rel (0) target = $region69
    $region68: #{bilstm_vae_forward.1} parent=1 // pred_region
      %105 = dma.done [#allocation8], 8192
    $region69: #{bilstm_vae_forward.1} parent=1 // pred_fallthru
      _
    // Predicated region
    $region70: #{bilstm_vae_forward.1} parent=1 // pred_check
      _
    $region71: #{bilstm_vae_forward.1} parent=1 // pred_check_branch
      %107 = sbr.rel (0) target = $region73
    $region72: #{bilstm_vae_forward.1} parent=1 // pred_region
      %108 = dma.done [#allocation8], 16384
    $region73: #{bilstm_vae_forward.1} parent=1 // pred_fallthru
      _
    // Predicated region
    $region74: #{bilstm_vae_forward.1} parent=1 // pred_check
      _
    $region75: #{bilstm_vae_forward.1} parent=1 // pred_check_branch
      %110 = sbr.rel (0) target = $region77
    $region76: #{bilstm_vae_forward.1} parent=1 // pred_region
      %111 = dma.done [#allocation11], 16384
    $region77: #{bilstm_vae_forward.1} parent=1 // pred_fallthru
      _
    %v112 = vld [vmem:[%s0] sm:$0xff]
    %v113 = vld [vmem:[%s0 + $0x8] sm:$0xff]
    %v114 = vld [vmem:[#allocation4] sm:$0xff]
    %v115 = vld [vmem:[#allocation4 + $0x8] sm:$0xff]
    %v116 = vld [vmem:[#allocation4 + $0x10] sm:$0xff]
    %v117 = vld [vmem:[#allocation4 + $0x18] sm:$0xff]
    %v118 = vld [vmem:[#allocation4 + $0x20] sm:$0xff]
    %v119 = vld [vmem:[#allocation4 + $0x28] sm:$0xff]
    %v120 = vld [vmem:[#allocation4 + $0x30] sm:$0xff]
    %v121 = vld [vmem:[#allocation4 + $0x38] sm:$0xff]
    %v122 = vld [vmem:[#allocation4 + $0x40] sm:$0xff]
    %v123 = vld [vmem:[#allocation4 + $0x48] sm:$0xff]
    %v124 = vld [vmem:[#allocation4 + $0x50] sm:$0xff]
    %v125 = vld [vmem:[#allocation4 + $0x58] sm:$0xff]
    %v126 = vld [vmem:[#allocation4 + $0x60] sm:$0xff]
    %v127 = vld [vmem:[#allocation4 + $0x68] sm:$0xff]
    %v128 = vld [vmem:[#allocation4 + $0x70] sm:$0xff]
    %v129 = vld [vmem:[#allocation4 + $0x78] sm:$0xff]
    %v130 = vld [vmem:[#allocation4 + $0x80] sm:$0xff]
    %v131 = vld [vmem:[#allocation4 + $0x88] sm:$0xff]
    %v132 = vld [vmem:[#allocation4 + $0x90] sm:$0xff]
    %v133 = vld [vmem:[#allocation4 + $0x98] sm:$0xff]
    %v134 = vld [vmem:[#allocation4 + $0xa0] sm:$0xff]
    %v135 = vld [vmem:[#allocation4 + $0xa8] sm:$0xff]
    %v136 = vld [vmem:[#allocation4 + $0xb0] sm:$0xff]
    %v137 = vld [vmem:[#allocation4 + $0xb8] sm:$0xff]
    %v138 = vld [vmem:[#allocation4 + $0xc0] sm:$0xff]
    %v139 = vld [vmem:[#allocation4 + $0xc8] sm:$0xff]
    %v140 = vld [vmem:[#allocation4 + $0xd0] sm:$0xff]
    %v141 = vld [vmem:[#allocation4 + $0xd8] sm:$0xff]
    %v142 = vld [vmem:[#allocation4 + $0xe0] sm:$0xff]
    %v143 = vld [vmem:[#allocation4 + $0xe8] sm:$0xff]
    %v144 = vld [vmem:[#allocation4 + $0xf0] sm:$0xff]
    %v145 = vld [vmem:[#allocation4 + $0xf8] sm:$0xff]
    %v146 = vld [vmem:[#allocation4 + $0x100] sm:$0xff]
    %v147 = vld [vmem:[#allocation4 + $0x108] sm:$0xff]
    %v148 = vld [vmem:[#allocation4 + $0x110] sm:$0xff]
    %v149 = vld [vmem:[#allocation4 + $0x118] sm:$0xff]
    %v150 = vld [vmem:[#allocation4 + $0x120] sm:$0xff]
    %v151 = vld [vmem:[#allocation4 + $0x128] sm:$0xff]
    %v152 = vld [vmem:[#allocation4 + $0x130] sm:$0xff]
    %v153 = vld [vmem:[#allocation4 + $0x138] sm:$0xff]
    %v154 = vld [vmem:[#allocation4 + $0x140] sm:$0xff]
    %v155 = vld [vmem:[#allocation4 + $0x148] sm:$0xff]
    %v156 = vld [vmem:[#allocation4 + $0x150] sm:$0xff]
    %v157 = vld [vmem:[#allocation4 + $0x158] sm:$0xff]
    %v158 = vld [vmem:[#allocation4 + $0x160] sm:$0xff]
    %v159 = vld [vmem:[#allocation4 + $0x168] sm:$0xff]
    %v160 = vld [vmem:[#allocation4 + $0x170] sm:$0xff]
    %v161 = vld [vmem:[#allocation4 + $0x178] sm:$0xff]
    %v162 = vld [vmem:[#allocation4 + $0x180] sm:$0xff]
    %v163 = vld [vmem:[#allocation4 + $0x188] sm:$0xff]
    %v164 = vld [vmem:[#allocation4 + $0x190] sm:$0xff]
    %v165 = vld [vmem:[#allocation4 + $0x198] sm:$0xff]
    %v166 = vld [vmem:[#allocation4 + $0x1a0] sm:$0xff]
    %v167 = vld [vmem:[#allocation4 + $0x1a8] sm:$0xff]
    %v168 = vld [vmem:[#allocation4 + $0x1b0] sm:$0xff]
    %v169 = vld [vmem:[#allocation4 + $0x1b8] sm:$0xff]
    %v170 = vld [vmem:[#allocation4 + $0x1c0] sm:$0xff]
    %v171 = vld [vmem:[#allocation4 + $0x1c8] sm:$0xff]
    %v172 = vld [vmem:[#allocation4 + $0x1d0] sm:$0xff]
    %v173 = vld [vmem:[#allocation4 + $0x1d8] sm:$0xff]
    %v174 = vld [vmem:[#allocation4 + $0x1e0] sm:$0xff]
    %v175 = vld [vmem:[#allocation4 + $0x1e8] sm:$0xff]
    %v176 = vld [vmem:[#allocation4 + $0x1f0] sm:$0xff]
    %v177 = vld [vmem:[#allocation4 + $0x1f8] sm:$0xff]
    %v178 = vld [vmem:[%s6] sm:$0xff]
    %v180 = vlaneseq
    %v181 = vshrl.u32 %v180, 7
    %v182 = vsub.s32 0, %v181
    %v183 = vrot.slane %v178, %v182
    %v184 = vlaneseq
    %v185 = vshrl.u32 %v184, 7
    %v186 = vsub.s32 1, %v185
    %v187 = vrot.slane %v178, %v186
    %v188 = vlaneseq
    %v189 = vshrl.u32 %v188, 7
    %v190 = vsub.s32 2, %v189
    %v191 = vrot.slane %v178, %v190
    %v192 = vlaneseq
    %v193 = vshrl.u32 %v192, 7
    %v194 = vsub.s32 3, %v193
    %v195 = vrot.slane %v178, %v194
    %v196 = vlaneseq
    %v197 = vshrl.u32 %v196, 7
    %v198 = vsub.s32 4, %v197
    %v199 = vrot.slane %v178, %v198
    %v200 = vlaneseq
    %v201 = vshrl.u32 %v200, 7
    %v202 = vsub.s32 5, %v201
    %v203 = vrot.slane %v178, %v202
    %v204 = vlaneseq
    %v205 = vshrl.u32 %v204, 7
    %v206 = vsub.s32 6, %v205
    %v207 = vrot.slane %v178, %v206
    %v208 = vlaneseq
    %v209 = vshrl.u32 %v208, 7
    %v210 = vsub.s32 7, %v209
    %v211 = vrot.slane %v178, %v210
    %vm220 = vcmask 523264
    %v222 = vsel %vm220, %v112, 0
    %v225 = vsel %vm220, %v113, 0
    %227 = vmatprep.subr.mxu0 0.0
    %228 = vmatpush1.msra.mxu0 0.0
    %229 = vmatprep.subr.mxu0 0.0
    %230 = vmatpush1.msra.mxu0 0.0
    %231 = vmatprep.subr.mxu0 0.0
    %232 = vmatpush1.msra.mxu0 0.0
    %233 = vmatprep.subr.mxu0 0.0
    %234 = vmatpush1.msra.mxu0 0.0
    %235 = vmatprep.subr.mxu0 0.0
    %236 = vmatpush1.msra.mxu0 0.0
    %237 = vmatprep.subr.mxu0 0.0
    %238 = vmatpush1.msra.mxu0 0.0
    %239 = vmatprep.subr.mxu0 0.0
    %240 = vmatpush1.msra.mxu0 0.0
    %241 = vmatprep.subr.mxu0 0.0
    %242 = vmatpush1.msra.mxu0 0.0
    %243 = vmatprep.subr.mxu0 %v171
    %244 = vmatpush1.msra.mxu0 %v170
    %245 = vmatprep.subr.mxu0 %v163
    %246 = vmatpush1.msra.mxu0 %v162
    %247 = vmatprep.subr.mxu0 %v155
    %248 = vmatpush1.msra.mxu0 %v154
    %249 = vmatprep.subr.mxu0 %v147
    %250 = vmatpush1.msra.mxu0 %v146
    %251 = vmatprep.subr.mxu0 %v139
    %252 = vmatpush1.msra.mxu0 %v138
    %253 = vmatprep.subr.mxu0 %v131
    %254 = vmatpush1.msra.mxu0 %v130
    %255 = vmatprep.subr.mxu0 %v123
    %256 = vmatpush1.msra.mxu0 %v122
    %257 = vmatprep.subr.mxu0 %v115
    %258 = vmatpush1.msra.mxu0 %v114
    %259 = vmatprep.subr.mxu0 0.0
    %260 = vmatpush2.msra.mxu0 0.0
    %261 = vmatprep.subr.mxu0 0.0
    %262 = vmatpush2.msra.mxu0 0.0
    %263 = vmatprep.subr.mxu0 0.0
    %264 = vmatpush2.msra.mxu0 0.0
    %265 = vmatprep.subr.mxu0 0.0
    %266 = vmatpush2.msra.mxu0 0.0
    %267 = vmatprep.subr.mxu0 0.0
    %268 = vmatpush2.msra.mxu0 0.0
    %269 = vmatprep.subr.mxu0 0.0
    %270 = vmatpush2.msra.mxu0 0.0
    %271 = vmatprep.subr.mxu0 0.0
    %272 = vmatpush2.msra.mxu0 0.0
    %273 = vmatprep.subr.mxu0 0.0
    %274 = vmatpush2.msra.mxu0 0.0
    %275 = vmatprep.subr.mxu0 0.0
    %276 = vmatpush2.msra.mxu0 0.0
    %277 = vmatprep.subr.mxu0 0.0
    %278 = vmatpush2.msra.mxu0 0.0
    %279 = vmatprep.subr.mxu0 0.0
    %280 = vmatpush2.msra.mxu0 0.0
    %281 = vmatprep.subr.mxu0 0.0
    %282 = vmatpush2.msra.mxu0 0.0
    %283 = vmatprep.subr.mxu0 0.0
    %284 = vmatpush2.msra.mxu0 0.0
    %285 = vmatprep.subr.mxu0 0.0
    %286 = vmatpush2.msra.mxu0 0.0
    %287 = vmatprep.subr.mxu0 0.0
    %288 = vmatpush2.msra.mxu0 0.0
    %289 = vmatprep.subr.mxu0 0.0
    %290 = vmatpush2.msra.mxu0 0.0
    %291 = vmatprep.mubr.f32.mxu0 0.0
    %292 = vmatmul.mubr.f32.gmra.mxu0 %v222
    %v293 = vpop.f32.mrf.mxu0
    %v294 = vadd.f32 %v183, %v293
    %v295 = vpop.f32.mrf.mxu0
    %v296 = vadd.f32 %v187, %v295
    %297 = vmatprep.mubr.f32.mxu0 0.0
    %298 = vmatmul.mubr.f32.gmra.mxu0 %v225
    %v299 = vpop.f32.mrf.mxu0
    %v300 = vadd.f32 %v183, %v299
    %v301 = vpop.f32.mrf.mxu0
    %v302 = vadd.f32 %v187, %v301
    %303 = vdwg.mxu0
    %304 = vmatprep.subr.mxu0 0.0
    %305 = vmatpush1.msra.mxu0 0.0
    %306 = vmatprep.subr.mxu0 0.0
    %307 = vmatpush1.msra.mxu0 0.0
    %308 = vmatprep.subr.mxu0 0.0
    %309 = vmatpush1.msra.mxu0 0.0
    %310 = vmatprep.subr.mxu0 0.0
    %311 = vmatpush1.msra.mxu0 0.0
    %312 = vmatprep.subr.mxu0 0.0
    %313 = vmatpush1.msra.mxu0 0.0
    %314 = vmatprep.subr.mxu0 0.0
    %315 = vmatpush1.msra.mxu0 0.0
    %316 = vmatprep.subr.mxu0 0.0
    %317 = vmatpush1.msra.mxu0 0.0
    %318 = vmatprep.subr.mxu0 0.0
    %319 = vmatpush1.msra.mxu0 0.0
    %320 = vmatprep.subr.mxu0 %v173
    %321 = vmatpush1.msra.mxu0 %v172
    %322 = vmatprep.subr.mxu0 %v165
    %323 = vmatpush1.msra.mxu0 %v164
    %324 = vmatprep.subr.mxu0 %v157
    %325 = vmatpush1.msra.mxu0 %v156
    %326 = vmatprep.subr.mxu0 %v149
    %327 = vmatpush1.msra.mxu0 %v148
    %328 = vmatprep.subr.mxu0 %v141
    %329 = vmatpush1.msra.mxu0 %v140
    %330 = vmatprep.subr.mxu0 %v133
    %331 = vmatpush1.msra.mxu0 %v132
    %332 = vmatprep.subr.mxu0 %v125
    %333 = vmatpush1.msra.mxu0 %v124
    %334 = vmatprep.subr.mxu0 %v117
    %335 = vmatpush1.msra.mxu0 %v116
    %336 = vmatprep.subr.mxu0 0.0
    %337 = vmatpush2.msra.mxu0 0.0
    %338 = vmatprep.subr.mxu0 0.0
    %339 = vmatpush2.msra.mxu0 0.0
    %340 = vmatprep.subr.mxu0 0.0
    %341 = vmatpush2.msra.mxu0 0.0
    %342 = vmatprep.subr.mxu0 0.0
    %343 = vmatpush2.msra.mxu0 0.0
    %344 = vmatprep.subr.mxu0 0.0
    %345 = vmatpush2.msra.mxu0 0.0
    %346 = vmatprep.subr.mxu0 0.0
    %347 = vmatpush2.msra.mxu0 0.0
    %348 = vmatprep.subr.mxu0 0.0
    %349 = vmatpush2.msra.mxu0 0.0
    %350 = vmatprep.subr.mxu0 0.0
    %351 = vmatpush2.msra.mxu0 0.0
    %352 = vmatprep.subr.mxu0 0.0
    %353 = vmatpush2.msra.mxu0 0.0
    %354 = vmatprep.subr.mxu0 0.0
    %355 = vmatpush2.msra.mxu0 0.0
    %356 = vmatprep.subr.mxu0 0.0
    %357 = vmatpush2.msra.mxu0 0.0
    %358 = vmatprep.subr.mxu0 0.0
    %359 = vmatpush2.msra.mxu0 0.0
    %360 = vmatprep.subr.mxu0 0.0
    %361 = vmatpush2.msra.mxu0 0.0
    %362 = vmatprep.subr.mxu0 0.0
    %363 = vmatpush2.msra.mxu0 0.0
    %364 = vmatprep.subr.mxu0 0.0
    %365 = vmatpush2.msra.mxu0 0.0
    %366 = vmatprep.subr.mxu0 0.0
    %367 = vmatpush2.msra.mxu0 0.0
    %368 = vmatprep.mubr.f32.mxu0 0.0
    %369 = vmatmul.mubr.f32.gmra.mxu0 %v222
    %v370 = vpop.f32.mrf.mxu0
    %v371 = vadd.f32 %v191, %v370
    %v372 = vpop.f32.mrf.mxu0
    %v373 = vadd.f32 %v195, %v372
    %374 = vmatprep.mubr.f32.mxu0 0.0
    %375 = vmatmul.mubr.f32.gmra.mxu0 %v225
    %v376 = vpop.f32.mrf.mxu0
    %v377 = vadd.f32 %v191, %v376
    %v378 = vpop.f32.mrf.mxu0
    %v379 = vadd.f32 %v195, %v378
    %380 = vdwg.mxu0
    %381 = vmatprep.subr.mxu0 0.0
    %382 = vmatpush1.msra.mxu0 0.0
    %383 = vmatprep.subr.mxu0 0.0
    %384 = vmatpush1.msra.mxu0 0.0
    %385 = vmatprep.subr.mxu0 0.0
    %386 = vmatpush1.msra.mxu0 0.0
    %387 = vmatprep.subr.mxu0 0.0
    %388 = vmatpush1.msra.mxu0 0.0
    %389 = vmatprep.subr.mxu0 0.0
    %390 = vmatpush1.msra.mxu0 0.0
    %391 = vmatprep.subr.mxu0 0.0
    %392 = vmatpush1.msra.mxu0 0.0
    %393 = vmatprep.subr.mxu0 0.0
    %394 = vmatpush1.msra.mxu0 0.0
    %395 = vmatprep.subr.mxu0 0.0
    %396 = vmatpush1.msra.mxu0 0.0
    %397 = vmatprep.subr.mxu0 %v175
    %398 = vmatpush1.msra.mxu0 %v174
    %399 = vmatprep.subr.mxu0 %v167
    %400 = vmatpush1.msra.mxu0 %v166
    %401 = vmatprep.subr.mxu0 %v159
    %402 = vmatpush1.msra.mxu0 %v158
    %403 = vmatprep.subr.mxu0 %v151
    %404 = vmatpush1.msra.mxu0 %v150
    %405 = vmatprep.subr.mxu0 %v143
    %406 = vmatpush1.msra.mxu0 %v142
    %407 = vmatprep.subr.mxu0 %v135
    %408 = vmatpush1.msra.mxu0 %v134
    %409 = vmatprep.subr.mxu0 %v127
    %410 = vmatpush1.msra.mxu0 %v126
    %411 = vmatprep.subr.mxu0 %v119
    %412 = vmatpush1.msra.mxu0 %v118
    %413 = vmatprep.subr.mxu0 0.0
    %414 = vmatpush2.msra.mxu0 0.0
    %415 = vmatprep.subr.mxu0 0.0
    %416 = vmatpush2.msra.mxu0 0.0
    %417 = vmatprep.subr.mxu0 0.0
    %418 = vmatpush2.msra.mxu0 0.0
    %419 = vmatprep.subr.mxu0 0.0
    %420 = vmatpush2.msra.mxu0 0.0
    %421 = vmatprep.subr.mxu0 0.0
    %422 = vmatpush2.msra.mxu0 0.0
    %423 = vmatprep.subr.mxu0 0.0
    %424 = vmatpush2.msra.mxu0 0.0
    %425 = vmatprep.subr.mxu0 0.0
    %426 = vmatpush2.msra.mxu0 0.0
    %427 = vmatprep.subr.mxu0 0.0
    %428 = vmatpush2.msra.mxu0 0.0
    %429 = vmatprep.subr.mxu0 0.0
    %430 = vmatpush2.msra.mxu0 0.0
    %431 = vmatprep.subr.mxu0 0.0
    %432 = vmatpush2.msra.mxu0 0.0
    %433 = vmatprep.subr.mxu0 0.0
    %434 = vmatpush2.msra.mxu0 0.0
    %435 = vmatprep.subr.mxu0 0.0
    %436 = vmatpush2.msra.mxu0 0.0
    %437 = vmatprep.subr.mxu0 0.0
    %438 = vmatpush2.msra.mxu0 0.0
    %439 = vmatprep.subr.mxu0 0.0
    %440 = vmatpush2.msra.mxu0 0.0
    %441 = vmatprep.subr.mxu0 0.0
    %442 = vmatpush2.msra.mxu0 0.0
    %443 = vmatprep.subr.mxu0 0.0
    %444 = vmatpush2.msra.mxu0 0.0
    %445 = vmatprep.mubr.f32.mxu0 0.0
    %446 = vmatmul.mubr.f32.gmra.mxu0 %v222
    %v447 = vpop.f32.mrf.mxu0
    %v448 = vadd.f32 %v199, %v447
    %v449 = vpop.f32.mrf.mxu0
    %v450 = vadd.f32 %v203, %v449
    %451 = vmatprep.mubr.f32.mxu0 0.0
    %452 = vmatmul.mubr.f32.gmra.mxu0 %v225
    %v453 = vpop.f32.mrf.mxu0
    %v454 = vadd.f32 %v199, %v453
    %v455 = vpop.f32.mrf.mxu0
    %v456 = vadd.f32 %v203, %v455
    %457 = vdwg.mxu0
    %458 = vmatprep.subr.mxu0 0.0
    %459 = vmatpush1.msra.mxu0 0.0
    %460 = vmatprep.subr.mxu0 0.0
    %461 = vmatpush1.msra.mxu0 0.0
    %462 = vmatprep.subr.mxu0 0.0
    %463 = vmatpush1.msra.mxu0 0.0
    %464 = vmatprep.subr.mxu0 0.0
    %465 = vmatpush1.msra.mxu0 0.0
    %466 = vmatprep.subr.mxu0 0.0
    %467 = vmatpush1.msra.mxu0 0.0
    %468 = vmatprep.subr.mxu0 0.0
    %469 = vmatpush1.msra.mxu0 0.0
    %470 = vmatprep.subr.mxu0 0.0
    %471 = vmatpush1.msra.mxu0 0.0
    %472 = vmatprep.subr.mxu0 0.0
    %473 = vmatpush1.msra.mxu0 0.0
    %474 = vmatprep.subr.mxu0 %v177
    %475 = vmatpush1.msra.mxu0 %v176
    %476 = vmatprep.subr.mxu0 %v169
    %477 = vmatpush1.msra.mxu0 %v168
    %478 = vmatprep.subr.mxu0 %v161
    %479 = vmatpush1.msra.mxu0 %v160
    %480 = vmatprep.subr.mxu0 %v153
    %481 = vmatpush1.msra.mxu0 %v152
    %482 = vmatprep.subr.mxu0 %v145
    %483 = vmatpush1.msra.mxu0 %v144
    %484 = vmatprep.subr.mxu0 %v137
    %485 = vmatpush1.msra.mxu0 %v136
    %486 = vmatprep.subr.mxu0 %v129
    %487 = vmatpush1.msra.mxu0 %v128
    %488 = vmatprep.subr.mxu0 %v121
    %489 = vmatpush1.msra.mxu0 %v120
    %490 = vmatprep.subr.mxu0 0.0
    %491 = vmatpush2.msra.mxu0 0.0
    %492 = vmatprep.subr.mxu0 0.0
    %493 = vmatpush2.msra.mxu0 0.0
    %494 = vmatprep.subr.mxu0 0.0
    %495 = vmatpush2.msra.mxu0 0.0
    %496 = vmatprep.subr.mxu0 0.0
    %497 = vmatpush2.msra.mxu0 0.0
    %498 = vmatprep.subr.mxu0 0.0
    %499 = vmatpush2.msra.mxu0 0.0
    %500 = vmatprep.subr.mxu0 0.0
    %501 = vmatpush2.msra.mxu0 0.0
    %502 = vmatprep.subr.mxu0 0.0
    %503 = vmatpush2.msra.mxu0 0.0
    %504 = vmatprep.subr.mxu0 0.0
    %505 = vmatpush2.msra.mxu0 0.0
    %506 = vmatprep.subr.mxu0 0.0
    %507 = vmatpush2.msra.mxu0 0.0
    %508 = vmatprep.subr.mxu0 0.0
    %509 = vmatpush2.msra.mxu0 0.0
    %510 = vmatprep.subr.mxu0 0.0
    %511 = vmatpush2.msra.mxu0 0.0
    %512 = vmatprep.subr.mxu0 0.0
    %513 = vmatpush2.msra.mxu0 0.0
    %514 = vmatprep.subr.mxu0 0.0
    %515 = vmatpush2.msra.mxu0 0.0
    %516 = vmatprep.subr.mxu0 0.0
    %517 = vmatpush2.msra.mxu0 0.0
    %518 = vmatprep.subr.mxu0 0.0
    %519 = vmatpush2.msra.mxu0 0.0
    %520 = vmatprep.subr.mxu0 0.0
    %521 = vmatpush2.msra.mxu0 0.0
    %522 = vmatprep.mubr.f32.mxu0 0.0
    %523 = vmatmul.mubr.f32.gmra.mxu0 %v222
    %v524 = vpop.f32.mrf.mxu0
    %v525 = vadd.f32 %v207, %v524
    %v526 = vpop.f32.mrf.mxu0
    %v527 = vadd.f32 %v211, %v526
    %528 = vmatprep.mubr.f32.mxu0 0.0
    %529 = vmatmul.mubr.f32.gmra.mxu0 %v225
    %v530 = vpop.f32.mrf.mxu0
    %v531 = vadd.f32 %v207, %v530
    %v532 = vpop.f32.mrf.mxu0
    %v533 = vadd.f32 %v211, %v532
    %534 = vdwg.mxu0
    %v535 = vld [vmem:[%s1] sm:$0xff]
    %v536 = vld [vmem:[%s1 + $0x8] sm:$0xff]
    %v537 = vld [vmem:[#allocation7] sm:$0xff]
    %v538 = vld [vmem:[#allocation7 + $0x8] sm:$0xff]
    %v539 = vld [vmem:[#allocation7 + $0x10] sm:$0xff]
    %v540 = vld [vmem:[#allocation7 + $0x18] sm:$0xff]
    %v541 = vld [vmem:[#allocation7 + $0x20] sm:$0xff]
    %v542 = vld [vmem:[#allocation7 + $0x28] sm:$0xff]
    %v543 = vld [vmem:[#allocation7 + $0x30] sm:$0xff]
    %v544 = vld [vmem:[#allocation7 + $0x38] sm:$0xff]
    %v545 = vld [vmem:[#allocation7 + $0x40] sm:$0xff]
    %v546 = vld [vmem:[#allocation7 + $0x48] sm:$0xff]
    %v547 = vld [vmem:[#allocation7 + $0x50] sm:$0xff]
    %v548 = vld [vmem:[#allocation7 + $0x58] sm:$0xff]
    %v549 = vld [vmem:[#allocation7 + $0x60] sm:$0xff]
    %v550 = vld [vmem:[#allocation7 + $0x68] sm:$0xff]
    %v551 = vld [vmem:[#allocation7 + $0x70] sm:$0xff]
    %v552 = vld [vmem:[#allocation7 + $0x78] sm:$0xff]
    %v553 = vld [vmem:[#allocation7 + $0x80] sm:$0xff]
    %v554 = vld [vmem:[#allocation7 + $0x88] sm:$0xff]
    %v555 = vld [vmem:[#allocation7 + $0x90] sm:$0xff]
    %v556 = vld [vmem:[#allocation7 + $0x98] sm:$0xff]
    %v557 = vld [vmem:[#allocation7 + $0xa0] sm:$0xff]
    %v558 = vld [vmem:[#allocation7 + $0xa8] sm:$0xff]
    %v559 = vld [vmem:[#allocation7 + $0xb0] sm:$0xff]
    %v560 = vld [vmem:[#allocation7 + $0xb8] sm:$0xff]
    %v561 = vld [vmem:[#allocation7 + $0xc0] sm:$0xff]
    %v562 = vld [vmem:[#allocation7 + $0xc8] sm:$0xff]
    %v563 = vld [vmem:[#allocation7 + $0xd0] sm:$0xff]
    %v564 = vld [vmem:[#allocation7 + $0xd8] sm:$0xff]
    %v565 = vld [vmem:[#allocation7 + $0xe0] sm:$0xff]
    %v566 = vld [vmem:[#allocation7 + $0xe8] sm:$0xff]
    %v567 = vld [vmem:[#allocation7 + $0xf0] sm:$0xff]
    %v568 = vld [vmem:[#allocation7 + $0xf8] sm:$0xff]
    %v569 = vld [vmem:[#allocation7 + $0x100] sm:$0xff]
    %v570 = vld [vmem:[#allocation7 + $0x108] sm:$0xff]
    %v571 = vld [vmem:[#allocation7 + $0x110] sm:$0xff]
    %v572 = vld [vmem:[#allocation7 + $0x118] sm:$0xff]
    %v573 = vld [vmem:[#allocation7 + $0x120] sm:$0xff]
    %v574 = vld [vmem:[#allocation7 + $0x128] sm:$0xff]
    %v575 = vld [vmem:[#allocation7 + $0x130] sm:$0xff]
    %v576 = vld [vmem:[#allocation7 + $0x138] sm:$0xff]
    %v577 = vld [vmem:[#allocation7 + $0x140] sm:$0xff]
    %v578 = vld [vmem:[#allocation7 + $0x148] sm:$0xff]
    %v579 = vld [vmem:[#allocation7 + $0x150] sm:$0xff]
    %v580 = vld [vmem:[#allocation7 + $0x158] sm:$0xff]
    %v581 = vld [vmem:[#allocation7 + $0x160] sm:$0xff]
    %v582 = vld [vmem:[#allocation7 + $0x168] sm:$0xff]
    %v583 = vld [vmem:[#allocation7 + $0x170] sm:$0xff]
    %v584 = vld [vmem:[#allocation7 + $0x178] sm:$0xff]
    %v585 = vld [vmem:[#allocation7 + $0x180] sm:$0xff]
    %v586 = vld [vmem:[#allocation7 + $0x188] sm:$0xff]
    %v587 = vld [vmem:[#allocation7 + $0x190] sm:$0xff]
    %v588 = vld [vmem:[#allocation7 + $0x198] sm:$0xff]
    %v589 = vld [vmem:[#allocation7 + $0x1a0] sm:$0xff]
    %v590 = vld [vmem:[#allocation7 + $0x1a8] sm:$0xff]
    %v591 = vld [vmem:[#allocation7 + $0x1b0] sm:$0xff]
    %v592 = vld [vmem:[#allocation7 + $0x1b8] sm:$0xff]
    %v593 = vld [vmem:[#allocation7 + $0x1c0] sm:$0xff]
    %v594 = vld [vmem:[#allocation7 + $0x1c8] sm:$0xff]
    %v595 = vld [vmem:[#allocation7 + $0x1d0] sm:$0xff]
    %v596 = vld [vmem:[#allocation7 + $0x1d8] sm:$0xff]
    %v597 = vld [vmem:[#allocation7 + $0x1e0] sm:$0xff]
    %v598 = vld [vmem:[#allocation7 + $0x1e8] sm:$0xff]
    %v599 = vld [vmem:[#allocation7 + $0x1f0] sm:$0xff]
    %v600 = vld [vmem:[#allocation7 + $0x1f8] sm:$0xff]
    %v601 = vld [vmem:[%s8] sm:$0xff]
    %v603 = vlaneseq
    %v604 = vshrl.u32 %v603, 7
    %v605 = vsub.s32 0, %v604
    %v606 = vrot.slane %v601, %v605
    %v607 = vlaneseq
    %v608 = vshrl.u32 %v607, 7
    %v609 = vsub.s32 1, %v608
    %v610 = vrot.slane %v601, %v609
    %v611 = vlaneseq
    %v612 = vshrl.u32 %v611, 7
    %v613 = vsub.s32 2, %v612
    %v614 = vrot.slane %v601, %v613
    %v615 = vlaneseq
    %v616 = vshrl.u32 %v615, 7
    %v617 = vsub.s32 3, %v616
    %v618 = vrot.slane %v601, %v617
    %v619 = vlaneseq
    %v620 = vshrl.u32 %v619, 7
    %v621 = vsub.s32 4, %v620
    %v622 = vrot.slane %v601, %v621
    %v623 = vlaneseq
    %v624 = vshrl.u32 %v623, 7
    %v625 = vsub.s32 5, %v624
    %v626 = vrot.slane %v601, %v625
    %v627 = vlaneseq
    %v628 = vshrl.u32 %v627, 7
    %v629 = vsub.s32 6, %v628
    %v630 = vrot.slane %v601, %v629
    %v631 = vlaneseq
    %v632 = vshrl.u32 %v631, 7
    %v633 = vsub.s32 7, %v632
    %v634 = vrot.slane %v601, %v633
    %v644 = vsel %vm220, %v535, 0
    %v647 = vsel %vm220, %v536, 0
    %649 = vmatprep.subr.mxu0 0.0
    %650 = vmatpush1.msra.mxu0 0.0
    %651 = vmatprep.subr.mxu0 0.0
    %652 = vmatpush1.msra.mxu0 0.0
    %653 = vmatprep.subr.mxu0 0.0
    %654 = vmatpush1.msra.mxu0 0.0
    %655 = vmatprep.subr.mxu0 0.0
    %656 = vmatpush1.msra.mxu0 0.0
    %657 = vmatprep.subr.mxu0 0.0
    %658 = vmatpush1.msra.mxu0 0.0
    %659 = vmatprep.subr.mxu0 0.0
    %660 = vmatpush1.msra.mxu0 0.0
    %661 = vmatprep.subr.mxu0 0.0
    %662 = vmatpush1.msra.mxu0 0.0
    %663 = vmatprep.subr.mxu0 0.0
    %664 = vmatpush1.msra.mxu0 0.0
    %665 = vmatprep.subr.mxu0 %v594
    %666 = vmatpush1.msra.mxu0 %v593
    %667 = vmatprep.subr.mxu0 %v586
    %668 = vmatpush1.msra.mxu0 %v585
    %669 = vmatprep.subr.mxu0 %v578
    %670 = vmatpush1.msra.mxu0 %v577
    %671 = vmatprep.subr.mxu0 %v570
    %672 = vmatpush1.msra.mxu0 %v569
    %673 = vmatprep.subr.mxu0 %v562
    %674 = vmatpush1.msra.mxu0 %v561
    %675 = vmatprep.subr.mxu0 %v554
    %676 = vmatpush1.msra.mxu0 %v553
    %677 = vmatprep.subr.mxu0 %v546
    %678 = vmatpush1.msra.mxu0 %v545
    %679 = vmatprep.subr.mxu0 %v538
    %680 = vmatpush1.msra.mxu0 %v537
    %681 = vmatprep.subr.mxu0 0.0
    %682 = vmatpush2.msra.mxu0 0.0
    %683 = vmatprep.subr.mxu0 0.0
    %684 = vmatpush2.msra.mxu0 0.0
    %685 = vmatprep.subr.mxu0 0.0
    %686 = vmatpush2.msra.mxu0 0.0
    %687 = vmatprep.subr.mxu0 0.0
    %688 = vmatpush2.msra.mxu0 0.0
    %689 = vmatprep.subr.mxu0 0.0
    %690 = vmatpush2.msra.mxu0 0.0
    %691 = vmatprep.subr.mxu0 0.0
    %692 = vmatpush2.msra.mxu0 0.0
    %693 = vmatprep.subr.mxu0 0.0
    %694 = vmatpush2.msra.mxu0 0.0
    %695 = vmatprep.subr.mxu0 0.0
    %696 = vmatpush2.msra.mxu0 0.0
    %697 = vmatprep.subr.mxu0 0.0
    %698 = vmatpush2.msra.mxu0 0.0
    %699 = vmatprep.subr.mxu0 0.0
    %700 = vmatpush2.msra.mxu0 0.0
    %701 = vmatprep.subr.mxu0 0.0
    %702 = vmatpush2.msra.mxu0 0.0
    %703 = vmatprep.subr.mxu0 0.0
    %704 = vmatpush2.msra.mxu0 0.0
    %705 = vmatprep.subr.mxu0 0.0
    %706 = vmatpush2.msra.mxu0 0.0
    %707 = vmatprep.subr.mxu0 0.0
    %708 = vmatpush2.msra.mxu0 0.0
    %709 = vmatprep.subr.mxu0 0.0
    %710 = vmatpush2.msra.mxu0 0.0
    %711 = vmatprep.subr.mxu0 0.0
    %712 = vmatpush2.msra.mxu0 0.0
    %713 = vmatprep.mubr.f32.mxu0 0.0
    %714 = vmatmul.mubr.f32.gmra.mxu0 %v644
    %v715 = vpop.f32.mrf.mxu0
    %v716 = vadd.f32 %v606, %v715
    %v717 = vpop.f32.mrf.mxu0
    %v718 = vadd.f32 %v610, %v717
    %719 = vmatprep.mubr.f32.mxu0 0.0
    %720 = vmatmul.mubr.f32.gmra.mxu0 %v647
    %v721 = vpop.f32.mrf.mxu0
    %v722 = vadd.f32 %v606, %v721
    %v723 = vpop.f32.mrf.mxu0
    %v724 = vadd.f32 %v610, %v723
    %725 = vdwg.mxu0
    %726 = vmatprep.subr.mxu0 0.0
    %727 = vmatpush1.msra.mxu0 0.0
    %728 = vmatprep.subr.mxu0 0.0
    %729 = vmatpush1.msra.mxu0 0.0
    %730 = vmatprep.subr.mxu0 0.0
    %731 = vmatpush1.msra.mxu0 0.0
    %732 = vmatprep.subr.mxu0 0.0
    %733 = vmatpush1.msra.mxu0 0.0
    %734 = vmatprep.subr.mxu0 0.0
    %735 = vmatpush1.msra.mxu0 0.0
    %736 = vmatprep.subr.mxu0 0.0
    %737 = vmatpush1.msra.mxu0 0.0
    %738 = vmatprep.subr.mxu0 0.0
    %739 = vmatpush1.msra.mxu0 0.0
    %740 = vmatprep.subr.mxu0 0.0
    %741 = vmatpush1.msra.mxu0 0.0
    %742 = vmatprep.subr.mxu0 %v596
    %743 = vmatpush1.msra.mxu0 %v595
    %744 = vmatprep.subr.mxu0 %v588
    %745 = vmatpush1.msra.mxu0 %v587
    %746 = vmatprep.subr.mxu0 %v580
    %747 = vmatpush1.msra.mxu0 %v579
    %748 = vmatprep.subr.mxu0 %v572
    %749 = vmatpush1.msra.mxu0 %v571
    %750 = vmatprep.subr.mxu0 %v564
    %751 = vmatpush1.msra.mxu0 %v563
    %752 = vmatprep.subr.mxu0 %v556
    %753 = vmatpush1.msra.mxu0 %v555
    %754 = vmatprep.subr.mxu0 %v548
    %755 = vmatpush1.msra.mxu0 %v547
    %756 = vmatprep.subr.mxu0 %v540
    %757 = vmatpush1.msra.mxu0 %v539
    %758 = vmatprep.subr.mxu0 0.0
    %759 = vmatpush2.msra.mxu0 0.0
    %760 = vmatprep.subr.mxu0 0.0
    %761 = vmatpush2.msra.mxu0 0.0
    %762 = vmatprep.subr.mxu0 0.0
    %763 = vmatpush2.msra.mxu0 0.0
    %764 = vmatprep.subr.mxu0 0.0
    %765 = vmatpush2.msra.mxu0 0.0
    %766 = vmatprep.subr.mxu0 0.0
    %767 = vmatpush2.msra.mxu0 0.0
    %768 = vmatprep.subr.mxu0 0.0
    %769 = vmatpush2.msra.mxu0 0.0
    %770 = vmatprep.subr.mxu0 0.0
    %771 = vmatpush2.msra.mxu0 0.0
    %772 = vmatprep.subr.mxu0 0.0
    %773 = vmatpush2.msra.mxu0 0.0
    %774 = vmatprep.subr.mxu0 0.0
    %775 = vmatpush2.msra.mxu0 0.0
    %776 = vmatprep.subr.mxu0 0.0
    %777 = vmatpush2.msra.mxu0 0.0
    %778 = vmatprep.subr.mxu0 0.0
    %779 = vmatpush2.msra.mxu0 0.0
    %780 = vmatprep.subr.mxu0 0.0
    %781 = vmatpush2.msra.mxu0 0.0
    %782 = vmatprep.subr.mxu0 0.0
    %783 = vmatpush2.msra.mxu0 0.0
    %784 = vmatprep.subr.mxu0 0.0
    %785 = vmatpush2.msra.mxu0 0.0
    %786 = vmatprep.subr.mxu0 0.0
    %787 = vmatpush2.msra.mxu0 0.0
    %788 = vmatprep.subr.mxu0 0.0
    %789 = vmatpush2.msra.mxu0 0.0
    %790 = vmatprep.mubr.f32.mxu0 0.0
    %791 = vmatmul.mubr.f32.gmra.mxu0 %v644
    %v792 = vpop.f32.mrf.mxu0
    %v793 = vadd.f32 %v614, %v792
    %v794 = vpop.f32.mrf.mxu0
    %v795 = vadd.f32 %v618, %v794
    %796 = vmatprep.mubr.f32.mxu0 0.0
    %797 = vmatmul.mubr.f32.gmra.mxu0 %v647
    %v798 = vpop.f32.mrf.mxu0
    %v799 = vadd.f32 %v614, %v798
    %v800 = vpop.f32.mrf.mxu0
    %v801 = vadd.f32 %v618, %v800
    %802 = vdwg.mxu0
    %803 = vmatprep.subr.mxu0 0.0
    %804 = vmatpush1.msra.mxu0 0.0
    %805 = vmatprep.subr.mxu0 0.0
    %806 = vmatpush1.msra.mxu0 0.0
    %807 = vmatprep.subr.mxu0 0.0
    %808 = vmatpush1.msra.mxu0 0.0
    %809 = vmatprep.subr.mxu0 0.0
    %810 = vmatpush1.msra.mxu0 0.0
    %811 = vmatprep.subr.mxu0 0.0
    %812 = vmatpush1.msra.mxu0 0.0
    %813 = vmatprep.subr.mxu0 0.0
    %814 = vmatpush1.msra.mxu0 0.0
    %815 = vmatprep.subr.mxu0 0.0
    %816 = vmatpush1.msra.mxu0 0.0
    %817 = vmatprep.subr.mxu0 0.0
    %818 = vmatpush1.msra.mxu0 0.0
    %819 = vmatprep.subr.mxu0 %v598
    %820 = vmatpush1.msra.mxu0 %v597
    %821 = vmatprep.subr.mxu0 %v590
    %822 = vmatpush1.msra.mxu0 %v589
    %823 = vmatprep.subr.mxu0 %v582
    %824 = vmatpush1.msra.mxu0 %v581
    %825 = vmatprep.subr.mxu0 %v574
    %826 = vmatpush1.msra.mxu0 %v573
    %827 = vmatprep.subr.mxu0 %v566
    %828 = vmatpush1.msra.mxu0 %v565
    %829 = vmatprep.subr.mxu0 %v558
    %830 = vmatpush1.msra.mxu0 %v557
    %831 = vmatprep.subr.mxu0 %v550
    %832 = vmatpush1.msra.mxu0 %v549
    %833 = vmatprep.subr.mxu0 %v542
    %834 = vmatpush1.msra.mxu0 %v541
    %835 = vmatprep.subr.mxu0 0.0
    %836 = vmatpush2.msra.mxu0 0.0
    %837 = vmatprep.subr.mxu0 0.0
    %838 = vmatpush2.msra.mxu0 0.0
    %839 = vmatprep.subr.mxu0 0.0
    %840 = vmatpush2.msra.mxu0 0.0
    %841 = vmatprep.subr.mxu0 0.0
    %842 = vmatpush2.msra.mxu0 0.0
    %843 = vmatprep.subr.mxu0 0.0
    %844 = vmatpush2.msra.mxu0 0.0
    %845 = vmatprep.subr.mxu0 0.0
    %846 = vmatpush2.msra.mxu0 0.0
    %847 = vmatprep.subr.mxu0 0.0
    %848 = vmatpush2.msra.mxu0 0.0
    %849 = vmatprep.subr.mxu0 0.0
    %850 = vmatpush2.msra.mxu0 0.0
    %851 = vmatprep.subr.mxu0 0.0
    %852 = vmatpush2.msra.mxu0 0.0
    %853 = vmatprep.subr.mxu0 0.0
    %854 = vmatpush2.msra.mxu0 0.0
    %855 = vmatprep.subr.mxu0 0.0
    %856 = vmatpush2.msra.mxu0 0.0
    %857 = vmatprep.subr.mxu0 0.0
    %858 = vmatpush2.msra.mxu0 0.0
    %859 = vmatprep.subr.mxu0 0.0
    %860 = vmatpush2.msra.mxu0 0.0
    %861 = vmatprep.subr.mxu0 0.0
    %862 = vmatpush2.msra.mxu0 0.0
    %863 = vmatprep.subr.mxu0 0.0
    %864 = vmatpush2.msra.mxu0 0.0
    %865 = vmatprep.subr.mxu0 0.0
    %866 = vmatpush2.msra.mxu0 0.0
    %867 = vmatprep.mubr.f32.mxu0 0.0
    %868 = vmatmul.mubr.f32.gmra.mxu0 %v644
    %v869 = vpop.f32.mrf.mxu0
    %v870 = vadd.f32 %v622, %v869
    %v871 = vpop.f32.mrf.mxu0
    %v872 = vadd.f32 %v626, %v871
    %873 = vmatprep.mubr.f32.mxu0 0.0
    %874 = vmatmul.mubr.f32.gmra.mxu0 %v647
    %v875 = vpop.f32.mrf.mxu0
    %v876 = vadd.f32 %v622, %v875
    %v877 = vpop.f32.mrf.mxu0
    %v878 = vadd.f32 %v626, %v877
    %879 = vdwg.mxu0
    %880 = vmatprep.subr.mxu0 0.0
    %881 = vmatpush1.msra.mxu0 0.0
    %882 = vmatprep.subr.mxu0 0.0
    %883 = vmatpush1.msra.mxu0 0.0
    %884 = vmatprep.subr.mxu0 0.0
    %885 = vmatpush1.msra.mxu0 0.0
    %886 = vmatprep.subr.mxu0 0.0
    %887 = vmatpush1.msra.mxu0 0.0
    %888 = vmatprep.subr.mxu0 0.0
    %889 = vmatpush1.msra.mxu0 0.0
    %890 = vmatprep.subr.mxu0 0.0
    %891 = vmatpush1.msra.mxu0 0.0
    %892 = vmatprep.subr.mxu0 0.0
    %893 = vmatpush1.msra.mxu0 0.0
    %894 = vmatprep.subr.mxu0 0.0
    %895 = vmatpush1.msra.mxu0 0.0
    %896 = vmatprep.subr.mxu0 %v600
    %897 = vmatpush1.msra.mxu0 %v599
    %898 = vmatprep.subr.mxu0 %v592
    %899 = vmatpush1.msra.mxu0 %v591
    %900 = vmatprep.subr.mxu0 %v584
    %901 = vmatpush1.msra.mxu0 %v583
    %902 = vmatprep.subr.mxu0 %v576
    %903 = vmatpush1.msra.mxu0 %v575
    %904 = vmatprep.subr.mxu0 %v568
    %905 = vmatpush1.msra.mxu0 %v567
    %906 = vmatprep.subr.mxu0 %v560
    %907 = vmatpush1.msra.mxu0 %v559
    %908 = vmatprep.subr.mxu0 %v552
    %909 = vmatpush1.msra.mxu0 %v551
    %910 = vmatprep.subr.mxu0 %v544
    %911 = vmatpush1.msra.mxu0 %v543
    %912 = vmatprep.subr.mxu0 0.0
    %913 = vmatpush2.msra.mxu0 0.0
    %914 = vmatprep.subr.mxu0 0.0
    %915 = vmatpush2.msra.mxu0 0.0
    %916 = vmatprep.subr.mxu0 0.0
    %917 = vmatpush2.msra.mxu0 0.0
    %918 = vmatprep.subr.mxu0 0.0
    %919 = vmatpush2.msra.mxu0 0.0
    %920 = vmatprep.subr.mxu0 0.0
    %921 = vmatpush2.msra.mxu0 0.0
    %922 = vmatprep.subr.mxu0 0.0
    %923 = vmatpush2.msra.mxu0 0.0
    %924 = vmatprep.subr.mxu0 0.0
    %925 = vmatpush2.msra.mxu0 0.0
    %926 = vmatprep.subr.mxu0 0.0
    %927 = vmatpush2.msra.mxu0 0.0
    %928 = vmatprep.subr.mxu0 0.0
    %929 = vmatpush2.msra.mxu0 0.0
    %930 = vmatprep.subr.mxu0 0.0
    %931 = vmatpush2.msra.mxu0 0.0
    %932 = vmatprep.subr.mxu0 0.0
    %933 = vmatpush2.msra.mxu0 0.0
    %934 = vmatprep.subr.mxu0 0.0
    %935 = vmatpush2.msra.mxu0 0.0
    %936 = vmatprep.subr.mxu0 0.0
    %937 = vmatpush2.msra.mxu0 0.0
    %938 = vmatprep.subr.mxu0 0.0
    %939 = vmatpush2.msra.mxu0 0.0
    %940 = vmatprep.subr.mxu0 0.0
    %941 = vmatpush2.msra.mxu0 0.0
    %942 = vmatprep.subr.mxu0 0.0
    %943 = vmatpush2.msra.mxu0 0.0
    %944 = vmatprep.mubr.f32.mxu0 0.0
    %945 = vmatmul.mubr.f32.gmra.mxu0 %v644
    %v946 = vpop.f32.mrf.mxu0
    %v947 = vadd.f32 %v630, %v946
    %v948 = vpop.f32.mrf.mxu0
    %v949 = vadd.f32 %v634, %v948
    %950 = vmatprep.mubr.f32.mxu0 0.0
    %951 = vmatmul.mubr.f32.gmra.mxu0 %v647
    %v952 = vpop.f32.mrf.mxu0
    %v953 = vadd.f32 %v630, %v952
    %v954 = vpop.f32.mrf.mxu0
    %v955 = vadd.f32 %v634, %v954
    %956 = vdwg.mxu0
    %v961 = vcombine.low %v294, %v296
    %v962 = vcombine.low %v371, %v373
    %965 = vst [vmem:[#allocation2] sm:$0x33] %v961
    %966 = vst [vmem:[#allocation2 + $0x8] sm:$0x33] %v962
    %v971 = vcombine.low %v716, %v718
    %v972 = vcombine.low %v793, %v795
    %v973 = vrot.slane %v971, 6
    %v974 = vrot.slane %v972, 6
    %977 = vst [vmem:[#allocation2] sm:$0xcc] %v973
    %978 = vst [vmem:[#allocation2 + $0x8] sm:$0xcc] %v974
    %v983 = vcombine.low %v448, %v450
    %v984 = vcombine.low %v525, %v527
    %987 = vst [vmem:[#allocation3] sm:$0x33] %v983
    %988 = vst [vmem:[#allocation3 + $0x8] sm:$0x33] %v984
    %v993 = vcombine.low %v870, %v872
    %v994 = vcombine.low %v947, %v949
    %v995 = vrot.slane %v993, 6
    %v996 = vrot.slane %v994, 6
    %999 = vst [vmem:[#allocation3] sm:$0xcc] %v995
    %1000 = vst [vmem:[#allocation3 + $0x8] sm:$0xcc] %v996
    %v1001 = vrot.slane %v961, 6
    %v1002 = vrot.slane %v1001, 4
    %v1003 = vrot.slane %v962, 6
    %v1004 = vrot.slane %v1003, 4
    %s1007 = scalar_lea.vmem [#allocation2], 16
    %1008 = vst [vmem:[%s1007] sm:$0x33] %v1002
    %1009 = vst [vmem:[%s1007 + $0x8] sm:$0x33] %v1004
    %1012 = vst [vmem:[%s1007] sm:$0xcc] %v971
    %1013 = vst [vmem:[%s1007 + $0x8] sm:$0xcc] %v972
    %v1014 = vrot.slane %v983, 6
    %v1015 = vrot.slane %v1014, 4
    %v1016 = vrot.slane %v984, 6
    %v1017 = vrot.slane %v1016, 4
    %s1020 = scalar_lea.vmem [#allocation3], 16
    %1021 = vst [vmem:[%s1020] sm:$0x33] %v1015
    %1022 = vst [vmem:[%s1020 + $0x8] sm:$0x33] %v1017
    %1025 = vst [vmem:[%s1020] sm:$0xcc] %v993
    %1026 = vst [vmem:[%s1020 + $0x8] sm:$0xcc] %v994
    %v1027 = vcombine.high %v294, %v296
    %v1028 = vcombine.high %v371, %v373
    %s1031 = scalar_lea.vmem [#allocation2], 32
    %1032 = vst [vmem:[%s1031] sm:$0x33] %v1027
    %1033 = vst [vmem:[%s1031 + $0x8] sm:$0x33] %v1028
    %v1034 = vcombine.high %v716, %v718
    %v1035 = vcombine.high %v793, %v795
    %v1036 = vrot.slane %v1034, 6
    %v1037 = vrot.slane %v1035, 6
    %1040 = vst [vmem:[%s1031] sm:$0xcc] %v1036
    %1041 = vst [vmem:[%s1031 + $0x8] sm:$0xcc] %v1037
    %v1042 = vcombine.high %v448, %v450
    %v1043 = vcombine.high %v525, %v527
    %s1046 = scalar_lea.vmem [#allocation3], 32
    %1047 = vst [vmem:[%s1046] sm:$0x33] %v1042
    %1048 = vst [vmem:[%s1046 + $0x8] sm:$0x33] %v1043
    %v1049 = vcombine.high %v870, %v872
    %v1050 = vcombine.high %v947, %v949
    %v1051 = vrot.slane %v1049, 6
    %v1052 = vrot.slane %v1050, 6
    %1055 = vst [vmem:[%s1046] sm:$0xcc] %v1051
    %1056 = vst [vmem:[%s1046 + $0x8] sm:$0xcc] %v1052
    %v1057 = vrot.slane %v1027, 6
    %v1058 = vrot.slane %v1057, 4
    %v1059 = vrot.slane %v1028, 6
    %v1060 = vrot.slane %v1059, 4
    %s1063 = scalar_lea.vmem [#allocation2], 48
    %1064 = vst [vmem:[%s1063] sm:$0x33] %v1058
    %1065 = vst [vmem:[%s1063 + $0x8] sm:$0x33] %v1060
    %1068 = vst [vmem:[%s1063] sm:$0xcc] %v1034
    %1069 = vst [vmem:[%s1063 + $0x8] sm:$0xcc] %v1035
    %v1070 = vrot.slane %v1042, 6
    %v1071 = vrot.slane %v1070, 4
    %v1072 = vrot.slane %v1043, 6
    %v1073 = vrot.slane %v1072, 4
    %s1076 = scalar_lea.vmem [#allocation3], 48
    %1077 = vst [vmem:[%s1076] sm:$0x33] %v1071
    %1078 = vst [vmem:[%s1076 + $0x8] sm:$0x33] %v1073
    %1081 = vst [vmem:[%s1076] sm:$0xcc] %v1049
    %1082 = vst [vmem:[%s1076 + $0x8] sm:$0xcc] %v1050
    %v1087 = vcombine.low %v300, %v302
    %v1088 = vcombine.low %v377, %v379
    %s1091 = scalar_lea.vmem [#allocation2], 64
    %1092 = vst [vmem:[%s1091] sm:$0x33] %v1087
    %1093 = vst [vmem:[%s1091 + $0x8] sm:$0x33] %v1088
    %v1098 = vcombine.low %v722, %v724
    %v1099 = vcombine.low %v799, %v801
    %v1100 = vrot.slane %v1098, 6
    %v1101 = vrot.slane %v1099, 6
    %1104 = vst [vmem:[%s1091] sm:$0xcc] %v1100
    %1105 = vst [vmem:[%s1091 + $0x8] sm:$0xcc] %v1101
    %v1110 = vcombine.low %v454, %v456
    %v1111 = vcombine.low %v531, %v533
    %s1114 = scalar_lea.vmem [#allocation3], 64
    %1115 = vst [vmem:[%s1114] sm:$0x33] %v1110
    %1116 = vst [vmem:[%s1114 + $0x8] sm:$0x33] %v1111
    %v1121 = vcombine.low %v876, %v878
    %v1122 = vcombine.low %v953, %v955
    %v1123 = vrot.slane %v1121, 6
    %v1124 = vrot.slane %v1122, 6
    %1127 = vst [vmem:[%s1114] sm:$0xcc] %v1123
    %1128 = vst [vmem:[%s1114 + $0x8] sm:$0xcc] %v1124
    %v1129 = vrot.slane %v1087, 6
    %v1130 = vrot.slane %v1129, 4
    %v1131 = vrot.slane %v1088, 6
    %v1132 = vrot.slane %v1131, 4
    %s1135 = scalar_lea.vmem [#allocation2], 80
    %1136 = vst [vmem:[%s1135] sm:$0x33] %v1130
    %1137 = vst [vmem:[%s1135 + $0x8] sm:$0x33] %v1132
    %1140 = vst [vmem:[%s1135] sm:$0xcc] %v1098
    %1141 = vst [vmem:[%s1135 + $0x8] sm:$0xcc] %v1099
    %v1142 = vrot.slane %v1110, 6
    %v1143 = vrot.slane %v1142, 4
    %v1144 = vrot.slane %v1111, 6
    %v1145 = vrot.slane %v1144, 4
    %s1148 = scalar_lea.vmem [#allocation3], 80
    %1149 = vst [vmem:[%s1148] sm:$0x33] %v1143
    %1150 = vst [vmem:[%s1148 + $0x8] sm:$0x33] %v1145
    %1153 = vst [vmem:[%s1148] sm:$0xcc] %v1121
    %1154 = vst [vmem:[%s1148 + $0x8] sm:$0xcc] %v1122
    %v1155 = vcombine.high %v300, %v302
    %v1156 = vcombine.high %v377, %v379
    %s1159 = scalar_lea.vmem [#allocation2], 96
    %1160 = vst [vmem:[%s1159] sm:$0x33] %v1155
    %1161 = vst [vmem:[%s1159 + $0x8] sm:$0x33] %v1156
    %v1162 = vcombine.high %v722, %v724
    %v1163 = vcombine.high %v799, %v801
    %v1164 = vrot.slane %v1162, 6
    %v1165 = vrot.slane %v1163, 6
    %1168 = vst [vmem:[%s1159] sm:$0xcc] %v1164
    %1169 = vst [vmem:[%s1159 + $0x8] sm:$0xcc] %v1165
    %v1170 = vcombine.high %v454, %v456
    %v1171 = vcombine.high %v531, %v533
    %s1174 = scalar_lea.vmem [#allocation3], 96
    %1175 = vst [vmem:[%s1174] sm:$0x33] %v1170
    %1176 = vst [vmem:[%s1174 + $0x8] sm:$0x33] %v1171
    %v1177 = vcombine.high %v876, %v878
    %v1178 = vcombine.high %v953, %v955
    %v1179 = vrot.slane %v1177, 6
    %v1180 = vrot.slane %v1178, 6
    %1183 = vst [vmem:[%s1174] sm:$0xcc] %v1179
    %1184 = vst [vmem:[%s1174 + $0x8] sm:$0xcc] %v1180
    %v1185 = vrot.slane %v1155, 6
    %v1186 = vrot.slane %v1185, 4
    %v1187 = vrot.slane %v1156, 6
    %v1188 = vrot.slane %v1187, 4
    %s1191 = scalar_lea.vmem [#allocation2], 112
    %1192 = vst [vmem:[%s1191] sm:$0x33] %v1186
    %1193 = vst [vmem:[%s1191 + $0x8] sm:$0x33] %v1188
    %1196 = vst [vmem:[%s1191] sm:$0xcc] %v1162
    %1197 = vst [vmem:[%s1191 + $0x8] sm:$0xcc] %v1163
    %v1198 = vrot.slane %v1170, 6
    %v1199 = vrot.slane %v1198, 4
    %v1200 = vrot.slane %v1171, 6
    %v1201 = vrot.slane %v1200, 4
    %s1204 = scalar_lea.vmem [#allocation3], 112
    %1205 = vst [vmem:[%s1204] sm:$0x33] %v1199
    %1206 = vst [vmem:[%s1204 + $0x8] sm:$0x33] %v1201
    %1209 = vst [vmem:[%s1204] sm:$0xcc] %v1177
    %1210 = vst [vmem:[%s1204 + $0x8] sm:$0xcc] %v1178
    %v1211 = vld [vmem:[%s2] sm:$0xf]
    %v1212 = vld [vmem:[%s3] sm:$0xf]
    %v1213 = vld [vmem:[#allocation9] sm:$0xff]
    %v1214 = vld [vmem:[#allocation9 + $0x8] sm:$0xff]
    %v1215 = vld [vmem:[#allocation9 + $0x10] sm:$0xff]
    %v1216 = vld [vmem:[#allocation9 + $0x18] sm:$0xff]
    %v1217 = vld [vmem:[#allocation9 + $0x20] sm:$0xff]
    %v1218 = vld [vmem:[#allocation9 + $0x28] sm:$0xff]
    %v1219 = vld [vmem:[#allocation9 + $0x30] sm:$0xff]
    %v1220 = vld [vmem:[#allocation9 + $0x38] sm:$0xff]
    %v1221 = vld [vmem:[#allocation9 + $0x40] sm:$0xff]
    %v1222 = vld [vmem:[#allocation9 + $0x48] sm:$0xff]
    %v1223 = vld [vmem:[#allocation9 + $0x50] sm:$0xff]
    %v1224 = vld [vmem:[#allocation9 + $0x58] sm:$0xff]
    %v1225 = vld [vmem:[#allocation9 + $0x60] sm:$0xff]
    %v1226 = vld [vmem:[#allocation9 + $0x68] sm:$0xff]
    %v1227 = vld [vmem:[#allocation9 + $0x70] sm:$0xff]
    %v1228 = vld [vmem:[#allocation9 + $0x78] sm:$0xff]
    %v1229 = vld [vmem:[#allocation9 + $0x80] sm:$0xff]
    %v1230 = vld [vmem:[#allocation9 + $0x88] sm:$0xff]
    %v1231 = vld [vmem:[#allocation9 + $0x90] sm:$0xff]
    %v1232 = vld [vmem:[#allocation9 + $0x98] sm:$0xff]
    %v1233 = vld [vmem:[#allocation9 + $0xa0] sm:$0xff]
    %v1234 = vld [vmem:[#allocation9 + $0xa8] sm:$0xff]
    %v1235 = vld [vmem:[#allocation9 + $0xb0] sm:$0xff]
    %v1236 = vld [vmem:[#allocation9 + $0xb8] sm:$0xff]
    %v1237 = vld [vmem:[#allocation9 + $0xc0] sm:$0xff]
    %v1238 = vld [vmem:[#allocation9 + $0xc8] sm:$0xff]
    %v1239 = vld [vmem:[#allocation9 + $0xd0] sm:$0xff]
    %v1240 = vld [vmem:[#allocation9 + $0xd8] sm:$0xff]
    %v1241 = vld [vmem:[#allocation9 + $0xe0] sm:$0xff]
    %v1242 = vld [vmem:[#allocation9 + $0xe8] sm:$0xff]
    %v1243 = vld [vmem:[#allocation9 + $0xf0] sm:$0xff]
    %v1244 = vld [vmem:[#allocation9 + $0xf8] sm:$0xff]
    %v1245 = vld [vmem:[#allocation9 + $0x100] sm:$0xff]
    %v1246 = vld [vmem:[#allocation9 + $0x108] sm:$0xff]
    %v1247 = vld [vmem:[#allocation9 + $0x110] sm:$0xff]
    %v1248 = vld [vmem:[#allocation9 + $0x118] sm:$0xff]
    %v1249 = vld [vmem:[#allocation9 + $0x120] sm:$0xff]
    %v1250 = vld [vmem:[#allocation9 + $0x128] sm:$0xff]
    %v1251 = vld [vmem:[#allocation9 + $0x130] sm:$0xff]
    %v1252 = vld [vmem:[#allocation9 + $0x138] sm:$0xff]
    %v1253 = vld [vmem:[#allocation9 + $0x140] sm:$0xff]
    %v1254 = vld [vmem:[#allocation9 + $0x148] sm:$0xff]
    %v1255 = vld [vmem:[#allocation9 + $0x150] sm:$0xff]
    %v1256 = vld [vmem:[#allocation9 + $0x158] sm:$0xff]
    %v1257 = vld [vmem:[#allocation9 + $0x160] sm:$0xff]
    %v1258 = vld [vmem:[#allocation9 + $0x168] sm:$0xff]
    %v1259 = vld [vmem:[#allocation9 + $0x170] sm:$0xff]
    %v1260 = vld [vmem:[#allocation9 + $0x178] sm:$0xff]
    %v1261 = vld [vmem:[#allocation9 + $0x180] sm:$0xff]
    %v1262 = vld [vmem:[#allocation9 + $0x188] sm:$0xff]
    %v1263 = vld [vmem:[#allocation9 + $0x190] sm:$0xff]
    %v1264 = vld [vmem:[#allocation9 + $0x198] sm:$0xff]
    %v1265 = vld [vmem:[#allocation9 + $0x1a0] sm:$0xff]
    %v1266 = vld [vmem:[#allocation9 + $0x1a8] sm:$0xff]
    %v1267 = vld [vmem:[#allocation9 + $0x1b0] sm:$0xff]
    %v1268 = vld [vmem:[#allocation9 + $0x1b8] sm:$0xff]
    %v1269 = vld [vmem:[#allocation9 + $0x1c0] sm:$0xff]
    %v1270 = vld [vmem:[#allocation9 + $0x1c8] sm:$0xff]
    %v1271 = vld [vmem:[#allocation9 + $0x1d0] sm:$0xff]
    %v1272 = vld [vmem:[#allocation9 + $0x1d8] sm:$0xff]
    %v1273 = vld [vmem:[#allocation9 + $0x1e0] sm:$0xff]
    %v1274 = vld [vmem:[#allocation9 + $0x1e8] sm:$0xff]
    %v1275 = vld [vmem:[#allocation9 + $0x1f0] sm:$0xff]
    %v1276 = vld [vmem:[#allocation9 + $0x1f8] sm:$0xff]
    %s1277 = scalar_lea.vmem [#allocation9], 512
    %v1278 = vld [vmem:[%s1277] sm:$0xff]
    %v1279 = vld [vmem:[%s1277 + $0x8] sm:$0xff]
    %v1280 = vld [vmem:[%s1277 + $0x10] sm:$0xff]
    %v1281 = vld [vmem:[%s1277 + $0x18] sm:$0xff]
    %v1282 = vld [vmem:[%s1277 + $0x20] sm:$0xff]
    %v1283 = vld [vmem:[%s1277 + $0x28] sm:$0xff]
    %v1284 = vld [vmem:[%s1277 + $0x30] sm:$0xff]
    %v1285 = vld [vmem:[%s1277 + $0x38] sm:$0xff]
    %v1286 = vld [vmem:[%s1277 + $0x40] sm:$0xff]
    %v1287 = vld [vmem:[%s1277 + $0x48] sm:$0xff]
    %v1288 = vld [vmem:[%s1277 + $0x50] sm:$0xff]
    %v1289 = vld [vmem:[%s1277 + $0x58] sm:$0xff]
    %v1290 = vld [vmem:[%s1277 + $0x60] sm:$0xff]
    %v1291 = vld [vmem:[%s1277 + $0x68] sm:$0xff]
    %v1292 = vld [vmem:[%s1277 + $0x70] sm:$0xff]
    %v1293 = vld [vmem:[%s1277 + $0x78] sm:$0xff]
    %v1294 = vld [vmem:[%s1277 + $0x80] sm:$0xff]
    %v1295 = vld [vmem:[%s1277 + $0x88] sm:$0xff]
    %v1296 = vld [vmem:[%s1277 + $0x90] sm:$0xff]
    %v1297 = vld [vmem:[%s1277 + $0x98] sm:$0xff]
    %v1298 = vld [vmem:[%s1277 + $0xa0] sm:$0xff]
    %v1299 = vld [vmem:[%s1277 + $0xa8] sm:$0xff]
    %v1300 = vld [vmem:[%s1277 + $0xb0] sm:$0xff]
    %v1301 = vld [vmem:[%s1277 + $0xb8] sm:$0xff]
    %v1302 = vld [vmem:[%s1277 + $0xc0] sm:$0xff]
    %v1303 = vld [vmem:[%s1277 + $0xc8] sm:$0xff]
    %v1304 = vld [vmem:[%s1277 + $0xd0] sm:$0xff]
    %v1305 = vld [vmem:[%s1277 + $0xd8] sm:$0xff]
    %v1306 = vld [vmem:[%s1277 + $0xe0] sm:$0xff]
    %v1307 = vld [vmem:[%s1277 + $0xe8] sm:$0xff]
    %v1308 = vld [vmem:[%s1277 + $0xf0] sm:$0xff]
    %v1309 = vld [vmem:[%s1277 + $0xf8] sm:$0xff]
    %v1310 = vld [vmem:[%s1277 + $0x100] sm:$0xff]
    %v1311 = vld [vmem:[%s1277 + $0x108] sm:$0xff]
    %v1312 = vld [vmem:[%s1277 + $0x110] sm:$0xff]
    %v1313 = vld [vmem:[%s1277 + $0x118] sm:$0xff]
    %v1314 = vld [vmem:[%s1277 + $0x120] sm:$0xff]
    %v1315 = vld [vmem:[%s1277 + $0x128] sm:$0xff]
    %v1316 = vld [vmem:[%s1277 + $0x130] sm:$0xff]
    %v1317 = vld [vmem:[%s1277 + $0x138] sm:$0xff]
    %v1318 = vld [vmem:[%s1277 + $0x140] sm:$0xff]
    %v1319 = vld [vmem:[%s1277 + $0x148] sm:$0xff]
    %v1320 = vld [vmem:[%s1277 + $0x150] sm:$0xff]
    %v1321 = vld [vmem:[%s1277 + $0x158] sm:$0xff]
    %v1322 = vld [vmem:[%s1277 + $0x160] sm:$0xff]
    %v1323 = vld [vmem:[%s1277 + $0x168] sm:$0xff]
    %v1324 = vld [vmem:[%s1277 + $0x170] sm:$0xff]
    %v1325 = vld [vmem:[%s1277 + $0x178] sm:$0xff]
    %v1326 = vld [vmem:[%s1277 + $0x180] sm:$0xff]
    %v1327 = vld [vmem:[%s1277 + $0x188] sm:$0xff]
    %v1328 = vld [vmem:[%s1277 + $0x190] sm:$0xff]
    %v1329 = vld [vmem:[%s1277 + $0x198] sm:$0xff]
    %v1330 = vld [vmem:[%s1277 + $0x1a0] sm:$0xff]
    %v1331 = vld [vmem:[%s1277 + $0x1a8] sm:$0xff]
    %v1332 = vld [vmem:[%s1277 + $0x1b0] sm:$0xff]
    %v1333 = vld [vmem:[%s1277 + $0x1b8] sm:$0xff]
    %v1334 = vld [vmem:[%s1277 + $0x1c0] sm:$0xff]
    %v1335 = vld [vmem:[%s1277 + $0x1c8] sm:$0xff]
    %v1336 = vld [vmem:[%s1277 + $0x1d0] sm:$0xff]
    %v1337 = vld [vmem:[%s1277 + $0x1d8] sm:$0xff]
    %v1338 = vld [vmem:[%s1277 + $0x1e0] sm:$0xff]
    %v1339 = vld [vmem:[%s1277 + $0x1e8] sm:$0xff]
    %v1340 = vld [vmem:[%s1277 + $0x1f0] sm:$0xff]
    %v1341 = vld [vmem:[%s1277 + $0x1f8] sm:$0xff]
    %v1342 = vld [vmem:[#allocation2] sm:$0xff]
    %v1343 = vld [vmem:[#allocation2 + $0x8] sm:$0xff]
    %1344 = vmatprep.subr.mxu0 %v1274
    %1345 = vmatpush1.msra.mxu0 %v1273
    %1346 = vmatprep.subr.mxu0 %v1270
    %1347 = vmatpush1.msra.mxu0 %v1269
    %1348 = vmatprep.subr.mxu0 %v1266
    %1349 = vmatpush1.msra.mxu0 %v1265
    %1350 = vmatprep.subr.mxu0 %v1262
    %1351 = vmatpush1.msra.mxu0 %v1261
    %1352 = vmatprep.subr.mxu0 %v1258
    %1353 = vmatpush1.msra.mxu0 %v1257
    %1354 = vmatprep.subr.mxu0 %v1254
    %1355 = vmatpush1.msra.mxu0 %v1253
    %1356 = vmatprep.subr.mxu0 %v1250
    %1357 = vmatpush1.msra.mxu0 %v1249
    %1358 = vmatprep.subr.mxu0 %v1246
    %1359 = vmatpush1.msra.mxu0 %v1245
    %1360 = vmatprep.subr.mxu0 %v1242
    %1361 = vmatpush1.msra.mxu0 %v1241
    %1362 = vmatprep.subr.mxu0 %v1238
    %1363 = vmatpush1.msra.mxu0 %v1237
    %1364 = vmatprep.subr.mxu0 %v1234
    %1365 = vmatpush1.msra.mxu0 %v1233
    %1366 = vmatprep.subr.mxu0 %v1230
    %1367 = vmatpush1.msra.mxu0 %v1229
    %1368 = vmatprep.subr.mxu0 %v1226
    %1369 = vmatpush1.msra.mxu0 %v1225
    %1370 = vmatprep.subr.mxu0 %v1222
    %1371 = vmatpush1.msra.mxu0 %v1221
    %1372 = vmatprep.subr.mxu0 %v1218
    %1373 = vmatpush1.msra.mxu0 %v1217
    %1374 = vmatprep.subr.mxu0 %v1214
    %1375 = vmatpush1.msra.mxu0 %v1213
    %1376 = vmatprep.subr.mxu0 0.0
    %1377 = vmatpush2.msra.mxu0 0.0
    %1378 = vmatprep.subr.mxu0 0.0
    %1379 = vmatpush2.msra.mxu0 0.0
    %1380 = vmatprep.subr.mxu0 0.0
    %1381 = vmatpush2.msra.mxu0 0.0
    %1382 = vmatprep.subr.mxu0 0.0
    %1383 = vmatpush2.msra.mxu0 0.0
    %1384 = vmatprep.subr.mxu0 0.0
    %1385 = vmatpush2.msra.mxu0 0.0
    %1386 = vmatprep.subr.mxu0 0.0
    %1387 = vmatpush2.msra.mxu0 0.0
    %1388 = vmatprep.subr.mxu0 0.0
    %1389 = vmatpush2.msra.mxu0 0.0
    %1390 = vmatprep.subr.mxu0 0.0
    %1391 = vmatpush2.msra.mxu0 0.0
    %1392 = vmatprep.subr.mxu0 0.0
    %1393 = vmatpush2.msra.mxu0 0.0
    %1394 = vmatprep.subr.mxu0 0.0
    %1395 = vmatpush2.msra.mxu0 0.0
    %1396 = vmatprep.subr.mxu0 0.0
    %1397 = vmatpush2.msra.mxu0 0.0
    %1398 = vmatprep.subr.mxu0 0.0
    %1399 = vmatpush2.msra.mxu0 0.0
    %1400 = vmatprep.subr.mxu0 0.0
    %1401 = vmatpush2.msra.mxu0 0.0
    %1402 = vmatprep.subr.mxu0 0.0
    %1403 = vmatpush2.msra.mxu0 0.0
    %1404 = vmatprep.subr.mxu0 0.0
    %1405 = vmatpush2.msra.mxu0 0.0
    %1406 = vmatprep.subr.mxu0 0.0
    %1407 = vmatpush2.msra.mxu0 0.0
    %1408 = vmatprep.mubr.f32.mxu0 0.0
    %1409 = vmatmul.mubr.f32.gmra.mxu0 %v1211
    %v1410 = vpop.f32.mrf.mxu0
    %v1411 = vadd.f32 0.0, %v1410
    %v1412 = vpop.f32.mrf.mxu0
    %v1413 = vadd.f32 0.0, %v1412
    %1414 = vdwg.mxu0
    %1415 = vmatprep.subr.mxu0 %v1276
    %1416 = vmatpush1.msra.mxu0 %v1275
    %1417 = vmatprep.subr.mxu0 %v1272
    %1418 = vmatpush1.msra.mxu0 %v1271
    %1419 = vmatprep.subr.mxu0 %v1268
    %1420 = vmatpush1.msra.mxu0 %v1267
    %1421 = vmatprep.subr.mxu0 %v1264
    %1422 = vmatpush1.msra.mxu0 %v1263
    %1423 = vmatprep.subr.mxu0 %v1260
    %1424 = vmatpush1.msra.mxu0 %v1259
    %1425 = vmatprep.subr.mxu0 %v1256
    %1426 = vmatpush1.msra.mxu0 %v1255
    %1427 = vmatprep.subr.mxu0 %v1252
    %1428 = vmatpush1.msra.mxu0 %v1251
    %1429 = vmatprep.subr.mxu0 %v1248
    %1430 = vmatpush1.msra.mxu0 %v1247
    %1431 = vmatprep.subr.mxu0 %v1244
    %1432 = vmatpush1.msra.mxu0 %v1243
    %1433 = vmatprep.subr.mxu0 %v1240
    %1434 = vmatpush1.msra.mxu0 %v1239
    %1435 = vmatprep.subr.mxu0 %v1236
    %1436 = vmatpush1.msra.mxu0 %v1235
    %1437 = vmatprep.subr.mxu0 %v1232
    %1438 = vmatpush1.msra.mxu0 %v1231
    %1439 = vmatprep.subr.mxu0 %v1228
    %1440 = vmatpush1.msra.mxu0 %v1227
    %1441 = vmatprep.subr.mxu0 %v1224
    %1442 = vmatpush1.msra.mxu0 %v1223
    %1443 = vmatprep.subr.mxu0 %v1220
    %1444 = vmatpush1.msra.mxu0 %v1219
    %1445 = vmatprep.subr.mxu0 %v1216
    %1446 = vmatpush1.msra.mxu0 %v1215
    %1447 = vmatprep.subr.mxu0 0.0
    %1448 = vmatpush2.msra.mxu0 0.0
    %1449 = vmatprep.subr.mxu0 0.0
    %1450 = vmatpush2.msra.mxu0 0.0
    %1451 = vmatprep.subr.mxu0 0.0
    %1452 = vmatpush2.msra.mxu0 0.0
    %1453 = vmatprep.subr.mxu0 0.0
    %1454 = vmatpush2.msra.mxu0 0.0
    %1455 = vmatprep.subr.mxu0 0.0
    %1456 = vmatpush2.msra.mxu0 0.0
    %1457 = vmatprep.subr.mxu0 0.0
    %1458 = vmatpush2.msra.mxu0 0.0
    %1459 = vmatprep.subr.mxu0 0.0
    %1460 = vmatpush2.msra.mxu0 0.0
    %1461 = vmatprep.subr.mxu0 0.0
    %1462 = vmatpush2.msra.mxu0 0.0
    %1463 = vmatprep.subr.mxu0 0.0
    %1464 = vmatpush2.msra.mxu0 0.0
    %1465 = vmatprep.subr.mxu0 0.0
    %1466 = vmatpush2.msra.mxu0 0.0
    %1467 = vmatprep.subr.mxu0 0.0
    %1468 = vmatpush2.msra.mxu0 0.0
    %1469 = vmatprep.subr.mxu0 0.0
    %1470 = vmatpush2.msra.mxu0 0.0
    %1471 = vmatprep.subr.mxu0 0.0
    %1472 = vmatpush2.msra.mxu0 0.0
    %1473 = vmatprep.subr.mxu0 0.0
    %1474 = vmatpush2.msra.mxu0 0.0
    %1475 = vmatprep.subr.mxu0 0.0
    %1476 = vmatpush2.msra.mxu0 0.0
    %1477 = vmatprep.subr.mxu0 0.0
    %1478 = vmatpush2.msra.mxu0 0.0
    %1479 = vmatprep.mubr.f32.mxu0 0.0
    %1480 = vmatmul.mubr.f32.gmra.mxu0 %v1211
    %v1481 = vpop.f32.mrf.mxu0
    %v1482 = vadd.f32 0.0, %v1481
    %v1483 = vpop.f32.mrf.mxu0
    %v1484 = vadd.f32 0.0, %v1483
    %1485 = vdwg.mxu0
    %v1487 = vrot.slane %v1211, 2
    %1489 = vmatprep.subr.mxu0 %v1339
    %1490 = vmatpush1.msra.mxu0 %v1338
    %1491 = vmatprep.subr.mxu0 %v1335
    %1492 = vmatpush1.msra.mxu0 %v1334
    %1493 = vmatprep.subr.mxu0 %v1331
    %1494 = vmatpush1.msra.mxu0 %v1330
    %1495 = vmatprep.subr.mxu0 %v1327
    %1496 = vmatpush1.msra.mxu0 %v1326
    %1497 = vmatprep.subr.mxu0 %v1323
    %1498 = vmatpush1.msra.mxu0 %v1322
    %1499 = vmatprep.subr.mxu0 %v1319
    %1500 = vmatpush1.msra.mxu0 %v1318
    %1501 = vmatprep.subr.mxu0 %v1315
    %1502 = vmatpush1.msra.mxu0 %v1314
    %1503 = vmatprep.subr.mxu0 %v1311
    %1504 = vmatpush1.msra.mxu0 %v1310
    %1505 = vmatprep.subr.mxu0 %v1307
    %1506 = vmatpush1.msra.mxu0 %v1306
    %1507 = vmatprep.subr.mxu0 %v1303
    %1508 = vmatpush1.msra.mxu0 %v1302
    %1509 = vmatprep.subr.mxu0 %v1299
    %1510 = vmatpush1.msra.mxu0 %v1298
    %1511 = vmatprep.subr.mxu0 %v1295
    %1512 = vmatpush1.msra.mxu0 %v1294
    %1513 = vmatprep.subr.mxu0 %v1291
    %1514 = vmatpush1.msra.mxu0 %v1290
    %1515 = vmatprep.subr.mxu0 %v1287
    %1516 = vmatpush1.msra.mxu0 %v1286
    %1517 = vmatprep.subr.mxu0 %v1283
    %1518 = vmatpush1.msra.mxu0 %v1282
    %1519 = vmatprep.subr.mxu0 %v1279
    %1520 = vmatpush1.msra.mxu0 %v1278
    %1521 = vmatprep.subr.mxu0 0.0
    %1522 = vmatpush2.msra.mxu0 0.0
    %1523 = vmatprep.subr.mxu0 0.0
    %1524 = vmatpush2.msra.mxu0 0.0
    %1525 = vmatprep.subr.mxu0 0.0
    %1526 = vmatpush2.msra.mxu0 0.0
    %1527 = vmatprep.subr.mxu0 0.0
    %1528 = vmatpush2.msra.mxu0 0.0
    %1529 = vmatprep.subr.mxu0 0.0
    %1530 = vmatpush2.msra.mxu0 0.0
    %1531 = vmatprep.subr.mxu0 0.0
    %1532 = vmatpush2.msra.mxu0 0.0
    %1533 = vmatprep.subr.mxu0 0.0
    %1534 = vmatpush2.msra.mxu0 0.0
    %1535 = vmatprep.subr.mxu0 0.0
    %1536 = vmatpush2.msra.mxu0 0.0
    %1537 = vmatprep.subr.mxu0 0.0
    %1538 = vmatpush2.msra.mxu0 0.0
    %1539 = vmatprep.subr.mxu0 0.0
    %1540 = vmatpush2.msra.mxu0 0.0
    %1541 = vmatprep.subr.mxu0 0.0
    %1542 = vmatpush2.msra.mxu0 0.0
    %1543 = vmatprep.subr.mxu0 0.0
    %1544 = vmatpush2.msra.mxu0 0.0
    %1545 = vmatprep.subr.mxu0 0.0
    %1546 = vmatpush2.msra.mxu0 0.0
    %1547 = vmatprep.subr.mxu0 0.0
    %1548 = vmatpush2.msra.mxu0 0.0
    %1549 = vmatprep.subr.mxu0 0.0
    %1550 = vmatpush2.msra.mxu0 0.0
    %1551 = vmatprep.subr.mxu0 0.0
    %1552 = vmatpush2.msra.mxu0 0.0
    %1553 = vmatprep.mubr.f32.mxu0 0.0
    %1554 = vmatmul.mubr.f32.gmra.mxu0 %v1487
    %v1555 = vpop.f32.mrf.mxu0
    %v1556 = vadd.f32 0.0, %v1555
    %v1557 = vpop.f32.mrf.mxu0
    %v1558 = vadd.f32 0.0, %v1557
    %1559 = vdwg.mxu0
    %1560 = vmatprep.subr.mxu0 %v1341
    %1561 = vmatpush1.msra.mxu0 %v1340
    %1562 = vmatprep.subr.mxu0 %v1337
    %1563 = vmatpush1.msra.mxu0 %v1336
    %1564 = vmatprep.subr.mxu0 %v1333
    %1565 = vmatpush1.msra.mxu0 %v1332
    %1566 = vmatprep.subr.mxu0 %v1329
    %1567 = vmatpush1.msra.mxu0 %v1328
    %1568 = vmatprep.subr.mxu0 %v1325
    %1569 = vmatpush1.msra.mxu0 %v1324
    %1570 = vmatprep.subr.mxu0 %v1321
    %1571 = vmatpush1.msra.mxu0 %v1320
    %1572 = vmatprep.subr.mxu0 %v1317
    %1573 = vmatpush1.msra.mxu0 %v1316
    %1574 = vmatprep.subr.mxu0 %v1313
    %1575 = vmatpush1.msra.mxu0 %v1312
    %1576 = vmatprep.subr.mxu0 %v1309
    %1577 = vmatpush1.msra.mxu0 %v1308
    %1578 = vmatprep.subr.mxu0 %v1305
    %1579 = vmatpush1.msra.mxu0 %v1304
    %1580 = vmatprep.subr.mxu0 %v1301
    %1581 = vmatpush1.msra.mxu0 %v1300
    %1582 = vmatprep.subr.mxu0 %v1297
    %1583 = vmatpush1.msra.mxu0 %v1296
    %1584 = vmatprep.subr.mxu0 %v1293
    %1585 = vmatpush1.msra.mxu0 %v1292
    %1586 = vmatprep.subr.mxu0 %v1289
    %1587 = vmatpush1.msra.mxu0 %v1288
    %1588 = vmatprep.subr.mxu0 %v1285
    %1589 = vmatpush1.msra.mxu0 %v1284
    %1590 = vmatprep.subr.mxu0 %v1281
    %1591 = vmatpush1.msra.mxu0 %v1280
    %1592 = vmatprep.subr.mxu0 0.0
    %1593 = vmatpush2.msra.mxu0 0.0
    %1594 = vmatprep.subr.mxu0 0.0
    %1595 = vmatpush2.msra.mxu0 0.0
    %1596 = vmatprep.subr.mxu0 0.0
    %1597 = vmatpush2.msra.mxu0 0.0
    %1598 = vmatprep.subr.mxu0 0.0
    %1599 = vmatpush2.msra.mxu0 0.0
    %1600 = vmatprep.subr.mxu0 0.0
    %1601 = vmatpush2.msra.mxu0 0.0
    %1602 = vmatprep.subr.mxu0 0.0
    %1603 = vmatpush2.msra.mxu0 0.0
    %1604 = vmatprep.subr.mxu0 0.0
    %1605 = vmatpush2.msra.mxu0 0.0
    %1606 = vmatprep.subr.mxu0 0.0
    %1607 = vmatpush2.msra.mxu0 0.0
    %1608 = vmatprep.subr.mxu0 0.0
    %1609 = vmatpush2.msra.mxu0 0.0
    %1610 = vmatprep.subr.mxu0 0.0
    %1611 = vmatpush2.msra.mxu0 0.0
    %1612 = vmatprep.subr.mxu0 0.0
    %1613 = vmatpush2.msra.mxu0 0.0
    %1614 = vmatprep.subr.mxu0 0.0
    %1615 = vmatpush2.msra.mxu0 0.0
    %1616 = vmatprep.subr.mxu0 0.0
    %1617 = vmatpush2.msra.mxu0 0.0
    %1618 = vmatprep.subr.mxu0 0.0
    %1619 = vmatpush2.msra.mxu0 0.0
    %1620 = vmatprep.subr.mxu0 0.0
    %1621 = vmatpush2.msra.mxu0 0.0
    %1622 = vmatprep.subr.mxu0 0.0
    %1623 = vmatpush2.msra.mxu0 0.0
    %1624 = vmatprep.mubr.f32.mxu0 0.0
    %1625 = vmatmul.mubr.f32.gmra.mxu0 %v1487
    %v1626 = vpop.f32.mrf.mxu0
    %v1627 = vadd.f32 0.0, %v1626
    %v1628 = vpop.f32.mrf.mxu0
    %v1629 = vadd.f32 0.0, %v1628
    %1630 = vdwg.mxu0
    %v1635 = vrot.slane %v1556, 6
    %v1636 = vrot.slane %v1558, 6
    %v1637 = vrot.slane %v1627, 6
    %v1638 = vrot.slane %v1629, 6
    %vm1643 = vcmask 1041408
    %v1644 = vsel %vm1643, %v1411, %v1635
    %v1645 = vsel %vm1643, %v1413, %v1636
    %v1646 = vsel %vm1643, %v1482, %v1637
    %v1647 = vsel %vm1643, %v1484, %v1638
    %v1652 = vcombine.low %v1644, %v1645
    %v1653 = vcombine.low %v1646, %v1647
    %v1656 = vadd.f32 %v1342, %v1652
    %v1657 = vadd.f32 %v1343, %v1653
    %v1658 = vxor.u32 %v1656, 2147483648
    %v1659 = vxor.u32 %v1657, 2147483648
    %v1660 = vmul.f32 %v1658, 1.442695
    %v1661 = vpow.pop %v1660
    %v1662 = vmul.f32 %v1659, 1.442695
    %v1663 = vpow.pop %v1662
    %v1664 = vadd.f32 %v1661, 1.0
    %v1665 = vadd.f32 %v1663, 1.0
    %v1666 = vrcp.pop %v1664
    %v1667 = vmul.f32 1.0, %v1666
    %v1668 = vrcp.pop %v1665
    %v1669 = vmul.f32 1.0, %v1668
    %v1671 = vrot.slane %v1657, 4
    %v1673 = vtanh.pop %v1671
    %v1675 = vrot.slane %v1667, 4
    %v1677 = vmul.f32 %v1675, %v1212
    %v1678 = vmul.f32 %v1667, %v1673
    %v1679 = vadd.f32 %v1677, %v1678
    %v1680 = vtanh.pop %v1679
    %v1681 = vmul.f32 %v1669, %v1680
    %v1682 = vld [vmem:[%s1007] sm:$0xff]
    %v1683 = vld [vmem:[%s1007 + $0x8] sm:$0xff]
    %1684 = vmatprep.subr.mxu0 %v1274
    %1685 = vmatpush1.msra.mxu0 %v1273
    %1686 = vmatprep.subr.mxu0 %v1270
    %1687 = vmatpush1.msra.mxu0 %v1269
    %1688 = vmatprep.subr.mxu0 %v1266
    %1689 = vmatpush1.msra.mxu0 %v1265
    %1690 = vmatprep.subr.mxu0 %v1262
    %1691 = vmatpush1.msra.mxu0 %v1261
    %1692 = vmatprep.subr.mxu0 %v1258
    %1693 = vmatpush1.msra.mxu0 %v1257
    %1694 = vmatprep.subr.mxu0 %v1254
    %1695 = vmatpush1.msra.mxu0 %v1253
    %1696 = vmatprep.subr.mxu0 %v1250
    %1697 = vmatpush1.msra.mxu0 %v1249
    %1698 = vmatprep.subr.mxu0 %v1246
    %1699 = vmatpush1.msra.mxu0 %v1245
    %1700 = vmatprep.subr.mxu0 %v1242
    %1701 = vmatpush1.msra.mxu0 %v1241
    %1702 = vmatprep.subr.mxu0 %v1238
    %1703 = vmatpush1.msra.mxu0 %v1237
    %1704 = vmatprep.subr.mxu0 %v1234
    %1705 = vmatpush1.msra.mxu0 %v1233
    %1706 = vmatprep.subr.mxu0 %v1230
    %1707 = vmatpush1.msra.mxu0 %v1229
    %1708 = vmatprep.subr.mxu0 %v1226
    %1709 = vmatpush1.msra.mxu0 %v1225
    %1710 = vmatprep.subr.mxu0 %v1222
    %1711 = vmatpush1.msra.mxu0 %v1221
    %1712 = vmatprep.subr.mxu0 %v1218
    %1713 = vmatpush1.msra.mxu0 %v1217
    %1714 = vmatprep.subr.mxu0 %v1214
    %1715 = vmatpush1.msra.mxu0 %v1213
    %1716 = vmatprep.subr.mxu0 0.0
    %1717 = vmatpush2.msra.mxu0 0.0
    %1718 = vmatprep.subr.mxu0 0.0
    %1719 = vmatpush2.msra.mxu0 0.0
    %1720 = vmatprep.subr.mxu0 0.0
    %1721 = vmatpush2.msra.mxu0 0.0
    %1722 = vmatprep.subr.mxu0 0.0
    %1723 = vmatpush2.msra.mxu0 0.0
    %1724 = vmatprep.subr.mxu0 0.0
    %1725 = vmatpush2.msra.mxu0 0.0
    %1726 = vmatprep.subr.mxu0 0.0
    %1727 = vmatpush2.msra.mxu0 0.0
    %1728 = vmatprep.subr.mxu0 0.0
    %1729 = vmatpush2.msra.mxu0 0.0
    %1730 = vmatprep.subr.mxu0 0.0
    %1731 = vmatpush2.msra.mxu0 0.0
    %1732 = vmatprep.subr.mxu0 0.0
    %1733 = vmatpush2.msra.mxu0 0.0
    %1734 = vmatprep.subr.mxu0 0.0
    %1735 = vmatpush2.msra.mxu0 0.0
    %1736 = vmatprep.subr.mxu0 0.0
    %1737 = vmatpush2.msra.mxu0 0.0
    %1738 = vmatprep.subr.mxu0 0.0
    %1739 = vmatpush2.msra.mxu0 0.0
    %1740 = vmatprep.subr.mxu0 0.0
    %1741 = vmatpush2.msra.mxu0 0.0
    %1742 = vmatprep.subr.mxu0 0.0
    %1743 = vmatpush2.msra.mxu0 0.0
    %1744 = vmatprep.subr.mxu0 0.0
    %1745 = vmatpush2.msra.mxu0 0.0
    %1746 = vmatprep.subr.mxu0 0.0
    %1747 = vmatpush2.msra.mxu0 0.0
    %1748 = vmatprep.mubr.f32.mxu0 0.0
    %1749 = vmatmul.mubr.f32.gmra.mxu0 %v1681
    %v1750 = vpop.f32.mrf.mxu0
    %v1751 = vadd.f32 0.0, %v1750
    %v1752 = vpop.f32.mrf.mxu0
    %v1753 = vadd.f32 0.0, %v1752
    %1754 = vdwg.mxu0
    %1755 = vmatprep.subr.mxu0 %v1276
    %1756 = vmatpush1.msra.mxu0 %v1275
    %1757 = vmatprep.subr.mxu0 %v1272
    %1758 = vmatpush1.msra.mxu0 %v1271
    %1759 = vmatprep.subr.mxu0 %v1268
    %1760 = vmatpush1.msra.mxu0 %v1267
    %1761 = vmatprep.subr.mxu0 %v1264
    %1762 = vmatpush1.msra.mxu0 %v1263
    %1763 = vmatprep.subr.mxu0 %v1260
    %1764 = vmatpush1.msra.mxu0 %v1259
    %1765 = vmatprep.subr.mxu0 %v1256
    %1766 = vmatpush1.msra.mxu0 %v1255
    %1767 = vmatprep.subr.mxu0 %v1252
    %1768 = vmatpush1.msra.mxu0 %v1251
    %1769 = vmatprep.subr.mxu0 %v1248
    %1770 = vmatpush1.msra.mxu0 %v1247
    %1771 = vmatprep.subr.mxu0 %v1244
    %1772 = vmatpush1.msra.mxu0 %v1243
    %1773 = vmatprep.subr.mxu0 %v1240
    %1774 = vmatpush1.msra.mxu0 %v1239
    %1775 = vmatprep.subr.mxu0 %v1236
    %1776 = vmatpush1.msra.mxu0 %v1235
    %1777 = vmatprep.subr.mxu0 %v1232
    %1778 = vmatpush1.msra.mxu0 %v1231
    %1779 = vmatprep.subr.mxu0 %v1228
    %1780 = vmatpush1.msra.mxu0 %v1227
    %1781 = vmatprep.subr.mxu0 %v1224
    %1782 = vmatpush1.msra.mxu0 %v1223
    %1783 = vmatprep.subr.mxu0 %v1220
    %1784 = vmatpush1.msra.mxu0 %v1219
    %1785 = vmatprep.subr.mxu0 %v1216
    %1786 = vmatpush1.msra.mxu0 %v1215
    %1787 = vmatprep.subr.mxu0 0.0
    %1788 = vmatpush2.msra.mxu0 0.0
    %1789 = vmatprep.subr.mxu0 0.0
    %1790 = vmatpush2.msra.mxu0 0.0
    %1791 = vmatprep.subr.mxu0 0.0
    %1792 = vmatpush2.msra.mxu0 0.0
    %1793 = vmatprep.subr.mxu0 0.0
    %1794 = vmatpush2.msra.mxu0 0.0
    %1795 = vmatprep.subr.mxu0 0.0
    %1796 = vmatpush2.msra.mxu0 0.0
    %1797 = vmatprep.subr.mxu0 0.0
    %1798 = vmatpush2.msra.mxu0 0.0
    %1799 = vmatprep.subr.mxu0 0.0
    %1800 = vmatpush2.msra.mxu0 0.0
    %1801 = vmatprep.subr.mxu0 0.0
    %1802 = vmatpush2.msra.mxu0 0.0
    %1803 = vmatprep.subr.mxu0 0.0
    %1804 = vmatpush2.msra.mxu0 0.0
    %1805 = vmatprep.subr.mxu0 0.0
    %1806 = vmatpush2.msra.mxu0 0.0
    %1807 = vmatprep.subr.mxu0 0.0
    %1808 = vmatpush2.msra.mxu0 0.0
    %1809 = vmatprep.subr.mxu0 0.0
    %1810 = vmatpush2.msra.mxu0 0.0
    %1811 = vmatprep.subr.mxu0 0.0
    %1812 = vmatpush2.msra.mxu0 0.0
    %1813 = vmatprep.subr.mxu0 0.0
    %1814 = vmatpush2.msra.mxu0 0.0
    %1815 = vmatprep.subr.mxu0 0.0
    %1816 = vmatpush2.msra.mxu0 0.0
    %1817 = vmatprep.subr.mxu0 0.0
    %1818 = vmatpush2.msra.mxu0 0.0
    %1819 = vmatprep.mubr.f32.mxu0 0.0
    %1820 = vmatmul.mubr.f32.gmra.mxu0 %v1681
    %v1821 = vpop.f32.mrf.mxu0
    %v1822 = vadd.f32 0.0, %v1821
    %v1823 = vpop.f32.mrf.mxu0
    %v1824 = vadd.f32 0.0, %v1823
    %1825 = vdwg.mxu0
    %v1827 = vrot.slane %v1681, 2
    %1829 = vmatprep.subr.mxu0 %v1339
    %1830 = vmatpush1.msra.mxu0 %v1338
    %1831 = vmatprep.subr.mxu0 %v1335
    %1832 = vmatpush1.msra.mxu0 %v1334
    %1833 = vmatprep.subr.mxu0 %v1331
    %1834 = vmatpush1.msra.mxu0 %v1330
    %1835 = vmatprep.subr.mxu0 %v1327
    %1836 = vmatpush1.msra.mxu0 %v1326
    %1837 = vmatprep.subr.mxu0 %v1323
    %1838 = vmatpush1.msra.mxu0 %v1322
    %1839 = vmatprep.subr.mxu0 %v1319
    %1840 = vmatpush1.msra.mxu0 %v1318
    %1841 = vmatprep.subr.mxu0 %v1315
    %1842 = vmatpush1.msra.mxu0 %v1314
    %1843 = vmatprep.subr.mxu0 %v1311
    %1844 = vmatpush1.msra.mxu0 %v1310
    %1845 = vmatprep.subr.mxu0 %v1307
    %1846 = vmatpush1.msra.mxu0 %v1306
    %1847 = vmatprep.subr.mxu0 %v1303
    %1848 = vmatpush1.msra.mxu0 %v1302
    %1849 = vmatprep.subr.mxu0 %v1299
    %1850 = vmatpush1.msra.mxu0 %v1298
    %1851 = vmatprep.subr.mxu0 %v1295
    %1852 = vmatpush1.msra.mxu0 %v1294
    %1853 = vmatprep.subr.mxu0 %v1291
    %1854 = vmatpush1.msra.mxu0 %v1290
    %1855 = vmatprep.subr.mxu0 %v1287
    %1856 = vmatpush1.msra.mxu0 %v1286
    %1857 = vmatprep.subr.mxu0 %v1283
    %1858 = vmatpush1.msra.mxu0 %v1282
    %1859 = vmatprep.subr.mxu0 %v1279
    %1860 = vmatpush1.msra.mxu0 %v1278
    %1861 = vmatprep.subr.mxu0 0.0
    %1862 = vmatpush2.msra.mxu0 0.0
    %1863 = vmatprep.subr.mxu0 0.0
    %1864 = vmatpush2.msra.mxu0 0.0
    %1865 = vmatprep.subr.mxu0 0.0
    %1866 = vmatpush2.msra.mxu0 0.0
    %1867 = vmatprep.subr.mxu0 0.0
    %1868 = vmatpush2.msra.mxu0 0.0
    %1869 = vmatprep.subr.mxu0 0.0
    %1870 = vmatpush2.msra.mxu0 0.0
    %1871 = vmatprep.subr.mxu0 0.0
    %1872 = vmatpush2.msra.mxu0 0.0
    %1873 = vmatprep.subr.mxu0 0.0
    %1874 = vmatpush2.msra.mxu0 0.0
    %1875 = vmatprep.subr.mxu0 0.0
    %1876 = vmatpush2.msra.mxu0 0.0
    %1877 = vmatprep.subr.mxu0 0.0
    %1878 = vmatpush2.msra.mxu0 0.0
    %1879 = vmatprep.subr.mxu0 0.0
    %1880 = vmatpush2.msra.mxu0 0.0
    %1881 = vmatprep.subr.mxu0 0.0
    %1882 = vmatpush2.msra.mxu0 0.0
    %1883 = vmatprep.subr.mxu0 0.0
    %1884 = vmatpush2.msra.mxu0 0.0
    %1885 = vmatprep.subr.mxu0 0.0
    %1886 = vmatpush2.msra.mxu0 0.0
    %1887 = vmatprep.subr.mxu0 0.0
    %1888 = vmatpush2.msra.mxu0 0.0
    %1889 = vmatprep.subr.mxu0 0.0
    %1890 = vmatpush2.msra.mxu0 0.0
    %1891 = vmatprep.subr.mxu0 0.0
    %1892 = vmatpush2.msra.mxu0 0.0
    %1893 = vmatprep.mubr.f32.mxu0 0.0
    %1894 = vmatmul.mubr.f32.gmra.mxu0 %v1827
    %v1895 = vpop.f32.mrf.mxu0
    %v1896 = vadd.f32 0.0, %v1895
    %v1897 = vpop.f32.mrf.mxu0
    %v1898 = vadd.f32 0.0, %v1897
    %1899 = vdwg.mxu0
    %1900 = vmatprep.subr.mxu0 %v1341
    %1901 = vmatpush1.msra.mxu0 %v1340
    %1902 = vmatprep.subr.mxu0 %v1337
    %1903 = vmatpush1.msra.mxu0 %v1336
    %1904 = vmatprep.subr.mxu0 %v1333
    %1905 = vmatpush1.msra.mxu0 %v1332
    %1906 = vmatprep.subr.mxu0 %v1329
    %1907 = vmatpush1.msra.mxu0 %v1328
    %1908 = vmatprep.subr.mxu0 %v1325
    %1909 = vmatpush1.msra.mxu0 %v1324
    %1910 = vmatprep.subr.mxu0 %v1321
    %1911 = vmatpush1.msra.mxu0 %v1320
    %1912 = vmatprep.subr.mxu0 %v1317
    %1913 = vmatpush1.msra.mxu0 %v1316
    %1914 = vmatprep.subr.mxu0 %v1313
    %1915 = vmatpush1.msra.mxu0 %v1312
    %1916 = vmatprep.subr.mxu0 %v1309
    %1917 = vmatpush1.msra.mxu0 %v1308
    %1918 = vmatprep.subr.mxu0 %v1305
    %1919 = vmatpush1.msra.mxu0 %v1304
    %1920 = vmatprep.subr.mxu0 %v1301
    %1921 = vmatpush1.msra.mxu0 %v1300
    %1922 = vmatprep.subr.mxu0 %v1297
    %1923 = vmatpush1.msra.mxu0 %v1296
    %1924 = vmatprep.subr.mxu0 %v1293
    %1925 = vmatpush1.msra.mxu0 %v1292
    %1926 = vmatprep.subr.mxu0 %v1289
    %1927 = vmatpush1.msra.mxu0 %v1288
    %1928 = vmatprep.subr.mxu0 %v1285
    %1929 = vmatpush1.msra.mxu0 %v1284
    %1930 = vmatprep.subr.mxu0 %v1281
    %1931 = vmatpush1.msra.mxu0 %v1280
    %1932 = vmatprep.subr.mxu0 0.0
    %1933 = vmatpush2.msra.mxu0 0.0
    %1934 = vmatprep.subr.mxu0 0.0
    %1935 = vmatpush2.msra.mxu0 0.0
    %1936 = vmatprep.subr.mxu0 0.0
    %1937 = vmatpush2.msra.mxu0 0.0
    %1938 = vmatprep.subr.mxu0 0.0
    %1939 = vmatpush2.msra.mxu0 0.0
    %1940 = vmatprep.subr.mxu0 0.0
    %1941 = vmatpush2.msra.mxu0 0.0
    %1942 = vmatprep.subr.mxu0 0.0
    %1943 = vmatpush2.msra.mxu0 0.0
    %1944 = vmatprep.subr.mxu0 0.0
    %1945 = vmatpush2.msra.mxu0 0.0
    %1946 = vmatprep.subr.mxu0 0.0
    %1947 = vmatpush2.msra.mxu0 0.0
    %1948 = vmatprep.subr.mxu0 0.0
    %1949 = vmatpush2.msra.mxu0 0.0
    %1950 = vmatprep.subr.mxu0 0.0
    %1951 = vmatpush2.msra.mxu0 0.0
    %1952 = vmatprep.subr.mxu0 0.0
    %1953 = vmatpush2.msra.mxu0 0.0
    %1954 = vmatprep.subr.mxu0 0.0
    %1955 = vmatpush2.msra.mxu0 0.0
    %1956 = vmatprep.subr.mxu0 0.0
    %1957 = vmatpush2.msra.mxu0 0.0
    %1958 = vmatprep.subr.mxu0 0.0
    %1959 = vmatpush2.msra.mxu0 0.0
    %1960 = vmatprep.subr.mxu0 0.0
    %1961 = vmatpush2.msra.mxu0 0.0
    %1962 = vmatprep.subr.mxu0 0.0
    %1963 = vmatpush2.msra.mxu0 0.0
    %1964 = vmatprep.mubr.f32.mxu0 0.0
    %1965 = vmatmul.mubr.f32.gmra.mxu0 %v1827
    %v1966 = vpop.f32.mrf.mxu0
    %v1967 = vadd.f32 0.0, %v1966
    %v1968 = vpop.f32.mrf.mxu0
    %v1969 = vadd.f32 0.0, %v1968
    %1970 = vdwg.mxu0
    %v1975 = vrot.slane %v1896, 6
    %v1976 = vrot.slane %v1898, 6
    %v1977 = vrot.slane %v1967, 6
    %v1978 = vrot.slane %v1969, 6
    %v1983 = vsel %vm1643, %v1751, %v1975
    %v1984 = vsel %vm1643, %v1753, %v1976
    %v1985 = vsel %vm1643, %v1822, %v1977
    %v1986 = vsel %vm1643, %v1824, %v1978
    %v1991 = vcombine.low %v1983, %v1984
    %v1992 = vcombine.low %v1985, %v1986
    %v1995 = vadd.f32 %v1682, %v1991
    %v1996 = vadd.f32 %v1683, %v1992
    %v1997 = vxor.u32 %v1995, 2147483648
    %v1998 = vxor.u32 %v1996, 2147483648
    %v1999 = vmul.f32 %v1997, 1.442695
    %v2000 = vpow.pop %v1999
    %v2001 = vmul.f32 %v1998, 1.442695
    %v2002 = vpow.pop %v2001
    %v2003 = vadd.f32 %v2000, 1.0
    %v2004 = vadd.f32 %v2002, 1.0
    %v2005 = vrcp.pop %v2003
    %v2006 = vmul.f32 1.0, %v2005
    %v2007 = vrcp.pop %v2004
    %v2008 = vmul.f32 1.0, %v2007
    %v2010 = vrot.slane %v1996, 4
    %v2012 = vtanh.pop %v2010
    %v2014 = vrot.slane %v2006, 4
    %v2016 = vmul.f32 %v2014, %v1679
    %v2017 = vmul.f32 %v2006, %v2012
    %v2018 = vadd.f32 %v2016, %v2017
    %v2019 = vtanh.pop %v2018
    %v2020 = vmul.f32 %v2008, %v2019
    %v2021 = vld [vmem:[%s1031] sm:$0xff]
    %v2022 = vld [vmem:[%s1031 + $0x8] sm:$0xff]
    %2023 = vmatprep.subr.mxu0 %v1274
    %2024 = vmatpush1.msra.mxu0 %v1273
    %2025 = vmatprep.subr.mxu0 %v1270
    %2026 = vmatpush1.msra.mxu0 %v1269
    %2027 = vmatprep.subr.mxu0 %v1266
    %2028 = vmatpush1.msra.mxu0 %v1265
    %2029 = vmatprep.subr.mxu0 %v1262
    %2030 = vmatpush1.msra.mxu0 %v1261
    %2031 = vmatprep.subr.mxu0 %v1258
    %2032 = vmatpush1.msra.mxu0 %v1257
    %2033 = vmatprep.subr.mxu0 %v1254
    %2034 = vmatpush1.msra.mxu0 %v1253
    %2035 = vmatprep.subr.mxu0 %v1250
    %2036 = vmatpush1.msra.mxu0 %v1249
    %2037 = vmatprep.subr.mxu0 %v1246
    %2038 = vmatpush1.msra.mxu0 %v1245
    %2039 = vmatprep.subr.mxu0 %v1242
    %2040 = vmatpush1.msra.mxu0 %v1241
    %2041 = vmatprep.subr.mxu0 %v1238
    %2042 = vmatpush1.msra.mxu0 %v1237
    %2043 = vmatprep.subr.mxu0 %v1234
    %2044 = vmatpush1.msra.mxu0 %v1233
    %2045 = vmatprep.subr.mxu0 %v1230
    %2046 = vmatpush1.msra.mxu0 %v1229
    %2047 = vmatprep.subr.mxu0 %v1226
    %2048 = vmatpush1.msra.mxu0 %v1225
    %2049 = vmatprep.subr.mxu0 %v1222
    %2050 = vmatpush1.msra.mxu0 %v1221
    %2051 = vmatprep.subr.mxu0 %v1218
    %2052 = vmatpush1.msra.mxu0 %v1217
    %2053 = vmatprep.subr.mxu0 %v1214
    %2054 = vmatpush1.msra.mxu0 %v1213
    %2055 = vmatprep.subr.mxu0 0.0
    %2056 = vmatpush2.msra.mxu0 0.0
    %2057 = vmatprep.subr.mxu0 0.0
    %2058 = vmatpush2.msra.mxu0 0.0
    %2059 = vmatprep.subr.mxu0 0.0
    %2060 = vmatpush2.msra.mxu0 0.0
    %2061 = vmatprep.subr.mxu0 0.0
    %2062 = vmatpush2.msra.mxu0 0.0
    %2063 = vmatprep.subr.mxu0 0.0
    %2064 = vmatpush2.msra.mxu0 0.0
    %2065 = vmatprep.subr.mxu0 0.0
    %2066 = vmatpush2.msra.mxu0 0.0
    %2067 = vmatprep.subr.mxu0 0.0
    %2068 = vmatpush2.msra.mxu0 0.0
    %2069 = vmatprep.subr.mxu0 0.0
    %2070 = vmatpush2.msra.mxu0 0.0
    %2071 = vmatprep.subr.mxu0 0.0
    %2072 = vmatpush2.msra.mxu0 0.0
    %2073 = vmatprep.subr.mxu0 0.0
    %2074 = vmatpush2.msra.mxu0 0.0
    %2075 = vmatprep.subr.mxu0 0.0
    %2076 = vmatpush2.msra.mxu0 0.0
    %2077 = vmatprep.subr.mxu0 0.0
    %2078 = vmatpush2.msra.mxu0 0.0
    %2079 = vmatprep.subr.mxu0 0.0
    %2080 = vmatpush2.msra.mxu0 0.0
    %2081 = vmatprep.subr.mxu0 0.0
    %2082 = vmatpush2.msra.mxu0 0.0
    %2083 = vmatprep.subr.mxu0 0.0
    %2084 = vmatpush2.msra.mxu0 0.0
    %2085 = vmatprep.subr.mxu0 0.0
    %2086 = vmatpush2.msra.mxu0 0.0
    %2087 = vmatprep.mubr.f32.mxu0 0.0
    %2088 = vmatmul.mubr.f32.gmra.mxu0 %v2020
    %v2089 = vpop.f32.mrf.mxu0
    %v2090 = vadd.f32 0.0, %v2089
    %v2091 = vpop.f32.mrf.mxu0
    %v2092 = vadd.f32 0.0, %v2091
    %2093 = vdwg.mxu0
    %2094 = vmatprep.subr.mxu0 %v1276
    %2095 = vmatpush1.msra.mxu0 %v1275
    %2096 = vmatprep.subr.mxu0 %v1272
    %2097 = vmatpush1.msra.mxu0 %v1271
    %2098 = vmatprep.subr.mxu0 %v1268
    %2099 = vmatpush1.msra.mxu0 %v1267
    %2100 = vmatprep.subr.mxu0 %v1264
    %2101 = vmatpush1.msra.mxu0 %v1263
    %2102 = vmatprep.subr.mxu0 %v1260
    %2103 = vmatpush1.msra.mxu0 %v1259
    %2104 = vmatprep.subr.mxu0 %v1256
    %2105 = vmatpush1.msra.mxu0 %v1255
    %2106 = vmatprep.subr.mxu0 %v1252
    %2107 = vmatpush1.msra.mxu0 %v1251
    %2108 = vmatprep.subr.mxu0 %v1248
    %2109 = vmatpush1.msra.mxu0 %v1247
    %2110 = vmatprep.subr.mxu0 %v1244
    %2111 = vmatpush1.msra.mxu0 %v1243
    %2112 = vmatprep.subr.mxu0 %v1240
    %2113 = vmatpush1.msra.mxu0 %v1239
    %2114 = vmatprep.subr.mxu0 %v1236
    %2115 = vmatpush1.msra.mxu0 %v1235
    %2116 = vmatprep.subr.mxu0 %v1232
    %2117 = vmatpush1.msra.mxu0 %v1231
    %2118 = vmatprep.subr.mxu0 %v1228
    %2119 = vmatpush1.msra.mxu0 %v1227
    %2120 = vmatprep.subr.mxu0 %v1224
    %2121 = vmatpush1.msra.mxu0 %v1223
    %2122 = vmatprep.subr.mxu0 %v1220
    %2123 = vmatpush1.msra.mxu0 %v1219
    %2124 = vmatprep.subr.mxu0 %v1216
    %2125 = vmatpush1.msra.mxu0 %v1215
    %2126 = vmatprep.subr.mxu0 0.0
    %2127 = vmatpush2.msra.mxu0 0.0
    %2128 = vmatprep.subr.mxu0 0.0
    %2129 = vmatpush2.msra.mxu0 0.0
    %2130 = vmatprep.subr.mxu0 0.0
    %2131 = vmatpush2.msra.mxu0 0.0
    %2132 = vmatprep.subr.mxu0 0.0
    %2133 = vmatpush2.msra.mxu0 0.0
    %2134 = vmatprep.subr.mxu0 0.0
    %2135 = vmatpush2.msra.mxu0 0.0
    %2136 = vmatprep.subr.mxu0 0.0
    %2137 = vmatpush2.msra.mxu0 0.0
    %2138 = vmatprep.subr.mxu0 0.0
    %2139 = vmatpush2.msra.mxu0 0.0
    %2140 = vmatprep.subr.mxu0 0.0
    %2141 = vmatpush2.msra.mxu0 0.0
    %2142 = vmatprep.subr.mxu0 0.0
    %2143 = vmatpush2.msra.mxu0 0.0
    %2144 = vmatprep.subr.mxu0 0.0
    %2145 = vmatpush2.msra.mxu0 0.0
    %2146 = vmatprep.subr.mxu0 0.0
    %2147 = vmatpush2.msra.mxu0 0.0
    %2148 = vmatprep.subr.mxu0 0.0
    %2149 = vmatpush2.msra.mxu0 0.0
    %2150 = vmatprep.subr.mxu0 0.0
    %2151 = vmatpush2.msra.mxu0 0.0
    %2152 = vmatprep.subr.mxu0 0.0
    %2153 = vmatpush2.msra.mxu0 0.0
    %2154 = vmatprep.subr.mxu0 0.0
    %2155 = vmatpush2.msra.mxu0 0.0
    %2156 = vmatprep.subr.mxu0 0.0
    %2157 = vmatpush2.msra.mxu0 0.0
    %2158 = vmatprep.mubr.f32.mxu0 0.0
    %2159 = vmatmul.mubr.f32.gmra.mxu0 %v2020
    %v2160 = vpop.f32.mrf.mxu0
    %v2161 = vadd.f32 0.0, %v2160
    %v2162 = vpop.f32.mrf.mxu0
    %v2163 = vadd.f32 0.0, %v2162
    %2164 = vdwg.mxu0
    %v2166 = vrot.slane %v2020, 2
    %2168 = vmatprep.subr.mxu0 %v1339
    %2169 = vmatpush1.msra.mxu0 %v1338
    %2170 = vmatprep.subr.mxu0 %v1335
    %2171 = vmatpush1.msra.mxu0 %v1334
    %2172 = vmatprep.subr.mxu0 %v1331
    %2173 = vmatpush1.msra.mxu0 %v1330
    %2174 = vmatprep.subr.mxu0 %v1327
    %2175 = vmatpush1.msra.mxu0 %v1326
    %2176 = vmatprep.subr.mxu0 %v1323
    %2177 = vmatpush1.msra.mxu0 %v1322
    %2178 = vmatprep.subr.mxu0 %v1319
    %2179 = vmatpush1.msra.mxu0 %v1318
    %2180 = vmatprep.subr.mxu0 %v1315
    %2181 = vmatpush1.msra.mxu0 %v1314
    %2182 = vmatprep.subr.mxu0 %v1311
    %2183 = vmatpush1.msra.mxu0 %v1310
    %2184 = vmatprep.subr.mxu0 %v1307
    %2185 = vmatpush1.msra.mxu0 %v1306
    %2186 = vmatprep.subr.mxu0 %v1303
    %2187 = vmatpush1.msra.mxu0 %v1302
    %2188 = vmatprep.subr.mxu0 %v1299
    %2189 = vmatpush1.msra.mxu0 %v1298
    %2190 = vmatprep.subr.mxu0 %v1295
    %2191 = vmatpush1.msra.mxu0 %v1294
    %2192 = vmatprep.subr.mxu0 %v1291
    %2193 = vmatpush1.msra.mxu0 %v1290
    %2194 = vmatprep.subr.mxu0 %v1287
    %2195 = vmatpush1.msra.mxu0 %v1286
    %2196 = vmatprep.subr.mxu0 %v1283
    %2197 = vmatpush1.msra.mxu0 %v1282
    %2198 = vmatprep.subr.mxu0 %v1279
    %2199 = vmatpush1.msra.mxu0 %v1278
    %2200 = vmatprep.subr.mxu0 0.0
    %2201 = vmatpush2.msra.mxu0 0.0
    %2202 = vmatprep.subr.mxu0 0.0
    %2203 = vmatpush2.msra.mxu0 0.0
    %2204 = vmatprep.subr.mxu0 0.0
    %2205 = vmatpush2.msra.mxu0 0.0
    %2206 = vmatprep.subr.mxu0 0.0
    %2207 = vmatpush2.msra.mxu0 0.0
    %2208 = vmatprep.subr.mxu0 0.0
    %2209 = vmatpush2.msra.mxu0 0.0
    %2210 = vmatprep.subr.mxu0 0.0
    %2211 = vmatpush2.msra.mxu0 0.0
    %2212 = vmatprep.subr.mxu0 0.0
    %2213 = vmatpush2.msra.mxu0 0.0
    %2214 = vmatprep.subr.mxu0 0.0
    %2215 = vmatpush2.msra.mxu0 0.0
    %2216 = vmatprep.subr.mxu0 0.0
    %2217 = vmatpush2.msra.mxu0 0.0
    %2218 = vmatprep.subr.mxu0 0.0
    %2219 = vmatpush2.msra.mxu0 0.0
    %2220 = vmatprep.subr.mxu0 0.0
    %2221 = vmatpush2.msra.mxu0 0.0
    %2222 = vmatprep.subr.mxu0 0.0
    %2223 = vmatpush2.msra.mxu0 0.0
    %2224 = vmatprep.subr.mxu0 0.0
    %2225 = vmatpush2.msra.mxu0 0.0
    %2226 = vmatprep.subr.mxu0 0.0
    %2227 = vmatpush2.msra.mxu0 0.0
    %2228 = vmatprep.subr.mxu0 0.0
    %2229 = vmatpush2.msra.mxu0 0.0
    %2230 = vmatprep.subr.mxu0 0.0
    %2231 = vmatpush2.msra.mxu0 0.0
    %2232 = vmatprep.mubr.f32.mxu0 0.0
    %2233 = vmatmul.mubr.f32.gmra.mxu0 %v2166
    %v2234 = vpop.f32.mrf.mxu0
    %v2235 = vadd.f32 0.0, %v2234
    %v2236 = vpop.f32.mrf.mxu0
    %v2237 = vadd.f32 0.0, %v2236
    %2238 = vdwg.mxu0
    %2239 = vmatprep.subr.mxu0 %v1341
    %2240 = vmatpush1.msra.mxu0 %v1340
    %2241 = vmatprep.subr.mxu0 %v1337
    %2242 = vmatpush1.msra.mxu0 %v1336
    %2243 = vmatprep.subr.mxu0 %v1333
    %2244 = vmatpush1.msra.mxu0 %v1332
    %2245 = vmatprep.subr.mxu0 %v1329
    %2246 = vmatpush1.msra.mxu0 %v1328
    %2247 = vmatprep.subr.mxu0 %v1325
    %2248 = vmatpush1.msra.mxu0 %v1324
    %2249 = vmatprep.subr.mxu0 %v1321
    %2250 = vmatpush1.msra.mxu0 %v1320
    %2251 = vmatprep.subr.mxu0 %v1317
    %2252 = vmatpush1.msra.mxu0 %v1316
    %2253 = vmatprep.subr.mxu0 %v1313
    %2254 = vmatpush1.msra.mxu0 %v1312
    %2255 = vmatprep.subr.mxu0 %v1309
    %2256 = vmatpush1.msra.mxu0 %v1308
    %2257 = vmatprep.subr.mxu0 %v1305
    %2258 = vmatpush1.msra.mxu0 %v1304
    %2259 = vmatprep.subr.mxu0 %v1301
    %2260 = vmatpush1.msra.mxu0 %v1300
    %2261 = vmatprep.subr.mxu0 %v1297
    %2262 = vmatpush1.msra.mxu0 %v1296
    %2263 = vmatprep.subr.mxu0 %v1293
    %2264 = vmatpush1.msra.mxu0 %v1292
    %2265 = vmatprep.subr.mxu0 %v1289
    %2266 = vmatpush1.msra.mxu0 %v1288
    %2267 = vmatprep.subr.mxu0 %v1285
    %2268 = vmatpush1.msra.mxu0 %v1284
    %2269 = vmatprep.subr.mxu0 %v1281
    %2270 = vmatpush1.msra.mxu0 %v1280
    %2271 = vmatprep.subr.mxu0 0.0
    %2272 = vmatpush2.msra.mxu0 0.0
    %2273 = vmatprep.subr.mxu0 0.0
    %2274 = vmatpush2.msra.mxu0 0.0
    %2275 = vmatprep.subr.mxu0 0.0
    %2276 = vmatpush2.msra.mxu0 0.0
    %2277 = vmatprep.subr.mxu0 0.0
    %2278 = vmatpush2.msra.mxu0 0.0
    %2279 = vmatprep.subr.mxu0 0.0
    %2280 = vmatpush2.msra.mxu0 0.0
    %2281 = vmatprep.subr.mxu0 0.0
    %2282 = vmatpush2.msra.mxu0 0.0
    %2283 = vmatprep.subr.mxu0 0.0
    %2284 = vmatpush2.msra.mxu0 0.0
    %2285 = vmatprep.subr.mxu0 0.0
    %2286 = vmatpush2.msra.mxu0 0.0
    %2287 = vmatprep.subr.mxu0 0.0
    %2288 = vmatpush2.msra.mxu0 0.0
    %2289 = vmatprep.subr.mxu0 0.0
    %2290 = vmatpush2.msra.mxu0 0.0
    %2291 = vmatprep.subr.mxu0 0.0
    %2292 = vmatpush2.msra.mxu0 0.0
    %2293 = vmatprep.subr.mxu0 0.0
    %2294 = vmatpush2.msra.mxu0 0.0
    %2295 = vmatprep.subr.mxu0 0.0
    %2296 = vmatpush2.msra.mxu0 0.0
    %2297 = vmatprep.subr.mxu0 0.0
    %2298 = vmatpush2.msra.mxu0 0.0
    %2299 = vmatprep.subr.mxu0 0.0
    %2300 = vmatpush2.msra.mxu0 0.0
    %2301 = vmatprep.subr.mxu0 0.0
    %2302 = vmatpush2.msra.mxu0 0.0
    %2303 = vmatprep.mubr.f32.mxu0 0.0
    %2304 = vmatmul.mubr.f32.gmra.mxu0 %v2166
    %v2305 = vpop.f32.mrf.mxu0
    %v2306 = vadd.f32 0.0, %v2305
    %v2307 = vpop.f32.mrf.mxu0
    %v2308 = vadd.f32 0.0, %v2307
    %2309 = vdwg.mxu0
    %v2314 = vrot.slane %v2235, 6
    %v2315 = vrot.slane %v2237, 6
    %v2316 = vrot.slane %v2306, 6
    %v2317 = vrot.slane %v2308, 6
    %v2322 = vsel %vm1643, %v2090, %v2314
    %v2323 = vsel %vm1643, %v2092, %v2315
    %v2324 = vsel %vm1643, %v2161, %v2316
    %v2325 = vsel %vm1643, %v2163, %v2317
    %v2330 = vcombine.low %v2322, %v2323
    %v2331 = vcombine.low %v2324, %v2325
    %v2334 = vadd.f32 %v2021, %v2330
    %v2335 = vadd.f32 %v2022, %v2331
    %v2336 = vxor.u32 %v2334, 2147483648
    %v2337 = vxor.u32 %v2335, 2147483648
    %v2338 = vmul.f32 %v2336, 1.442695
    %v2339 = vpow.pop %v2338
    %v2340 = vmul.f32 %v2337, 1.442695
    %v2341 = vpow.pop %v2340
    %v2342 = vadd.f32 %v2339, 1.0
    %v2343 = vadd.f32 %v2341, 1.0
    %v2344 = vrcp.pop %v2342
    %v2345 = vmul.f32 1.0, %v2344
    %v2346 = vrcp.pop %v2343
    %v2347 = vmul.f32 1.0, %v2346
    %v2349 = vrot.slane %v2335, 4
    %v2351 = vtanh.pop %v2349
    %v2353 = vrot.slane %v2345, 4
    %v2355 = vmul.f32 %v2353, %v2018
    %v2356 = vmul.f32 %v2345, %v2351
    %v2357 = vadd.f32 %v2355, %v2356
    %v2358 = vtanh.pop %v2357
    %v2359 = vmul.f32 %v2347, %v2358
    %v2360 = vld [vmem:[%s1063] sm:$0xff]
    %v2361 = vld [vmem:[%s1063 + $0x8] sm:$0xff]
    %2362 = vmatprep.subr.mxu0 %v1274
    %2363 = vmatpush1.msra.mxu0 %v1273
    %2364 = vmatprep.subr.mxu0 %v1270
    %2365 = vmatpush1.msra.mxu0 %v1269
    %2366 = vmatprep.subr.mxu0 %v1266
    %2367 = vmatpush1.msra.mxu0 %v1265
    %2368 = vmatprep.subr.mxu0 %v1262
    %2369 = vmatpush1.msra.mxu0 %v1261
    %2370 = vmatprep.subr.mxu0 %v1258
    %2371 = vmatpush1.msra.mxu0 %v1257
    %2372 = vmatprep.subr.mxu0 %v1254
    %2373 = vmatpush1.msra.mxu0 %v1253
    %2374 = vmatprep.subr.mxu0 %v1250
    %2375 = vmatpush1.msra.mxu0 %v1249
    %2376 = vmatprep.subr.mxu0 %v1246
    %2377 = vmatpush1.msra.mxu0 %v1245
    %2378 = vmatprep.subr.mxu0 %v1242
    %2379 = vmatpush1.msra.mxu0 %v1241
    %2380 = vmatprep.subr.mxu0 %v1238
    %2381 = vmatpush1.msra.mxu0 %v1237
    %2382 = vmatprep.subr.mxu0 %v1234
    %2383 = vmatpush1.msra.mxu0 %v1233
    %2384 = vmatprep.subr.mxu0 %v1230
    %2385 = vmatpush1.msra.mxu0 %v1229
    %2386 = vmatprep.subr.mxu0 %v1226
    %2387 = vmatpush1.msra.mxu0 %v1225
    %2388 = vmatprep.subr.mxu0 %v1222
    %2389 = vmatpush1.msra.mxu0 %v1221
    %2390 = vmatprep.subr.mxu0 %v1218
    %2391 = vmatpush1.msra.mxu0 %v1217
    %2392 = vmatprep.subr.mxu0 %v1214
    %2393 = vmatpush1.msra.mxu0 %v1213
    %2394 = vmatprep.subr.mxu0 0.0
    %2395 = vmatpush2.msra.mxu0 0.0
    %2396 = vmatprep.subr.mxu0 0.0
    %2397 = vmatpush2.msra.mxu0 0.0
    %2398 = vmatprep.subr.mxu0 0.0
    %2399 = vmatpush2.msra.mxu0 0.0
    %2400 = vmatprep.subr.mxu0 0.0
    %2401 = vmatpush2.msra.mxu0 0.0
    %2402 = vmatprep.subr.mxu0 0.0
    %2403 = vmatpush2.msra.mxu0 0.0
    %2404 = vmatprep.subr.mxu0 0.0
    %2405 = vmatpush2.msra.mxu0 0.0
    %2406 = vmatprep.subr.mxu0 0.0
    %2407 = vmatpush2.msra.mxu0 0.0
    %2408 = vmatprep.subr.mxu0 0.0
    %2409 = vmatpush2.msra.mxu0 0.0
    %2410 = vmatprep.subr.mxu0 0.0
    %2411 = vmatpush2.msra.mxu0 0.0
    %2412 = vmatprep.subr.mxu0 0.0
    %2413 = vmatpush2.msra.mxu0 0.0
    %2414 = vmatprep.subr.mxu0 0.0
    %2415 = vmatpush2.msra.mxu0 0.0
    %2416 = vmatprep.subr.mxu0 0.0
    %2417 = vmatpush2.msra.mxu0 0.0
    %2418 = vmatprep.subr.mxu0 0.0
    %2419 = vmatpush2.msra.mxu0 0.0
    %2420 = vmatprep.subr.mxu0 0.0
    %2421 = vmatpush2.msra.mxu0 0.0
    %2422 = vmatprep.subr.mxu0 0.0
    %2423 = vmatpush2.msra.mxu0 0.0
    %2424 = vmatprep.subr.mxu0 0.0
    %2425 = vmatpush2.msra.mxu0 0.0
    %2426 = vmatprep.mubr.f32.mxu0 0.0
    %2427 = vmatmul.mubr.f32.gmra.mxu0 %v2359
    %v2428 = vpop.f32.mrf.mxu0
    %v2429 = vadd.f32 0.0, %v2428
    %v2430 = vpop.f32.mrf.mxu0
    %v2431 = vadd.f32 0.0, %v2430
    %2432 = vdwg.mxu0
    %2433 = vmatprep.subr.mxu0 %v1276
    %2434 = vmatpush1.msra.mxu0 %v1275
    %2435 = vmatprep.subr.mxu0 %v1272
    %2436 = vmatpush1.msra.mxu0 %v1271
    %2437 = vmatprep.subr.mxu0 %v1268
    %2438 = vmatpush1.msra.mxu0 %v1267
    %2439 = vmatprep.subr.mxu0 %v1264
    %2440 = vmatpush1.msra.mxu0 %v1263
    %2441 = vmatprep.subr.mxu0 %v1260
    %2442 = vmatpush1.msra.mxu0 %v1259
    %2443 = vmatprep.subr.mxu0 %v1256
    %2444 = vmatpush1.msra.mxu0 %v1255
    %2445 = vmatprep.subr.mxu0 %v1252
    %2446 = vmatpush1.msra.mxu0 %v1251
    %2447 = vmatprep.subr.mxu0 %v1248
    %2448 = vmatpush1.msra.mxu0 %v1247
    %2449 = vmatprep.subr.mxu0 %v1244
    %2450 = vmatpush1.msra.mxu0 %v1243
    %2451 = vmatprep.subr.mxu0 %v1240
    %2452 = vmatpush1.msra.mxu0 %v1239
    %2453 = vmatprep.subr.mxu0 %v1236
    %2454 = vmatpush1.msra.mxu0 %v1235
    %2455 = vmatprep.subr.mxu0 %v1232
    %2456 = vmatpush1.msra.mxu0 %v1231
    %2457 = vmatprep.subr.mxu0 %v1228
    %2458 = vmatpush1.msra.mxu0 %v1227
    %2459 = vmatprep.subr.mxu0 %v1224
    %2460 = vmatpush1.msra.mxu0 %v1223
    %2461 = vmatprep.subr.mxu0 %v1220
    %2462 = vmatpush1.msra.mxu0 %v1219
    %2463 = vmatprep.subr.mxu0 %v1216
    %2464 = vmatpush1.msra.mxu0 %v1215
    %2465 = vmatprep.subr.mxu0 0.0
    %2466 = vmatpush2.msra.mxu0 0.0
    %2467 = vmatprep.subr.mxu0 0.0
    %2468 = vmatpush2.msra.mxu0 0.0
    %2469 = vmatprep.subr.mxu0 0.0
    %2470 = vmatpush2.msra.mxu0 0.0
    %2471 = vmatprep.subr.mxu0 0.0
    %2472 = vmatpush2.msra.mxu0 0.0
    %2473 = vmatprep.subr.mxu0 0.0
    %2474 = vmatpush2.msra.mxu0 0.0
    %2475 = vmatprep.subr.mxu0 0.0
    %2476 = vmatpush2.msra.mxu0 0.0
    %2477 = vmatprep.subr.mxu0 0.0
    %2478 = vmatpush2.msra.mxu0 0.0
    %2479 = vmatprep.subr.mxu0 0.0
    %2480 = vmatpush2.msra.mxu0 0.0
    %2481 = vmatprep.subr.mxu0 0.0
    %2482 = vmatpush2.msra.mxu0 0.0
    %2483 = vmatprep.subr.mxu0 0.0
    %2484 = vmatpush2.msra.mxu0 0.0
    %2485 = vmatprep.subr.mxu0 0.0
    %2486 = vmatpush2.msra.mxu0 0.0
    %2487 = vmatprep.subr.mxu0 0.0
    %2488 = vmatpush2.msra.mxu0 0.0
    %2489 = vmatprep.subr.mxu0 0.0
    %2490 = vmatpush2.msra.mxu0 0.0
    %2491 = vmatprep.subr.mxu0 0.0
    %2492 = vmatpush2.msra.mxu0 0.0
    %2493 = vmatprep.subr.mxu0 0.0
    %2494 = vmatpush2.msra.mxu0 0.0
    %2495 = vmatprep.subr.mxu0 0.0
    %2496 = vmatpush2.msra.mxu0 0.0
    %2497 = vmatprep.mubr.f32.mxu0 0.0
    %2498 = vmatmul.mubr.f32.gmra.mxu0 %v2359
    %v2499 = vpop.f32.mrf.mxu0
    %v2500 = vadd.f32 0.0, %v2499
    %v2501 = vpop.f32.mrf.mxu0
    %v2502 = vadd.f32 0.0, %v2501
    %2503 = vdwg.mxu0
    %v2505 = vrot.slane %v2359, 2
    %2507 = vmatprep.subr.mxu0 %v1339
    %2508 = vmatpush1.msra.mxu0 %v1338
    %2509 = vmatprep.subr.mxu0 %v1335
    %2510 = vmatpush1.msra.mxu0 %v1334
    %2511 = vmatprep.subr.mxu0 %v1331
    %2512 = vmatpush1.msra.mxu0 %v1330
    %2513 = vmatprep.subr.mxu0 %v1327
    %2514 = vmatpush1.msra.mxu0 %v1326
    %2515 = vmatprep.subr.mxu0 %v1323
    %2516 = vmatpush1.msra.mxu0 %v1322
    %2517 = vmatprep.subr.mxu0 %v1319
    %2518 = vmatpush1.msra.mxu0 %v1318
    %2519 = vmatprep.subr.mxu0 %v1315
    %2520 = vmatpush1.msra.mxu0 %v1314
    %2521 = vmatprep.subr.mxu0 %v1311
    %2522 = vmatpush1.msra.mxu0 %v1310
    %2523 = vmatprep.subr.mxu0 %v1307
    %2524 = vmatpush1.msra.mxu0 %v1306
    %2525 = vmatprep.subr.mxu0 %v1303
    %2526 = vmatpush1.msra.mxu0 %v1302
    %2527 = vmatprep.subr.mxu0 %v1299
    %2528 = vmatpush1.msra.mxu0 %v1298
    %2529 = vmatprep.subr.mxu0 %v1295
    %2530 = vmatpush1.msra.mxu0 %v1294
    %2531 = vmatprep.subr.mxu0 %v1291
    %2532 = vmatpush1.msra.mxu0 %v1290
    %2533 = vmatprep.subr.mxu0 %v1287
    %2534 = vmatpush1.msra.mxu0 %v1286
    %2535 = vmatprep.subr.mxu0 %v1283
    %2536 = vmatpush1.msra.mxu0 %v1282
    %2537 = vmatprep.subr.mxu0 %v1279
    %2538 = vmatpush1.msra.mxu0 %v1278
    %2539 = vmatprep.subr.mxu0 0.0
    %2540 = vmatpush2.msra.mxu0 0.0
    %2541 = vmatprep.subr.mxu0 0.0
    %2542 = vmatpush2.msra.mxu0 0.0
    %2543 = vmatprep.subr.mxu0 0.0
    %2544 = vmatpush2.msra.mxu0 0.0
    %2545 = vmatprep.subr.mxu0 0.0
    %2546 = vmatpush2.msra.mxu0 0.0
    %2547 = vmatprep.subr.mxu0 0.0
    %2548 = vmatpush2.msra.mxu0 0.0
    %2549 = vmatprep.subr.mxu0 0.0
    %2550 = vmatpush2.msra.mxu0 0.0
    %2551 = vmatprep.subr.mxu0 0.0
    %2552 = vmatpush2.msra.mxu0 0.0
    %2553 = vmatprep.subr.mxu0 0.0
    %2554 = vmatpush2.msra.mxu0 0.0
    %2555 = vmatprep.subr.mxu0 0.0
    %2556 = vmatpush2.msra.mxu0 0.0
    %2557 = vmatprep.subr.mxu0 0.0
    %2558 = vmatpush2.msra.mxu0 0.0
    %2559 = vmatprep.subr.mxu0 0.0
    %2560 = vmatpush2.msra.mxu0 0.0
    %2561 = vmatprep.subr.mxu0 0.0
    %2562 = vmatpush2.msra.mxu0 0.0
    %2563 = vmatprep.subr.mxu0 0.0
    %2564 = vmatpush2.msra.mxu0 0.0
    %2565 = vmatprep.subr.mxu0 0.0
    %2566 = vmatpush2.msra.mxu0 0.0
    %2567 = vmatprep.subr.mxu0 0.0
    %2568 = vmatpush2.msra.mxu0 0.0
    %2569 = vmatprep.subr.mxu0 0.0
    %2570 = vmatpush2.msra.mxu0 0.0
    %2571 = vmatprep.mubr.f32.mxu0 0.0
    %2572 = vmatmul.mubr.f32.gmra.mxu0 %v2505
    %v2573 = vpop.f32.mrf.mxu0
    %v2574 = vadd.f32 0.0, %v2573
    %v2575 = vpop.f32.mrf.mxu0
    %v2576 = vadd.f32 0.0, %v2575
    %2577 = vdwg.mxu0
    %2578 = vmatprep.subr.mxu0 %v1341
    %2579 = vmatpush1.msra.mxu0 %v1340
    %2580 = vmatprep.subr.mxu0 %v1337
    %2581 = vmatpush1.msra.mxu0 %v1336
    %2582 = vmatprep.subr.mxu0 %v1333
    %2583 = vmatpush1.msra.mxu0 %v1332
    %2584 = vmatprep.subr.mxu0 %v1329
    %2585 = vmatpush1.msra.mxu0 %v1328
    %2586 = vmatprep.subr.mxu0 %v1325
    %2587 = vmatpush1.msra.mxu0 %v1324
    %2588 = vmatprep.subr.mxu0 %v1321
    %2589 = vmatpush1.msra.mxu0 %v1320
    %2590 = vmatprep.subr.mxu0 %v1317
    %2591 = vmatpush1.msra.mxu0 %v1316
    %2592 = vmatprep.subr.mxu0 %v1313
    %2593 = vmatpush1.msra.mxu0 %v1312
    %2594 = vmatprep.subr.mxu0 %v1309
    %2595 = vmatpush1.msra.mxu0 %v1308
    %2596 = vmatprep.subr.mxu0 %v1305
    %2597 = vmatpush1.msra.mxu0 %v1304
    %2598 = vmatprep.subr.mxu0 %v1301
    %2599 = vmatpush1.msra.mxu0 %v1300
    %2600 = vmatprep.subr.mxu0 %v1297
    %2601 = vmatpush1.msra.mxu0 %v1296
    %2602 = vmatprep.subr.mxu0 %v1293
    %2603 = vmatpush1.msra.mxu0 %v1292
    %2604 = vmatprep.subr.mxu0 %v1289
    %2605 = vmatpush1.msra.mxu0 %v1288
    %2606 = vmatprep.subr.mxu0 %v1285
    %2607 = vmatpush1.msra.mxu0 %v1284
    %2608 = vmatprep.subr.mxu0 %v1281
    %2609 = vmatpush1.msra.mxu0 %v1280
    %2610 = vmatprep.subr.mxu0 0.0
    %2611 = vmatpush2.msra.mxu0 0.0
    %2612 = vmatprep.subr.mxu0 0.0
    %2613 = vmatpush2.msra.mxu0 0.0
    %2614 = vmatprep.subr.mxu0 0.0
    %2615 = vmatpush2.msra.mxu0 0.0
    %2616 = vmatprep.subr.mxu0 0.0
    %2617 = vmatpush2.msra.mxu0 0.0
    %2618 = vmatprep.subr.mxu0 0.0
    %2619 = vmatpush2.msra.mxu0 0.0
    %2620 = vmatprep.subr.mxu0 0.0
    %2621 = vmatpush2.msra.mxu0 0.0
    %2622 = vmatprep.subr.mxu0 0.0
    %2623 = vmatpush2.msra.mxu0 0.0
    %2624 = vmatprep.subr.mxu0 0.0
    %2625 = vmatpush2.msra.mxu0 0.0
    %2626 = vmatprep.subr.mxu0 0.0
    %2627 = vmatpush2.msra.mxu0 0.0
    %2628 = vmatprep.subr.mxu0 0.0
    %2629 = vmatpush2.msra.mxu0 0.0
    %2630 = vmatprep.subr.mxu0 0.0
    %2631 = vmatpush2.msra.mxu0 0.0
    %2632 = vmatprep.subr.mxu0 0.0
    %2633 = vmatpush2.msra.mxu0 0.0
    %2634 = vmatprep.subr.mxu0 0.0
    %2635 = vmatpush2.msra.mxu0 0.0
    %2636 = vmatprep.subr.mxu0 0.0
    %2637 = vmatpush2.msra.mxu0 0.0
    %2638 = vmatprep.subr.mxu0 0.0
    %2639 = vmatpush2.msra.mxu0 0.0
    %2640 = vmatprep.subr.mxu0 0.0
    %2641 = vmatpush2.msra.mxu0 0.0
    %2642 = vmatprep.mubr.f32.mxu0 0.0
    %2643 = vmatmul.mubr.f32.gmra.mxu0 %v2505
    %v2644 = vpop.f32.mrf.mxu0
    %v2645 = vadd.f32 0.0, %v2644
    %v2646 = vpop.f32.mrf.mxu0
    %v2647 = vadd.f32 0.0, %v2646
    %2648 = vdwg.mxu0
    %v2653 = vrot.slane %v2574, 6
    %v2654 = vrot.slane %v2576, 6
    %v2655 = vrot.slane %v2645, 6
    %v2656 = vrot.slane %v2647, 6
    %v2661 = vsel %vm1643, %v2429, %v2653
    %v2662 = vsel %vm1643, %v2431, %v2654
    %v2663 = vsel %vm1643, %v2500, %v2655
    %v2664 = vsel %vm1643, %v2502, %v2656
    %v2669 = vcombine.low %v2661, %v2662
    %v2670 = vcombine.low %v2663, %v2664
    %v2673 = vadd.f32 %v2360, %v2669
    %v2674 = vadd.f32 %v2361, %v2670
    %v2675 = vxor.u32 %v2673, 2147483648
    %v2676 = vxor.u32 %v2674, 2147483648
    %v2677 = vmul.f32 %v2675, 1.442695
    %v2678 = vpow.pop %v2677
    %v2679 = vmul.f32 %v2676, 1.442695
    %v2680 = vpow.pop %v2679
    %v2681 = vadd.f32 %v2678, 1.0
    %v2682 = vadd.f32 %v2680, 1.0
    %v2683 = vrcp.pop %v2681
    %v2684 = vmul.f32 1.0, %v2683
    %v2685 = vrcp.pop %v2682
    %v2686 = vmul.f32 1.0, %v2685
    %v2688 = vrot.slane %v2674, 4
    %v2690 = vtanh.pop %v2688
    %v2692 = vrot.slane %v2684, 4
    %v2694 = vmul.f32 %v2692, %v2357
    %v2695 = vmul.f32 %v2684, %v2690
    %v2696 = vadd.f32 %v2694, %v2695
    %v2697 = vtanh.pop %v2696
    %v2698 = vmul.f32 %v2686, %v2697
    %v2699 = vld [vmem:[%s1091] sm:$0xff]
    %v2700 = vld [vmem:[%s1091 + $0x8] sm:$0xff]
    %2701 = vmatprep.subr.mxu0 %v1274
    %2702 = vmatpush1.msra.mxu0 %v1273
    %2703 = vmatprep.subr.mxu0 %v1270
    %2704 = vmatpush1.msra.mxu0 %v1269
    %2705 = vmatprep.subr.mxu0 %v1266
    %2706 = vmatpush1.msra.mxu0 %v1265
    %2707 = vmatprep.subr.mxu0 %v1262
    %2708 = vmatpush1.msra.mxu0 %v1261
    %2709 = vmatprep.subr.mxu0 %v1258
    %2710 = vmatpush1.msra.mxu0 %v1257
    %2711 = vmatprep.subr.mxu0 %v1254
    %2712 = vmatpush1.msra.mxu0 %v1253
    %2713 = vmatprep.subr.mxu0 %v1250
    %2714 = vmatpush1.msra.mxu0 %v1249
    %2715 = vmatprep.subr.mxu0 %v1246
    %2716 = vmatpush1.msra.mxu0 %v1245
    %2717 = vmatprep.subr.mxu0 %v1242
    %2718 = vmatpush1.msra.mxu0 %v1241
    %2719 = vmatprep.subr.mxu0 %v1238
    %2720 = vmatpush1.msra.mxu0 %v1237
    %2721 = vmatprep.subr.mxu0 %v1234
    %2722 = vmatpush1.msra.mxu0 %v1233
    %2723 = vmatprep.subr.mxu0 %v1230
    %2724 = vmatpush1.msra.mxu0 %v1229
    %2725 = vmatprep.subr.mxu0 %v1226
    %2726 = vmatpush1.msra.mxu0 %v1225
    %2727 = vmatprep.subr.mxu0 %v1222
    %2728 = vmatpush1.msra.mxu0 %v1221
    %2729 = vmatprep.subr.mxu0 %v1218
    %2730 = vmatpush1.msra.mxu0 %v1217
    %2731 = vmatprep.subr.mxu0 %v1214
    %2732 = vmatpush1.msra.mxu0 %v1213
    %2733 = vmatprep.subr.mxu0 0.0
    %2734 = vmatpush2.msra.mxu0 0.0
    %2735 = vmatprep.subr.mxu0 0.0
    %2736 = vmatpush2.msra.mxu0 0.0
    %2737 = vmatprep.subr.mxu0 0.0
    %2738 = vmatpush2.msra.mxu0 0.0
    %2739 = vmatprep.subr.mxu0 0.0
    %2740 = vmatpush2.msra.mxu0 0.0
    %2741 = vmatprep.subr.mxu0 0.0
    %2742 = vmatpush2.msra.mxu0 0.0
    %2743 = vmatprep.subr.mxu0 0.0
    %2744 = vmatpush2.msra.mxu0 0.0
    %2745 = vmatprep.subr.mxu0 0.0
    %2746 = vmatpush2.msra.mxu0 0.0
    %2747 = vmatprep.subr.mxu0 0.0
    %2748 = vmatpush2.msra.mxu0 0.0
    %2749 = vmatprep.subr.mxu0 0.0
    %2750 = vmatpush2.msra.mxu0 0.0
    %2751 = vmatprep.subr.mxu0 0.0
    %2752 = vmatpush2.msra.mxu0 0.0
    %2753 = vmatprep.subr.mxu0 0.0
    %2754 = vmatpush2.msra.mxu0 0.0
    %2755 = vmatprep.subr.mxu0 0.0
    %2756 = vmatpush2.msra.mxu0 0.0
    %2757 = vmatprep.subr.mxu0 0.0
    %2758 = vmatpush2.msra.mxu0 0.0
    %2759 = vmatprep.subr.mxu0 0.0
    %2760 = vmatpush2.msra.mxu0 0.0
    %2761 = vmatprep.subr.mxu0 0.0
    %2762 = vmatpush2.msra.mxu0 0.0
    %2763 = vmatprep.subr.mxu0 0.0
    %2764 = vmatpush2.msra.mxu0 0.0
    %2765 = vmatprep.mubr.f32.mxu0 0.0
    %2766 = vmatmul.mubr.f32.gmra.mxu0 %v2698
    %v2767 = vpop.f32.mrf.mxu0
    %v2768 = vadd.f32 0.0, %v2767
    %v2769 = vpop.f32.mrf.mxu0
    %v2770 = vadd.f32 0.0, %v2769
    %2771 = vdwg.mxu0
    %2772 = vmatprep.subr.mxu0 %v1276
    %2773 = vmatpush1.msra.mxu0 %v1275
    %2774 = vmatprep.subr.mxu0 %v1272
    %2775 = vmatpush1.msra.mxu0 %v1271
    %2776 = vmatprep.subr.mxu0 %v1268
    %2777 = vmatpush1.msra.mxu0 %v1267
    %2778 = vmatprep.subr.mxu0 %v1264
    %2779 = vmatpush1.msra.mxu0 %v1263
    %2780 = vmatprep.subr.mxu0 %v1260
    %2781 = vmatpush1.msra.mxu0 %v1259
    %2782 = vmatprep.subr.mxu0 %v1256
    %2783 = vmatpush1.msra.mxu0 %v1255
    %2784 = vmatprep.subr.mxu0 %v1252
    %2785 = vmatpush1.msra.mxu0 %v1251
    %2786 = vmatprep.subr.mxu0 %v1248
    %2787 = vmatpush1.msra.mxu0 %v1247
    %2788 = vmatprep.subr.mxu0 %v1244
    %2789 = vmatpush1.msra.mxu0 %v1243
    %2790 = vmatprep.subr.mxu0 %v1240
    %2791 = vmatpush1.msra.mxu0 %v1239
    %2792 = vmatprep.subr.mxu0 %v1236
    %2793 = vmatpush1.msra.mxu0 %v1235
    %2794 = vmatprep.subr.mxu0 %v1232
    %2795 = vmatpush1.msra.mxu0 %v1231
    %2796 = vmatprep.subr.mxu0 %v1228
    %2797 = vmatpush1.msra.mxu0 %v1227
    %2798 = vmatprep.subr.mxu0 %v1224
    %2799 = vmatpush1.msra.mxu0 %v1223
    %2800 = vmatprep.subr.mxu0 %v1220
    %2801 = vmatpush1.msra.mxu0 %v1219
    %2802 = vmatprep.subr.mxu0 %v1216
    %2803 = vmatpush1.msra.mxu0 %v1215
    %2804 = vmatprep.subr.mxu0 0.0
    %2805 = vmatpush2.msra.mxu0 0.0
    %2806 = vmatprep.subr.mxu0 0.0
    %2807 = vmatpush2.msra.mxu0 0.0
    %2808 = vmatprep.subr.mxu0 0.0
    %2809 = vmatpush2.msra.mxu0 0.0
    %2810 = vmatprep.subr.mxu0 0.0
    %2811 = vmatpush2.msra.mxu0 0.0
    %2812 = vmatprep.subr.mxu0 0.0
    %2813 = vmatpush2.msra.mxu0 0.0
    %2814 = vmatprep.subr.mxu0 0.0
    %2815 = vmatpush2.msra.mxu0 0.0
    %2816 = vmatprep.subr.mxu0 0.0
    %2817 = vmatpush2.msra.mxu0 0.0
    %2818 = vmatprep.subr.mxu0 0.0
    %2819 = vmatpush2.msra.mxu0 0.0
    %2820 = vmatprep.subr.mxu0 0.0
    %2821 = vmatpush2.msra.mxu0 0.0
    %2822 = vmatprep.subr.mxu0 0.0
    %2823 = vmatpush2.msra.mxu0 0.0
    %2824 = vmatprep.subr.mxu0 0.0
    %2825 = vmatpush2.msra.mxu0 0.0
    %2826 = vmatprep.subr.mxu0 0.0
    %2827 = vmatpush2.msra.mxu0 0.0
    %2828 = vmatprep.subr.mxu0 0.0
    %2829 = vmatpush2.msra.mxu0 0.0
    %2830 = vmatprep.subr.mxu0 0.0
    %2831 = vmatpush2.msra.mxu0 0.0
    %2832 = vmatprep.subr.mxu0 0.0
    %2833 = vmatpush2.msra.mxu0 0.0
    %2834 = vmatprep.subr.mxu0 0.0
    %2835 = vmatpush2.msra.mxu0 0.0
    %2836 = vmatprep.mubr.f32.mxu0 0.0
    %2837 = vmatmul.mubr.f32.gmra.mxu0 %v2698
    %v2838 = vpop.f32.mrf.mxu0
    %v2839 = vadd.f32 0.0, %v2838
    %v2840 = vpop.f32.mrf.mxu0
    %v2841 = vadd.f32 0.0, %v2840
    %2842 = vdwg.mxu0
    %v2844 = vrot.slane %v2698, 2
    %2846 = vmatprep.subr.mxu0 %v1339
    %2847 = vmatpush1.msra.mxu0 %v1338
    %2848 = vmatprep.subr.mxu0 %v1335
    %2849 = vmatpush1.msra.mxu0 %v1334
    %2850 = vmatprep.subr.mxu0 %v1331
    %2851 = vmatpush1.msra.mxu0 %v1330
    %2852 = vmatprep.subr.mxu0 %v1327
    %2853 = vmatpush1.msra.mxu0 %v1326
    %2854 = vmatprep.subr.mxu0 %v1323
    %2855 = vmatpush1.msra.mxu0 %v1322
    %2856 = vmatprep.subr.mxu0 %v1319
    %2857 = vmatpush1.msra.mxu0 %v1318
    %2858 = vmatprep.subr.mxu0 %v1315
    %2859 = vmatpush1.msra.mxu0 %v1314
    %2860 = vmatprep.subr.mxu0 %v1311
    %2861 = vmatpush1.msra.mxu0 %v1310
    %2862 = vmatprep.subr.mxu0 %v1307
    %2863 = vmatpush1.msra.mxu0 %v1306
    %2864 = vmatprep.subr.mxu0 %v1303
    %2865 = vmatpush1.msra.mxu0 %v1302
    %2866 = vmatprep.subr.mxu0 %v1299
    %2867 = vmatpush1.msra.mxu0 %v1298
    %2868 = vmatprep.subr.mxu0 %v1295
    %2869 = vmatpush1.msra.mxu0 %v1294
    %2870 = vmatprep.subr.mxu0 %v1291
    %2871 = vmatpush1.msra.mxu0 %v1290
    %2872 = vmatprep.subr.mxu0 %v1287
    %2873 = vmatpush1.msra.mxu0 %v1286
    %2874 = vmatprep.subr.mxu0 %v1283
    %2875 = vmatpush1.msra.mxu0 %v1282
    %2876 = vmatprep.subr.mxu0 %v1279
    %2877 = vmatpush1.msra.mxu0 %v1278
    %2878 = vmatprep.subr.mxu0 0.0
    %2879 = vmatpush2.msra.mxu0 0.0
    %2880 = vmatprep.subr.mxu0 0.0
    %2881 = vmatpush2.msra.mxu0 0.0
    %2882 = vmatprep.subr.mxu0 0.0
    %2883 = vmatpush2.msra.mxu0 0.0
    %2884 = vmatprep.subr.mxu0 0.0
    %2885 = vmatpush2.msra.mxu0 0.0
    %2886 = vmatprep.subr.mxu0 0.0
    %2887 = vmatpush2.msra.mxu0 0.0
    %2888 = vmatprep.subr.mxu0 0.0
    %2889 = vmatpush2.msra.mxu0 0.0
    %2890 = vmatprep.subr.mxu0 0.0
    %2891 = vmatpush2.msra.mxu0 0.0
    %2892 = vmatprep.subr.mxu0 0.0
    %2893 = vmatpush2.msra.mxu0 0.0
    %2894 = vmatprep.subr.mxu0 0.0
    %2895 = vmatpush2.msra.mxu0 0.0
    %2896 = vmatprep.subr.mxu0 0.0
    %2897 = vmatpush2.msra.mxu0 0.0
    %2898 = vmatprep.subr.mxu0 0.0
    %2899 = vmatpush2.msra.mxu0 0.0
    %2900 = vmatprep.subr.mxu0 0.0
    %2901 = vmatpush2.msra.mxu0 0.0
    %2902 = vmatprep.subr.mxu0 0.0
    %2903 = vmatpush2.msra.mxu0 0.0
    %2904 = vmatprep.subr.mxu0 0.0
    %2905 = vmatpush2.msra.mxu0 0.0
    %2906 = vmatprep.subr.mxu0 0.0
    %2907 = vmatpush2.msra.mxu0 0.0
    %2908 = vmatprep.subr.mxu0 0.0
    %2909 = vmatpush2.msra.mxu0 0.0
    %2910 = vmatprep.mubr.f32.mxu0 0.0
    %2911 = vmatmul.mubr.f32.gmra.mxu0 %v2844
    %v2912 = vpop.f32.mrf.mxu0
    %v2913 = vadd.f32 0.0, %v2912
    %v2914 = vpop.f32.mrf.mxu0
    %v2915 = vadd.f32 0.0, %v2914
    %2916 = vdwg.mxu0
    %2917 = vmatprep.subr.mxu0 %v1341
    %2918 = vmatpush1.msra.mxu0 %v1340
    %2919 = vmatprep.subr.mxu0 %v1337
    %2920 = vmatpush1.msra.mxu0 %v1336
    %2921 = vmatprep.subr.mxu0 %v1333
    %2922 = vmatpush1.msra.mxu0 %v1332
    %2923 = vmatprep.subr.mxu0 %v1329
    %2924 = vmatpush1.msra.mxu0 %v1328
    %2925 = vmatprep.subr.mxu0 %v1325
    %2926 = vmatpush1.msra.mxu0 %v1324
    %2927 = vmatprep.subr.mxu0 %v1321
    %2928 = vmatpush1.msra.mxu0 %v1320
    %2929 = vmatprep.subr.mxu0 %v1317
    %2930 = vmatpush1.msra.mxu0 %v1316
    %2931 = vmatprep.subr.mxu0 %v1313
    %2932 = vmatpush1.msra.mxu0 %v1312
    %2933 = vmatprep.subr.mxu0 %v1309
    %2934 = vmatpush1.msra.mxu0 %v1308
    %2935 = vmatprep.subr.mxu0 %v1305
    %2936 = vmatpush1.msra.mxu0 %v1304
    %2937 = vmatprep.subr.mxu0 %v1301
    %2938 = vmatpush1.msra.mxu0 %v1300
    %2939 = vmatprep.subr.mxu0 %v1297
    %2940 = vmatpush1.msra.mxu0 %v1296
    %2941 = vmatprep.subr.mxu0 %v1293
    %2942 = vmatpush1.msra.mxu0 %v1292
    %2943 = vmatprep.subr.mxu0 %v1289
    %2944 = vmatpush1.msra.mxu0 %v1288
    %2945 = vmatprep.subr.mxu0 %v1285
    %2946 = vmatpush1.msra.mxu0 %v1284
    %2947 = vmatprep.subr.mxu0 %v1281
    %2948 = vmatpush1.msra.mxu0 %v1280
    %2949 = vmatprep.subr.mxu0 0.0
    %2950 = vmatpush2.msra.mxu0 0.0
    %2951 = vmatprep.subr.mxu0 0.0
    %2952 = vmatpush2.msra.mxu0 0.0
    %2953 = vmatprep.subr.mxu0 0.0
    %2954 = vmatpush2.msra.mxu0 0.0
    %2955 = vmatprep.subr.mxu0 0.0
    %2956 = vmatpush2.msra.mxu0 0.0
    %2957 = vmatprep.subr.mxu0 0.0
    %2958 = vmatpush2.msra.mxu0 0.0
    %2959 = vmatprep.subr.mxu0 0.0
    %2960 = vmatpush2.msra.mxu0 0.0
    %2961 = vmatprep.subr.mxu0 0.0
    %2962 = vmatpush2.msra.mxu0 0.0
    %2963 = vmatprep.subr.mxu0 0.0
    %2964 = vmatpush2.msra.mxu0 0.0
    %2965 = vmatprep.subr.mxu0 0.0
    %2966 = vmatpush2.msra.mxu0 0.0
    %2967 = vmatprep.subr.mxu0 0.0
    %2968 = vmatpush2.msra.mxu0 0.0
    %2969 = vmatprep.subr.mxu0 0.0
    %2970 = vmatpush2.msra.mxu0 0.0
    %2971 = vmatprep.subr.mxu0 0.0
    %2972 = vmatpush2.msra.mxu0 0.0
    %2973 = vmatprep.subr.mxu0 0.0
    %2974 = vmatpush2.msra.mxu0 0.0
    %2975 = vmatprep.subr.mxu0 0.0
    %2976 = vmatpush2.msra.mxu0 0.0
    %2977 = vmatprep.subr.mxu0 0.0
    %2978 = vmatpush2.msra.mxu0 0.0
    %2979 = vmatprep.subr.mxu0 0.0
    %2980 = vmatpush2.msra.mxu0 0.0
    %2981 = vmatprep.mubr.f32.mxu0 0.0
    %2982 = vmatmul.mubr.f32.gmra.mxu0 %v2844
    %v2983 = vpop.f32.mrf.mxu0
    %v2984 = vadd.f32 0.0, %v2983
    %v2985 = vpop.f32.mrf.mxu0
    %v2986 = vadd.f32 0.0, %v2985
    %2987 = vdwg.mxu0
    %v2992 = vrot.slane %v2913, 6
    %v2993 = vrot.slane %v2915, 6
    %v2994 = vrot.slane %v2984, 6
    %v2995 = vrot.slane %v2986, 6
    %v3000 = vsel %vm1643, %v2768, %v2992
    %v3001 = vsel %vm1643, %v2770, %v2993
    %v3002 = vsel %vm1643, %v2839, %v2994
    %v3003 = vsel %vm1643, %v2841, %v2995
    %v3008 = vcombine.low %v3000, %v3001
    %v3009 = vcombine.low %v3002, %v3003
    %v3012 = vadd.f32 %v2699, %v3008
    %v3013 = vadd.f32 %v2700, %v3009
    %v3014 = vxor.u32 %v3012, 2147483648
    %v3015 = vxor.u32 %v3013, 2147483648
    %v3016 = vmul.f32 %v3014, 1.442695
    %v3017 = vpow.pop %v3016
    %v3018 = vmul.f32 %v3015, 1.442695
    %v3019 = vpow.pop %v3018
    %v3020 = vadd.f32 %v3017, 1.0
    %v3021 = vadd.f32 %v3019, 1.0
    %v3022 = vrcp.pop %v3020
    %v3023 = vmul.f32 1.0, %v3022
    %v3024 = vrcp.pop %v3021
    %v3025 = vmul.f32 1.0, %v3024
    %v3027 = vrot.slane %v3013, 4
    %v3029 = vtanh.pop %v3027
    %v3031 = vrot.slane %v3023, 4
    %v3033 = vmul.f32 %v3031, %v2696
    %v3034 = vmul.f32 %v3023, %v3029
    %v3035 = vadd.f32 %v3033, %v3034
    %v3036 = vtanh.pop %v3035
    %v3037 = vmul.f32 %v3025, %v3036
    %v3038 = vld [vmem:[%s1135] sm:$0xff]
    %v3039 = vld [vmem:[%s1135 + $0x8] sm:$0xff]
    %3040 = vmatprep.subr.mxu0 %v1274
    %3041 = vmatpush1.msra.mxu0 %v1273
    %3042 = vmatprep.subr.mxu0 %v1270
    %3043 = vmatpush1.msra.mxu0 %v1269
    %3044 = vmatprep.subr.mxu0 %v1266
    %3045 = vmatpush1.msra.mxu0 %v1265
    %3046 = vmatprep.subr.mxu0 %v1262
    %3047 = vmatpush1.msra.mxu0 %v1261
    %3048 = vmatprep.subr.mxu0 %v1258
    %3049 = vmatpush1.msra.mxu0 %v1257
    %3050 = vmatprep.subr.mxu0 %v1254
    %3051 = vmatpush1.msra.mxu0 %v1253
    %3052 = vmatprep.subr.mxu0 %v1250
    %3053 = vmatpush1.msra.mxu0 %v1249
    %3054 = vmatprep.subr.mxu0 %v1246
    %3055 = vmatpush1.msra.mxu0 %v1245
    %3056 = vmatprep.subr.mxu0 %v1242
    %3057 = vmatpush1.msra.mxu0 %v1241
    %3058 = vmatprep.subr.mxu0 %v1238
    %3059 = vmatpush1.msra.mxu0 %v1237
    %3060 = vmatprep.subr.mxu0 %v1234
    %3061 = vmatpush1.msra.mxu0 %v1233
    %3062 = vmatprep.subr.mxu0 %v1230
    %3063 = vmatpush1.msra.mxu0 %v1229
    %3064 = vmatprep.subr.mxu0 %v1226
    %3065 = vmatpush1.msra.mxu0 %v1225
    %3066 = vmatprep.subr.mxu0 %v1222
    %3067 = vmatpush1.msra.mxu0 %v1221
    %3068 = vmatprep.subr.mxu0 %v1218
    %3069 = vmatpush1.msra.mxu0 %v1217
    %3070 = vmatprep.subr.mxu0 %v1214
    %3071 = vmatpush1.msra.mxu0 %v1213
    %3072 = vmatprep.subr.mxu0 0.0
    %3073 = vmatpush2.msra.mxu0 0.0
    %3074 = vmatprep.subr.mxu0 0.0
    %3075 = vmatpush2.msra.mxu0 0.0
    %3076 = vmatprep.subr.mxu0 0.0
    %3077 = vmatpush2.msra.mxu0 0.0
    %3078 = vmatprep.subr.mxu0 0.0
    %3079 = vmatpush2.msra.mxu0 0.0
    %3080 = vmatprep.subr.mxu0 0.0
    %3081 = vmatpush2.msra.mxu0 0.0
    %3082 = vmatprep.subr.mxu0 0.0
    %3083 = vmatpush2.msra.mxu0 0.0
    %3084 = vmatprep.subr.mxu0 0.0
    %3085 = vmatpush2.msra.mxu0 0.0
    %3086 = vmatprep.subr.mxu0 0.0
    %3087 = vmatpush2.msra.mxu0 0.0
    %3088 = vmatprep.subr.mxu0 0.0
    %3089 = vmatpush2.msra.mxu0 0.0
    %3090 = vmatprep.subr.mxu0 0.0
    %3091 = vmatpush2.msra.mxu0 0.0
    %3092 = vmatprep.subr.mxu0 0.0
    %3093 = vmatpush2.msra.mxu0 0.0
    %3094 = vmatprep.subr.mxu0 0.0
    %3095 = vmatpush2.msra.mxu0 0.0
    %3096 = vmatprep.subr.mxu0 0.0
    %3097 = vmatpush2.msra.mxu0 0.0
    %3098 = vmatprep.subr.mxu0 0.0
    %3099 = vmatpush2.msra.mxu0 0.0
    %3100 = vmatprep.subr.mxu0 0.0
    %3101 = vmatpush2.msra.mxu0 0.0
    %3102 = vmatprep.subr.mxu0 0.0
    %3103 = vmatpush2.msra.mxu0 0.0
    %3104 = vmatprep.mubr.f32.mxu0 0.0
    %3105 = vmatmul.mubr.f32.gmra.mxu0 %v3037
    %v3106 = vpop.f32.mrf.mxu0
    %v3107 = vadd.f32 0.0, %v3106
    %v3108 = vpop.f32.mrf.mxu0
    %v3109 = vadd.f32 0.0, %v3108
    %3110 = vdwg.mxu0
    %3111 = vmatprep.subr.mxu0 %v1276
    %3112 = vmatpush1.msra.mxu0 %v1275
    %3113 = vmatprep.subr.mxu0 %v1272
    %3114 = vmatpush1.msra.mxu0 %v1271
    %3115 = vmatprep.subr.mxu0 %v1268
    %3116 = vmatpush1.msra.mxu0 %v1267
    %3117 = vmatprep.subr.mxu0 %v1264
    %3118 = vmatpush1.msra.mxu0 %v1263
    %3119 = vmatprep.subr.mxu0 %v1260
    %3120 = vmatpush1.msra.mxu0 %v1259
    %3121 = vmatprep.subr.mxu0 %v1256
    %3122 = vmatpush1.msra.mxu0 %v1255
    %3123 = vmatprep.subr.mxu0 %v1252
    %3124 = vmatpush1.msra.mxu0 %v1251
    %3125 = vmatprep.subr.mxu0 %v1248
    %3126 = vmatpush1.msra.mxu0 %v1247
    %3127 = vmatprep.subr.mxu0 %v1244
    %3128 = vmatpush1.msra.mxu0 %v1243
    %3129 = vmatprep.subr.mxu0 %v1240
    %3130 = vmatpush1.msra.mxu0 %v1239
    %3131 = vmatprep.subr.mxu0 %v1236
    %3132 = vmatpush1.msra.mxu0 %v1235
    %3133 = vmatprep.subr.mxu0 %v1232
    %3134 = vmatpush1.msra.mxu0 %v1231
    %3135 = vmatprep.subr.mxu0 %v1228
    %3136 = vmatpush1.msra.mxu0 %v1227
    %3137 = vmatprep.subr.mxu0 %v1224
    %3138 = vmatpush1.msra.mxu0 %v1223
    %3139 = vmatprep.subr.mxu0 %v1220
    %3140 = vmatpush1.msra.mxu0 %v1219
    %3141 = vmatprep.subr.mxu0 %v1216
    %3142 = vmatpush1.msra.mxu0 %v1215
    %3143 = vmatprep.subr.mxu0 0.0
    %3144 = vmatpush2.msra.mxu0 0.0
    %3145 = vmatprep.subr.mxu0 0.0
    %3146 = vmatpush2.msra.mxu0 0.0
    %3147 = vmatprep.subr.mxu0 0.0
    %3148 = vmatpush2.msra.mxu0 0.0
    %3149 = vmatprep.subr.mxu0 0.0
    %3150 = vmatpush2.msra.mxu0 0.0
    %3151 = vmatprep.subr.mxu0 0.0
    %3152 = vmatpush2.msra.mxu0 0.0
    %3153 = vmatprep.subr.mxu0 0.0
    %3154 = vmatpush2.msra.mxu0 0.0
    %3155 = vmatprep.subr.mxu0 0.0
    %3156 = vmatpush2.msra.mxu0 0.0
    %3157 = vmatprep.subr.mxu0 0.0
    %3158 = vmatpush2.msra.mxu0 0.0
    %3159 = vmatprep.subr.mxu0 0.0
    %3160 = vmatpush2.msra.mxu0 0.0
    %3161 = vmatprep.subr.mxu0 0.0
    %3162 = vmatpush2.msra.mxu0 0.0
    %3163 = vmatprep.subr.mxu0 0.0
    %3164 = vmatpush2.msra.mxu0 0.0
    %3165 = vmatprep.subr.mxu0 0.0
    %3166 = vmatpush2.msra.mxu0 0.0
    %3167 = vmatprep.subr.mxu0 0.0
    %3168 = vmatpush2.msra.mxu0 0.0
    %3169 = vmatprep.subr.mxu0 0.0
    %3170 = vmatpush2.msra.mxu0 0.0
    %3171 = vmatprep.subr.mxu0 0.0
    %3172 = vmatpush2.msra.mxu0 0.0
    %3173 = vmatprep.subr.mxu0 0.0
    %3174 = vmatpush2.msra.mxu0 0.0
    %3175 = vmatprep.mubr.f32.mxu0 0.0
    %3176 = vmatmul.mubr.f32.gmra.mxu0 %v3037
    %v3177 = vpop.f32.mrf.mxu0
    %v3178 = vadd.f32 0.0, %v3177
    %v3179 = vpop.f32.mrf.mxu0
    %v3180 = vadd.f32 0.0, %v3179
    %3181 = vdwg.mxu0
    %v3183 = vrot.slane %v3037, 2
    %3185 = vmatprep.subr.mxu0 %v1339
    %3186 = vmatpush1.msra.mxu0 %v1338
    %3187 = vmatprep.subr.mxu0 %v1335
    %3188 = vmatpush1.msra.mxu0 %v1334
    %3189 = vmatprep.subr.mxu0 %v1331
    %3190 = vmatpush1.msra.mxu0 %v1330
    %3191 = vmatprep.subr.mxu0 %v1327
    %3192 = vmatpush1.msra.mxu0 %v1326
    %3193 = vmatprep.subr.mxu0 %v1323
    %3194 = vmatpush1.msra.mxu0 %v1322
    %3195 = vmatprep.subr.mxu0 %v1319
    %3196 = vmatpush1.msra.mxu0 %v1318
    %3197 = vmatprep.subr.mxu0 %v1315
    %3198 = vmatpush1.msra.mxu0 %v1314
    %3199 = vmatprep.subr.mxu0 %v1311
    %3200 = vmatpush1.msra.mxu0 %v1310
    %3201 = vmatprep.subr.mxu0 %v1307
    %3202 = vmatpush1.msra.mxu0 %v1306
    %3203 = vmatprep.subr.mxu0 %v1303
    %3204 = vmatpush1.msra.mxu0 %v1302
    %3205 = vmatprep.subr.mxu0 %v1299
    %3206 = vmatpush1.msra.mxu0 %v1298
    %3207 = vmatprep.subr.mxu0 %v1295
    %3208 = vmatpush1.msra.mxu0 %v1294
    %3209 = vmatprep.subr.mxu0 %v1291
    %3210 = vmatpush1.msra.mxu0 %v1290
    %3211 = vmatprep.subr.mxu0 %v1287
    %3212 = vmatpush1.msra.mxu0 %v1286
    %3213 = vmatprep.subr.mxu0 %v1283
    %3214 = vmatpush1.msra.mxu0 %v1282
    %3215 = vmatprep.subr.mxu0 %v1279
    %3216 = vmatpush1.msra.mxu0 %v1278
    %3217 = vmatprep.subr.mxu0 0.0
    %3218 = vmatpush2.msra.mxu0 0.0
    %3219 = vmatprep.subr.mxu0 0.0
    %3220 = vmatpush2.msra.mxu0 0.0
    %3221 = vmatprep.subr.mxu0 0.0
    %3222 = vmatpush2.msra.mxu0 0.0
    %3223 = vmatprep.subr.mxu0 0.0
    %3224 = vmatpush2.msra.mxu0 0.0
    %3225 = vmatprep.subr.mxu0 0.0
    %3226 = vmatpush2.msra.mxu0 0.0
    %3227 = vmatprep.subr.mxu0 0.0
    %3228 = vmatpush2.msra.mxu0 0.0
    %3229 = vmatprep.subr.mxu0 0.0
    %3230 = vmatpush2.msra.mxu0 0.0
    %3231 = vmatprep.subr.mxu0 0.0
    %3232 = vmatpush2.msra.mxu0 0.0
    %3233 = vmatprep.subr.mxu0 0.0
    %3234 = vmatpush2.msra.mxu0 0.0
    %3235 = vmatprep.subr.mxu0 0.0
    %3236 = vmatpush2.msra.mxu0 0.0
    %3237 = vmatprep.subr.mxu0 0.0
    %3238 = vmatpush2.msra.mxu0 0.0
    %3239 = vmatprep.subr.mxu0 0.0
    %3240 = vmatpush2.msra.mxu0 0.0
    %3241 = vmatprep.subr.mxu0 0.0
    %3242 = vmatpush2.msra.mxu0 0.0
    %3243 = vmatprep.subr.mxu0 0.0
    %3244 = vmatpush2.msra.mxu0 0.0
    %3245 = vmatprep.subr.mxu0 0.0
    %3246 = vmatpush2.msra.mxu0 0.0
    %3247 = vmatprep.subr.mxu0 0.0
    %3248 = vmatpush2.msra.mxu0 0.0
    %3249 = vmatprep.mubr.f32.mxu0 0.0
    %3250 = vmatmul.mubr.f32.gmra.mxu0 %v3183
    %v3251 = vpop.f32.mrf.mxu0
    %v3252 = vadd.f32 0.0, %v3251
    %v3253 = vpop.f32.mrf.mxu0
    %v3254 = vadd.f32 0.0, %v3253
    %3255 = vdwg.mxu0
    %3256 = vmatprep.subr.mxu0 %v1341
    %3257 = vmatpush1.msra.mxu0 %v1340
    %3258 = vmatprep.subr.mxu0 %v1337
    %3259 = vmatpush1.msra.mxu0 %v1336
    %3260 = vmatprep.subr.mxu0 %v1333
    %3261 = vmatpush1.msra.mxu0 %v1332
    %3262 = vmatprep.subr.mxu0 %v1329
    %3263 = vmatpush1.msra.mxu0 %v1328
    %3264 = vmatprep.subr.mxu0 %v1325
    %3265 = vmatpush1.msra.mxu0 %v1324
    %3266 = vmatprep.subr.mxu0 %v1321
    %3267 = vmatpush1.msra.mxu0 %v1320
    %3268 = vmatprep.subr.mxu0 %v1317
    %3269 = vmatpush1.msra.mxu0 %v1316
    %3270 = vmatprep.subr.mxu0 %v1313
    %3271 = vmatpush1.msra.mxu0 %v1312
    %3272 = vmatprep.subr.mxu0 %v1309
    %3273 = vmatpush1.msra.mxu0 %v1308
    %3274 = vmatprep.subr.mxu0 %v1305
    %3275 = vmatpush1.msra.mxu0 %v1304
    %3276 = vmatprep.subr.mxu0 %v1301
    %3277 = vmatpush1.msra.mxu0 %v1300
    %3278 = vmatprep.subr.mxu0 %v1297
    %3279 = vmatpush1.msra.mxu0 %v1296
    %3280 = vmatprep.subr.mxu0 %v1293
    %3281 = vmatpush1.msra.mxu0 %v1292
    %3282 = vmatprep.subr.mxu0 %v1289
    %3283 = vmatpush1.msra.mxu0 %v1288
    %3284 = vmatprep.subr.mxu0 %v1285
    %3285 = vmatpush1.msra.mxu0 %v1284
    %3286 = vmatprep.subr.mxu0 %v1281
    %3287 = vmatpush1.msra.mxu0 %v1280
    %3288 = vmatprep.subr.mxu0 0.0
    %3289 = vmatpush2.msra.mxu0 0.0
    %3290 = vmatprep.subr.mxu0 0.0
    %3291 = vmatpush2.msra.mxu0 0.0
    %3292 = vmatprep.subr.mxu0 0.0
    %3293 = vmatpush2.msra.mxu0 0.0
    %3294 = vmatprep.subr.mxu0 0.0
    %3295 = vmatpush2.msra.mxu0 0.0
    %3296 = vmatprep.subr.mxu0 0.0
    %3297 = vmatpush2.msra.mxu0 0.0
    %3298 = vmatprep.subr.mxu0 0.0
    %3299 = vmatpush2.msra.mxu0 0.0
    %3300 = vmatprep.subr.mxu0 0.0
    %3301 = vmatpush2.msra.mxu0 0.0
    %3302 = vmatprep.subr.mxu0 0.0
    %3303 = vmatpush2.msra.mxu0 0.0
    %3304 = vmatprep.subr.mxu0 0.0
    %3305 = vmatpush2.msra.mxu0 0.0
    %3306 = vmatprep.subr.mxu0 0.0
    %3307 = vmatpush2.msra.mxu0 0.0
    %3308 = vmatprep.subr.mxu0 0.0
    %3309 = vmatpush2.msra.mxu0 0.0
    %3310 = vmatprep.subr.mxu0 0.0
    %3311 = vmatpush2.msra.mxu0 0.0
    %3312 = vmatprep.subr.mxu0 0.0
    %3313 = vmatpush2.msra.mxu0 0.0
    %3314 = vmatprep.subr.mxu0 0.0
    %3315 = vmatpush2.msra.mxu0 0.0
    %3316 = vmatprep.subr.mxu0 0.0
    %3317 = vmatpush2.msra.mxu0 0.0
    %3318 = vmatprep.subr.mxu0 0.0
    %3319 = vmatpush2.msra.mxu0 0.0
    %3320 = vmatprep.mubr.f32.mxu0 0.0
    %3321 = vmatmul.mubr.f32.gmra.mxu0 %v3183
    %v3322 = vpop.f32.mrf.mxu0
    %v3323 = vadd.f32 0.0, %v3322
    %v3324 = vpop.f32.mrf.mxu0
    %v3325 = vadd.f32 0.0, %v3324
    %3326 = vdwg.mxu0
    %v3331 = vrot.slane %v3252, 6
    %v3332 = vrot.slane %v3254, 6
    %v3333 = vrot.slane %v3323, 6
    %v3334 = vrot.slane %v3325, 6
    %v3339 = vsel %vm1643, %v3107, %v3331
    %v3340 = vsel %vm1643, %v3109, %v3332
    %v3341 = vsel %vm1643, %v3178, %v3333
    %v3342 = vsel %vm1643, %v3180, %v3334
    %v3347 = vcombine.low %v3339, %v3340
    %v3348 = vcombine.low %v3341, %v3342
    %v3351 = vadd.f32 %v3038, %v3347
    %v3352 = vadd.f32 %v3039, %v3348
    %v3353 = vxor.u32 %v3351, 2147483648
    %v3354 = vxor.u32 %v3352, 2147483648
    %v3355 = vmul.f32 %v3353, 1.442695
    %v3356 = vpow.pop %v3355
    %v3357 = vmul.f32 %v3354, 1.442695
    %v3358 = vpow.pop %v3357
    %v3359 = vadd.f32 %v3356, 1.0
    %v3360 = vadd.f32 %v3358, 1.0
    %v3361 = vrcp.pop %v3359
    %v3362 = vmul.f32 1.0, %v3361
    %v3363 = vrcp.pop %v3360
    %v3364 = vmul.f32 1.0, %v3363
    %v3366 = vrot.slane %v3352, 4
    %v3368 = vtanh.pop %v3366
    %v3370 = vrot.slane %v3362, 4
    %v3372 = vmul.f32 %v3370, %v3035
    %v3373 = vmul.f32 %v3362, %v3368
    %v3374 = vadd.f32 %v3372, %v3373
    %v3375 = vtanh.pop %v3374
    %v3376 = vmul.f32 %v3364, %v3375
    %v3377 = vld [vmem:[%s1159] sm:$0xff]
    %v3378 = vld [vmem:[%s1159 + $0x8] sm:$0xff]
    %3379 = vmatprep.subr.mxu0 %v1274
    %3380 = vmatpush1.msra.mxu0 %v1273
    %3381 = vmatprep.subr.mxu0 %v1270
    %3382 = vmatpush1.msra.mxu0 %v1269
    %3383 = vmatprep.subr.mxu0 %v1266
    %3384 = vmatpush1.msra.mxu0 %v1265
    %3385 = vmatprep.subr.mxu0 %v1262
    %3386 = vmatpush1.msra.mxu0 %v1261
    %3387 = vmatprep.subr.mxu0 %v1258
    %3388 = vmatpush1.msra.mxu0 %v1257
    %3389 = vmatprep.subr.mxu0 %v1254
    %3390 = vmatpush1.msra.mxu0 %v1253
    %3391 = vmatprep.subr.mxu0 %v1250
    %3392 = vmatpush1.msra.mxu0 %v1249
    %3393 = vmatprep.subr.mxu0 %v1246
    %3394 = vmatpush1.msra.mxu0 %v1245
    %3395 = vmatprep.subr.mxu0 %v1242
    %3396 = vmatpush1.msra.mxu0 %v1241
    %3397 = vmatprep.subr.mxu0 %v1238
    %3398 = vmatpush1.msra.mxu0 %v1237
    %3399 = vmatprep.subr.mxu0 %v1234
    %3400 = vmatpush1.msra.mxu0 %v1233
    %3401 = vmatprep.subr.mxu0 %v1230
    %3402 = vmatpush1.msra.mxu0 %v1229
    %3403 = vmatprep.subr.mxu0 %v1226
    %3404 = vmatpush1.msra.mxu0 %v1225
    %3405 = vmatprep.subr.mxu0 %v1222
    %3406 = vmatpush1.msra.mxu0 %v1221
    %3407 = vmatprep.subr.mxu0 %v1218
    %3408 = vmatpush1.msra.mxu0 %v1217
    %3409 = vmatprep.subr.mxu0 %v1214
    %3410 = vmatpush1.msra.mxu0 %v1213
    %3411 = vmatprep.subr.mxu0 0.0
    %3412 = vmatpush2.msra.mxu0 0.0
    %3413 = vmatprep.subr.mxu0 0.0
    %3414 = vmatpush2.msra.mxu0 0.0
    %3415 = vmatprep.subr.mxu0 0.0
    %3416 = vmatpush2.msra.mxu0 0.0
    %3417 = vmatprep.subr.mxu0 0.0
    %3418 = vmatpush2.msra.mxu0 0.0
    %3419 = vmatprep.subr.mxu0 0.0
    %3420 = vmatpush2.msra.mxu0 0.0
    %3421 = vmatprep.subr.mxu0 0.0
    %3422 = vmatpush2.msra.mxu0 0.0
    %3423 = vmatprep.subr.mxu0 0.0
    %3424 = vmatpush2.msra.mxu0 0.0
    %3425 = vmatprep.subr.mxu0 0.0
    %3426 = vmatpush2.msra.mxu0 0.0
    %3427 = vmatprep.subr.mxu0 0.0
    %3428 = vmatpush2.msra.mxu0 0.0
    %3429 = vmatprep.subr.mxu0 0.0
    %3430 = vmatpush2.msra.mxu0 0.0
    %3431 = vmatprep.subr.mxu0 0.0
    %3432 = vmatpush2.msra.mxu0 0.0
    %3433 = vmatprep.subr.mxu0 0.0
    %3434 = vmatpush2.msra.mxu0 0.0
    %3435 = vmatprep.subr.mxu0 0.0
    %3436 = vmatpush2.msra.mxu0 0.0
    %3437 = vmatprep.subr.mxu0 0.0
    %3438 = vmatpush2.msra.mxu0 0.0
    %3439 = vmatprep.subr.mxu0 0.0
    %3440 = vmatpush2.msra.mxu0 0.0
    %3441 = vmatprep.subr.mxu0 0.0
    %3442 = vmatpush2.msra.mxu0 0.0
    %3443 = vmatprep.mubr.f32.mxu0 0.0
    %3444 = vmatmul.mubr.f32.gmra.mxu0 %v3376
    %v3445 = vpop.f32.mrf.mxu0
    %v3446 = vadd.f32 0.0, %v3445
    %v3447 = vpop.f32.mrf.mxu0
    %v3448 = vadd.f32 0.0, %v3447
    %3449 = vdwg.mxu0
    %3450 = vmatprep.subr.mxu0 %v1276
    %3451 = vmatpush1.msra.mxu0 %v1275
    %3452 = vmatprep.subr.mxu0 %v1272
    %3453 = vmatpush1.msra.mxu0 %v1271
    %3454 = vmatprep.subr.mxu0 %v1268
    %3455 = vmatpush1.msra.mxu0 %v1267
    %3456 = vmatprep.subr.mxu0 %v1264
    %3457 = vmatpush1.msra.mxu0 %v1263
    %3458 = vmatprep.subr.mxu0 %v1260
    %3459 = vmatpush1.msra.mxu0 %v1259
    %3460 = vmatprep.subr.mxu0 %v1256
    %3461 = vmatpush1.msra.mxu0 %v1255
    %3462 = vmatprep.subr.mxu0 %v1252
    %3463 = vmatpush1.msra.mxu0 %v1251
    %3464 = vmatprep.subr.mxu0 %v1248
    %3465 = vmatpush1.msra.mxu0 %v1247
    %3466 = vmatprep.subr.mxu0 %v1244
    %3467 = vmatpush1.msra.mxu0 %v1243
    %3468 = vmatprep.subr.mxu0 %v1240
    %3469 = vmatpush1.msra.mxu0 %v1239
    %3470 = vmatprep.subr.mxu0 %v1236
    %3471 = vmatpush1.msra.mxu0 %v1235
    %3472 = vmatprep.subr.mxu0 %v1232
    %3473 = vmatpush1.msra.mxu0 %v1231
    %3474 = vmatprep.subr.mxu0 %v1228
    %3475 = vmatpush1.msra.mxu0 %v1227
    %3476 = vmatprep.subr.mxu0 %v1224
    %3477 = vmatpush1.msra.mxu0 %v1223
    %3478 = vmatprep.subr.mxu0 %v1220
    %3479 = vmatpush1.msra.mxu0 %v1219
    %3480 = vmatprep.subr.mxu0 %v1216
    %3481 = vmatpush1.msra.mxu0 %v1215
    %3482 = vmatprep.subr.mxu0 0.0
    %3483 = vmatpush2.msra.mxu0 0.0
    %3484 = vmatprep.subr.mxu0 0.0
    %3485 = vmatpush2.msra.mxu0 0.0
    %3486 = vmatprep.subr.mxu0 0.0
    %3487 = vmatpush2.msra.mxu0 0.0
    %3488 = vmatprep.subr.mxu0 0.0
    %3489 = vmatpush2.msra.mxu0 0.0
    %3490 = vmatprep.subr.mxu0 0.0
    %3491 = vmatpush2.msra.mxu0 0.0
    %3492 = vmatprep.subr.mxu0 0.0
    %3493 = vmatpush2.msra.mxu0 0.0
    %3494 = vmatprep.subr.mxu0 0.0
    %3495 = vmatpush2.msra.mxu0 0.0
    %3496 = vmatprep.subr.mxu0 0.0
    %3497 = vmatpush2.msra.mxu0 0.0
    %3498 = vmatprep.subr.mxu0 0.0
    %3499 = vmatpush2.msra.mxu0 0.0
    %3500 = vmatprep.subr.mxu0 0.0
    %3501 = vmatpush2.msra.mxu0 0.0
    %3502 = vmatprep.subr.mxu0 0.0
    %3503 = vmatpush2.msra.mxu0 0.0
    %3504 = vmatprep.subr.mxu0 0.0
    %3505 = vmatpush2.msra.mxu0 0.0
    %3506 = vmatprep.subr.mxu0 0.0
    %3507 = vmatpush2.msra.mxu0 0.0
    %3508 = vmatprep.subr.mxu0 0.0
    %3509 = vmatpush2.msra.mxu0 0.0
    %3510 = vmatprep.subr.mxu0 0.0
    %3511 = vmatpush2.msra.mxu0 0.0
    %3512 = vmatprep.subr.mxu0 0.0
    %3513 = vmatpush2.msra.mxu0 0.0
    %3514 = vmatprep.mubr.f32.mxu0 0.0
    %3515 = vmatmul.mubr.f32.gmra.mxu0 %v3376
    %v3516 = vpop.f32.mrf.mxu0
    %v3517 = vadd.f32 0.0, %v3516
    %v3518 = vpop.f32.mrf.mxu0
    %v3519 = vadd.f32 0.0, %v3518
    %3520 = vdwg.mxu0
    %v3522 = vrot.slane %v3376, 2
    %3524 = vmatprep.subr.mxu0 %v1339
    %3525 = vmatpush1.msra.mxu0 %v1338
    %3526 = vmatprep.subr.mxu0 %v1335
    %3527 = vmatpush1.msra.mxu0 %v1334
    %3528 = vmatprep.subr.mxu0 %v1331
    %3529 = vmatpush1.msra.mxu0 %v1330
    %3530 = vmatprep.subr.mxu0 %v1327
    %3531 = vmatpush1.msra.mxu0 %v1326
    %3532 = vmatprep.subr.mxu0 %v1323
    %3533 = vmatpush1.msra.mxu0 %v1322
    %3534 = vmatprep.subr.mxu0 %v1319
    %3535 = vmatpush1.msra.mxu0 %v1318
    %3536 = vmatprep.subr.mxu0 %v1315
    %3537 = vmatpush1.msra.mxu0 %v1314
    %3538 = vmatprep.subr.mxu0 %v1311
    %3539 = vmatpush1.msra.mxu0 %v1310
    %3540 = vmatprep.subr.mxu0 %v1307
    %3541 = vmatpush1.msra.mxu0 %v1306
    %3542 = vmatprep.subr.mxu0 %v1303
    %3543 = vmatpush1.msra.mxu0 %v1302
    %3544 = vmatprep.subr.mxu0 %v1299
    %3545 = vmatpush1.msra.mxu0 %v1298
    %3546 = vmatprep.subr.mxu0 %v1295
    %3547 = vmatpush1.msra.mxu0 %v1294
    %3548 = vmatprep.subr.mxu0 %v1291
    %3549 = vmatpush1.msra.mxu0 %v1290
    %3550 = vmatprep.subr.mxu0 %v1287
    %3551 = vmatpush1.msra.mxu0 %v1286
    %3552 = vmatprep.subr.mxu0 %v1283
    %3553 = vmatpush1.msra.mxu0 %v1282
    %3554 = vmatprep.subr.mxu0 %v1279
    %3555 = vmatpush1.msra.mxu0 %v1278
    %3556 = vmatprep.subr.mxu0 0.0
    %3557 = vmatpush2.msra.mxu0 0.0
    %3558 = vmatprep.subr.mxu0 0.0
    %3559 = vmatpush2.msra.mxu0 0.0
    %3560 = vmatprep.subr.mxu0 0.0
    %3561 = vmatpush2.msra.mxu0 0.0
    %3562 = vmatprep.subr.mxu0 0.0
    %3563 = vmatpush2.msra.mxu0 0.0
    %3564 = vmatprep.subr.mxu0 0.0
    %3565 = vmatpush2.msra.mxu0 0.0
    %3566 = vmatprep.subr.mxu0 0.0
    %3567 = vmatpush2.msra.mxu0 0.0
    %3568 = vmatprep.subr.mxu0 0.0
    %3569 = vmatpush2.msra.mxu0 0.0
    %3570 = vmatprep.subr.mxu0 0.0
    %3571 = vmatpush2.msra.mxu0 0.0
    %3572 = vmatprep.subr.mxu0 0.0
    %3573 = vmatpush2.msra.mxu0 0.0
    %3574 = vmatprep.subr.mxu0 0.0
    %3575 = vmatpush2.msra.mxu0 0.0
    %3576 = vmatprep.subr.mxu0 0.0
    %3577 = vmatpush2.msra.mxu0 0.0
    %3578 = vmatprep.subr.mxu0 0.0
    %3579 = vmatpush2.msra.mxu0 0.0
    %3580 = vmatprep.subr.mxu0 0.0
    %3581 = vmatpush2.msra.mxu0 0.0
    %3582 = vmatprep.subr.mxu0 0.0
    %3583 = vmatpush2.msra.mxu0 0.0
    %3584 = vmatprep.subr.mxu0 0.0
    %3585 = vmatpush2.msra.mxu0 0.0
    %3586 = vmatprep.subr.mxu0 0.0
    %3587 = vmatpush2.msra.mxu0 0.0
    %3588 = vmatprep.mubr.f32.mxu0 0.0
    %3589 = vmatmul.mubr.f32.gmra.mxu0 %v3522
    %v3590 = vpop.f32.mrf.mxu0
    %v3591 = vadd.f32 0.0, %v3590
    %v3592 = vpop.f32.mrf.mxu0
    %v3593 = vadd.f32 0.0, %v3592
    %3594 = vdwg.mxu0
    %3595 = vmatprep.subr.mxu0 %v1341
    %3596 = vmatpush1.msra.mxu0 %v1340
    %3597 = vmatprep.subr.mxu0 %v1337
    %3598 = vmatpush1.msra.mxu0 %v1336
    %3599 = vmatprep.subr.mxu0 %v1333
    %3600 = vmatpush1.msra.mxu0 %v1332
    %3601 = vmatprep.subr.mxu0 %v1329
    %3602 = vmatpush1.msra.mxu0 %v1328
    %3603 = vmatprep.subr.mxu0 %v1325
    %3604 = vmatpush1.msra.mxu0 %v1324
    %3605 = vmatprep.subr.mxu0 %v1321
    %3606 = vmatpush1.msra.mxu0 %v1320
    %3607 = vmatprep.subr.mxu0 %v1317
    %3608 = vmatpush1.msra.mxu0 %v1316
    %3609 = vmatprep.subr.mxu0 %v1313
    %3610 = vmatpush1.msra.mxu0 %v1312
    %3611 = vmatprep.subr.mxu0 %v1309
    %3612 = vmatpush1.msra.mxu0 %v1308
    %3613 = vmatprep.subr.mxu0 %v1305
    %3614 = vmatpush1.msra.mxu0 %v1304
    %3615 = vmatprep.subr.mxu0 %v1301
    %3616 = vmatpush1.msra.mxu0 %v1300
    %3617 = vmatprep.subr.mxu0 %v1297
    %3618 = vmatpush1.msra.mxu0 %v1296
    %3619 = vmatprep.subr.mxu0 %v1293
    %3620 = vmatpush1.msra.mxu0 %v1292
    %3621 = vmatprep.subr.mxu0 %v1289
    %3622 = vmatpush1.msra.mxu0 %v1288
    %3623 = vmatprep.subr.mxu0 %v1285
    %3624 = vmatpush1.msra.mxu0 %v1284
    %3625 = vmatprep.subr.mxu0 %v1281
    %3626 = vmatpush1.msra.mxu0 %v1280
    %3627 = vmatprep.subr.mxu0 0.0
    %3628 = vmatpush2.msra.mxu0 0.0
    %3629 = vmatprep.subr.mxu0 0.0
    %3630 = vmatpush2.msra.mxu0 0.0
    %3631 = vmatprep.subr.mxu0 0.0
    %3632 = vmatpush2.msra.mxu0 0.0
    %3633 = vmatprep.subr.mxu0 0.0
    %3634 = vmatpush2.msra.mxu0 0.0
    %3635 = vmatprep.subr.mxu0 0.0
    %3636 = vmatpush2.msra.mxu0 0.0
    %3637 = vmatprep.subr.mxu0 0.0
    %3638 = vmatpush2.msra.mxu0 0.0
    %3639 = vmatprep.subr.mxu0 0.0
    %3640 = vmatpush2.msra.mxu0 0.0
    %3641 = vmatprep.subr.mxu0 0.0
    %3642 = vmatpush2.msra.mxu0 0.0
    %3643 = vmatprep.subr.mxu0 0.0
    %3644 = vmatpush2.msra.mxu0 0.0
    %3645 = vmatprep.subr.mxu0 0.0
    %3646 = vmatpush2.msra.mxu0 0.0
    %3647 = vmatprep.subr.mxu0 0.0
    %3648 = vmatpush2.msra.mxu0 0.0
    %3649 = vmatprep.subr.mxu0 0.0
    %3650 = vmatpush2.msra.mxu0 0.0
    %3651 = vmatprep.subr.mxu0 0.0
    %3652 = vmatpush2.msra.mxu0 0.0
    %3653 = vmatprep.subr.mxu0 0.0
    %3654 = vmatpush2.msra.mxu0 0.0
    %3655 = vmatprep.subr.mxu0 0.0
    %3656 = vmatpush2.msra.mxu0 0.0
    %3657 = vmatprep.subr.mxu0 0.0
    %3658 = vmatpush2.msra.mxu0 0.0
    %3659 = vmatprep.mubr.f32.mxu0 0.0
    %3660 = vmatmul.mubr.f32.gmra.mxu0 %v3522
    %v3661 = vpop.f32.mrf.mxu0
    %v3662 = vadd.f32 0.0, %v3661
    %v3663 = vpop.f32.mrf.mxu0
    %v3664 = vadd.f32 0.0, %v3663
    %3665 = vdwg.mxu0
    %v3670 = vrot.slane %v3591, 6
    %v3671 = vrot.slane %v3593, 6
    %v3672 = vrot.slane %v3662, 6
    %v3673 = vrot.slane %v3664, 6
    %v3678 = vsel %vm1643, %v3446, %v3670
    %v3679 = vsel %vm1643, %v3448, %v3671
    %v3680 = vsel %vm1643, %v3517, %v3672
    %v3681 = vsel %vm1643, %v3519, %v3673
    %v3686 = vcombine.low %v3678, %v3679
    %v3687 = vcombine.low %v3680, %v3681
    %v3690 = vadd.f32 %v3377, %v3686
    %v3691 = vadd.f32 %v3378, %v3687
    %v3692 = vxor.u32 %v3690, 2147483648
    %v3693 = vxor.u32 %v3691, 2147483648
    %v3694 = vmul.f32 %v3692, 1.442695
    %v3695 = vpow.pop %v3694
    %v3696 = vmul.f32 %v3693, 1.442695
    %v3697 = vpow.pop %v3696
    %v3698 = vadd.f32 %v3695, 1.0
    %v3699 = vadd.f32 %v3697, 1.0
    %v3700 = vrcp.pop %v3698
    %v3701 = vmul.f32 1.0, %v3700
    %v3702 = vrcp.pop %v3699
    %v3703 = vmul.f32 1.0, %v3702
    %v3705 = vrot.slane %v3691, 4
    %v3707 = vtanh.pop %v3705
    %v3709 = vrot.slane %v3701, 4
    %v3711 = vmul.f32 %v3709, %v3374
    %v3712 = vmul.f32 %v3701, %v3707
    %v3713 = vadd.f32 %v3711, %v3712
    %v3714 = vtanh.pop %v3713
    %v3715 = vmul.f32 %v3703, %v3714
    %v3716 = vld [vmem:[%s1191] sm:$0xff]
    %v3717 = vld [vmem:[%s1191 + $0x8] sm:$0xff]
    %3718 = vmatprep.subr.mxu0 %v1274
    %3719 = vmatpush1.msra.mxu0 %v1273
    %3720 = vmatprep.subr.mxu0 %v1270
    %3721 = vmatpush1.msra.mxu0 %v1269
    %3722 = vmatprep.subr.mxu0 %v1266
    %3723 = vmatpush1.msra.mxu0 %v1265
    %3724 = vmatprep.subr.mxu0 %v1262
    %3725 = vmatpush1.msra.mxu0 %v1261
    %3726 = vmatprep.subr.mxu0 %v1258
    %3727 = vmatpush1.msra.mxu0 %v1257
    %3728 = vmatprep.subr.mxu0 %v1254
    %3729 = vmatpush1.msra.mxu0 %v1253
    %3730 = vmatprep.subr.mxu0 %v1250
    %3731 = vmatpush1.msra.mxu0 %v1249
    %3732 = vmatprep.subr.mxu0 %v1246
    %3733 = vmatpush1.msra.mxu0 %v1245
    %3734 = vmatprep.subr.mxu0 %v1242
    %3735 = vmatpush1.msra.mxu0 %v1241
    %3736 = vmatprep.subr.mxu0 %v1238
    %3737 = vmatpush1.msra.mxu0 %v1237
    %3738 = vmatprep.subr.mxu0 %v1234
    %3739 = vmatpush1.msra.mxu0 %v1233
    %3740 = vmatprep.subr.mxu0 %v1230
    %3741 = vmatpush1.msra.mxu0 %v1229
    %3742 = vmatprep.subr.mxu0 %v1226
    %3743 = vmatpush1.msra.mxu0 %v1225
    %3744 = vmatprep.subr.mxu0 %v1222
    %3745 = vmatpush1.msra.mxu0 %v1221
    %3746 = vmatprep.subr.mxu0 %v1218
    %3747 = vmatpush1.msra.mxu0 %v1217
    %3748 = vmatprep.subr.mxu0 %v1214
    %3749 = vmatpush1.msra.mxu0 %v1213
    %3750 = vmatprep.subr.mxu0 0.0
    %3751 = vmatpush2.msra.mxu0 0.0
    %3752 = vmatprep.subr.mxu0 0.0
    %3753 = vmatpush2.msra.mxu0 0.0
    %3754 = vmatprep.subr.mxu0 0.0
    %3755 = vmatpush2.msra.mxu0 0.0
    %3756 = vmatprep.subr.mxu0 0.0
    %3757 = vmatpush2.msra.mxu0 0.0
    %3758 = vmatprep.subr.mxu0 0.0
    %3759 = vmatpush2.msra.mxu0 0.0
    %3760 = vmatprep.subr.mxu0 0.0
    %3761 = vmatpush2.msra.mxu0 0.0
    %3762 = vmatprep.subr.mxu0 0.0
    %3763 = vmatpush2.msra.mxu0 0.0
    %3764 = vmatprep.subr.mxu0 0.0
    %3765 = vmatpush2.msra.mxu0 0.0
    %3766 = vmatprep.subr.mxu0 0.0
    %3767 = vmatpush2.msra.mxu0 0.0
    %3768 = vmatprep.subr.mxu0 0.0
    %3769 = vmatpush2.msra.mxu0 0.0
    %3770 = vmatprep.subr.mxu0 0.0
    %3771 = vmatpush2.msra.mxu0 0.0
    %3772 = vmatprep.subr.mxu0 0.0
    %3773 = vmatpush2.msra.mxu0 0.0
    %3774 = vmatprep.subr.mxu0 0.0
    %3775 = vmatpush2.msra.mxu0 0.0
    %3776 = vmatprep.subr.mxu0 0.0
    %3777 = vmatpush2.msra.mxu0 0.0
    %3778 = vmatprep.subr.mxu0 0.0
    %3779 = vmatpush2.msra.mxu0 0.0
    %3780 = vmatprep.subr.mxu0 0.0
    %3781 = vmatpush2.msra.mxu0 0.0
    %3782 = vmatprep.mubr.f32.mxu0 0.0
    %3783 = vmatmul.mubr.f32.gmra.mxu0 %v3715
    %v3784 = vpop.f32.mrf.mxu0
    %v3785 = vadd.f32 0.0, %v3784
    %v3786 = vpop.f32.mrf.mxu0
    %v3787 = vadd.f32 0.0, %v3786
    %3788 = vdwg.mxu0
    %3789 = vmatprep.subr.mxu0 %v1276
    %3790 = vmatpush1.msra.mxu0 %v1275
    %3791 = vmatprep.subr.mxu0 %v1272
    %3792 = vmatpush1.msra.mxu0 %v1271
    %3793 = vmatprep.subr.mxu0 %v1268
    %3794 = vmatpush1.msra.mxu0 %v1267
    %3795 = vmatprep.subr.mxu0 %v1264
    %3796 = vmatpush1.msra.mxu0 %v1263
    %3797 = vmatprep.subr.mxu0 %v1260
    %3798 = vmatpush1.msra.mxu0 %v1259
    %3799 = vmatprep.subr.mxu0 %v1256
    %3800 = vmatpush1.msra.mxu0 %v1255
    %3801 = vmatprep.subr.mxu0 %v1252
    %3802 = vmatpush1.msra.mxu0 %v1251
    %3803 = vmatprep.subr.mxu0 %v1248
    %3804 = vmatpush1.msra.mxu0 %v1247
    %3805 = vmatprep.subr.mxu0 %v1244
    %3806 = vmatpush1.msra.mxu0 %v1243
    %3807 = vmatprep.subr.mxu0 %v1240
    %3808 = vmatpush1.msra.mxu0 %v1239
    %3809 = vmatprep.subr.mxu0 %v1236
    %3810 = vmatpush1.msra.mxu0 %v1235
    %3811 = vmatprep.subr.mxu0 %v1232
    %3812 = vmatpush1.msra.mxu0 %v1231
    %3813 = vmatprep.subr.mxu0 %v1228
    %3814 = vmatpush1.msra.mxu0 %v1227
    %3815 = vmatprep.subr.mxu0 %v1224
    %3816 = vmatpush1.msra.mxu0 %v1223
    %3817 = vmatprep.subr.mxu0 %v1220
    %3818 = vmatpush1.msra.mxu0 %v1219
    %3819 = vmatprep.subr.mxu0 %v1216
    %3820 = vmatpush1.msra.mxu0 %v1215
    %3821 = vmatprep.subr.mxu0 0.0
    %3822 = vmatpush2.msra.mxu0 0.0
    %3823 = vmatprep.subr.mxu0 0.0
    %3824 = vmatpush2.msra.mxu0 0.0
    %3825 = vmatprep.subr.mxu0 0.0
    %3826 = vmatpush2.msra.mxu0 0.0
    %3827 = vmatprep.subr.mxu0 0.0
    %3828 = vmatpush2.msra.mxu0 0.0
    %3829 = vmatprep.subr.mxu0 0.0
    %3830 = vmatpush2.msra.mxu0 0.0
    %3831 = vmatprep.subr.mxu0 0.0
    %3832 = vmatpush2.msra.mxu0 0.0
    %3833 = vmatprep.subr.mxu0 0.0
    %3834 = vmatpush2.msra.mxu0 0.0
    %3835 = vmatprep.subr.mxu0 0.0
    %3836 = vmatpush2.msra.mxu0 0.0
    %3837 = vmatprep.subr.mxu0 0.0
    %3838 = vmatpush2.msra.mxu0 0.0
    %3839 = vmatprep.subr.mxu0 0.0
    %3840 = vmatpush2.msra.mxu0 0.0
    %3841 = vmatprep.subr.mxu0 0.0
    %3842 = vmatpush2.msra.mxu0 0.0
    %3843 = vmatprep.subr.mxu0 0.0
    %3844 = vmatpush2.msra.mxu0 0.0
    %3845 = vmatprep.subr.mxu0 0.0
    %3846 = vmatpush2.msra.mxu0 0.0
    %3847 = vmatprep.subr.mxu0 0.0
    %3848 = vmatpush2.msra.mxu0 0.0
    %3849 = vmatprep.subr.mxu0 0.0
    %3850 = vmatpush2.msra.mxu0 0.0
    %3851 = vmatprep.subr.mxu0 0.0
    %3852 = vmatpush2.msra.mxu0 0.0
    %3853 = vmatprep.mubr.f32.mxu0 0.0
    %3854 = vmatmul.mubr.f32.gmra.mxu0 %v3715
    %v3855 = vpop.f32.mrf.mxu0
    %v3856 = vadd.f32 0.0, %v3855
    %v3857 = vpop.f32.mrf.mxu0
    %v3858 = vadd.f32 0.0, %v3857
    %3859 = vdwg.mxu0
    %v3861 = vrot.slane %v3715, 2
    %3863 = vmatprep.subr.mxu0 %v1339
    %3864 = vmatpush1.msra.mxu0 %v1338
    %3865 = vmatprep.subr.mxu0 %v1335
    %3866 = vmatpush1.msra.mxu0 %v1334
    %3867 = vmatprep.subr.mxu0 %v1331
    %3868 = vmatpush1.msra.mxu0 %v1330
    %3869 = vmatprep.subr.mxu0 %v1327
    %3870 = vmatpush1.msra.mxu0 %v1326
    %3871 = vmatprep.subr.mxu0 %v1323
    %3872 = vmatpush1.msra.mxu0 %v1322
    %3873 = vmatprep.subr.mxu0 %v1319
    %3874 = vmatpush1.msra.mxu0 %v1318
    %3875 = vmatprep.subr.mxu0 %v1315
    %3876 = vmatpush1.msra.mxu0 %v1314
    %3877 = vmatprep.subr.mxu0 %v1311
    %3878 = vmatpush1.msra.mxu0 %v1310
    %3879 = vmatprep.subr.mxu0 %v1307
    %3880 = vmatpush1.msra.mxu0 %v1306
    %3881 = vmatprep.subr.mxu0 %v1303
    %3882 = vmatpush1.msra.mxu0 %v1302
    %3883 = vmatprep.subr.mxu0 %v1299
    %3884 = vmatpush1.msra.mxu0 %v1298
    %3885 = vmatprep.subr.mxu0 %v1295
    %3886 = vmatpush1.msra.mxu0 %v1294
    %3887 = vmatprep.subr.mxu0 %v1291
    %3888 = vmatpush1.msra.mxu0 %v1290
    %3889 = vmatprep.subr.mxu0 %v1287
    %3890 = vmatpush1.msra.mxu0 %v1286
    %3891 = vmatprep.subr.mxu0 %v1283
    %3892 = vmatpush1.msra.mxu0 %v1282
    %3893 = vmatprep.subr.mxu0 %v1279
    %3894 = vmatpush1.msra.mxu0 %v1278
    %3895 = vmatprep.subr.mxu0 0.0
    %3896 = vmatpush2.msra.mxu0 0.0
    %3897 = vmatprep.subr.mxu0 0.0
    %3898 = vmatpush2.msra.mxu0 0.0
    %3899 = vmatprep.subr.mxu0 0.0
    %3900 = vmatpush2.msra.mxu0 0.0
    %3901 = vmatprep.subr.mxu0 0.0
    %3902 = vmatpush2.msra.mxu0 0.0
    %3903 = vmatprep.subr.mxu0 0.0
    %3904 = vmatpush2.msra.mxu0 0.0
    %3905 = vmatprep.subr.mxu0 0.0
    %3906 = vmatpush2.msra.mxu0 0.0
    %3907 = vmatprep.subr.mxu0 0.0
    %3908 = vmatpush2.msra.mxu0 0.0
    %3909 = vmatprep.subr.mxu0 0.0
    %3910 = vmatpush2.msra.mxu0 0.0
    %3911 = vmatprep.subr.mxu0 0.0
    %3912 = vmatpush2.msra.mxu0 0.0
    %3913 = vmatprep.subr.mxu0 0.0
    %3914 = vmatpush2.msra.mxu0 0.0
    %3915 = vmatprep.subr.mxu0 0.0
    %3916 = vmatpush2.msra.mxu0 0.0
    %3917 = vmatprep.subr.mxu0 0.0
    %3918 = vmatpush2.msra.mxu0 0.0
    %3919 = vmatprep.subr.mxu0 0.0
    %3920 = vmatpush2.msra.mxu0 0.0
    %3921 = vmatprep.subr.mxu0 0.0
    %3922 = vmatpush2.msra.mxu0 0.0
    %3923 = vmatprep.subr.mxu0 0.0
    %3924 = vmatpush2.msra.mxu0 0.0
    %3925 = vmatprep.subr.mxu0 0.0
    %3926 = vmatpush2.msra.mxu0 0.0
    %3927 = vmatprep.mubr.f32.mxu0 0.0
    %3928 = vmatmul.mubr.f32.gmra.mxu0 %v3861
    %v3929 = vpop.f32.mrf.mxu0
    %v3930 = vadd.f32 0.0, %v3929
    %v3931 = vpop.f32.mrf.mxu0
    %v3932 = vadd.f32 0.0, %v3931
    %3933 = vdwg.mxu0
    %3934 = vmatprep.subr.mxu0 %v1341
    %3935 = vmatpush1.msra.mxu0 %v1340
    %3936 = vmatprep.subr.mxu0 %v1337
    %3937 = vmatpush1.msra.mxu0 %v1336
    %3938 = vmatprep.subr.mxu0 %v1333
    %3939 = vmatpush1.msra.mxu0 %v1332
    %3940 = vmatprep.subr.mxu0 %v1329
    %3941 = vmatpush1.msra.mxu0 %v1328
    %3942 = vmatprep.subr.mxu0 %v1325
    %3943 = vmatpush1.msra.mxu0 %v1324
    %3944 = vmatprep.subr.mxu0 %v1321
    %3945 = vmatpush1.msra.mxu0 %v1320
    %3946 = vmatprep.subr.mxu0 %v1317
    %3947 = vmatpush1.msra.mxu0 %v1316
    %3948 = vmatprep.subr.mxu0 %v1313
    %3949 = vmatpush1.msra.mxu0 %v1312
    %3950 = vmatprep.subr.mxu0 %v1309
    %3951 = vmatpush1.msra.mxu0 %v1308
    %3952 = vmatprep.subr.mxu0 %v1305
    %3953 = vmatpush1.msra.mxu0 %v1304
    %3954 = vmatprep.subr.mxu0 %v1301
    %3955 = vmatpush1.msra.mxu0 %v1300
    %3956 = vmatprep.subr.mxu0 %v1297
    %3957 = vmatpush1.msra.mxu0 %v1296
    %3958 = vmatprep.subr.mxu0 %v1293
    %3959 = vmatpush1.msra.mxu0 %v1292
    %3960 = vmatprep.subr.mxu0 %v1289
    %3961 = vmatpush1.msra.mxu0 %v1288
    %3962 = vmatprep.subr.mxu0 %v1285
    %3963 = vmatpush1.msra.mxu0 %v1284
    %3964 = vmatprep.subr.mxu0 %v1281
    %3965 = vmatpush1.msra.mxu0 %v1280
    %3966 = vmatprep.subr.mxu0 0.0
    %3967 = vmatpush2.msra.mxu0 0.0
    %3968 = vmatprep.subr.mxu0 0.0
    %3969 = vmatpush2.msra.mxu0 0.0
    %3970 = vmatprep.subr.mxu0 0.0
    %3971 = vmatpush2.msra.mxu0 0.0
    %3972 = vmatprep.subr.mxu0 0.0
    %3973 = vmatpush2.msra.mxu0 0.0
    %3974 = vmatprep.subr.mxu0 0.0
    %3975 = vmatpush2.msra.mxu0 0.0
    %3976 = vmatprep.subr.mxu0 0.0
    %3977 = vmatpush2.msra.mxu0 0.0
    %3978 = vmatprep.subr.mxu0 0.0
    %3979 = vmatpush2.msra.mxu0 0.0
    %3980 = vmatprep.subr.mxu0 0.0
    %3981 = vmatpush2.msra.mxu0 0.0
    %3982 = vmatprep.subr.mxu0 0.0
    %3983 = vmatpush2.msra.mxu0 0.0
    %3984 = vmatprep.subr.mxu0 0.0
    %3985 = vmatpush2.msra.mxu0 0.0
    %3986 = vmatprep.subr.mxu0 0.0
    %3987 = vmatpush2.msra.mxu0 0.0
    %3988 = vmatprep.subr.mxu0 0.0
    %3989 = vmatpush2.msra.mxu0 0.0
    %3990 = vmatprep.subr.mxu0 0.0
    %3991 = vmatpush2.msra.mxu0 0.0
    %3992 = vmatprep.subr.mxu0 0.0
    %3993 = vmatpush2.msra.mxu0 0.0
    %3994 = vmatprep.subr.mxu0 0.0
    %3995 = vmatpush2.msra.mxu0 0.0
    %3996 = vmatprep.subr.mxu0 0.0
    %3997 = vmatpush2.msra.mxu0 0.0
    %3998 = vmatprep.mubr.f32.mxu0 0.0
    %3999 = vmatmul.mubr.f32.gmra.mxu0 %v3861
    %v4000 = vpop.f32.mrf.mxu0
    %v4001 = vadd.f32 0.0, %v4000
    %v4002 = vpop.f32.mrf.mxu0
    %v4003 = vadd.f32 0.0, %v4002
    %4004 = vdwg.mxu0
    %v4009 = vrot.slane %v3930, 6
    %v4010 = vrot.slane %v3932, 6
    %v4011 = vrot.slane %v4001, 6
    %v4012 = vrot.slane %v4003, 6
    %v4017 = vsel %vm1643, %v3785, %v4009
    %v4018 = vsel %vm1643, %v3787, %v4010
    %v4019 = vsel %vm1643, %v3856, %v4011
    %v4020 = vsel %vm1643, %v3858, %v4012
    %v4025 = vcombine.low %v4017, %v4018
    %v4026 = vcombine.low %v4019, %v4020
    %v4029 = vadd.f32 %v3716, %v4025
    %v4030 = vadd.f32 %v3717, %v4026
    %v4031 = vxor.u32 %v4029, 2147483648
    %v4032 = vxor.u32 %v4030, 2147483648
    %v4033 = vmul.f32 %v4031, 1.442695
    %v4034 = vpow.pop %v4033
    %v4035 = vmul.f32 %v4032, 1.442695
    %v4036 = vpow.pop %v4035
    %v4037 = vadd.f32 %v4034, 1.0
    %v4038 = vadd.f32 %v4036, 1.0
    %v4039 = vrcp.pop %v4037
    %v4040 = vmul.f32 1.0, %v4039
    %v4041 = vrcp.pop %v4038
    %v4042 = vmul.f32 1.0, %v4041
    %v4044 = vrot.slane %v4030, 4
    %v4046 = vtanh.pop %v4044
    %v4048 = vrot.slane %v4040, 4
    %v4050 = vmul.f32 %v4048, %v3713
    %v4051 = vmul.f32 %v4040, %v4046
    %v4052 = vadd.f32 %v4050, %v4051
    %v4053 = vtanh.pop %v4052
    %v4054 = vmul.f32 %v4042, %v4053
    %4055 = vst [vmem:[#allocation12] sm:$0xf] %v4054
    %4056 = vst [vmem:[#allocation13] sm:$0xf] %v4052
    %v4057 = vld [vmem:[%s11] sm:$0xff]
    %v4058 = vld [vmem:[%s11 + $0x8] sm:$0xff]
    %v4059 = vld [vmem:[%s11 + $0x10] sm:$0xff]
    %v4060 = vld [vmem:[%s11 + $0x18] sm:$0xff]
    %v4061 = vld [vmem:[%s11 + $0x20] sm:$0xff]
    %v4062 = vld [vmem:[%s11 + $0x28] sm:$0xff]
    %v4063 = vld [vmem:[%s11 + $0x30] sm:$0xff]
    %v4064 = vld [vmem:[%s11 + $0x38] sm:$0xff]
    %v4065 = vld [vmem:[%s11 + $0x40] sm:$0xff]
    %v4066 = vld [vmem:[%s11 + $0x48] sm:$0xff]
    %v4067 = vld [vmem:[%s11 + $0x50] sm:$0xff]
    %v4068 = vld [vmem:[%s11 + $0x58] sm:$0xff]
    %v4069 = vld [vmem:[%s11 + $0x60] sm:$0xff]
    %v4070 = vld [vmem:[%s11 + $0x68] sm:$0xff]
    %v4071 = vld [vmem:[%s11 + $0x70] sm:$0xff]
    %v4072 = vld [vmem:[%s11 + $0x78] sm:$0xff]
    %v4073 = vld [vmem:[%s12] sm:$0x1]
    %v4075 = vlaneseq
    %v4076 = vshrl.u32 %v4075, 7
    %v4077 = vsub.s32 0, %v4076
    %v4078 = vrot.slane %v4073, %v4077
    %4080 = vmatprep.subr.mxu0 0.0
    %4081 = vmatpush1.msra.mxu0 %v4072
    %4082 = vmatprep.subr.mxu0 0.0
    %4083 = vmatpush1.msra.mxu0 %v4071
    %4084 = vmatprep.subr.mxu0 0.0
    %4085 = vmatpush1.msra.mxu0 %v4070
    %4086 = vmatprep.subr.mxu0 0.0
    %4087 = vmatpush1.msra.mxu0 %v4069
    %4088 = vmatprep.subr.mxu0 0.0
    %4089 = vmatpush1.msra.mxu0 %v4068
    %4090 = vmatprep.subr.mxu0 0.0
    %4091 = vmatpush1.msra.mxu0 %v4067
    %4092 = vmatprep.subr.mxu0 0.0
    %4093 = vmatpush1.msra.mxu0 %v4066
    %4094 = vmatprep.subr.mxu0 0.0
    %4095 = vmatpush1.msra.mxu0 %v4065
    %4096 = vmatprep.subr.mxu0 0.0
    %4097 = vmatpush1.msra.mxu0 %v4064
    %4098 = vmatprep.subr.mxu0 0.0
    %4099 = vmatpush1.msra.mxu0 %v4063
    %4100 = vmatprep.subr.mxu0 0.0
    %4101 = vmatpush1.msra.mxu0 %v4062
    %4102 = vmatprep.subr.mxu0 0.0
    %4103 = vmatpush1.msra.mxu0 %v4061
    %4104 = vmatprep.subr.mxu0 0.0
    %4105 = vmatpush1.msra.mxu0 %v4060
    %4106 = vmatprep.subr.mxu0 0.0
    %4107 = vmatpush1.msra.mxu0 %v4059
    %4108 = vmatprep.subr.mxu0 0.0
    %4109 = vmatpush1.msra.mxu0 %v4058
    %4110 = vmatprep.subr.mxu0 0.0
    %4111 = vmatpush1.msra.mxu0 %v4057
    %4112 = vmatprep.subr.mxu0 0.0
    %4113 = vmatpush2.msra.mxu0 0.0
    %4114 = vmatprep.subr.mxu0 0.0
    %4115 = vmatpush2.msra.mxu0 0.0
    %4116 = vmatprep.subr.mxu0 0.0
    %4117 = vmatpush2.msra.mxu0 0.0
    %4118 = vmatprep.subr.mxu0 0.0
    %4119 = vmatpush2.msra.mxu0 0.0
    %4120 = vmatprep.subr.mxu0 0.0
    %4121 = vmatpush2.msra.mxu0 0.0
    %4122 = vmatprep.subr.mxu0 0.0
    %4123 = vmatpush2.msra.mxu0 0.0
    %4124 = vmatprep.subr.mxu0 0.0
    %4125 = vmatpush2.msra.mxu0 0.0
    %4126 = vmatprep.subr.mxu0 0.0
    %4127 = vmatpush2.msra.mxu0 0.0
    %4128 = vmatprep.subr.mxu0 0.0
    %4129 = vmatpush2.msra.mxu0 0.0
    %4130 = vmatprep.subr.mxu0 0.0
    %4131 = vmatpush2.msra.mxu0 0.0
    %4132 = vmatprep.subr.mxu0 0.0
    %4133 = vmatpush2.msra.mxu0 0.0
    %4134 = vmatprep.subr.mxu0 0.0
    %4135 = vmatpush2.msra.mxu0 0.0
    %4136 = vmatprep.subr.mxu0 0.0
    %4137 = vmatpush2.msra.mxu0 0.0
    %4138 = vmatprep.subr.mxu0 0.0
    %4139 = vmatpush2.msra.mxu0 0.0
    %4140 = vmatprep.subr.mxu0 0.0
    %4141 = vmatpush2.msra.mxu0 0.0
    %4142 = vmatprep.subr.mxu0 0.0
    %4143 = vmatpush2.msra.mxu0 0.0
    %4144 = vmatprep.mubr.f32.mxu0 0.0
    %4145 = vmatmul.mubr.f32.gmra.mxu0 %v4054
    %v4146 = vpop.f32.mrf.mxu0
    %v4147 = vadd.f32 %v4078, %v4146
    %v4148 = vpop.f32.mrf.mxu0
    %4149 = vdwg.mxu0
    %vm4150 = vcmask 519168
    %4151 = vst.msk [vmem:[%s17] sm:$0xf] %vm4150, %v4147
    %v4152 = vmul.f32 %v4147, 0.5
    %v4153 = vmul.f32 %v4152, 1.442695
    %v4154 = vpow.pop %v4153
    %v4155 = vld [vmem:[%s4] sm:$0xf]
    %4157 = vset.pattern.permute.xlu0 0
    %4158 = vperm.xlu0 %4157, %v4155
    %v4159 = vpop.permute.xlu0 %4158
    %v4161 = vmul.f32 %v4159, %v4154
    %4163 = vrot.lane.b32.xlu0 %v4147, 32
    %v4164 = vpop.permute.xlu0 %4163
    %v4166 = vadd.f32 %v4161, %v4164
    %v4167 = vld [vmem:[%s13] sm:$0xff]
    %v4168 = vld [vmem:[%s13 + $0x8] sm:$0xff]
    %v4169 = vld [vmem:[%s13 + $0x10] sm:$0xff]
    %v4170 = vld [vmem:[%s13 + $0x18] sm:$0xff]
    %v4171 = vld [vmem:[%s14] sm:$0x1]
    %v4173 = vlaneseq
    %v4174 = vshrl.u32 %v4173, 7
    %v4175 = vsub.s32 0, %v4174
    %v4176 = vrot.slane %v4171, %v4175
    %4179 = vrot.lane.b32.xlu0 %v4166, 96
    %v4180 = vpop.permute.xlu0 %4179
    %vm4181 = vcmask 261120
    %v4182 = vsel %vm4181, %v4180, 0
    %4184 = vmatprep.subr.mxu0 0.0
    %4185 = vmatpush1.msra.mxu0 0.0
    %4186 = vmatprep.subr.mxu0 0.0
    %4187 = vmatpush1.msra.mxu0 0.0
    %4188 = vmatprep.subr.mxu0 0.0
    %4189 = vmatpush1.msra.mxu0 0.0
    %4190 = vmatprep.subr.mxu0 0.0
    %4191 = vmatpush1.msra.mxu0 0.0
    %4192 = vmatprep.subr.mxu0 0.0
    %4193 = vmatpush1.msra.mxu0 0.0
    %4194 = vmatprep.subr.mxu0 0.0
    %4195 = vmatpush1.msra.mxu0 0.0
    %4196 = vmatprep.subr.mxu0 0.0
    %4197 = vmatpush1.msra.mxu0 0.0
    %4198 = vmatprep.subr.mxu0 0.0
    %4199 = vmatpush1.msra.mxu0 0.0
    %4200 = vmatprep.subr.mxu0 0.0
    %4201 = vmatpush1.msra.mxu0 0.0
    %4202 = vmatprep.subr.mxu0 0.0
    %4203 = vmatpush1.msra.mxu0 0.0
    %4204 = vmatprep.subr.mxu0 0.0
    %4205 = vmatpush1.msra.mxu0 0.0
    %4206 = vmatprep.subr.mxu0 0.0
    %4207 = vmatpush1.msra.mxu0 0.0
    %4208 = vmatprep.subr.mxu0 0.0
    %4209 = vmatpush1.msra.mxu0 %v4170
    %4210 = vmatprep.subr.mxu0 0.0
    %4211 = vmatpush1.msra.mxu0 %v4169
    %4212 = vmatprep.subr.mxu0 0.0
    %4213 = vmatpush1.msra.mxu0 %v4168
    %4214 = vmatprep.subr.mxu0 0.0
    %4215 = vmatpush1.msra.mxu0 %v4167
    %4216 = vmatprep.subr.mxu0 0.0
    %4217 = vmatpush2.msra.mxu0 0.0
    %4218 = vmatprep.subr.mxu0 0.0
    %4219 = vmatpush2.msra.mxu0 0.0
    %4220 = vmatprep.subr.mxu0 0.0
    %4221 = vmatpush2.msra.mxu0 0.0
    %4222 = vmatprep.subr.mxu0 0.0
    %4223 = vmatpush2.msra.mxu0 0.0
    %4224 = vmatprep.subr.mxu0 0.0
    %4225 = vmatpush2.msra.mxu0 0.0
    %4226 = vmatprep.subr.mxu0 0.0
    %4227 = vmatpush2.msra.mxu0 0.0
    %4228 = vmatprep.subr.mxu0 0.0
    %4229 = vmatpush2.msra.mxu0 0.0
    %4230 = vmatprep.subr.mxu0 0.0
    %4231 = vmatpush2.msra.mxu0 0.0
    %4232 = vmatprep.subr.mxu0 0.0
    %4233 = vmatpush2.msra.mxu0 0.0
    %4234 = vmatprep.subr.mxu0 0.0
    %4235 = vmatpush2.msra.mxu0 0.0
    %4236 = vmatprep.subr.mxu0 0.0
    %4237 = vmatpush2.msra.mxu0 0.0
    %4238 = vmatprep.subr.mxu0 0.0
    %4239 = vmatpush2.msra.mxu0 0.0
    %4240 = vmatprep.subr.mxu0 0.0
    %4241 = vmatpush2.msra.mxu0 0.0
    %4242 = vmatprep.subr.mxu0 0.0
    %4243 = vmatpush2.msra.mxu0 0.0
    %4244 = vmatprep.subr.mxu0 0.0
    %4245 = vmatpush2.msra.mxu0 0.0
    %4246 = vmatprep.subr.mxu0 0.0
    %4247 = vmatpush2.msra.mxu0 0.0
    %4248 = vmatprep.mubr.f32.mxu0 0.0
    %4249 = vmatmul.mubr.f32.gmra.mxu0 %v4182
    %v4250 = vpop.f32.mrf.mxu0
    %v4251 = vadd.f32 %v4176, %v4250
    %v4252 = vpop.f32.mrf.mxu0
    %4253 = vdwg.mxu0
    %v4254 = vld [vmem:[#allocation10] sm:$0xff]
    %v4255 = vld [vmem:[#allocation10 + $0x8] sm:$0xff]
    %v4256 = vld [vmem:[#allocation10 + $0x10] sm:$0xff]
    %v4257 = vld [vmem:[#allocation10 + $0x18] sm:$0xff]
    %v4258 = vld [vmem:[#allocation10 + $0x20] sm:$0xff]
    %v4259 = vld [vmem:[#allocation10 + $0x28] sm:$0xff]
    %v4260 = vld [vmem:[#allocation10 + $0x30] sm:$0xff]
    %v4261 = vld [vmem:[#allocation10 + $0x38] sm:$0xff]
    %v4262 = vld [vmem:[#allocation10 + $0x40] sm:$0xff]
    %v4263 = vld [vmem:[#allocation10 + $0x48] sm:$0xff]
    %v4264 = vld [vmem:[#allocation10 + $0x50] sm:$0xff]
    %v4265 = vld [vmem:[#allocation10 + $0x58] sm:$0xff]
    %v4266 = vld [vmem:[#allocation10 + $0x60] sm:$0xff]
    %v4267 = vld [vmem:[#allocation10 + $0x68] sm:$0xff]
    %v4268 = vld [vmem:[#allocation10 + $0x70] sm:$0xff]
    %v4269 = vld [vmem:[#allocation10 + $0x78] sm:$0xff]
    %v4270 = vld [vmem:[#allocation10 + $0x80] sm:$0xff]
    %v4271 = vld [vmem:[#allocation10 + $0x88] sm:$0xff]
    %v4272 = vld [vmem:[#allocation10 + $0x90] sm:$0xff]
    %v4273 = vld [vmem:[#allocation10 + $0x98] sm:$0xff]
    %v4274 = vld [vmem:[#allocation10 + $0xa0] sm:$0xff]
    %v4275 = vld [vmem:[#allocation10 + $0xa8] sm:$0xff]
    %v4276 = vld [vmem:[#allocation10 + $0xb0] sm:$0xff]
    %v4277 = vld [vmem:[#allocation10 + $0xb8] sm:$0xff]
    %v4278 = vld [vmem:[#allocation10 + $0xc0] sm:$0xff]
    %v4279 = vld [vmem:[#allocation10 + $0xc8] sm:$0xff]
    %v4280 = vld [vmem:[#allocation10 + $0xd0] sm:$0xff]
    %v4281 = vld [vmem:[#allocation10 + $0xd8] sm:$0xff]
    %v4282 = vld [vmem:[#allocation10 + $0xe0] sm:$0xff]
    %v4283 = vld [vmem:[#allocation10 + $0xe8] sm:$0xff]
    %v4284 = vld [vmem:[#allocation10 + $0xf0] sm:$0xff]
    %v4285 = vld [vmem:[#allocation10 + $0xf8] sm:$0xff]
    %v4286 = vld [vmem:[#allocation10 + $0x100] sm:$0xff]
    %v4287 = vld [vmem:[#allocation10 + $0x108] sm:$0xff]
    %v4288 = vld [vmem:[#allocation10 + $0x110] sm:$0xff]
    %v4289 = vld [vmem:[#allocation10 + $0x118] sm:$0xff]
    %v4290 = vld [vmem:[#allocation10 + $0x120] sm:$0xff]
    %v4291 = vld [vmem:[#allocation10 + $0x128] sm:$0xff]
    %v4292 = vld [vmem:[#allocation10 + $0x130] sm:$0xff]
    %v4293 = vld [vmem:[#allocation10 + $0x138] sm:$0xff]
    %v4294 = vld [vmem:[#allocation10 + $0x140] sm:$0xff]
    %v4295 = vld [vmem:[#allocation10 + $0x148] sm:$0xff]
    %v4296 = vld [vmem:[#allocation10 + $0x150] sm:$0xff]
    %v4297 = vld [vmem:[#allocation10 + $0x158] sm:$0xff]
    %v4298 = vld [vmem:[#allocation10 + $0x160] sm:$0xff]
    %v4299 = vld [vmem:[#allocation10 + $0x168] sm:$0xff]
    %v4300 = vld [vmem:[#allocation10 + $0x170] sm:$0xff]
    %v4301 = vld [vmem:[#allocation10 + $0x178] sm:$0xff]
    %v4302 = vld [vmem:[#allocation10 + $0x180] sm:$0xff]
    %v4303 = vld [vmem:[#allocation10 + $0x188] sm:$0xff]
    %v4304 = vld [vmem:[#allocation10 + $0x190] sm:$0xff]
    %v4305 = vld [vmem:[#allocation10 + $0x198] sm:$0xff]
    %v4306 = vld [vmem:[#allocation10 + $0x1a0] sm:$0xff]
    %v4307 = vld [vmem:[#allocation10 + $0x1a8] sm:$0xff]
    %v4308 = vld [vmem:[#allocation10 + $0x1b0] sm:$0xff]
    %v4309 = vld [vmem:[#allocation10 + $0x1b8] sm:$0xff]
    %v4310 = vld [vmem:[#allocation10 + $0x1c0] sm:$0xff]
    %v4311 = vld [vmem:[#allocation10 + $0x1c8] sm:$0xff]
    %v4312 = vld [vmem:[#allocation10 + $0x1d0] sm:$0xff]
    %v4313 = vld [vmem:[#allocation10 + $0x1d8] sm:$0xff]
    %v4314 = vld [vmem:[#allocation10 + $0x1e0] sm:$0xff]
    %v4315 = vld [vmem:[#allocation10 + $0x1e8] sm:$0xff]
    %v4316 = vld [vmem:[#allocation10 + $0x1f0] sm:$0xff]
    %v4317 = vld [vmem:[#allocation10 + $0x1f8] sm:$0xff]
    %s4318 = scalar_lea.vmem [#allocation10], 512
    %v4319 = vld [vmem:[%s4318] sm:$0xff]
    %v4320 = vld [vmem:[%s4318 + $0x8] sm:$0xff]
    %v4321 = vld [vmem:[%s4318 + $0x10] sm:$0xff]
    %v4322 = vld [vmem:[%s4318 + $0x18] sm:$0xff]
    %v4323 = vld [vmem:[%s4318 + $0x20] sm:$0xff]
    %v4324 = vld [vmem:[%s4318 + $0x28] sm:$0xff]
    %v4325 = vld [vmem:[%s4318 + $0x30] sm:$0xff]
    %v4326 = vld [vmem:[%s4318 + $0x38] sm:$0xff]
    %v4327 = vld [vmem:[%s4318 + $0x40] sm:$0xff]
    %v4328 = vld [vmem:[%s4318 + $0x48] sm:$0xff]
    %v4329 = vld [vmem:[%s4318 + $0x50] sm:$0xff]
    %v4330 = vld [vmem:[%s4318 + $0x58] sm:$0xff]
    %v4331 = vld [vmem:[%s4318 + $0x60] sm:$0xff]
    %v4332 = vld [vmem:[%s4318 + $0x68] sm:$0xff]
    %v4333 = vld [vmem:[%s4318 + $0x70] sm:$0xff]
    %v4334 = vld [vmem:[%s4318 + $0x78] sm:$0xff]
    %v4335 = vld [vmem:[%s4318 + $0x80] sm:$0xff]
    %v4336 = vld [vmem:[%s4318 + $0x88] sm:$0xff]
    %v4337 = vld [vmem:[%s4318 + $0x90] sm:$0xff]
    %v4338 = vld [vmem:[%s4318 + $0x98] sm:$0xff]
    %v4339 = vld [vmem:[%s4318 + $0xa0] sm:$0xff]
    %v4340 = vld [vmem:[%s4318 + $0xa8] sm:$0xff]
    %v4341 = vld [vmem:[%s4318 + $0xb0] sm:$0xff]
    %v4342 = vld [vmem:[%s4318 + $0xb8] sm:$0xff]
    %v4343 = vld [vmem:[%s4318 + $0xc0] sm:$0xff]
    %v4344 = vld [vmem:[%s4318 + $0xc8] sm:$0xff]
    %v4345 = vld [vmem:[%s4318 + $0xd0] sm:$0xff]
    %v4346 = vld [vmem:[%s4318 + $0xd8] sm:$0xff]
    %v4347 = vld [vmem:[%s4318 + $0xe0] sm:$0xff]
    %v4348 = vld [vmem:[%s4318 + $0xe8] sm:$0xff]
    %v4349 = vld [vmem:[%s4318 + $0xf0] sm:$0xff]
    %v4350 = vld [vmem:[%s4318 + $0xf8] sm:$0xff]
    %v4351 = vld [vmem:[%s4318 + $0x100] sm:$0xff]
    %v4352 = vld [vmem:[%s4318 + $0x108] sm:$0xff]
    %v4353 = vld [vmem:[%s4318 + $0x110] sm:$0xff]
    %v4354 = vld [vmem:[%s4318 + $0x118] sm:$0xff]
    %v4355 = vld [vmem:[%s4318 + $0x120] sm:$0xff]
    %v4356 = vld [vmem:[%s4318 + $0x128] sm:$0xff]
    %v4357 = vld [vmem:[%s4318 + $0x130] sm:$0xff]
    %v4358 = vld [vmem:[%s4318 + $0x138] sm:$0xff]
    %v4359 = vld [vmem:[%s4318 + $0x140] sm:$0xff]
    %v4360 = vld [vmem:[%s4318 + $0x148] sm:$0xff]
    %v4361 = vld [vmem:[%s4318 + $0x150] sm:$0xff]
    %v4362 = vld [vmem:[%s4318 + $0x158] sm:$0xff]
    %v4363 = vld [vmem:[%s4318 + $0x160] sm:$0xff]
    %v4364 = vld [vmem:[%s4318 + $0x168] sm:$0xff]
    %v4365 = vld [vmem:[%s4318 + $0x170] sm:$0xff]
    %v4366 = vld [vmem:[%s4318 + $0x178] sm:$0xff]
    %v4367 = vld [vmem:[%s4318 + $0x180] sm:$0xff]
    %v4368 = vld [vmem:[%s4318 + $0x188] sm:$0xff]
    %v4369 = vld [vmem:[%s4318 + $0x190] sm:$0xff]
    %v4370 = vld [vmem:[%s4318 + $0x198] sm:$0xff]
    %v4371 = vld [vmem:[%s4318 + $0x1a0] sm:$0xff]
    %v4372 = vld [vmem:[%s4318 + $0x1a8] sm:$0xff]
    %v4373 = vld [vmem:[%s4318 + $0x1b0] sm:$0xff]
    %v4374 = vld [vmem:[%s4318 + $0x1b8] sm:$0xff]
    %v4375 = vld [vmem:[%s4318 + $0x1c0] sm:$0xff]
    %v4376 = vld [vmem:[%s4318 + $0x1c8] sm:$0xff]
    %v4377 = vld [vmem:[%s4318 + $0x1d0] sm:$0xff]
    %v4378 = vld [vmem:[%s4318 + $0x1d8] sm:$0xff]
    %v4379 = vld [vmem:[%s4318 + $0x1e0] sm:$0xff]
    %v4380 = vld [vmem:[%s4318 + $0x1e8] sm:$0xff]
    %v4381 = vld [vmem:[%s4318 + $0x1f0] sm:$0xff]
    %v4382 = vld [vmem:[%s4318 + $0x1f8] sm:$0xff]
    %v4383 = vld [vmem:[#allocation3] sm:$0xff]
    %v4384 = vld [vmem:[#allocation3 + $0x8] sm:$0xff]
    %4385 = vmatprep.subr.mxu0 %v4315
    %4386 = vmatpush1.msra.mxu0 %v4314
    %4387 = vmatprep.subr.mxu0 %v4311
    %4388 = vmatpush1.msra.mxu0 %v4310
    %4389 = vmatprep.subr.mxu0 %v4307
    %4390 = vmatpush1.msra.mxu0 %v4306
    %4391 = vmatprep.subr.mxu0 %v4303
    %4392 = vmatpush1.msra.mxu0 %v4302
    %4393 = vmatprep.subr.mxu0 %v4299
    %4394 = vmatpush1.msra.mxu0 %v4298
    %4395 = vmatprep.subr.mxu0 %v4295
    %4396 = vmatpush1.msra.mxu0 %v4294
    %4397 = vmatprep.subr.mxu0 %v4291
    %4398 = vmatpush1.msra.mxu0 %v4290
    %4399 = vmatprep.subr.mxu0 %v4287
    %4400 = vmatpush1.msra.mxu0 %v4286
    %4401 = vmatprep.subr.mxu0 %v4283
    %4402 = vmatpush1.msra.mxu0 %v4282
    %4403 = vmatprep.subr.mxu0 %v4279
    %4404 = vmatpush1.msra.mxu0 %v4278
    %4405 = vmatprep.subr.mxu0 %v4275
    %4406 = vmatpush1.msra.mxu0 %v4274
    %4407 = vmatprep.subr.mxu0 %v4271
    %4408 = vmatpush1.msra.mxu0 %v4270
    %4409 = vmatprep.subr.mxu0 %v4267
    %4410 = vmatpush1.msra.mxu0 %v4266
    %4411 = vmatprep.subr.mxu0 %v4263
    %4412 = vmatpush1.msra.mxu0 %v4262
    %4413 = vmatprep.subr.mxu0 %v4259
    %4414 = vmatpush1.msra.mxu0 %v4258
    %4415 = vmatprep.subr.mxu0 %v4255
    %4416 = vmatpush1.msra.mxu0 %v4254
    %4417 = vmatprep.subr.mxu0 0.0
    %4418 = vmatpush2.msra.mxu0 0.0
    %4419 = vmatprep.subr.mxu0 0.0
    %4420 = vmatpush2.msra.mxu0 0.0
    %4421 = vmatprep.subr.mxu0 0.0
    %4422 = vmatpush2.msra.mxu0 0.0
    %4423 = vmatprep.subr.mxu0 0.0
    %4424 = vmatpush2.msra.mxu0 0.0
    %4425 = vmatprep.subr.mxu0 0.0
    %4426 = vmatpush2.msra.mxu0 0.0
    %4427 = vmatprep.subr.mxu0 0.0
    %4428 = vmatpush2.msra.mxu0 0.0
    %4429 = vmatprep.subr.mxu0 0.0
    %4430 = vmatpush2.msra.mxu0 0.0
    %4431 = vmatprep.subr.mxu0 0.0
    %4432 = vmatpush2.msra.mxu0 0.0
    %4433 = vmatprep.subr.mxu0 0.0
    %4434 = vmatpush2.msra.mxu0 0.0
    %4435 = vmatprep.subr.mxu0 0.0
    %4436 = vmatpush2.msra.mxu0 0.0
    %4437 = vmatprep.subr.mxu0 0.0
    %4438 = vmatpush2.msra.mxu0 0.0
    %4439 = vmatprep.subr.mxu0 0.0
    %4440 = vmatpush2.msra.mxu0 0.0
    %4441 = vmatprep.subr.mxu0 0.0
    %4442 = vmatpush2.msra.mxu0 0.0
    %4443 = vmatprep.subr.mxu0 0.0
    %4444 = vmatpush2.msra.mxu0 0.0
    %4445 = vmatprep.subr.mxu0 0.0
    %4446 = vmatpush2.msra.mxu0 0.0
    %4447 = vmatprep.subr.mxu0 0.0
    %4448 = vmatpush2.msra.mxu0 0.0
    %4449 = vmatprep.mubr.f32.mxu0 0.0
    %4450 = vmatmul.mubr.f32.gmra.mxu0 %v4251
    %v4451 = vpop.f32.mrf.mxu0
    %v4452 = vadd.f32 0.0, %v4451
    %v4453 = vpop.f32.mrf.mxu0
    %v4454 = vadd.f32 0.0, %v4453
    %4455 = vdwg.mxu0
    %4456 = vmatprep.subr.mxu0 %v4317
    %4457 = vmatpush1.msra.mxu0 %v4316
    %4458 = vmatprep.subr.mxu0 %v4313
    %4459 = vmatpush1.msra.mxu0 %v4312
    %4460 = vmatprep.subr.mxu0 %v4309
    %4461 = vmatpush1.msra.mxu0 %v4308
    %4462 = vmatprep.subr.mxu0 %v4305
    %4463 = vmatpush1.msra.mxu0 %v4304
    %4464 = vmatprep.subr.mxu0 %v4301
    %4465 = vmatpush1.msra.mxu0 %v4300
    %4466 = vmatprep.subr.mxu0 %v4297
    %4467 = vmatpush1.msra.mxu0 %v4296
    %4468 = vmatprep.subr.mxu0 %v4293
    %4469 = vmatpush1.msra.mxu0 %v4292
    %4470 = vmatprep.subr.mxu0 %v4289
    %4471 = vmatpush1.msra.mxu0 %v4288
    %4472 = vmatprep.subr.mxu0 %v4285
    %4473 = vmatpush1.msra.mxu0 %v4284
    %4474 = vmatprep.subr.mxu0 %v4281
    %4475 = vmatpush1.msra.mxu0 %v4280
    %4476 = vmatprep.subr.mxu0 %v4277
    %4477 = vmatpush1.msra.mxu0 %v4276
    %4478 = vmatprep.subr.mxu0 %v4273
    %4479 = vmatpush1.msra.mxu0 %v4272
    %4480 = vmatprep.subr.mxu0 %v4269
    %4481 = vmatpush1.msra.mxu0 %v4268
    %4482 = vmatprep.subr.mxu0 %v4265
    %4483 = vmatpush1.msra.mxu0 %v4264
    %4484 = vmatprep.subr.mxu0 %v4261
    %4485 = vmatpush1.msra.mxu0 %v4260
    %4486 = vmatprep.subr.mxu0 %v4257
    %4487 = vmatpush1.msra.mxu0 %v4256
    %4488 = vmatprep.subr.mxu0 0.0
    %4489 = vmatpush2.msra.mxu0 0.0
    %4490 = vmatprep.subr.mxu0 0.0
    %4491 = vmatpush2.msra.mxu0 0.0
    %4492 = vmatprep.subr.mxu0 0.0
    %4493 = vmatpush2.msra.mxu0 0.0
    %4494 = vmatprep.subr.mxu0 0.0
    %4495 = vmatpush2.msra.mxu0 0.0
    %4496 = vmatprep.subr.mxu0 0.0
    %4497 = vmatpush2.msra.mxu0 0.0
    %4498 = vmatprep.subr.mxu0 0.0
    %4499 = vmatpush2.msra.mxu0 0.0
    %4500 = vmatprep.subr.mxu0 0.0
    %4501 = vmatpush2.msra.mxu0 0.0
    %4502 = vmatprep.subr.mxu0 0.0
    %4503 = vmatpush2.msra.mxu0 0.0
    %4504 = vmatprep.subr.mxu0 0.0
    %4505 = vmatpush2.msra.mxu0 0.0
    %4506 = vmatprep.subr.mxu0 0.0
    %4507 = vmatpush2.msra.mxu0 0.0
    %4508 = vmatprep.subr.mxu0 0.0
    %4509 = vmatpush2.msra.mxu0 0.0
    %4510 = vmatprep.subr.mxu0 0.0
    %4511 = vmatpush2.msra.mxu0 0.0
    %4512 = vmatprep.subr.mxu0 0.0
    %4513 = vmatpush2.msra.mxu0 0.0
    %4514 = vmatprep.subr.mxu0 0.0
    %4515 = vmatpush2.msra.mxu0 0.0
    %4516 = vmatprep.subr.mxu0 0.0
    %4517 = vmatpush2.msra.mxu0 0.0
    %4518 = vmatprep.subr.mxu0 0.0
    %4519 = vmatpush2.msra.mxu0 0.0
    %4520 = vmatprep.mubr.f32.mxu0 0.0
    %4521 = vmatmul.mubr.f32.gmra.mxu0 %v4251
    %v4522 = vpop.f32.mrf.mxu0
    %v4523 = vadd.f32 0.0, %v4522
    %v4524 = vpop.f32.mrf.mxu0
    %v4525 = vadd.f32 0.0, %v4524
    %4526 = vdwg.mxu0
    %v4528 = vrot.slane %v4251, 2
    %4530 = vmatprep.subr.mxu0 %v4380
    %4531 = vmatpush1.msra.mxu0 %v4379
    %4532 = vmatprep.subr.mxu0 %v4376
    %4533 = vmatpush1.msra.mxu0 %v4375
    %4534 = vmatprep.subr.mxu0 %v4372
    %4535 = vmatpush1.msra.mxu0 %v4371
    %4536 = vmatprep.subr.mxu0 %v4368
    %4537 = vmatpush1.msra.mxu0 %v4367
    %4538 = vmatprep.subr.mxu0 %v4364
    %4539 = vmatpush1.msra.mxu0 %v4363
    %4540 = vmatprep.subr.mxu0 %v4360
    %4541 = vmatpush1.msra.mxu0 %v4359
    %4542 = vmatprep.subr.mxu0 %v4356
    %4543 = vmatpush1.msra.mxu0 %v4355
    %4544 = vmatprep.subr.mxu0 %v4352
    %4545 = vmatpush1.msra.mxu0 %v4351
    %4546 = vmatprep.subr.mxu0 %v4348
    %4547 = vmatpush1.msra.mxu0 %v4347
    %4548 = vmatprep.subr.mxu0 %v4344
    %4549 = vmatpush1.msra.mxu0 %v4343
    %4550 = vmatprep.subr.mxu0 %v4340
    %4551 = vmatpush1.msra.mxu0 %v4339
    %4552 = vmatprep.subr.mxu0 %v4336
    %4553 = vmatpush1.msra.mxu0 %v4335
    %4554 = vmatprep.subr.mxu0 %v4332
    %4555 = vmatpush1.msra.mxu0 %v4331
    %4556 = vmatprep.subr.mxu0 %v4328
    %4557 = vmatpush1.msra.mxu0 %v4327
    %4558 = vmatprep.subr.mxu0 %v4324
    %4559 = vmatpush1.msra.mxu0 %v4323
    %4560 = vmatprep.subr.mxu0 %v4320
    %4561 = vmatpush1.msra.mxu0 %v4319
    %4562 = vmatprep.subr.mxu0 0.0
    %4563 = vmatpush2.msra.mxu0 0.0
    %4564 = vmatprep.subr.mxu0 0.0
    %4565 = vmatpush2.msra.mxu0 0.0
    %4566 = vmatprep.subr.mxu0 0.0
    %4567 = vmatpush2.msra.mxu0 0.0
    %4568 = vmatprep.subr.mxu0 0.0
    %4569 = vmatpush2.msra.mxu0 0.0
    %4570 = vmatprep.subr.mxu0 0.0
    %4571 = vmatpush2.msra.mxu0 0.0
    %4572 = vmatprep.subr.mxu0 0.0
    %4573 = vmatpush2.msra.mxu0 0.0
    %4574 = vmatprep.subr.mxu0 0.0
    %4575 = vmatpush2.msra.mxu0 0.0
    %4576 = vmatprep.subr.mxu0 0.0
    %4577 = vmatpush2.msra.mxu0 0.0
    %4578 = vmatprep.subr.mxu0 0.0
    %4579 = vmatpush2.msra.mxu0 0.0
    %4580 = vmatprep.subr.mxu0 0.0
    %4581 = vmatpush2.msra.mxu0 0.0
    %4582 = vmatprep.subr.mxu0 0.0
    %4583 = vmatpush2.msra.mxu0 0.0
    %4584 = vmatprep.subr.mxu0 0.0
    %4585 = vmatpush2.msra.mxu0 0.0
    %4586 = vmatprep.subr.mxu0 0.0
    %4587 = vmatpush2.msra.mxu0 0.0
    %4588 = vmatprep.subr.mxu0 0.0
    %4589 = vmatpush2.msra.mxu0 0.0
    %4590 = vmatprep.subr.mxu0 0.0
    %4591 = vmatpush2.msra.mxu0 0.0
    %4592 = vmatprep.subr.mxu0 0.0
    %4593 = vmatpush2.msra.mxu0 0.0
    %4594 = vmatprep.mubr.f32.mxu0 0.0
    %4595 = vmatmul.mubr.f32.gmra.mxu0 %v4528
    %v4596 = vpop.f32.mrf.mxu0
    %v4597 = vadd.f32 0.0, %v4596
    %v4598 = vpop.f32.mrf.mxu0
    %v4599 = vadd.f32 0.0, %v4598
    %4600 = vdwg.mxu0
    %4601 = vmatprep.subr.mxu0 %v4382
    %4602 = vmatpush1.msra.mxu0 %v4381
    %4603 = vmatprep.subr.mxu0 %v4378
    %4604 = vmatpush1.msra.mxu0 %v4377
    %4605 = vmatprep.subr.mxu0 %v4374
    %4606 = vmatpush1.msra.mxu0 %v4373
    %4607 = vmatprep.subr.mxu0 %v4370
    %4608 = vmatpush1.msra.mxu0 %v4369
    %4609 = vmatprep.subr.mxu0 %v4366
    %4610 = vmatpush1.msra.mxu0 %v4365
    %4611 = vmatprep.subr.mxu0 %v4362
    %4612 = vmatpush1.msra.mxu0 %v4361
    %4613 = vmatprep.subr.mxu0 %v4358
    %4614 = vmatpush1.msra.mxu0 %v4357
    %4615 = vmatprep.subr.mxu0 %v4354
    %4616 = vmatpush1.msra.mxu0 %v4353
    %4617 = vmatprep.subr.mxu0 %v4350
    %4618 = vmatpush1.msra.mxu0 %v4349
    %4619 = vmatprep.subr.mxu0 %v4346
    %4620 = vmatpush1.msra.mxu0 %v4345
    %4621 = vmatprep.subr.mxu0 %v4342
    %4622 = vmatpush1.msra.mxu0 %v4341
    %4623 = vmatprep.subr.mxu0 %v4338
    %4624 = vmatpush1.msra.mxu0 %v4337
    %4625 = vmatprep.subr.mxu0 %v4334
    %4626 = vmatpush1.msra.mxu0 %v4333
    %4627 = vmatprep.subr.mxu0 %v4330
    %4628 = vmatpush1.msra.mxu0 %v4329
    %4629 = vmatprep.subr.mxu0 %v4326
    %4630 = vmatpush1.msra.mxu0 %v4325
    %4631 = vmatprep.subr.mxu0 %v4322
    %4632 = vmatpush1.msra.mxu0 %v4321
    %4633 = vmatprep.subr.mxu0 0.0
    %4634 = vmatpush2.msra.mxu0 0.0
    %4635 = vmatprep.subr.mxu0 0.0
    %4636 = vmatpush2.msra.mxu0 0.0
    %4637 = vmatprep.subr.mxu0 0.0
    %4638 = vmatpush2.msra.mxu0 0.0
    %4639 = vmatprep.subr.mxu0 0.0
    %4640 = vmatpush2.msra.mxu0 0.0
    %4641 = vmatprep.subr.mxu0 0.0
    %4642 = vmatpush2.msra.mxu0 0.0
    %4643 = vmatprep.subr.mxu0 0.0
    %4644 = vmatpush2.msra.mxu0 0.0
    %4645 = vmatprep.subr.mxu0 0.0
    %4646 = vmatpush2.msra.mxu0 0.0
    %4647 = vmatprep.subr.mxu0 0.0
    %4648 = vmatpush2.msra.mxu0 0.0
    %4649 = vmatprep.subr.mxu0 0.0
    %4650 = vmatpush2.msra.mxu0 0.0
    %4651 = vmatprep.subr.mxu0 0.0
    %4652 = vmatpush2.msra.mxu0 0.0
    %4653 = vmatprep.subr.mxu0 0.0
    %4654 = vmatpush2.msra.mxu0 0.0
    %4655 = vmatprep.subr.mxu0 0.0
    %4656 = vmatpush2.msra.mxu0 0.0
    %4657 = vmatprep.subr.mxu0 0.0
    %4658 = vmatpush2.msra.mxu0 0.0
    %4659 = vmatprep.subr.mxu0 0.0
    %4660 = vmatpush2.msra.mxu0 0.0
    %4661 = vmatprep.subr.mxu0 0.0
    %4662 = vmatpush2.msra.mxu0 0.0
    %4663 = vmatprep.subr.mxu0 0.0
    %4664 = vmatpush2.msra.mxu0 0.0
    %4665 = vmatprep.mubr.f32.mxu0 0.0
    %4666 = vmatmul.mubr.f32.gmra.mxu0 %v4528
    %v4667 = vpop.f32.mrf.mxu0
    %v4668 = vadd.f32 0.0, %v4667
    %v4669 = vpop.f32.mrf.mxu0
    %v4670 = vadd.f32 0.0, %v4669
    %4671 = vdwg.mxu0
    %v4676 = vrot.slane %v4597, 6
    %v4677 = vrot.slane %v4599, 6
    %v4678 = vrot.slane %v4668, 6
    %v4679 = vrot.slane %v4670, 6
    %v4684 = vsel %vm1643, %v4452, %v4676
    %v4685 = vsel %vm1643, %v4454, %v4677
    %v4686 = vsel %vm1643, %v4523, %v4678
    %v4687 = vsel %vm1643, %v4525, %v4679
    %v4692 = vcombine.low %v4684, %v4685
    %v4693 = vcombine.low %v4686, %v4687
    %v4696 = vadd.f32 %v4383, %v4692
    %v4697 = vadd.f32 %v4384, %v4693
    %v4698 = vxor.u32 %v4696, 2147483648
    %v4699 = vxor.u32 %v4697, 2147483648
    %v4700 = vmul.f32 %v4698, 1.442695
    %v4701 = vpow.pop %v4700
    %v4702 = vmul.f32 %v4699, 1.442695
    %v4703 = vpow.pop %v4702
    %v4704 = vadd.f32 %v4701, 1.0
    %v4705 = vadd.f32 %v4703, 1.0
    %v4706 = vrcp.pop %v4704
    %v4707 = vmul.f32 1.0, %v4706
    %v4708 = vrcp.pop %v4705
    %v4709 = vmul.f32 1.0, %v4708
    %v4711 = vrot.slane %v4697, 4
    %v4713 = vtanh.pop %v4711
    %v4715 = vrot.slane %v4707, 4
    %v4717 = vmul.f32 %v4715, %v4251
    %v4718 = vmul.f32 %v4707, %v4713
    %v4719 = vadd.f32 %v4717, %v4718
    %v4720 = vtanh.pop %v4719
    %v4721 = vmul.f32 %v4709, %v4720
    %4722 = vst [vmem:[%s15] sm:$0x3] %v4721
    %s4723 = scalar_lea.vmem %s16, 14
    %4724 = vst [vmem:[%s4723 - $0x2] sm:$0xc] %v4721
    %v4725 = vld [vmem:[%s1020] sm:$0xff]
    %v4726 = vld [vmem:[%s1020 + $0x8] sm:$0xff]
    %4727 = vmatprep.subr.mxu0 %v4315
    %4728 = vmatpush1.msra.mxu0 %v4314
    %4729 = vmatprep.subr.mxu0 %v4311
    %4730 = vmatpush1.msra.mxu0 %v4310
    %4731 = vmatprep.subr.mxu0 %v4307
    %4732 = vmatpush1.msra.mxu0 %v4306
    %4733 = vmatprep.subr.mxu0 %v4303
    %4734 = vmatpush1.msra.mxu0 %v4302
    %4735 = vmatprep.subr.mxu0 %v4299
    %4736 = vmatpush1.msra.mxu0 %v4298
    %4737 = vmatprep.subr.mxu0 %v4295
    %4738 = vmatpush1.msra.mxu0 %v4294
    %4739 = vmatprep.subr.mxu0 %v4291
    %4740 = vmatpush1.msra.mxu0 %v4290
    %4741 = vmatprep.subr.mxu0 %v4287
    %4742 = vmatpush1.msra.mxu0 %v4286
    %4743 = vmatprep.subr.mxu0 %v4283
    %4744 = vmatpush1.msra.mxu0 %v4282
    %4745 = vmatprep.subr.mxu0 %v4279
    %4746 = vmatpush1.msra.mxu0 %v4278
    %4747 = vmatprep.subr.mxu0 %v4275
    %4748 = vmatpush1.msra.mxu0 %v4274
    %4749 = vmatprep.subr.mxu0 %v4271
    %4750 = vmatpush1.msra.mxu0 %v4270
    %4751 = vmatprep.subr.mxu0 %v4267
    %4752 = vmatpush1.msra.mxu0 %v4266
    %4753 = vmatprep.subr.mxu0 %v4263
    %4754 = vmatpush1.msra.mxu0 %v4262
    %4755 = vmatprep.subr.mxu0 %v4259
    %4756 = vmatpush1.msra.mxu0 %v4258
    %4757 = vmatprep.subr.mxu0 %v4255
    %4758 = vmatpush1.msra.mxu0 %v4254
    %4759 = vmatprep.subr.mxu0 0.0
    %4760 = vmatpush2.msra.mxu0 0.0
    %4761 = vmatprep.subr.mxu0 0.0
    %4762 = vmatpush2.msra.mxu0 0.0
    %4763 = vmatprep.subr.mxu0 0.0
    %4764 = vmatpush2.msra.mxu0 0.0
    %4765 = vmatprep.subr.mxu0 0.0
    %4766 = vmatpush2.msra.mxu0 0.0
    %4767 = vmatprep.subr.mxu0 0.0
    %4768 = vmatpush2.msra.mxu0 0.0
    %4769 = vmatprep.subr.mxu0 0.0
    %4770 = vmatpush2.msra.mxu0 0.0
    %4771 = vmatprep.subr.mxu0 0.0
    %4772 = vmatpush2.msra.mxu0 0.0
    %4773 = vmatprep.subr.mxu0 0.0
    %4774 = vmatpush2.msra.mxu0 0.0
    %4775 = vmatprep.subr.mxu0 0.0
    %4776 = vmatpush2.msra.mxu0 0.0
    %4777 = vmatprep.subr.mxu0 0.0
    %4778 = vmatpush2.msra.mxu0 0.0
    %4779 = vmatprep.subr.mxu0 0.0
    %4780 = vmatpush2.msra.mxu0 0.0
    %4781 = vmatprep.subr.mxu0 0.0
    %4782 = vmatpush2.msra.mxu0 0.0
    %4783 = vmatprep.subr.mxu0 0.0
    %4784 = vmatpush2.msra.mxu0 0.0
    %4785 = vmatprep.subr.mxu0 0.0
    %4786 = vmatpush2.msra.mxu0 0.0
    %4787 = vmatprep.subr.mxu0 0.0
    %4788 = vmatpush2.msra.mxu0 0.0
    %4789 = vmatprep.subr.mxu0 0.0
    %4790 = vmatpush2.msra.mxu0 0.0
    %4791 = vmatprep.mubr.f32.mxu0 0.0
    %4792 = vmatmul.mubr.f32.gmra.mxu0 %v4721
    %v4793 = vpop.f32.mrf.mxu0
    %v4794 = vadd.f32 0.0, %v4793
    %v4795 = vpop.f32.mrf.mxu0
    %v4796 = vadd.f32 0.0, %v4795
    %4797 = vdwg.mxu0
    %4798 = vmatprep.subr.mxu0 %v4317
    %4799 = vmatpush1.msra.mxu0 %v4316
    %4800 = vmatprep.subr.mxu0 %v4313
    %4801 = vmatpush1.msra.mxu0 %v4312
    %4802 = vmatprep.subr.mxu0 %v4309
    %4803 = vmatpush1.msra.mxu0 %v4308
    %4804 = vmatprep.subr.mxu0 %v4305
    %4805 = vmatpush1.msra.mxu0 %v4304
    %4806 = vmatprep.subr.mxu0 %v4301
    %4807 = vmatpush1.msra.mxu0 %v4300
    %4808 = vmatprep.subr.mxu0 %v4297
    %4809 = vmatpush1.msra.mxu0 %v4296
    %4810 = vmatprep.subr.mxu0 %v4293
    %4811 = vmatpush1.msra.mxu0 %v4292
    %4812 = vmatprep.subr.mxu0 %v4289
    %4813 = vmatpush1.msra.mxu0 %v4288
    %4814 = vmatprep.subr.mxu0 %v4285
    %4815 = vmatpush1.msra.mxu0 %v4284
    %4816 = vmatprep.subr.mxu0 %v4281
    %4817 = vmatpush1.msra.mxu0 %v4280
    %4818 = vmatprep.subr.mxu0 %v4277
    %4819 = vmatpush1.msra.mxu0 %v4276
    %4820 = vmatprep.subr.mxu0 %v4273
    %4821 = vmatpush1.msra.mxu0 %v4272
    %4822 = vmatprep.subr.mxu0 %v4269
    %4823 = vmatpush1.msra.mxu0 %v4268
    %4824 = vmatprep.subr.mxu0 %v4265
    %4825 = vmatpush1.msra.mxu0 %v4264
    %4826 = vmatprep.subr.mxu0 %v4261
    %4827 = vmatpush1.msra.mxu0 %v4260
    %4828 = vmatprep.subr.mxu0 %v4257
    %4829 = vmatpush1.msra.mxu0 %v4256
    %4830 = vmatprep.subr.mxu0 0.0
    %4831 = vmatpush2.msra.mxu0 0.0
    %4832 = vmatprep.subr.mxu0 0.0
    %4833 = vmatpush2.msra.mxu0 0.0
    %4834 = vmatprep.subr.mxu0 0.0
    %4835 = vmatpush2.msra.mxu0 0.0
    %4836 = vmatprep.subr.mxu0 0.0
    %4837 = vmatpush2.msra.mxu0 0.0
    %4838 = vmatprep.subr.mxu0 0.0
    %4839 = vmatpush2.msra.mxu0 0.0
    %4840 = vmatprep.subr.mxu0 0.0
    %4841 = vmatpush2.msra.mxu0 0.0
    %4842 = vmatprep.subr.mxu0 0.0
    %4843 = vmatpush2.msra.mxu0 0.0
    %4844 = vmatprep.subr.mxu0 0.0
    %4845 = vmatpush2.msra.mxu0 0.0
    %4846 = vmatprep.subr.mxu0 0.0
    %4847 = vmatpush2.msra.mxu0 0.0
    %4848 = vmatprep.subr.mxu0 0.0
    %4849 = vmatpush2.msra.mxu0 0.0
    %4850 = vmatprep.subr.mxu0 0.0
    %4851 = vmatpush2.msra.mxu0 0.0
    %4852 = vmatprep.subr.mxu0 0.0
    %4853 = vmatpush2.msra.mxu0 0.0
    %4854 = vmatprep.subr.mxu0 0.0
    %4855 = vmatpush2.msra.mxu0 0.0
    %4856 = vmatprep.subr.mxu0 0.0
    %4857 = vmatpush2.msra.mxu0 0.0
    %4858 = vmatprep.subr.mxu0 0.0
    %4859 = vmatpush2.msra.mxu0 0.0
    %4860 = vmatprep.subr.mxu0 0.0
    %4861 = vmatpush2.msra.mxu0 0.0
    %4862 = vmatprep.mubr.f32.mxu0 0.0
    %4863 = vmatmul.mubr.f32.gmra.mxu0 %v4721
    %v4864 = vpop.f32.mrf.mxu0
    %v4865 = vadd.f32 0.0, %v4864
    %v4866 = vpop.f32.mrf.mxu0
    %v4867 = vadd.f32 0.0, %v4866
    %4868 = vdwg.mxu0
    %v4870 = vrot.slane %v4721, 2
    %4872 = vmatprep.subr.mxu0 %v4380
    %4873 = vmatpush1.msra.mxu0 %v4379
    %4874 = vmatprep.subr.mxu0 %v4376
    %4875 = vmatpush1.msra.mxu0 %v4375
    %4876 = vmatprep.subr.mxu0 %v4372
    %4877 = vmatpush1.msra.mxu0 %v4371
    %4878 = vmatprep.subr.mxu0 %v4368
    %4879 = vmatpush1.msra.mxu0 %v4367
    %4880 = vmatprep.subr.mxu0 %v4364
    %4881 = vmatpush1.msra.mxu0 %v4363
    %4882 = vmatprep.subr.mxu0 %v4360
    %4883 = vmatpush1.msra.mxu0 %v4359
    %4884 = vmatprep.subr.mxu0 %v4356
    %4885 = vmatpush1.msra.mxu0 %v4355
    %4886 = vmatprep.subr.mxu0 %v4352
    %4887 = vmatpush1.msra.mxu0 %v4351
    %4888 = vmatprep.subr.mxu0 %v4348
    %4889 = vmatpush1.msra.mxu0 %v4347
    %4890 = vmatprep.subr.mxu0 %v4344
    %4891 = vmatpush1.msra.mxu0 %v4343
    %4892 = vmatprep.subr.mxu0 %v4340
    %4893 = vmatpush1.msra.mxu0 %v4339
    %4894 = vmatprep.subr.mxu0 %v4336
    %4895 = vmatpush1.msra.mxu0 %v4335
    %4896 = vmatprep.subr.mxu0 %v4332
    %4897 = vmatpush1.msra.mxu0 %v4331
    %4898 = vmatprep.subr.mxu0 %v4328
    %4899 = vmatpush1.msra.mxu0 %v4327
    %4900 = vmatprep.subr.mxu0 %v4324
    %4901 = vmatpush1.msra.mxu0 %v4323
    %4902 = vmatprep.subr.mxu0 %v4320
    %4903 = vmatpush1.msra.mxu0 %v4319
    %4904 = vmatprep.subr.mxu0 0.0
    %4905 = vmatpush2.msra.mxu0 0.0
    %4906 = vmatprep.subr.mxu0 0.0
    %4907 = vmatpush2.msra.mxu0 0.0
    %4908 = vmatprep.subr.mxu0 0.0
    %4909 = vmatpush2.msra.mxu0 0.0
    %4910 = vmatprep.subr.mxu0 0.0
    %4911 = vmatpush2.msra.mxu0 0.0
    %4912 = vmatprep.subr.mxu0 0.0
    %4913 = vmatpush2.msra.mxu0 0.0
    %4914 = vmatprep.subr.mxu0 0.0
    %4915 = vmatpush2.msra.mxu0 0.0
    %4916 = vmatprep.subr.mxu0 0.0
    %4917 = vmatpush2.msra.mxu0 0.0
    %4918 = vmatprep.subr.mxu0 0.0
    %4919 = vmatpush2.msra.mxu0 0.0
    %4920 = vmatprep.subr.mxu0 0.0
    %4921 = vmatpush2.msra.mxu0 0.0
    %4922 = vmatprep.subr.mxu0 0.0
    %4923 = vmatpush2.msra.mxu0 0.0
    %4924 = vmatprep.subr.mxu0 0.0
    %4925 = vmatpush2.msra.mxu0 0.0
    %4926 = vmatprep.subr.mxu0 0.0
    %4927 = vmatpush2.msra.mxu0 0.0
    %4928 = vmatprep.subr.mxu0 0.0
    %4929 = vmatpush2.msra.mxu0 0.0
    %4930 = vmatprep.subr.mxu0 0.0
    %4931 = vmatpush2.msra.mxu0 0.0
    %4932 = vmatprep.subr.mxu0 0.0
    %4933 = vmatpush2.msra.mxu0 0.0
    %4934 = vmatprep.subr.mxu0 0.0
    %4935 = vmatpush2.msra.mxu0 0.0
    %4936 = vmatprep.mubr.f32.mxu0 0.0
    %4937 = vmatmul.mubr.f32.gmra.mxu0 %v4870
    %v4938 = vpop.f32.mrf.mxu0
    %v4939 = vadd.f32 0.0, %v4938
    %v4940 = vpop.f32.mrf.mxu0
    %v4941 = vadd.f32 0.0, %v4940
    %4942 = vdwg.mxu0
    %4943 = vmatprep.subr.mxu0 %v4382
    %4944 = vmatpush1.msra.mxu0 %v4381
    %4945 = vmatprep.subr.mxu0 %v4378
    %4946 = vmatpush1.msra.mxu0 %v4377
    %4947 = vmatprep.subr.mxu0 %v4374
    %4948 = vmatpush1.msra.mxu0 %v4373
    %4949 = vmatprep.subr.mxu0 %v4370
    %4950 = vmatpush1.msra.mxu0 %v4369
    %4951 = vmatprep.subr.mxu0 %v4366
    %4952 = vmatpush1.msra.mxu0 %v4365
    %4953 = vmatprep.subr.mxu0 %v4362
    %4954 = vmatpush1.msra.mxu0 %v4361
    %4955 = vmatprep.subr.mxu0 %v4358
    %4956 = vmatpush1.msra.mxu0 %v4357
    %4957 = vmatprep.subr.mxu0 %v4354
    %4958 = vmatpush1.msra.mxu0 %v4353
    %4959 = vmatprep.subr.mxu0 %v4350
    %4960 = vmatpush1.msra.mxu0 %v4349
    %4961 = vmatprep.subr.mxu0 %v4346
    %4962 = vmatpush1.msra.mxu0 %v4345
    %4963 = vmatprep.subr.mxu0 %v4342
    %4964 = vmatpush1.msra.mxu0 %v4341
    %4965 = vmatprep.subr.mxu0 %v4338
    %4966 = vmatpush1.msra.mxu0 %v4337
    %4967 = vmatprep.subr.mxu0 %v4334
    %4968 = vmatpush1.msra.mxu0 %v4333
    %4969 = vmatprep.subr.mxu0 %v4330
    %4970 = vmatpush1.msra.mxu0 %v4329
    %4971 = vmatprep.subr.mxu0 %v4326
    %4972 = vmatpush1.msra.mxu0 %v4325
    %4973 = vmatprep.subr.mxu0 %v4322
    %4974 = vmatpush1.msra.mxu0 %v4321
    %4975 = vmatprep.subr.mxu0 0.0
    %4976 = vmatpush2.msra.mxu0 0.0
    %4977 = vmatprep.subr.mxu0 0.0
    %4978 = vmatpush2.msra.mxu0 0.0
    %4979 = vmatprep.subr.mxu0 0.0
    %4980 = vmatpush2.msra.mxu0 0.0
    %4981 = vmatprep.subr.mxu0 0.0
    %4982 = vmatpush2.msra.mxu0 0.0
    %4983 = vmatprep.subr.mxu0 0.0
    %4984 = vmatpush2.msra.mxu0 0.0
    %4985 = vmatprep.subr.mxu0 0.0
    %4986 = vmatpush2.msra.mxu0 0.0
    %4987 = vmatprep.subr.mxu0 0.0
    %4988 = vmatpush2.msra.mxu0 0.0
    %4989 = vmatprep.subr.mxu0 0.0
    %4990 = vmatpush2.msra.mxu0 0.0
    %4991 = vmatprep.subr.mxu0 0.0
    %4992 = vmatpush2.msra.mxu0 0.0
    %4993 = vmatprep.subr.mxu0 0.0
    %4994 = vmatpush2.msra.mxu0 0.0
    %4995 = vmatprep.subr.mxu0 0.0
    %4996 = vmatpush2.msra.mxu0 0.0
    %4997 = vmatprep.subr.mxu0 0.0
    %4998 = vmatpush2.msra.mxu0 0.0
    %4999 = vmatprep.subr.mxu0 0.0
    %5000 = vmatpush2.msra.mxu0 0.0
    %5001 = vmatprep.subr.mxu0 0.0
    %5002 = vmatpush2.msra.mxu0 0.0
    %5003 = vmatprep.subr.mxu0 0.0
    %5004 = vmatpush2.msra.mxu0 0.0
    %5005 = vmatprep.subr.mxu0 0.0
    %5006 = vmatpush2.msra.mxu0 0.0
    %5007 = vmatprep.mubr.f32.mxu0 0.0
    %5008 = vmatmul.mubr.f32.gmra.mxu0 %v4870
    %v5009 = vpop.f32.mrf.mxu0
    %v5010 = vadd.f32 0.0, %v5009
    %v5011 = vpop.f32.mrf.mxu0
    %v5012 = vadd.f32 0.0, %v5011
    %5013 = vdwg.mxu0
    %v5018 = vrot.slane %v4939, 6
    %v5019 = vrot.slane %v4941, 6
    %v5020 = vrot.slane %v5010, 6
    %v5021 = vrot.slane %v5012, 6
    %v5026 = vsel %vm1643, %v4794, %v5018
    %v5027 = vsel %vm1643, %v4796, %v5019
    %v5028 = vsel %vm1643, %v4865, %v5020
    %v5029 = vsel %vm1643, %v4867, %v5021
    %v5034 = vcombine.low %v5026, %v5027
    %v5035 = vcombine.low %v5028, %v5029
    %v5038 = vadd.f32 %v4725, %v5034
    %v5039 = vadd.f32 %v4726, %v5035
    %v5040 = vxor.u32 %v5038, 2147483648
    %v5041 = vxor.u32 %v5039, 2147483648
    %v5042 = vmul.f32 %v5040, 1.442695
    %v5043 = vpow.pop %v5042
    %v5044 = vmul.f32 %v5041, 1.442695
    %v5045 = vpow.pop %v5044
    %v5046 = vadd.f32 %v5043, 1.0
    %v5047 = vadd.f32 %v5045, 1.0
    %v5048 = vrcp.pop %v5046
    %v5049 = vmul.f32 1.0, %v5048
    %v5050 = vrcp.pop %v5047
    %v5051 = vmul.f32 1.0, %v5050
    %v5053 = vrot.slane %v5039, 4
    %v5055 = vtanh.pop %v5053
    %v5057 = vrot.slane %v5049, 4
    %v5059 = vmul.f32 %v5057, %v4719
    %v5060 = vmul.f32 %v5049, %v5055
    %v5061 = vadd.f32 %v5059, %v5060
    %v5062 = vtanh.pop %v5061
    %v5063 = vmul.f32 %v5051, %v5062
    %s5064 = scalar_lea.vmem %s15, 2
    %5065 = vst [vmem:[%s5064] sm:$0x3] %v5063
    %s5066 = scalar_lea.vmem %s16, 12
    %5067 = vst [vmem:[%s5066 - $0x2] sm:$0xc] %v5063
    %v5068 = vld [vmem:[%s1046] sm:$0xff]
    %v5069 = vld [vmem:[%s1046 + $0x8] sm:$0xff]
    %5070 = vmatprep.subr.mxu0 %v4315
    %5071 = vmatpush1.msra.mxu0 %v4314
    %5072 = vmatprep.subr.mxu0 %v4311
    %5073 = vmatpush1.msra.mxu0 %v4310
    %5074 = vmatprep.subr.mxu0 %v4307
    %5075 = vmatpush1.msra.mxu0 %v4306
    %5076 = vmatprep.subr.mxu0 %v4303
    %5077 = vmatpush1.msra.mxu0 %v4302
    %5078 = vmatprep.subr.mxu0 %v4299
    %5079 = vmatpush1.msra.mxu0 %v4298
    %5080 = vmatprep.subr.mxu0 %v4295
    %5081 = vmatpush1.msra.mxu0 %v4294
    %5082 = vmatprep.subr.mxu0 %v4291
    %5083 = vmatpush1.msra.mxu0 %v4290
    %5084 = vmatprep.subr.mxu0 %v4287
    %5085 = vmatpush1.msra.mxu0 %v4286
    %5086 = vmatprep.subr.mxu0 %v4283
    %5087 = vmatpush1.msra.mxu0 %v4282
    %5088 = vmatprep.subr.mxu0 %v4279
    %5089 = vmatpush1.msra.mxu0 %v4278
    %5090 = vmatprep.subr.mxu0 %v4275
    %5091 = vmatpush1.msra.mxu0 %v4274
    %5092 = vmatprep.subr.mxu0 %v4271
    %5093 = vmatpush1.msra.mxu0 %v4270
    %5094 = vmatprep.subr.mxu0 %v4267
    %5095 = vmatpush1.msra.mxu0 %v4266
    %5096 = vmatprep.subr.mxu0 %v4263
    %5097 = vmatpush1.msra.mxu0 %v4262
    %5098 = vmatprep.subr.mxu0 %v4259
    %5099 = vmatpush1.msra.mxu0 %v4258
    %5100 = vmatprep.subr.mxu0 %v4255
    %5101 = vmatpush1.msra.mxu0 %v4254
    %5102 = vmatprep.subr.mxu0 0.0
    %5103 = vmatpush2.msra.mxu0 0.0
    %5104 = vmatprep.subr.mxu0 0.0
    %5105 = vmatpush2.msra.mxu0 0.0
    %5106 = vmatprep.subr.mxu0 0.0
    %5107 = vmatpush2.msra.mxu0 0.0
    %5108 = vmatprep.subr.mxu0 0.0
    %5109 = vmatpush2.msra.mxu0 0.0
    %5110 = vmatprep.subr.mxu0 0.0
    %5111 = vmatpush2.msra.mxu0 0.0
    %5112 = vmatprep.subr.mxu0 0.0
    %5113 = vmatpush2.msra.mxu0 0.0
    %5114 = vmatprep.subr.mxu0 0.0
    %5115 = vmatpush2.msra.mxu0 0.0
    %5116 = vmatprep.subr.mxu0 0.0
    %5117 = vmatpush2.msra.mxu0 0.0
    %5118 = vmatprep.subr.mxu0 0.0
    %5119 = vmatpush2.msra.mxu0 0.0
    %5120 = vmatprep.subr.mxu0 0.0
    %5121 = vmatpush2.msra.mxu0 0.0
    %5122 = vmatprep.subr.mxu0 0.0
    %5123 = vmatpush2.msra.mxu0 0.0
    %5124 = vmatprep.subr.mxu0 0.0
    %5125 = vmatpush2.msra.mxu0 0.0
    %5126 = vmatprep.subr.mxu0 0.0
    %5127 = vmatpush2.msra.mxu0 0.0
    %5128 = vmatprep.subr.mxu0 0.0
    %5129 = vmatpush2.msra.mxu0 0.0
    %5130 = vmatprep.subr.mxu0 0.0
    %5131 = vmatpush2.msra.mxu0 0.0
    %5132 = vmatprep.subr.mxu0 0.0
    %5133 = vmatpush2.msra.mxu0 0.0
    %5134 = vmatprep.mubr.f32.mxu0 0.0
    %5135 = vmatmul.mubr.f32.gmra.mxu0 %v5063
    %v5136 = vpop.f32.mrf.mxu0
    %v5137 = vadd.f32 0.0, %v5136
    %v5138 = vpop.f32.mrf.mxu0
    %v5139 = vadd.f32 0.0, %v5138
    %5140 = vdwg.mxu0
    %5141 = vmatprep.subr.mxu0 %v4317
    %5142 = vmatpush1.msra.mxu0 %v4316
    %5143 = vmatprep.subr.mxu0 %v4313
    %5144 = vmatpush1.msra.mxu0 %v4312
    %5145 = vmatprep.subr.mxu0 %v4309
    %5146 = vmatpush1.msra.mxu0 %v4308
    %5147 = vmatprep.subr.mxu0 %v4305
    %5148 = vmatpush1.msra.mxu0 %v4304
    %5149 = vmatprep.subr.mxu0 %v4301
    %5150 = vmatpush1.msra.mxu0 %v4300
    %5151 = vmatprep.subr.mxu0 %v4297
    %5152 = vmatpush1.msra.mxu0 %v4296
    %5153 = vmatprep.subr.mxu0 %v4293
    %5154 = vmatpush1.msra.mxu0 %v4292
    %5155 = vmatprep.subr.mxu0 %v4289
    %5156 = vmatpush1.msra.mxu0 %v4288
    %5157 = vmatprep.subr.mxu0 %v4285
    %5158 = vmatpush1.msra.mxu0 %v4284
    %5159 = vmatprep.subr.mxu0 %v4281
    %5160 = vmatpush1.msra.mxu0 %v4280
    %5161 = vmatprep.subr.mxu0 %v4277
    %5162 = vmatpush1.msra.mxu0 %v4276
    %5163 = vmatprep.subr.mxu0 %v4273
    %5164 = vmatpush1.msra.mxu0 %v4272
    %5165 = vmatprep.subr.mxu0 %v4269
    %5166 = vmatpush1.msra.mxu0 %v4268
    %5167 = vmatprep.subr.mxu0 %v4265
    %5168 = vmatpush1.msra.mxu0 %v4264
    %5169 = vmatprep.subr.mxu0 %v4261
    %5170 = vmatpush1.msra.mxu0 %v4260
    %5171 = vmatprep.subr.mxu0 %v4257
    %5172 = vmatpush1.msra.mxu0 %v4256
    %5173 = vmatprep.subr.mxu0 0.0
    %5174 = vmatpush2.msra.mxu0 0.0
    %5175 = vmatprep.subr.mxu0 0.0
    %5176 = vmatpush2.msra.mxu0 0.0
    %5177 = vmatprep.subr.mxu0 0.0
    %5178 = vmatpush2.msra.mxu0 0.0
    %5179 = vmatprep.subr.mxu0 0.0
    %5180 = vmatpush2.msra.mxu0 0.0
    %5181 = vmatprep.subr.mxu0 0.0
    %5182 = vmatpush2.msra.mxu0 0.0
    %5183 = vmatprep.subr.mxu0 0.0
    %5184 = vmatpush2.msra.mxu0 0.0
    %5185 = vmatprep.subr.mxu0 0.0
    %5186 = vmatpush2.msra.mxu0 0.0
    %5187 = vmatprep.subr.mxu0 0.0
    %5188 = vmatpush2.msra.mxu0 0.0
    %5189 = vmatprep.subr.mxu0 0.0
    %5190 = vmatpush2.msra.mxu0 0.0
    %5191 = vmatprep.subr.mxu0 0.0
    %5192 = vmatpush2.msra.mxu0 0.0
    %5193 = vmatprep.subr.mxu0 0.0
    %5194 = vmatpush2.msra.mxu0 0.0
    %5195 = vmatprep.subr.mxu0 0.0
    %5196 = vmatpush2.msra.mxu0 0.0
    %5197 = vmatprep.subr.mxu0 0.0
    %5198 = vmatpush2.msra.mxu0 0.0
    %5199 = vmatprep.subr.mxu0 0.0
    %5200 = vmatpush2.msra.mxu0 0.0
    %5201 = vmatprep.subr.mxu0 0.0
    %5202 = vmatpush2.msra.mxu0 0.0
    %5203 = vmatprep.subr.mxu0 0.0
    %5204 = vmatpush2.msra.mxu0 0.0
    %5205 = vmatprep.mubr.f32.mxu0 0.0
    %5206 = vmatmul.mubr.f32.gmra.mxu0 %v5063
    %v5207 = vpop.f32.mrf.mxu0
    %v5208 = vadd.f32 0.0, %v5207
    %v5209 = vpop.f32.mrf.mxu0
    %v5210 = vadd.f32 0.0, %v5209
    %5211 = vdwg.mxu0
    %v5213 = vrot.slane %v5063, 2
    %5215 = vmatprep.subr.mxu0 %v4380
    %5216 = vmatpush1.msra.mxu0 %v4379
    %5217 = vmatprep.subr.mxu0 %v4376
    %5218 = vmatpush1.msra.mxu0 %v4375
    %5219 = vmatprep.subr.mxu0 %v4372
    %5220 = vmatpush1.msra.mxu0 %v4371
    %5221 = vmatprep.subr.mxu0 %v4368
    %5222 = vmatpush1.msra.mxu0 %v4367
    %5223 = vmatprep.subr.mxu0 %v4364
    %5224 = vmatpush1.msra.mxu0 %v4363
    %5225 = vmatprep.subr.mxu0 %v4360
    %5226 = vmatpush1.msra.mxu0 %v4359
    %5227 = vmatprep.subr.mxu0 %v4356
    %5228 = vmatpush1.msra.mxu0 %v4355
    %5229 = vmatprep.subr.mxu0 %v4352
    %5230 = vmatpush1.msra.mxu0 %v4351
    %5231 = vmatprep.subr.mxu0 %v4348
    %5232 = vmatpush1.msra.mxu0 %v4347
    %5233 = vmatprep.subr.mxu0 %v4344
    %5234 = vmatpush1.msra.mxu0 %v4343
    %5235 = vmatprep.subr.mxu0 %v4340
    %5236 = vmatpush1.msra.mxu0 %v4339
    %5237 = vmatprep.subr.mxu0 %v4336
    %5238 = vmatpush1.msra.mxu0 %v4335
    %5239 = vmatprep.subr.mxu0 %v4332
    %5240 = vmatpush1.msra.mxu0 %v4331
    %5241 = vmatprep.subr.mxu0 %v4328
    %5242 = vmatpush1.msra.mxu0 %v4327
    %5243 = vmatprep.subr.mxu0 %v4324
    %5244 = vmatpush1.msra.mxu0 %v4323
    %5245 = vmatprep.subr.mxu0 %v4320
    %5246 = vmatpush1.msra.mxu0 %v4319
    %5247 = vmatprep.subr.mxu0 0.0
    %5248 = vmatpush2.msra.mxu0 0.0
    %5249 = vmatprep.subr.mxu0 0.0
    %5250 = vmatpush2.msra.mxu0 0.0
    %5251 = vmatprep.subr.mxu0 0.0
    %5252 = vmatpush2.msra.mxu0 0.0
    %5253 = vmatprep.subr.mxu0 0.0
    %5254 = vmatpush2.msra.mxu0 0.0
    %5255 = vmatprep.subr.mxu0 0.0
    %5256 = vmatpush2.msra.mxu0 0.0
    %5257 = vmatprep.subr.mxu0 0.0
    %5258 = vmatpush2.msra.mxu0 0.0
    %5259 = vmatprep.subr.mxu0 0.0
    %5260 = vmatpush2.msra.mxu0 0.0
    %5261 = vmatprep.subr.mxu0 0.0
    %5262 = vmatpush2.msra.mxu0 0.0
    %5263 = vmatprep.subr.mxu0 0.0
    %5264 = vmatpush2.msra.mxu0 0.0
    %5265 = vmatprep.subr.mxu0 0.0
    %5266 = vmatpush2.msra.mxu0 0.0
    %5267 = vmatprep.subr.mxu0 0.0
    %5268 = vmatpush2.msra.mxu0 0.0
    %5269 = vmatprep.subr.mxu0 0.0
    %5270 = vmatpush2.msra.mxu0 0.0
    %5271 = vmatprep.subr.mxu0 0.0
    %5272 = vmatpush2.msra.mxu0 0.0
    %5273 = vmatprep.subr.mxu0 0.0
    %5274 = vmatpush2.msra.mxu0 0.0
    %5275 = vmatprep.subr.mxu0 0.0
    %5276 = vmatpush2.msra.mxu0 0.0
    %5277 = vmatprep.subr.mxu0 0.0
    %5278 = vmatpush2.msra.mxu0 0.0
    %5279 = vmatprep.mubr.f32.mxu0 0.0
    %5280 = vmatmul.mubr.f32.gmra.mxu0 %v5213
    %v5281 = vpop.f32.mrf.mxu0
    %v5282 = vadd.f32 0.0, %v5281
    %v5283 = vpop.f32.mrf.mxu0
    %v5284 = vadd.f32 0.0, %v5283
    %5285 = vdwg.mxu0
    %5286 = vmatprep.subr.mxu0 %v4382
    %5287 = vmatpush1.msra.mxu0 %v4381
    %5288 = vmatprep.subr.mxu0 %v4378
    %5289 = vmatpush1.msra.mxu0 %v4377
    %5290 = vmatprep.subr.mxu0 %v4374
    %5291 = vmatpush1.msra.mxu0 %v4373
    %5292 = vmatprep.subr.mxu0 %v4370
    %5293 = vmatpush1.msra.mxu0 %v4369
    %5294 = vmatprep.subr.mxu0 %v4366
    %5295 = vmatpush1.msra.mxu0 %v4365
    %5296 = vmatprep.subr.mxu0 %v4362
    %5297 = vmatpush1.msra.mxu0 %v4361
    %5298 = vmatprep.subr.mxu0 %v4358
    %5299 = vmatpush1.msra.mxu0 %v4357
    %5300 = vmatprep.subr.mxu0 %v4354
    %5301 = vmatpush1.msra.mxu0 %v4353
    %5302 = vmatprep.subr.mxu0 %v4350
    %5303 = vmatpush1.msra.mxu0 %v4349
    %5304 = vmatprep.subr.mxu0 %v4346
    %5305 = vmatpush1.msra.mxu0 %v4345
    %5306 = vmatprep.subr.mxu0 %v4342
    %5307 = vmatpush1.msra.mxu0 %v4341
    %5308 = vmatprep.subr.mxu0 %v4338
    %5309 = vmatpush1.msra.mxu0 %v4337
    %5310 = vmatprep.subr.mxu0 %v4334
    %5311 = vmatpush1.msra.mxu0 %v4333
    %5312 = vmatprep.subr.mxu0 %v4330
    %5313 = vmatpush1.msra.mxu0 %v4329
    %5314 = vmatprep.subr.mxu0 %v4326
    %5315 = vmatpush1.msra.mxu0 %v4325
    %5316 = vmatprep.subr.mxu0 %v4322
    %5317 = vmatpush1.msra.mxu0 %v4321
    %5318 = vmatprep.subr.mxu0 0.0
    %5319 = vmatpush2.msra.mxu0 0.0
    %5320 = vmatprep.subr.mxu0 0.0
    %5321 = vmatpush2.msra.mxu0 0.0
    %5322 = vmatprep.subr.mxu0 0.0
    %5323 = vmatpush2.msra.mxu0 0.0
    %5324 = vmatprep.subr.mxu0 0.0
    %5325 = vmatpush2.msra.mxu0 0.0
    %5326 = vmatprep.subr.mxu0 0.0
    %5327 = vmatpush2.msra.mxu0 0.0
    %5328 = vmatprep.subr.mxu0 0.0
    %5329 = vmatpush2.msra.mxu0 0.0
    %5330 = vmatprep.subr.mxu0 0.0
    %5331 = vmatpush2.msra.mxu0 0.0
    %5332 = vmatprep.subr.mxu0 0.0
    %5333 = vmatpush2.msra.mxu0 0.0
    %5334 = vmatprep.subr.mxu0 0.0
    %5335 = vmatpush2.msra.mxu0 0.0
    %5336 = vmatprep.subr.mxu0 0.0
    %5337 = vmatpush2.msra.mxu0 0.0
    %5338 = vmatprep.subr.mxu0 0.0
    %5339 = vmatpush2.msra.mxu0 0.0
    %5340 = vmatprep.subr.mxu0 0.0
    %5341 = vmatpush2.msra.mxu0 0.0
    %5342 = vmatprep.subr.mxu0 0.0
    %5343 = vmatpush2.msra.mxu0 0.0
    %5344 = vmatprep.subr.mxu0 0.0
    %5345 = vmatpush2.msra.mxu0 0.0
    %5346 = vmatprep.subr.mxu0 0.0
    %5347 = vmatpush2.msra.mxu0 0.0
    %5348 = vmatprep.subr.mxu0 0.0
    %5349 = vmatpush2.msra.mxu0 0.0
    %5350 = vmatprep.mubr.f32.mxu0 0.0
    %5351 = vmatmul.mubr.f32.gmra.mxu0 %v5213
    %v5352 = vpop.f32.mrf.mxu0
    %v5353 = vadd.f32 0.0, %v5352
    %v5354 = vpop.f32.mrf.mxu0
    %v5355 = vadd.f32 0.0, %v5354
    %5356 = vdwg.mxu0
    %v5361 = vrot.slane %v5282, 6
    %v5362 = vrot.slane %v5284, 6
    %v5363 = vrot.slane %v5353, 6
    %v5364 = vrot.slane %v5355, 6
    %v5369 = vsel %vm1643, %v5137, %v5361
    %v5370 = vsel %vm1643, %v5139, %v5362
    %v5371 = vsel %vm1643, %v5208, %v5363
    %v5372 = vsel %vm1643, %v5210, %v5364
    %v5377 = vcombine.low %v5369, %v5370
    %v5378 = vcombine.low %v5371, %v5372
    %v5381 = vadd.f32 %v5068, %v5377
    %v5382 = vadd.f32 %v5069, %v5378
    %v5383 = vxor.u32 %v5381, 2147483648
    %v5384 = vxor.u32 %v5382, 2147483648
    %v5385 = vmul.f32 %v5383, 1.442695
    %v5386 = vpow.pop %v5385
    %v5387 = vmul.f32 %v5384, 1.442695
    %v5388 = vpow.pop %v5387
    %v5389 = vadd.f32 %v5386, 1.0
    %v5390 = vadd.f32 %v5388, 1.0
    %v5391 = vrcp.pop %v5389
    %v5392 = vmul.f32 1.0, %v5391
    %v5393 = vrcp.pop %v5390
    %v5394 = vmul.f32 1.0, %v5393
    %v5396 = vrot.slane %v5382, 4
    %v5398 = vtanh.pop %v5396
    %v5400 = vrot.slane %v5392, 4
    %v5402 = vmul.f32 %v5400, %v5061
    %v5403 = vmul.f32 %v5392, %v5398
    %v5404 = vadd.f32 %v5402, %v5403
    %v5405 = vtanh.pop %v5404
    %v5406 = vmul.f32 %v5394, %v5405
    %s5407 = scalar_lea.vmem %s15, 4
    %5408 = vst [vmem:[%s5407] sm:$0x3] %v5406
    %s5409 = scalar_lea.vmem %s16, 10
    %5410 = vst [vmem:[%s5409 - $0x2] sm:$0xc] %v5406
    %v5411 = vld [vmem:[%s1076] sm:$0xff]
    %v5412 = vld [vmem:[%s1076 + $0x8] sm:$0xff]
    %5413 = vmatprep.subr.mxu0 %v4315
    %5414 = vmatpush1.msra.mxu0 %v4314
    %5415 = vmatprep.subr.mxu0 %v4311
    %5416 = vmatpush1.msra.mxu0 %v4310
    %5417 = vmatprep.subr.mxu0 %v4307
    %5418 = vmatpush1.msra.mxu0 %v4306
    %5419 = vmatprep.subr.mxu0 %v4303
    %5420 = vmatpush1.msra.mxu0 %v4302
    %5421 = vmatprep.subr.mxu0 %v4299
    %5422 = vmatpush1.msra.mxu0 %v4298
    %5423 = vmatprep.subr.mxu0 %v4295
    %5424 = vmatpush1.msra.mxu0 %v4294
    %5425 = vmatprep.subr.mxu0 %v4291
    %5426 = vmatpush1.msra.mxu0 %v4290
    %5427 = vmatprep.subr.mxu0 %v4287
    %5428 = vmatpush1.msra.mxu0 %v4286
    %5429 = vmatprep.subr.mxu0 %v4283
    %5430 = vmatpush1.msra.mxu0 %v4282
    %5431 = vmatprep.subr.mxu0 %v4279
    %5432 = vmatpush1.msra.mxu0 %v4278
    %5433 = vmatprep.subr.mxu0 %v4275
    %5434 = vmatpush1.msra.mxu0 %v4274
    %5435 = vmatprep.subr.mxu0 %v4271
    %5436 = vmatpush1.msra.mxu0 %v4270
    %5437 = vmatprep.subr.mxu0 %v4267
    %5438 = vmatpush1.msra.mxu0 %v4266
    %5439 = vmatprep.subr.mxu0 %v4263
    %5440 = vmatpush1.msra.mxu0 %v4262
    %5441 = vmatprep.subr.mxu0 %v4259
    %5442 = vmatpush1.msra.mxu0 %v4258
    %5443 = vmatprep.subr.mxu0 %v4255
    %5444 = vmatpush1.msra.mxu0 %v4254
    %5445 = vmatprep.subr.mxu0 0.0
    %5446 = vmatpush2.msra.mxu0 0.0
    %5447 = vmatprep.subr.mxu0 0.0
    %5448 = vmatpush2.msra.mxu0 0.0
    %5449 = vmatprep.subr.mxu0 0.0
    %5450 = vmatpush2.msra.mxu0 0.0
    %5451 = vmatprep.subr.mxu0 0.0
    %5452 = vmatpush2.msra.mxu0 0.0
    %5453 = vmatprep.subr.mxu0 0.0
    %5454 = vmatpush2.msra.mxu0 0.0
    %5455 = vmatprep.subr.mxu0 0.0
    %5456 = vmatpush2.msra.mxu0 0.0
    %5457 = vmatprep.subr.mxu0 0.0
    %5458 = vmatpush2.msra.mxu0 0.0
    %5459 = vmatprep.subr.mxu0 0.0
    %5460 = vmatpush2.msra.mxu0 0.0
    %5461 = vmatprep.subr.mxu0 0.0
    %5462 = vmatpush2.msra.mxu0 0.0
    %5463 = vmatprep.subr.mxu0 0.0
    %5464 = vmatpush2.msra.mxu0 0.0
    %5465 = vmatprep.subr.mxu0 0.0
    %5466 = vmatpush2.msra.mxu0 0.0
    %5467 = vmatprep.subr.mxu0 0.0
    %5468 = vmatpush2.msra.mxu0 0.0
    %5469 = vmatprep.subr.mxu0 0.0
    %5470 = vmatpush2.msra.mxu0 0.0
    %5471 = vmatprep.subr.mxu0 0.0
    %5472 = vmatpush2.msra.mxu0 0.0
    %5473 = vmatprep.subr.mxu0 0.0
    %5474 = vmatpush2.msra.mxu0 0.0
    %5475 = vmatprep.subr.mxu0 0.0
    %5476 = vmatpush2.msra.mxu0 0.0
    %5477 = vmatprep.mubr.f32.mxu0 0.0
    %5478 = vmatmul.mubr.f32.gmra.mxu0 %v5406
    %v5479 = vpop.f32.mrf.mxu0
    %v5480 = vadd.f32 0.0, %v5479
    %v5481 = vpop.f32.mrf.mxu0
    %v5482 = vadd.f32 0.0, %v5481
    %5483 = vdwg.mxu0
    %5484 = vmatprep.subr.mxu0 %v4317
    %5485 = vmatpush1.msra.mxu0 %v4316
    %5486 = vmatprep.subr.mxu0 %v4313
    %5487 = vmatpush1.msra.mxu0 %v4312
    %5488 = vmatprep.subr.mxu0 %v4309
    %5489 = vmatpush1.msra.mxu0 %v4308
    %5490 = vmatprep.subr.mxu0 %v4305
    %5491 = vmatpush1.msra.mxu0 %v4304
    %5492 = vmatprep.subr.mxu0 %v4301
    %5493 = vmatpush1.msra.mxu0 %v4300
    %5494 = vmatprep.subr.mxu0 %v4297
    %5495 = vmatpush1.msra.mxu0 %v4296
    %5496 = vmatprep.subr.mxu0 %v4293
    %5497 = vmatpush1.msra.mxu0 %v4292
    %5498 = vmatprep.subr.mxu0 %v4289
    %5499 = vmatpush1.msra.mxu0 %v4288
    %5500 = vmatprep.subr.mxu0 %v4285
    %5501 = vmatpush1.msra.mxu0 %v4284
    %5502 = vmatprep.subr.mxu0 %v4281
    %5503 = vmatpush1.msra.mxu0 %v4280
    %5504 = vmatprep.subr.mxu0 %v4277
    %5505 = vmatpush1.msra.mxu0 %v4276
    %5506 = vmatprep.subr.mxu0 %v4273
    %5507 = vmatpush1.msra.mxu0 %v4272
    %5508 = vmatprep.subr.mxu0 %v4269
    %5509 = vmatpush1.msra.mxu0 %v4268
    %5510 = vmatprep.subr.mxu0 %v4265
    %5511 = vmatpush1.msra.mxu0 %v4264
    %5512 = vmatprep.subr.mxu0 %v4261
    %5513 = vmatpush1.msra.mxu0 %v4260
    %5514 = vmatprep.subr.mxu0 %v4257
    %5515 = vmatpush1.msra.mxu0 %v4256
    %5516 = vmatprep.subr.mxu0 0.0
    %5517 = vmatpush2.msra.mxu0 0.0
    %5518 = vmatprep.subr.mxu0 0.0
    %5519 = vmatpush2.msra.mxu0 0.0
    %5520 = vmatprep.subr.mxu0 0.0
    %5521 = vmatpush2.msra.mxu0 0.0
    %5522 = vmatprep.subr.mxu0 0.0
    %5523 = vmatpush2.msra.mxu0 0.0
    %5524 = vmatprep.subr.mxu0 0.0
    %5525 = vmatpush2.msra.mxu0 0.0
    %5526 = vmatprep.subr.mxu0 0.0
    %5527 = vmatpush2.msra.mxu0 0.0
    %5528 = vmatprep.subr.mxu0 0.0
    %5529 = vmatpush2.msra.mxu0 0.0
    %5530 = vmatprep.subr.mxu0 0.0
    %5531 = vmatpush2.msra.mxu0 0.0
    %5532 = vmatprep.subr.mxu0 0.0
    %5533 = vmatpush2.msra.mxu0 0.0
    %5534 = vmatprep.subr.mxu0 0.0
    %5535 = vmatpush2.msra.mxu0 0.0
    %5536 = vmatprep.subr.mxu0 0.0
    %5537 = vmatpush2.msra.mxu0 0.0
    %5538 = vmatprep.subr.mxu0 0.0
    %5539 = vmatpush2.msra.mxu0 0.0
    %5540 = vmatprep.subr.mxu0 0.0
    %5541 = vmatpush2.msra.mxu0 0.0
    %5542 = vmatprep.subr.mxu0 0.0
    %5543 = vmatpush2.msra.mxu0 0.0
    %5544 = vmatprep.subr.mxu0 0.0
    %5545 = vmatpush2.msra.mxu0 0.0
    %5546 = vmatprep.subr.mxu0 0.0
    %5547 = vmatpush2.msra.mxu0 0.0
    %5548 = vmatprep.mubr.f32.mxu0 0.0
    %5549 = vmatmul.mubr.f32.gmra.mxu0 %v5406
    %v5550 = vpop.f32.mrf.mxu0
    %v5551 = vadd.f32 0.0, %v5550
    %v5552 = vpop.f32.mrf.mxu0
    %v5553 = vadd.f32 0.0, %v5552
    %5554 = vdwg.mxu0
    %v5556 = vrot.slane %v5406, 2
    %5558 = vmatprep.subr.mxu0 %v4380
    %5559 = vmatpush1.msra.mxu0 %v4379
    %5560 = vmatprep.subr.mxu0 %v4376
    %5561 = vmatpush1.msra.mxu0 %v4375
    %5562 = vmatprep.subr.mxu0 %v4372
    %5563 = vmatpush1.msra.mxu0 %v4371
    %5564 = vmatprep.subr.mxu0 %v4368
    %5565 = vmatpush1.msra.mxu0 %v4367
    %5566 = vmatprep.subr.mxu0 %v4364
    %5567 = vmatpush1.msra.mxu0 %v4363
    %5568 = vmatprep.subr.mxu0 %v4360
    %5569 = vmatpush1.msra.mxu0 %v4359
    %5570 = vmatprep.subr.mxu0 %v4356
    %5571 = vmatpush1.msra.mxu0 %v4355
    %5572 = vmatprep.subr.mxu0 %v4352
    %5573 = vmatpush1.msra.mxu0 %v4351
    %5574 = vmatprep.subr.mxu0 %v4348
    %5575 = vmatpush1.msra.mxu0 %v4347
    %5576 = vmatprep.subr.mxu0 %v4344
    %5577 = vmatpush1.msra.mxu0 %v4343
    %5578 = vmatprep.subr.mxu0 %v4340
    %5579 = vmatpush1.msra.mxu0 %v4339
    %5580 = vmatprep.subr.mxu0 %v4336
    %5581 = vmatpush1.msra.mxu0 %v4335
    %5582 = vmatprep.subr.mxu0 %v4332
    %5583 = vmatpush1.msra.mxu0 %v4331
    %5584 = vmatprep.subr.mxu0 %v4328
    %5585 = vmatpush1.msra.mxu0 %v4327
    %5586 = vmatprep.subr.mxu0 %v4324
    %5587 = vmatpush1.msra.mxu0 %v4323
    %5588 = vmatprep.subr.mxu0 %v4320
    %5589 = vmatpush1.msra.mxu0 %v4319
    %5590 = vmatprep.subr.mxu0 0.0
    %5591 = vmatpush2.msra.mxu0 0.0
    %5592 = vmatprep.subr.mxu0 0.0
    %5593 = vmatpush2.msra.mxu0 0.0
    %5594 = vmatprep.subr.mxu0 0.0
    %5595 = vmatpush2.msra.mxu0 0.0
    %5596 = vmatprep.subr.mxu0 0.0
    %5597 = vmatpush2.msra.mxu0 0.0
    %5598 = vmatprep.subr.mxu0 0.0
    %5599 = vmatpush2.msra.mxu0 0.0
    %5600 = vmatprep.subr.mxu0 0.0
    %5601 = vmatpush2.msra.mxu0 0.0
    %5602 = vmatprep.subr.mxu0 0.0
    %5603 = vmatpush2.msra.mxu0 0.0
    %5604 = vmatprep.subr.mxu0 0.0
    %5605 = vmatpush2.msra.mxu0 0.0
    %5606 = vmatprep.subr.mxu0 0.0
    %5607 = vmatpush2.msra.mxu0 0.0
    %5608 = vmatprep.subr.mxu0 0.0
    %5609 = vmatpush2.msra.mxu0 0.0
    %5610 = vmatprep.subr.mxu0 0.0
    %5611 = vmatpush2.msra.mxu0 0.0
    %5612 = vmatprep.subr.mxu0 0.0
    %5613 = vmatpush2.msra.mxu0 0.0
    %5614 = vmatprep.subr.mxu0 0.0
    %5615 = vmatpush2.msra.mxu0 0.0
    %5616 = vmatprep.subr.mxu0 0.0
    %5617 = vmatpush2.msra.mxu0 0.0
    %5618 = vmatprep.subr.mxu0 0.0
    %5619 = vmatpush2.msra.mxu0 0.0
    %5620 = vmatprep.subr.mxu0 0.0
    %5621 = vmatpush2.msra.mxu0 0.0
    %5622 = vmatprep.mubr.f32.mxu0 0.0
    %5623 = vmatmul.mubr.f32.gmra.mxu0 %v5556
    %v5624 = vpop.f32.mrf.mxu0
    %v5625 = vadd.f32 0.0, %v5624
    %v5626 = vpop.f32.mrf.mxu0
    %v5627 = vadd.f32 0.0, %v5626
    %5628 = vdwg.mxu0
    %5629 = vmatprep.subr.mxu0 %v4382
    %5630 = vmatpush1.msra.mxu0 %v4381
    %5631 = vmatprep.subr.mxu0 %v4378
    %5632 = vmatpush1.msra.mxu0 %v4377
    %5633 = vmatprep.subr.mxu0 %v4374
    %5634 = vmatpush1.msra.mxu0 %v4373
    %5635 = vmatprep.subr.mxu0 %v4370
    %5636 = vmatpush1.msra.mxu0 %v4369
    %5637 = vmatprep.subr.mxu0 %v4366
    %5638 = vmatpush1.msra.mxu0 %v4365
    %5639 = vmatprep.subr.mxu0 %v4362
    %5640 = vmatpush1.msra.mxu0 %v4361
    %5641 = vmatprep.subr.mxu0 %v4358
    %5642 = vmatpush1.msra.mxu0 %v4357
    %5643 = vmatprep.subr.mxu0 %v4354
    %5644 = vmatpush1.msra.mxu0 %v4353
    %5645 = vmatprep.subr.mxu0 %v4350
    %5646 = vmatpush1.msra.mxu0 %v4349
    %5647 = vmatprep.subr.mxu0 %v4346
    %5648 = vmatpush1.msra.mxu0 %v4345
    %5649 = vmatprep.subr.mxu0 %v4342
    %5650 = vmatpush1.msra.mxu0 %v4341
    %5651 = vmatprep.subr.mxu0 %v4338
    %5652 = vmatpush1.msra.mxu0 %v4337
    %5653 = vmatprep.subr.mxu0 %v4334
    %5654 = vmatpush1.msra.mxu0 %v4333
    %5655 = vmatprep.subr.mxu0 %v4330
    %5656 = vmatpush1.msra.mxu0 %v4329
    %5657 = vmatprep.subr.mxu0 %v4326
    %5658 = vmatpush1.msra.mxu0 %v4325
    %5659 = vmatprep.subr.mxu0 %v4322
    %5660 = vmatpush1.msra.mxu0 %v4321
    %5661 = vmatprep.subr.mxu0 0.0
    %5662 = vmatpush2.msra.mxu0 0.0
    %5663 = vmatprep.subr.mxu0 0.0
    %5664 = vmatpush2.msra.mxu0 0.0
    %5665 = vmatprep.subr.mxu0 0.0
    %5666 = vmatpush2.msra.mxu0 0.0
    %5667 = vmatprep.subr.mxu0 0.0
    %5668 = vmatpush2.msra.mxu0 0.0
    %5669 = vmatprep.subr.mxu0 0.0
    %5670 = vmatpush2.msra.mxu0 0.0
    %5671 = vmatprep.subr.mxu0 0.0
    %5672 = vmatpush2.msra.mxu0 0.0
    %5673 = vmatprep.subr.mxu0 0.0
    %5674 = vmatpush2.msra.mxu0 0.0
    %5675 = vmatprep.subr.mxu0 0.0
    %5676 = vmatpush2.msra.mxu0 0.0
    %5677 = vmatprep.subr.mxu0 0.0
    %5678 = vmatpush2.msra.mxu0 0.0
    %5679 = vmatprep.subr.mxu0 0.0
    %5680 = vmatpush2.msra.mxu0 0.0
    %5681 = vmatprep.subr.mxu0 0.0
    %5682 = vmatpush2.msra.mxu0 0.0
    %5683 = vmatprep.subr.mxu0 0.0
    %5684 = vmatpush2.msra.mxu0 0.0
    %5685 = vmatprep.subr.mxu0 0.0
    %5686 = vmatpush2.msra.mxu0 0.0
    %5687 = vmatprep.subr.mxu0 0.0
    %5688 = vmatpush2.msra.mxu0 0.0
    %5689 = vmatprep.subr.mxu0 0.0
    %5690 = vmatpush2.msra.mxu0 0.0
    %5691 = vmatprep.subr.mxu0 0.0
    %5692 = vmatpush2.msra.mxu0 0.0
    %5693 = vmatprep.mubr.f32.mxu0 0.0
    %5694 = vmatmul.mubr.f32.gmra.mxu0 %v5556
    %v5695 = vpop.f32.mrf.mxu0
    %v5696 = vadd.f32 0.0, %v5695
    %v5697 = vpop.f32.mrf.mxu0
    %v5698 = vadd.f32 0.0, %v5697
    %5699 = vdwg.mxu0
    %v5704 = vrot.slane %v5625, 6
    %v5705 = vrot.slane %v5627, 6
    %v5706 = vrot.slane %v5696, 6
    %v5707 = vrot.slane %v5698, 6
    %v5712 = vsel %vm1643, %v5480, %v5704
    %v5713 = vsel %vm1643, %v5482, %v5705
    %v5714 = vsel %vm1643, %v5551, %v5706
    %v5715 = vsel %vm1643, %v5553, %v5707
    %v5720 = vcombine.low %v5712, %v5713
    %v5721 = vcombine.low %v5714, %v5715
    %v5724 = vadd.f32 %v5411, %v5720
    %v5725 = vadd.f32 %v5412, %v5721
    %v5726 = vxor.u32 %v5724, 2147483648
    %v5727 = vxor.u32 %v5725, 2147483648
    %v5728 = vmul.f32 %v5726, 1.442695
    %v5729 = vpow.pop %v5728
    %v5730 = vmul.f32 %v5727, 1.442695
    %v5731 = vpow.pop %v5730
    %v5732 = vadd.f32 %v5729, 1.0
    %v5733 = vadd.f32 %v5731, 1.0
    %v5734 = vrcp.pop %v5732
    %v5735 = vmul.f32 1.0, %v5734
    %v5736 = vrcp.pop %v5733
    %v5737 = vmul.f32 1.0, %v5736
    %v5739 = vrot.slane %v5725, 4
    %v5741 = vtanh.pop %v5739
    %v5743 = vrot.slane %v5735, 4
    %v5745 = vmul.f32 %v5743, %v5404
    %v5746 = vmul.f32 %v5735, %v5741
    %v5747 = vadd.f32 %v5745, %v5746
    %v5748 = vtanh.pop %v5747
    %v5749 = vmul.f32 %v5737, %v5748
    %s5750 = scalar_lea.vmem %s15, 6
    %5751 = vst [vmem:[%s5750] sm:$0x3] %v5749
    %s5752 = scalar_lea.vmem %s16, 8
    %5753 = vst [vmem:[%s5752 - $0x2] sm:$0xc] %v5749
    %v5754 = vld [vmem:[%s1114] sm:$0xff]
    %v5755 = vld [vmem:[%s1114 + $0x8] sm:$0xff]
    %5756 = vmatprep.subr.mxu0 %v4315
    %5757 = vmatpush1.msra.mxu0 %v4314
    %5758 = vmatprep.subr.mxu0 %v4311
    %5759 = vmatpush1.msra.mxu0 %v4310
    %5760 = vmatprep.subr.mxu0 %v4307
    %5761 = vmatpush1.msra.mxu0 %v4306
    %5762 = vmatprep.subr.mxu0 %v4303
    %5763 = vmatpush1.msra.mxu0 %v4302
    %5764 = vmatprep.subr.mxu0 %v4299
    %5765 = vmatpush1.msra.mxu0 %v4298
    %5766 = vmatprep.subr.mxu0 %v4295
    %5767 = vmatpush1.msra.mxu0 %v4294
    %5768 = vmatprep.subr.mxu0 %v4291
    %5769 = vmatpush1.msra.mxu0 %v4290
    %5770 = vmatprep.subr.mxu0 %v4287
    %5771 = vmatpush1.msra.mxu0 %v4286
    %5772 = vmatprep.subr.mxu0 %v4283
    %5773 = vmatpush1.msra.mxu0 %v4282
    %5774 = vmatprep.subr.mxu0 %v4279
    %5775 = vmatpush1.msra.mxu0 %v4278
    %5776 = vmatprep.subr.mxu0 %v4275
    %5777 = vmatpush1.msra.mxu0 %v4274
    %5778 = vmatprep.subr.mxu0 %v4271
    %5779 = vmatpush1.msra.mxu0 %v4270
    %5780 = vmatprep.subr.mxu0 %v4267
    %5781 = vmatpush1.msra.mxu0 %v4266
    %5782 = vmatprep.subr.mxu0 %v4263
    %5783 = vmatpush1.msra.mxu0 %v4262
    %5784 = vmatprep.subr.mxu0 %v4259
    %5785 = vmatpush1.msra.mxu0 %v4258
    %5786 = vmatprep.subr.mxu0 %v4255
    %5787 = vmatpush1.msra.mxu0 %v4254
    %5788 = vmatprep.subr.mxu0 0.0
    %5789 = vmatpush2.msra.mxu0 0.0
    %5790 = vmatprep.subr.mxu0 0.0
    %5791 = vmatpush2.msra.mxu0 0.0
    %5792 = vmatprep.subr.mxu0 0.0
    %5793 = vmatpush2.msra.mxu0 0.0
    %5794 = vmatprep.subr.mxu0 0.0
    %5795 = vmatpush2.msra.mxu0 0.0
    %5796 = vmatprep.subr.mxu0 0.0
    %5797 = vmatpush2.msra.mxu0 0.0
    %5798 = vmatprep.subr.mxu0 0.0
    %5799 = vmatpush2.msra.mxu0 0.0
    %5800 = vmatprep.subr.mxu0 0.0
    %5801 = vmatpush2.msra.mxu0 0.0
    %5802 = vmatprep.subr.mxu0 0.0
    %5803 = vmatpush2.msra.mxu0 0.0
    %5804 = vmatprep.subr.mxu0 0.0
    %5805 = vmatpush2.msra.mxu0 0.0
    %5806 = vmatprep.subr.mxu0 0.0
    %5807 = vmatpush2.msra.mxu0 0.0
    %5808 = vmatprep.subr.mxu0 0.0
    %5809 = vmatpush2.msra.mxu0 0.0
    %5810 = vmatprep.subr.mxu0 0.0
    %5811 = vmatpush2.msra.mxu0 0.0
    %5812 = vmatprep.subr.mxu0 0.0
    %5813 = vmatpush2.msra.mxu0 0.0
    %5814 = vmatprep.subr.mxu0 0.0
    %5815 = vmatpush2.msra.mxu0 0.0
    %5816 = vmatprep.subr.mxu0 0.0
    %5817 = vmatpush2.msra.mxu0 0.0
    %5818 = vmatprep.subr.mxu0 0.0
    %5819 = vmatpush2.msra.mxu0 0.0
    %5820 = vmatprep.mubr.f32.mxu0 0.0
    %5821 = vmatmul.mubr.f32.gmra.mxu0 %v5749
    %v5822 = vpop.f32.mrf.mxu0
    %v5823 = vadd.f32 0.0, %v5822
    %v5824 = vpop.f32.mrf.mxu0
    %v5825 = vadd.f32 0.0, %v5824
    %5826 = vdwg.mxu0
    %5827 = vmatprep.subr.mxu0 %v4317
    %5828 = vmatpush1.msra.mxu0 %v4316
    %5829 = vmatprep.subr.mxu0 %v4313
    %5830 = vmatpush1.msra.mxu0 %v4312
    %5831 = vmatprep.subr.mxu0 %v4309
    %5832 = vmatpush1.msra.mxu0 %v4308
    %5833 = vmatprep.subr.mxu0 %v4305
    %5834 = vmatpush1.msra.mxu0 %v4304
    %5835 = vmatprep.subr.mxu0 %v4301
    %5836 = vmatpush1.msra.mxu0 %v4300
    %5837 = vmatprep.subr.mxu0 %v4297
    %5838 = vmatpush1.msra.mxu0 %v4296
    %5839 = vmatprep.subr.mxu0 %v4293
    %5840 = vmatpush1.msra.mxu0 %v4292
    %5841 = vmatprep.subr.mxu0 %v4289
    %5842 = vmatpush1.msra.mxu0 %v4288
    %5843 = vmatprep.subr.mxu0 %v4285
    %5844 = vmatpush1.msra.mxu0 %v4284
    %5845 = vmatprep.subr.mxu0 %v4281
    %5846 = vmatpush1.msra.mxu0 %v4280
    %5847 = vmatprep.subr.mxu0 %v4277
    %5848 = vmatpush1.msra.mxu0 %v4276
    %5849 = vmatprep.subr.mxu0 %v4273
    %5850 = vmatpush1.msra.mxu0 %v4272
    %5851 = vmatprep.subr.mxu0 %v4269
    %5852 = vmatpush1.msra.mxu0 %v4268
    %5853 = vmatprep.subr.mxu0 %v4265
    %5854 = vmatpush1.msra.mxu0 %v4264
    %5855 = vmatprep.subr.mxu0 %v4261
    %5856 = vmatpush1.msra.mxu0 %v4260
    %5857 = vmatprep.subr.mxu0 %v4257
    %5858 = vmatpush1.msra.mxu0 %v4256
    %5859 = vmatprep.subr.mxu0 0.0
    %5860 = vmatpush2.msra.mxu0 0.0
    %5861 = vmatprep.subr.mxu0 0.0
    %5862 = vmatpush2.msra.mxu0 0.0
    %5863 = vmatprep.subr.mxu0 0.0
    %5864 = vmatpush2.msra.mxu0 0.0
    %5865 = vmatprep.subr.mxu0 0.0
    %5866 = vmatpush2.msra.mxu0 0.0
    %5867 = vmatprep.subr.mxu0 0.0
    %5868 = vmatpush2.msra.mxu0 0.0
    %5869 = vmatprep.subr.mxu0 0.0
    %5870 = vmatpush2.msra.mxu0 0.0
    %5871 = vmatprep.subr.mxu0 0.0
    %5872 = vmatpush2.msra.mxu0 0.0
    %5873 = vmatprep.subr.mxu0 0.0
    %5874 = vmatpush2.msra.mxu0 0.0
    %5875 = vmatprep.subr.mxu0 0.0
    %5876 = vmatpush2.msra.mxu0 0.0
    %5877 = vmatprep.subr.mxu0 0.0
    %5878 = vmatpush2.msra.mxu0 0.0
    %5879 = vmatprep.subr.mxu0 0.0
    %5880 = vmatpush2.msra.mxu0 0.0
    %5881 = vmatprep.subr.mxu0 0.0
    %5882 = vmatpush2.msra.mxu0 0.0
    %5883 = vmatprep.subr.mxu0 0.0
    %5884 = vmatpush2.msra.mxu0 0.0
    %5885 = vmatprep.subr.mxu0 0.0
    %5886 = vmatpush2.msra.mxu0 0.0
    %5887 = vmatprep.subr.mxu0 0.0
    %5888 = vmatpush2.msra.mxu0 0.0
    %5889 = vmatprep.subr.mxu0 0.0
    %5890 = vmatpush2.msra.mxu0 0.0
    %5891 = vmatprep.mubr.f32.mxu0 0.0
    %5892 = vmatmul.mubr.f32.gmra.mxu0 %v5749
    %v5893 = vpop.f32.mrf.mxu0
    %v5894 = vadd.f32 0.0, %v5893
    %v5895 = vpop.f32.mrf.mxu0
    %v5896 = vadd.f32 0.0, %v5895
    %5897 = vdwg.mxu0
    %v5899 = vrot.slane %v5749, 2
    %5901 = vmatprep.subr.mxu0 %v4380
    %5902 = vmatpush1.msra.mxu0 %v4379
    %5903 = vmatprep.subr.mxu0 %v4376
    %5904 = vmatpush1.msra.mxu0 %v4375
    %5905 = vmatprep.subr.mxu0 %v4372
    %5906 = vmatpush1.msra.mxu0 %v4371
    %5907 = vmatprep.subr.mxu0 %v4368
    %5908 = vmatpush1.msra.mxu0 %v4367
    %5909 = vmatprep.subr.mxu0 %v4364
    %5910 = vmatpush1.msra.mxu0 %v4363
    %5911 = vmatprep.subr.mxu0 %v4360
    %5912 = vmatpush1.msra.mxu0 %v4359
    %5913 = vmatprep.subr.mxu0 %v4356
    %5914 = vmatpush1.msra.mxu0 %v4355
    %5915 = vmatprep.subr.mxu0 %v4352
    %5916 = vmatpush1.msra.mxu0 %v4351
    %5917 = vmatprep.subr.mxu0 %v4348
    %5918 = vmatpush1.msra.mxu0 %v4347
    %5919 = vmatprep.subr.mxu0 %v4344
    %5920 = vmatpush1.msra.mxu0 %v4343
    %5921 = vmatprep.subr.mxu0 %v4340
    %5922 = vmatpush1.msra.mxu0 %v4339
    %5923 = vmatprep.subr.mxu0 %v4336
    %5924 = vmatpush1.msra.mxu0 %v4335
    %5925 = vmatprep.subr.mxu0 %v4332
    %5926 = vmatpush1.msra.mxu0 %v4331
    %5927 = vmatprep.subr.mxu0 %v4328
    %5928 = vmatpush1.msra.mxu0 %v4327
    %5929 = vmatprep.subr.mxu0 %v4324
    %5930 = vmatpush1.msra.mxu0 %v4323
    %5931 = vmatprep.subr.mxu0 %v4320
    %5932 = vmatpush1.msra.mxu0 %v4319
    %5933 = vmatprep.subr.mxu0 0.0
    %5934 = vmatpush2.msra.mxu0 0.0
    %5935 = vmatprep.subr.mxu0 0.0
    %5936 = vmatpush2.msra.mxu0 0.0
    %5937 = vmatprep.subr.mxu0 0.0
    %5938 = vmatpush2.msra.mxu0 0.0
    %5939 = vmatprep.subr.mxu0 0.0
    %5940 = vmatpush2.msra.mxu0 0.0
    %5941 = vmatprep.subr.mxu0 0.0
    %5942 = vmatpush2.msra.mxu0 0.0
    %5943 = vmatprep.subr.mxu0 0.0
    %5944 = vmatpush2.msra.mxu0 0.0
    %5945 = vmatprep.subr.mxu0 0.0
    %5946 = vmatpush2.msra.mxu0 0.0
    %5947 = vmatprep.subr.mxu0 0.0
    %5948 = vmatpush2.msra.mxu0 0.0
    %5949 = vmatprep.subr.mxu0 0.0
    %5950 = vmatpush2.msra.mxu0 0.0
    %5951 = vmatprep.subr.mxu0 0.0
    %5952 = vmatpush2.msra.mxu0 0.0
    %5953 = vmatprep.subr.mxu0 0.0
    %5954 = vmatpush2.msra.mxu0 0.0
    %5955 = vmatprep.subr.mxu0 0.0
    %5956 = vmatpush2.msra.mxu0 0.0
    %5957 = vmatprep.subr.mxu0 0.0
    %5958 = vmatpush2.msra.mxu0 0.0
    %5959 = vmatprep.subr.mxu0 0.0
    %5960 = vmatpush2.msra.mxu0 0.0
    %5961 = vmatprep.subr.mxu0 0.0
    %5962 = vmatpush2.msra.mxu0 0.0
    %5963 = vmatprep.subr.mxu0 0.0
    %5964 = vmatpush2.msra.mxu0 0.0
    %5965 = vmatprep.mubr.f32.mxu0 0.0
    %5966 = vmatmul.mubr.f32.gmra.mxu0 %v5899
    %v5967 = vpop.f32.mrf.mxu0
    %v5968 = vadd.f32 0.0, %v5967
    %v5969 = vpop.f32.mrf.mxu0
    %v5970 = vadd.f32 0.0, %v5969
    %5971 = vdwg.mxu0
    %5972 = vmatprep.subr.mxu0 %v4382
    %5973 = vmatpush1.msra.mxu0 %v4381
    %5974 = vmatprep.subr.mxu0 %v4378
    %5975 = vmatpush1.msra.mxu0 %v4377
    %5976 = vmatprep.subr.mxu0 %v4374
    %5977 = vmatpush1.msra.mxu0 %v4373
    %5978 = vmatprep.subr.mxu0 %v4370
    %5979 = vmatpush1.msra.mxu0 %v4369
    %5980 = vmatprep.subr.mxu0 %v4366
    %5981 = vmatpush1.msra.mxu0 %v4365
    %5982 = vmatprep.subr.mxu0 %v4362
    %5983 = vmatpush1.msra.mxu0 %v4361
    %5984 = vmatprep.subr.mxu0 %v4358
    %5985 = vmatpush1.msra.mxu0 %v4357
    %5986 = vmatprep.subr.mxu0 %v4354
    %5987 = vmatpush1.msra.mxu0 %v4353
    %5988 = vmatprep.subr.mxu0 %v4350
    %5989 = vmatpush1.msra.mxu0 %v4349
    %5990 = vmatprep.subr.mxu0 %v4346
    %5991 = vmatpush1.msra.mxu0 %v4345
    %5992 = vmatprep.subr.mxu0 %v4342
    %5993 = vmatpush1.msra.mxu0 %v4341
    %5994 = vmatprep.subr.mxu0 %v4338
    %5995 = vmatpush1.msra.mxu0 %v4337
    %5996 = vmatprep.subr.mxu0 %v4334
    %5997 = vmatpush1.msra.mxu0 %v4333
    %5998 = vmatprep.subr.mxu0 %v4330
    %5999 = vmatpush1.msra.mxu0 %v4329
    %6000 = vmatprep.subr.mxu0 %v4326
    %6001 = vmatpush1.msra.mxu0 %v4325
    %6002 = vmatprep.subr.mxu0 %v4322
    %6003 = vmatpush1.msra.mxu0 %v4321
    %6004 = vmatprep.subr.mxu0 0.0
    %6005 = vmatpush2.msra.mxu0 0.0
    %6006 = vmatprep.subr.mxu0 0.0
    %6007 = vmatpush2.msra.mxu0 0.0
    %6008 = vmatprep.subr.mxu0 0.0
    %6009 = vmatpush2.msra.mxu0 0.0
    %6010 = vmatprep.subr.mxu0 0.0
    %6011 = vmatpush2.msra.mxu0 0.0
    %6012 = vmatprep.subr.mxu0 0.0
    %6013 = vmatpush2.msra.mxu0 0.0
    %6014 = vmatprep.subr.mxu0 0.0
    %6015 = vmatpush2.msra.mxu0 0.0
    %6016 = vmatprep.subr.mxu0 0.0
    %6017 = vmatpush2.msra.mxu0 0.0
    %6018 = vmatprep.subr.mxu0 0.0
    %6019 = vmatpush2.msra.mxu0 0.0
    %6020 = vmatprep.subr.mxu0 0.0
    %6021 = vmatpush2.msra.mxu0 0.0
    %6022 = vmatprep.subr.mxu0 0.0
    %6023 = vmatpush2.msra.mxu0 0.0
    %6024 = vmatprep.subr.mxu0 0.0
    %6025 = vmatpush2.msra.mxu0 0.0
    %6026 = vmatprep.subr.mxu0 0.0
    %6027 = vmatpush2.msra.mxu0 0.0
    %6028 = vmatprep.subr.mxu0 0.0
    %6029 = vmatpush2.msra.mxu0 0.0
    %6030 = vmatprep.subr.mxu0 0.0
    %6031 = vmatpush2.msra.mxu0 0.0
    %6032 = vmatprep.subr.mxu0 0.0
    %6033 = vmatpush2.msra.mxu0 0.0
    %6034 = vmatprep.subr.mxu0 0.0
    %6035 = vmatpush2.msra.mxu0 0.0
    %6036 = vmatprep.mubr.f32.mxu0 0.0
    %6037 = vmatmul.mubr.f32.gmra.mxu0 %v5899
    %v6038 = vpop.f32.mrf.mxu0
    %v6039 = vadd.f32 0.0, %v6038
    %v6040 = vpop.f32.mrf.mxu0
    %v6041 = vadd.f32 0.0, %v6040
    %6042 = vdwg.mxu0
    %v6047 = vrot.slane %v5968, 6
    %v6048 = vrot.slane %v5970, 6
    %v6049 = vrot.slane %v6039, 6
    %v6050 = vrot.slane %v6041, 6
    %v6055 = vsel %vm1643, %v5823, %v6047
    %v6056 = vsel %vm1643, %v5825, %v6048
    %v6057 = vsel %vm1643, %v5894, %v6049
    %v6058 = vsel %vm1643, %v5896, %v6050
    %v6063 = vcombine.low %v6055, %v6056
    %v6064 = vcombine.low %v6057, %v6058
    %v6067 = vadd.f32 %v5754, %v6063
    %v6068 = vadd.f32 %v5755, %v6064
    %v6069 = vxor.u32 %v6067, 2147483648
    %v6070 = vxor.u32 %v6068, 2147483648
    %v6071 = vmul.f32 %v6069, 1.442695
    %v6072 = vpow.pop %v6071
    %v6073 = vmul.f32 %v6070, 1.442695
    %v6074 = vpow.pop %v6073
    %v6075 = vadd.f32 %v6072, 1.0
    %v6076 = vadd.f32 %v6074, 1.0
    %v6077 = vrcp.pop %v6075
    %v6078 = vmul.f32 1.0, %v6077
    %v6079 = vrcp.pop %v6076
    %v6080 = vmul.f32 1.0, %v6079
    %v6082 = vrot.slane %v6068, 4
    %v6084 = vtanh.pop %v6082
    %v6086 = vrot.slane %v6078, 4
    %v6088 = vmul.f32 %v6086, %v5747
    %v6089 = vmul.f32 %v6078, %v6084
    %v6090 = vadd.f32 %v6088, %v6089
    %v6091 = vtanh.pop %v6090
    %v6092 = vmul.f32 %v6080, %v6091
    %s6093 = scalar_lea.vmem %s15, 8
    %6094 = vst [vmem:[%s6093] sm:$0x3] %v6092
    %s6095 = scalar_lea.vmem %s16, 6
    %6096 = vst [vmem:[%s6095 - $0x2] sm:$0xc] %v6092
    %v6097 = vld [vmem:[%s1148] sm:$0xff]
    %v6098 = vld [vmem:[%s1148 + $0x8] sm:$0xff]
    %6099 = vmatprep.subr.mxu0 %v4315
    %6100 = vmatpush1.msra.mxu0 %v4314
    %6101 = vmatprep.subr.mxu0 %v4311
    %6102 = vmatpush1.msra.mxu0 %v4310
    %6103 = vmatprep.subr.mxu0 %v4307
    %6104 = vmatpush1.msra.mxu0 %v4306
    %6105 = vmatprep.subr.mxu0 %v4303
    %6106 = vmatpush1.msra.mxu0 %v4302
    %6107 = vmatprep.subr.mxu0 %v4299
    %6108 = vmatpush1.msra.mxu0 %v4298
    %6109 = vmatprep.subr.mxu0 %v4295
    %6110 = vmatpush1.msra.mxu0 %v4294
    %6111 = vmatprep.subr.mxu0 %v4291
    %6112 = vmatpush1.msra.mxu0 %v4290
    %6113 = vmatprep.subr.mxu0 %v4287
    %6114 = vmatpush1.msra.mxu0 %v4286
    %6115 = vmatprep.subr.mxu0 %v4283
    %6116 = vmatpush1.msra.mxu0 %v4282
    %6117 = vmatprep.subr.mxu0 %v4279
    %6118 = vmatpush1.msra.mxu0 %v4278
    %6119 = vmatprep.subr.mxu0 %v4275
    %6120 = vmatpush1.msra.mxu0 %v4274
    %6121 = vmatprep.subr.mxu0 %v4271
    %6122 = vmatpush1.msra.mxu0 %v4270
    %6123 = vmatprep.subr.mxu0 %v4267
    %6124 = vmatpush1.msra.mxu0 %v4266
    %6125 = vmatprep.subr.mxu0 %v4263
    %6126 = vmatpush1.msra.mxu0 %v4262
    %6127 = vmatprep.subr.mxu0 %v4259
    %6128 = vmatpush1.msra.mxu0 %v4258
    %6129 = vmatprep.subr.mxu0 %v4255
    %6130 = vmatpush1.msra.mxu0 %v4254
    %6131 = vmatprep.subr.mxu0 0.0
    %6132 = vmatpush2.msra.mxu0 0.0
    %6133 = vmatprep.subr.mxu0 0.0
    %6134 = vmatpush2.msra.mxu0 0.0
    %6135 = vmatprep.subr.mxu0 0.0
    %6136 = vmatpush2.msra.mxu0 0.0
    %6137 = vmatprep.subr.mxu0 0.0
    %6138 = vmatpush2.msra.mxu0 0.0
    %6139 = vmatprep.subr.mxu0 0.0
    %6140 = vmatpush2.msra.mxu0 0.0
    %6141 = vmatprep.subr.mxu0 0.0
    %6142 = vmatpush2.msra.mxu0 0.0
    %6143 = vmatprep.subr.mxu0 0.0
    %6144 = vmatpush2.msra.mxu0 0.0
    %6145 = vmatprep.subr.mxu0 0.0
    %6146 = vmatpush2.msra.mxu0 0.0
    %6147 = vmatprep.subr.mxu0 0.0
    %6148 = vmatpush2.msra.mxu0 0.0
    %6149 = vmatprep.subr.mxu0 0.0
    %6150 = vmatpush2.msra.mxu0 0.0
    %6151 = vmatprep.subr.mxu0 0.0
    %6152 = vmatpush2.msra.mxu0 0.0
    %6153 = vmatprep.subr.mxu0 0.0
    %6154 = vmatpush2.msra.mxu0 0.0
    %6155 = vmatprep.subr.mxu0 0.0
    %6156 = vmatpush2.msra.mxu0 0.0
    %6157 = vmatprep.subr.mxu0 0.0
    %6158 = vmatpush2.msra.mxu0 0.0
    %6159 = vmatprep.subr.mxu0 0.0
    %6160 = vmatpush2.msra.mxu0 0.0
    %6161 = vmatprep.subr.mxu0 0.0
    %6162 = vmatpush2.msra.mxu0 0.0
    %6163 = vmatprep.mubr.f32.mxu0 0.0
    %6164 = vmatmul.mubr.f32.gmra.mxu0 %v6092
    %v6165 = vpop.f32.mrf.mxu0
    %v6166 = vadd.f32 0.0, %v6165
    %v6167 = vpop.f32.mrf.mxu0
    %v6168 = vadd.f32 0.0, %v6167
    %6169 = vdwg.mxu0
    %6170 = vmatprep.subr.mxu0 %v4317
    %6171 = vmatpush1.msra.mxu0 %v4316
    %6172 = vmatprep.subr.mxu0 %v4313
    %6173 = vmatpush1.msra.mxu0 %v4312
    %6174 = vmatprep.subr.mxu0 %v4309
    %6175 = vmatpush1.msra.mxu0 %v4308
    %6176 = vmatprep.subr.mxu0 %v4305
    %6177 = vmatpush1.msra.mxu0 %v4304
    %6178 = vmatprep.subr.mxu0 %v4301
    %6179 = vmatpush1.msra.mxu0 %v4300
    %6180 = vmatprep.subr.mxu0 %v4297
    %6181 = vmatpush1.msra.mxu0 %v4296
    %6182 = vmatprep.subr.mxu0 %v4293
    %6183 = vmatpush1.msra.mxu0 %v4292
    %6184 = vmatprep.subr.mxu0 %v4289
    %6185 = vmatpush1.msra.mxu0 %v4288
    %6186 = vmatprep.subr.mxu0 %v4285
    %6187 = vmatpush1.msra.mxu0 %v4284
    %6188 = vmatprep.subr.mxu0 %v4281
    %6189 = vmatpush1.msra.mxu0 %v4280
    %6190 = vmatprep.subr.mxu0 %v4277
    %6191 = vmatpush1.msra.mxu0 %v4276
    %6192 = vmatprep.subr.mxu0 %v4273
    %6193 = vmatpush1.msra.mxu0 %v4272
    %6194 = vmatprep.subr.mxu0 %v4269
    %6195 = vmatpush1.msra.mxu0 %v4268
    %6196 = vmatprep.subr.mxu0 %v4265
    %6197 = vmatpush1.msra.mxu0 %v4264
    %6198 = vmatprep.subr.mxu0 %v4261
    %6199 = vmatpush1.msra.mxu0 %v4260
    %6200 = vmatprep.subr.mxu0 %v4257
    %6201 = vmatpush1.msra.mxu0 %v4256
    %6202 = vmatprep.subr.mxu0 0.0
    %6203 = vmatpush2.msra.mxu0 0.0
    %6204 = vmatprep.subr.mxu0 0.0
    %6205 = vmatpush2.msra.mxu0 0.0
    %6206 = vmatprep.subr.mxu0 0.0
    %6207 = vmatpush2.msra.mxu0 0.0
    %6208 = vmatprep.subr.mxu0 0.0
    %6209 = vmatpush2.msra.mxu0 0.0
    %6210 = vmatprep.subr.mxu0 0.0
    %6211 = vmatpush2.msra.mxu0 0.0
    %6212 = vmatprep.subr.mxu0 0.0
    %6213 = vmatpush2.msra.mxu0 0.0
    %6214 = vmatprep.subr.mxu0 0.0
    %6215 = vmatpush2.msra.mxu0 0.0
    %6216 = vmatprep.subr.mxu0 0.0
    %6217 = vmatpush2.msra.mxu0 0.0
    %6218 = vmatprep.subr.mxu0 0.0
    %6219 = vmatpush2.msra.mxu0 0.0
    %6220 = vmatprep.subr.mxu0 0.0
    %6221 = vmatpush2.msra.mxu0 0.0
    %6222 = vmatprep.subr.mxu0 0.0
    %6223 = vmatpush2.msra.mxu0 0.0
    %6224 = vmatprep.subr.mxu0 0.0
    %6225 = vmatpush2.msra.mxu0 0.0
    %6226 = vmatprep.subr.mxu0 0.0
    %6227 = vmatpush2.msra.mxu0 0.0
    %6228 = vmatprep.subr.mxu0 0.0
    %6229 = vmatpush2.msra.mxu0 0.0
    %6230 = vmatprep.subr.mxu0 0.0
    %6231 = vmatpush2.msra.mxu0 0.0
    %6232 = vmatprep.subr.mxu0 0.0
    %6233 = vmatpush2.msra.mxu0 0.0
    %6234 = vmatprep.mubr.f32.mxu0 0.0
    %6235 = vmatmul.mubr.f32.gmra.mxu0 %v6092
    %v6236 = vpop.f32.mrf.mxu0
    %v6237 = vadd.f32 0.0, %v6236
    %v6238 = vpop.f32.mrf.mxu0
    %v6239 = vadd.f32 0.0, %v6238
    %6240 = vdwg.mxu0
    %v6242 = vrot.slane %v6092, 2
    %6244 = vmatprep.subr.mxu0 %v4380
    %6245 = vmatpush1.msra.mxu0 %v4379
    %6246 = vmatprep.subr.mxu0 %v4376
    %6247 = vmatpush1.msra.mxu0 %v4375
    %6248 = vmatprep.subr.mxu0 %v4372
    %6249 = vmatpush1.msra.mxu0 %v4371
    %6250 = vmatprep.subr.mxu0 %v4368
    %6251 = vmatpush1.msra.mxu0 %v4367
    %6252 = vmatprep.subr.mxu0 %v4364
    %6253 = vmatpush1.msra.mxu0 %v4363
    %6254 = vmatprep.subr.mxu0 %v4360
    %6255 = vmatpush1.msra.mxu0 %v4359
    %6256 = vmatprep.subr.mxu0 %v4356
    %6257 = vmatpush1.msra.mxu0 %v4355
    %6258 = vmatprep.subr.mxu0 %v4352
    %6259 = vmatpush1.msra.mxu0 %v4351
    %6260 = vmatprep.subr.mxu0 %v4348
    %6261 = vmatpush1.msra.mxu0 %v4347
    %6262 = vmatprep.subr.mxu0 %v4344
    %6263 = vmatpush1.msra.mxu0 %v4343
    %6264 = vmatprep.subr.mxu0 %v4340
    %6265 = vmatpush1.msra.mxu0 %v4339
    %6266 = vmatprep.subr.mxu0 %v4336
    %6267 = vmatpush1.msra.mxu0 %v4335
    %6268 = vmatprep.subr.mxu0 %v4332
    %6269 = vmatpush1.msra.mxu0 %v4331
    %6270 = vmatprep.subr.mxu0 %v4328
    %6271 = vmatpush1.msra.mxu0 %v4327
    %6272 = vmatprep.subr.mxu0 %v4324
    %6273 = vmatpush1.msra.mxu0 %v4323
    %6274 = vmatprep.subr.mxu0 %v4320
    %6275 = vmatpush1.msra.mxu0 %v4319
    %6276 = vmatprep.subr.mxu0 0.0
    %6277 = vmatpush2.msra.mxu0 0.0
    %6278 = vmatprep.subr.mxu0 0.0
    %6279 = vmatpush2.msra.mxu0 0.0
    %6280 = vmatprep.subr.mxu0 0.0
    %6281 = vmatpush2.msra.mxu0 0.0
    %6282 = vmatprep.subr.mxu0 0.0
    %6283 = vmatpush2.msra.mxu0 0.0
    %6284 = vmatprep.subr.mxu0 0.0
    %6285 = vmatpush2.msra.mxu0 0.0
    %6286 = vmatprep.subr.mxu0 0.0
    %6287 = vmatpush2.msra.mxu0 0.0
    %6288 = vmatprep.subr.mxu0 0.0
    %6289 = vmatpush2.msra.mxu0 0.0
    %6290 = vmatprep.subr.mxu0 0.0
    %6291 = vmatpush2.msra.mxu0 0.0
    %6292 = vmatprep.subr.mxu0 0.0
    %6293 = vmatpush2.msra.mxu0 0.0
    %6294 = vmatprep.subr.mxu0 0.0
    %6295 = vmatpush2.msra.mxu0 0.0
    %6296 = vmatprep.subr.mxu0 0.0
    %6297 = vmatpush2.msra.mxu0 0.0
    %6298 = vmatprep.subr.mxu0 0.0
    %6299 = vmatpush2.msra.mxu0 0.0
    %6300 = vmatprep.subr.mxu0 0.0
    %6301 = vmatpush2.msra.mxu0 0.0
    %6302 = vmatprep.subr.mxu0 0.0
    %6303 = vmatpush2.msra.mxu0 0.0
    %6304 = vmatprep.subr.mxu0 0.0
    %6305 = vmatpush2.msra.mxu0 0.0
    %6306 = vmatprep.subr.mxu0 0.0
    %6307 = vmatpush2.msra.mxu0 0.0
    %6308 = vmatprep.mubr.f32.mxu0 0.0
    %6309 = vmatmul.mubr.f32.gmra.mxu0 %v6242
    %v6310 = vpop.f32.mrf.mxu0
    %v6311 = vadd.f32 0.0, %v6310
    %v6312 = vpop.f32.mrf.mxu0
    %v6313 = vadd.f32 0.0, %v6312
    %6314 = vdwg.mxu0
    %6315 = vmatprep.subr.mxu0 %v4382
    %6316 = vmatpush1.msra.mxu0 %v4381
    %6317 = vmatprep.subr.mxu0 %v4378
    %6318 = vmatpush1.msra.mxu0 %v4377
    %6319 = vmatprep.subr.mxu0 %v4374
    %6320 = vmatpush1.msra.mxu0 %v4373
    %6321 = vmatprep.subr.mxu0 %v4370
    %6322 = vmatpush1.msra.mxu0 %v4369
    %6323 = vmatprep.subr.mxu0 %v4366
    %6324 = vmatpush1.msra.mxu0 %v4365
    %6325 = vmatprep.subr.mxu0 %v4362
    %6326 = vmatpush1.msra.mxu0 %v4361
    %6327 = vmatprep.subr.mxu0 %v4358
    %6328 = vmatpush1.msra.mxu0 %v4357
    %6329 = vmatprep.subr.mxu0 %v4354
    %6330 = vmatpush1.msra.mxu0 %v4353
    %6331 = vmatprep.subr.mxu0 %v4350
    %6332 = vmatpush1.msra.mxu0 %v4349
    %6333 = vmatprep.subr.mxu0 %v4346
    %6334 = vmatpush1.msra.mxu0 %v4345
    %6335 = vmatprep.subr.mxu0 %v4342
    %6336 = vmatpush1.msra.mxu0 %v4341
    %6337 = vmatprep.subr.mxu0 %v4338
    %6338 = vmatpush1.msra.mxu0 %v4337
    %6339 = vmatprep.subr.mxu0 %v4334
    %6340 = vmatpush1.msra.mxu0 %v4333
    %6341 = vmatprep.subr.mxu0 %v4330
    %6342 = vmatpush1.msra.mxu0 %v4329
    %6343 = vmatprep.subr.mxu0 %v4326
    %6344 = vmatpush1.msra.mxu0 %v4325
    %6345 = vmatprep.subr.mxu0 %v4322
    %6346 = vmatpush1.msra.mxu0 %v4321
    %6347 = vmatprep.subr.mxu0 0.0
    %6348 = vmatpush2.msra.mxu0 0.0
    %6349 = vmatprep.subr.mxu0 0.0
    %6350 = vmatpush2.msra.mxu0 0.0
    %6351 = vmatprep.subr.mxu0 0.0
    %6352 = vmatpush2.msra.mxu0 0.0
    %6353 = vmatprep.subr.mxu0 0.0
    %6354 = vmatpush2.msra.mxu0 0.0
    %6355 = vmatprep.subr.mxu0 0.0
    %6356 = vmatpush2.msra.mxu0 0.0
    %6357 = vmatprep.subr.mxu0 0.0
    %6358 = vmatpush2.msra.mxu0 0.0
    %6359 = vmatprep.subr.mxu0 0.0
    %6360 = vmatpush2.msra.mxu0 0.0
    %6361 = vmatprep.subr.mxu0 0.0
    %6362 = vmatpush2.msra.mxu0 0.0
    %6363 = vmatprep.subr.mxu0 0.0
    %6364 = vmatpush2.msra.mxu0 0.0
    %6365 = vmatprep.subr.mxu0 0.0
    %6366 = vmatpush2.msra.mxu0 0.0
    %6367 = vmatprep.subr.mxu0 0.0
    %6368 = vmatpush2.msra.mxu0 0.0
    %6369 = vmatprep.subr.mxu0 0.0
    %6370 = vmatpush2.msra.mxu0 0.0
    %6371 = vmatprep.subr.mxu0 0.0
    %6372 = vmatpush2.msra.mxu0 0.0
    %6373 = vmatprep.subr.mxu0 0.0
    %6374 = vmatpush2.msra.mxu0 0.0
    %6375 = vmatprep.subr.mxu0 0.0
    %6376 = vmatpush2.msra.mxu0 0.0
    %6377 = vmatprep.subr.mxu0 0.0
    %6378 = vmatpush2.msra.mxu0 0.0
    %6379 = vmatprep.mubr.f32.mxu0 0.0
    %6380 = vmatmul.mubr.f32.gmra.mxu0 %v6242
    %v6381 = vpop.f32.mrf.mxu0
    %v6382 = vadd.f32 0.0, %v6381
    %v6383 = vpop.f32.mrf.mxu0
    %v6384 = vadd.f32 0.0, %v6383
    %6385 = vdwg.mxu0
    %v6390 = vrot.slane %v6311, 6
    %v6391 = vrot.slane %v6313, 6
    %v6392 = vrot.slane %v6382, 6
    %v6393 = vrot.slane %v6384, 6
    %v6398 = vsel %vm1643, %v6166, %v6390
    %v6399 = vsel %vm1643, %v6168, %v6391
    %v6400 = vsel %vm1643, %v6237, %v6392
    %v6401 = vsel %vm1643, %v6239, %v6393
    %v6406 = vcombine.low %v6398, %v6399
    %v6407 = vcombine.low %v6400, %v6401
    %v6410 = vadd.f32 %v6097, %v6406
    %v6411 = vadd.f32 %v6098, %v6407
    %v6412 = vxor.u32 %v6410, 2147483648
    %v6413 = vxor.u32 %v6411, 2147483648
    %v6414 = vmul.f32 %v6412, 1.442695
    %v6415 = vpow.pop %v6414
    %v6416 = vmul.f32 %v6413, 1.442695
    %v6417 = vpow.pop %v6416
    %v6418 = vadd.f32 %v6415, 1.0
    %v6419 = vadd.f32 %v6417, 1.0
    %v6420 = vrcp.pop %v6418
    %v6421 = vmul.f32 1.0, %v6420
    %v6422 = vrcp.pop %v6419
    %v6423 = vmul.f32 1.0, %v6422
    %v6425 = vrot.slane %v6411, 4
    %v6427 = vtanh.pop %v6425
    %v6429 = vrot.slane %v6421, 4
    %v6431 = vmul.f32 %v6429, %v6090
    %v6432 = vmul.f32 %v6421, %v6427
    %v6433 = vadd.f32 %v6431, %v6432
    %v6434 = vtanh.pop %v6433
    %v6435 = vmul.f32 %v6423, %v6434
    %s6436 = scalar_lea.vmem %s15, 10
    %6437 = vst [vmem:[%s6436] sm:$0x3] %v6435
    %s6438 = scalar_lea.vmem %s16, 4
    %6439 = vst [vmem:[%s6438 - $0x2] sm:$0xc] %v6435
    %v6440 = vld [vmem:[%s1174] sm:$0xff]
    %v6441 = vld [vmem:[%s1174 + $0x8] sm:$0xff]
    %6442 = vmatprep.subr.mxu0 %v4315
    %6443 = vmatpush1.msra.mxu0 %v4314
    %6444 = vmatprep.subr.mxu0 %v4311
    %6445 = vmatpush1.msra.mxu0 %v4310
    %6446 = vmatprep.subr.mxu0 %v4307
    %6447 = vmatpush1.msra.mxu0 %v4306
    %6448 = vmatprep.subr.mxu0 %v4303
    %6449 = vmatpush1.msra.mxu0 %v4302
    %6450 = vmatprep.subr.mxu0 %v4299
    %6451 = vmatpush1.msra.mxu0 %v4298
    %6452 = vmatprep.subr.mxu0 %v4295
    %6453 = vmatpush1.msra.mxu0 %v4294
    %6454 = vmatprep.subr.mxu0 %v4291
    %6455 = vmatpush1.msra.mxu0 %v4290
    %6456 = vmatprep.subr.mxu0 %v4287
    %6457 = vmatpush1.msra.mxu0 %v4286
    %6458 = vmatprep.subr.mxu0 %v4283
    %6459 = vmatpush1.msra.mxu0 %v4282
    %6460 = vmatprep.subr.mxu0 %v4279
    %6461 = vmatpush1.msra.mxu0 %v4278
    %6462 = vmatprep.subr.mxu0 %v4275
    %6463 = vmatpush1.msra.mxu0 %v4274
    %6464 = vmatprep.subr.mxu0 %v4271
    %6465 = vmatpush1.msra.mxu0 %v4270
    %6466 = vmatprep.subr.mxu0 %v4267
    %6467 = vmatpush1.msra.mxu0 %v4266
    %6468 = vmatprep.subr.mxu0 %v4263
    %6469 = vmatpush1.msra.mxu0 %v4262
    %6470 = vmatprep.subr.mxu0 %v4259
    %6471 = vmatpush1.msra.mxu0 %v4258
    %6472 = vmatprep.subr.mxu0 %v4255
    %6473 = vmatpush1.msra.mxu0 %v4254
    %6474 = vmatprep.subr.mxu0 0.0
    %6475 = vmatpush2.msra.mxu0 0.0
    %6476 = vmatprep.subr.mxu0 0.0
    %6477 = vmatpush2.msra.mxu0 0.0
    %6478 = vmatprep.subr.mxu0 0.0
    %6479 = vmatpush2.msra.mxu0 0.0
    %6480 = vmatprep.subr.mxu0 0.0
    %6481 = vmatpush2.msra.mxu0 0.0
    %6482 = vmatprep.subr.mxu0 0.0
    %6483 = vmatpush2.msra.mxu0 0.0
    %6484 = vmatprep.subr.mxu0 0.0
    %6485 = vmatpush2.msra.mxu0 0.0
    %6486 = vmatprep.subr.mxu0 0.0
    %6487 = vmatpush2.msra.mxu0 0.0
    %6488 = vmatprep.subr.mxu0 0.0
    %6489 = vmatpush2.msra.mxu0 0.0
    %6490 = vmatprep.subr.mxu0 0.0
    %6491 = vmatpush2.msra.mxu0 0.0
    %6492 = vmatprep.subr.mxu0 0.0
    %6493 = vmatpush2.msra.mxu0 0.0
    %6494 = vmatprep.subr.mxu0 0.0
    %6495 = vmatpush2.msra.mxu0 0.0
    %6496 = vmatprep.subr.mxu0 0.0
    %6497 = vmatpush2.msra.mxu0 0.0
    %6498 = vmatprep.subr.mxu0 0.0
    %6499 = vmatpush2.msra.mxu0 0.0
    %6500 = vmatprep.subr.mxu0 0.0
    %6501 = vmatpush2.msra.mxu0 0.0
    %6502 = vmatprep.subr.mxu0 0.0
    %6503 = vmatpush2.msra.mxu0 0.0
    %6504 = vmatprep.subr.mxu0 0.0
    %6505 = vmatpush2.msra.mxu0 0.0
    %6506 = vmatprep.mubr.f32.mxu0 0.0
    %6507 = vmatmul.mubr.f32.gmra.mxu0 %v6435
    %v6508 = vpop.f32.mrf.mxu0
    %v6509 = vadd.f32 0.0, %v6508
    %v6510 = vpop.f32.mrf.mxu0
    %v6511 = vadd.f32 0.0, %v6510
    %6512 = vdwg.mxu0
    %6513 = vmatprep.subr.mxu0 %v4317
    %6514 = vmatpush1.msra.mxu0 %v4316
    %6515 = vmatprep.subr.mxu0 %v4313
    %6516 = vmatpush1.msra.mxu0 %v4312
    %6517 = vmatprep.subr.mxu0 %v4309
    %6518 = vmatpush1.msra.mxu0 %v4308
    %6519 = vmatprep.subr.mxu0 %v4305
    %6520 = vmatpush1.msra.mxu0 %v4304
    %6521 = vmatprep.subr.mxu0 %v4301
    %6522 = vmatpush1.msra.mxu0 %v4300
    %6523 = vmatprep.subr.mxu0 %v4297
    %6524 = vmatpush1.msra.mxu0 %v4296
    %6525 = vmatprep.subr.mxu0 %v4293
    %6526 = vmatpush1.msra.mxu0 %v4292
    %6527 = vmatprep.subr.mxu0 %v4289
    %6528 = vmatpush1.msra.mxu0 %v4288
    %6529 = vmatprep.subr.mxu0 %v4285
    %6530 = vmatpush1.msra.mxu0 %v4284
    %6531 = vmatprep.subr.mxu0 %v4281
    %6532 = vmatpush1.msra.mxu0 %v4280
    %6533 = vmatprep.subr.mxu0 %v4277
    %6534 = vmatpush1.msra.mxu0 %v4276
    %6535 = vmatprep.subr.mxu0 %v4273
    %6536 = vmatpush1.msra.mxu0 %v4272
    %6537 = vmatprep.subr.mxu0 %v4269
    %6538 = vmatpush1.msra.mxu0 %v4268
    %6539 = vmatprep.subr.mxu0 %v4265
    %6540 = vmatpush1.msra.mxu0 %v4264
    %6541 = vmatprep.subr.mxu0 %v4261
    %6542 = vmatpush1.msra.mxu0 %v4260
    %6543 = vmatprep.subr.mxu0 %v4257
    %6544 = vmatpush1.msra.mxu0 %v4256
    %6545 = vmatprep.subr.mxu0 0.0
    %6546 = vmatpush2.msra.mxu0 0.0
    %6547 = vmatprep.subr.mxu0 0.0
    %6548 = vmatpush2.msra.mxu0 0.0
    %6549 = vmatprep.subr.mxu0 0.0
    %6550 = vmatpush2.msra.mxu0 0.0
    %6551 = vmatprep.subr.mxu0 0.0
    %6552 = vmatpush2.msra.mxu0 0.0
    %6553 = vmatprep.subr.mxu0 0.0
    %6554 = vmatpush2.msra.mxu0 0.0
    %6555 = vmatprep.subr.mxu0 0.0
    %6556 = vmatpush2.msra.mxu0 0.0
    %6557 = vmatprep.subr.mxu0 0.0
    %6558 = vmatpush2.msra.mxu0 0.0
    %6559 = vmatprep.subr.mxu0 0.0
    %6560 = vmatpush2.msra.mxu0 0.0
    %6561 = vmatprep.subr.mxu0 0.0
    %6562 = vmatpush2.msra.mxu0 0.0
    %6563 = vmatprep.subr.mxu0 0.0
    %6564 = vmatpush2.msra.mxu0 0.0
    %6565 = vmatprep.subr.mxu0 0.0
    %6566 = vmatpush2.msra.mxu0 0.0
    %6567 = vmatprep.subr.mxu0 0.0
    %6568 = vmatpush2.msra.mxu0 0.0
    %6569 = vmatprep.subr.mxu0 0.0
    %6570 = vmatpush2.msra.mxu0 0.0
    %6571 = vmatprep.subr.mxu0 0.0
    %6572 = vmatpush2.msra.mxu0 0.0
    %6573 = vmatprep.subr.mxu0 0.0
    %6574 = vmatpush2.msra.mxu0 0.0
    %6575 = vmatprep.subr.mxu0 0.0
    %6576 = vmatpush2.msra.mxu0 0.0
    %6577 = vmatprep.mubr.f32.mxu0 0.0
    %6578 = vmatmul.mubr.f32.gmra.mxu0 %v6435
    %v6579 = vpop.f32.mrf.mxu0
    %v6580 = vadd.f32 0.0, %v6579
    %v6581 = vpop.f32.mrf.mxu0
    %v6582 = vadd.f32 0.0, %v6581
    %6583 = vdwg.mxu0
    %v6585 = vrot.slane %v6435, 2
    %6587 = vmatprep.subr.mxu0 %v4380
    %6588 = vmatpush1.msra.mxu0 %v4379
    %6589 = vmatprep.subr.mxu0 %v4376
    %6590 = vmatpush1.msra.mxu0 %v4375
    %6591 = vmatprep.subr.mxu0 %v4372
    %6592 = vmatpush1.msra.mxu0 %v4371
    %6593 = vmatprep.subr.mxu0 %v4368
    %6594 = vmatpush1.msra.mxu0 %v4367
    %6595 = vmatprep.subr.mxu0 %v4364
    %6596 = vmatpush1.msra.mxu0 %v4363
    %6597 = vmatprep.subr.mxu0 %v4360
    %6598 = vmatpush1.msra.mxu0 %v4359
    %6599 = vmatprep.subr.mxu0 %v4356
    %6600 = vmatpush1.msra.mxu0 %v4355
    %6601 = vmatprep.subr.mxu0 %v4352
    %6602 = vmatpush1.msra.mxu0 %v4351
    %6603 = vmatprep.subr.mxu0 %v4348
    %6604 = vmatpush1.msra.mxu0 %v4347
    %6605 = vmatprep.subr.mxu0 %v4344
    %6606 = vmatpush1.msra.mxu0 %v4343
    %6607 = vmatprep.subr.mxu0 %v4340
    %6608 = vmatpush1.msra.mxu0 %v4339
    %6609 = vmatprep.subr.mxu0 %v4336
    %6610 = vmatpush1.msra.mxu0 %v4335
    %6611 = vmatprep.subr.mxu0 %v4332
    %6612 = vmatpush1.msra.mxu0 %v4331
    %6613 = vmatprep.subr.mxu0 %v4328
    %6614 = vmatpush1.msra.mxu0 %v4327
    %6615 = vmatprep.subr.mxu0 %v4324
    %6616 = vmatpush1.msra.mxu0 %v4323
    %6617 = vmatprep.subr.mxu0 %v4320
    %6618 = vmatpush1.msra.mxu0 %v4319
    %6619 = vmatprep.subr.mxu0 0.0
    %6620 = vmatpush2.msra.mxu0 0.0
    %6621 = vmatprep.subr.mxu0 0.0
    %6622 = vmatpush2.msra.mxu0 0.0
    %6623 = vmatprep.subr.mxu0 0.0
    %6624 = vmatpush2.msra.mxu0 0.0
    %6625 = vmatprep.subr.mxu0 0.0
    %6626 = vmatpush2.msra.mxu0 0.0
    %6627 = vmatprep.subr.mxu0 0.0
    %6628 = vmatpush2.msra.mxu0 0.0
    %6629 = vmatprep.subr.mxu0 0.0
    %6630 = vmatpush2.msra.mxu0 0.0
    %6631 = vmatprep.subr.mxu0 0.0
    %6632 = vmatpush2.msra.mxu0 0.0
    %6633 = vmatprep.subr.mxu0 0.0
    %6634 = vmatpush2.msra.mxu0 0.0
    %6635 = vmatprep.subr.mxu0 0.0
    %6636 = vmatpush2.msra.mxu0 0.0
    %6637 = vmatprep.subr.mxu0 0.0
    %6638 = vmatpush2.msra.mxu0 0.0
    %6639 = vmatprep.subr.mxu0 0.0
    %6640 = vmatpush2.msra.mxu0 0.0
    %6641 = vmatprep.subr.mxu0 0.0
    %6642 = vmatpush2.msra.mxu0 0.0
    %6643 = vmatprep.subr.mxu0 0.0
    %6644 = vmatpush2.msra.mxu0 0.0
    %6645 = vmatprep.subr.mxu0 0.0
    %6646 = vmatpush2.msra.mxu0 0.0
    %6647 = vmatprep.subr.mxu0 0.0
    %6648 = vmatpush2.msra.mxu0 0.0
    %6649 = vmatprep.subr.mxu0 0.0
    %6650 = vmatpush2.msra.mxu0 0.0
    %6651 = vmatprep.mubr.f32.mxu0 0.0
    %6652 = vmatmul.mubr.f32.gmra.mxu0 %v6585
    %v6653 = vpop.f32.mrf.mxu0
    %v6654 = vadd.f32 0.0, %v6653
    %v6655 = vpop.f32.mrf.mxu0
    %v6656 = vadd.f32 0.0, %v6655
    %6657 = vdwg.mxu0
    %6658 = vmatprep.subr.mxu0 %v4382
    %6659 = vmatpush1.msra.mxu0 %v4381
    %6660 = vmatprep.subr.mxu0 %v4378
    %6661 = vmatpush1.msra.mxu0 %v4377
    %6662 = vmatprep.subr.mxu0 %v4374
    %6663 = vmatpush1.msra.mxu0 %v4373
    %6664 = vmatprep.subr.mxu0 %v4370
    %6665 = vmatpush1.msra.mxu0 %v4369
    %6666 = vmatprep.subr.mxu0 %v4366
    %6667 = vmatpush1.msra.mxu0 %v4365
    %6668 = vmatprep.subr.mxu0 %v4362
    %6669 = vmatpush1.msra.mxu0 %v4361
    %6670 = vmatprep.subr.mxu0 %v4358
    %6671 = vmatpush1.msra.mxu0 %v4357
    %6672 = vmatprep.subr.mxu0 %v4354
    %6673 = vmatpush1.msra.mxu0 %v4353
    %6674 = vmatprep.subr.mxu0 %v4350
    %6675 = vmatpush1.msra.mxu0 %v4349
    %6676 = vmatprep.subr.mxu0 %v4346
    %6677 = vmatpush1.msra.mxu0 %v4345
    %6678 = vmatprep.subr.mxu0 %v4342
    %6679 = vmatpush1.msra.mxu0 %v4341
    %6680 = vmatprep.subr.mxu0 %v4338
    %6681 = vmatpush1.msra.mxu0 %v4337
    %6682 = vmatprep.subr.mxu0 %v4334
    %6683 = vmatpush1.msra.mxu0 %v4333
    %6684 = vmatprep.subr.mxu0 %v4330
    %6685 = vmatpush1.msra.mxu0 %v4329
    %6686 = vmatprep.subr.mxu0 %v4326
    %6687 = vmatpush1.msra.mxu0 %v4325
    %6688 = vmatprep.subr.mxu0 %v4322
    %6689 = vmatpush1.msra.mxu0 %v4321
    %6690 = vmatprep.subr.mxu0 0.0
    %6691 = vmatpush2.msra.mxu0 0.0
    %6692 = vmatprep.subr.mxu0 0.0
    %6693 = vmatpush2.msra.mxu0 0.0
    %6694 = vmatprep.subr.mxu0 0.0
    %6695 = vmatpush2.msra.mxu0 0.0
    %6696 = vmatprep.subr.mxu0 0.0
    %6697 = vmatpush2.msra.mxu0 0.0
    %6698 = vmatprep.subr.mxu0 0.0
    %6699 = vmatpush2.msra.mxu0 0.0
    %6700 = vmatprep.subr.mxu0 0.0
    %6701 = vmatpush2.msra.mxu0 0.0
    %6702 = vmatprep.subr.mxu0 0.0
    %6703 = vmatpush2.msra.mxu0 0.0
    %6704 = vmatprep.subr.mxu0 0.0
    %6705 = vmatpush2.msra.mxu0 0.0
    %6706 = vmatprep.subr.mxu0 0.0
    %6707 = vmatpush2.msra.mxu0 0.0
    %6708 = vmatprep.subr.mxu0 0.0
    %6709 = vmatpush2.msra.mxu0 0.0
    %6710 = vmatprep.subr.mxu0 0.0
    %6711 = vmatpush2.msra.mxu0 0.0
    %6712 = vmatprep.subr.mxu0 0.0
    %6713 = vmatpush2.msra.mxu0 0.0
    %6714 = vmatprep.subr.mxu0 0.0
    %6715 = vmatpush2.msra.mxu0 0.0
    %6716 = vmatprep.subr.mxu0 0.0
    %6717 = vmatpush2.msra.mxu0 0.0
    %6718 = vmatprep.subr.mxu0 0.0
    %6719 = vmatpush2.msra.mxu0 0.0
    %6720 = vmatprep.subr.mxu0 0.0
    %6721 = vmatpush2.msra.mxu0 0.0
    %6722 = vmatprep.mubr.f32.mxu0 0.0
    %6723 = vmatmul.mubr.f32.gmra.mxu0 %v6585
    %v6724 = vpop.f32.mrf.mxu0
    %v6725 = vadd.f32 0.0, %v6724
    %v6726 = vpop.f32.mrf.mxu0
    %v6727 = vadd.f32 0.0, %v6726
    %6728 = vdwg.mxu0
    %v6733 = vrot.slane %v6654, 6
    %v6734 = vrot.slane %v6656, 6
    %v6735 = vrot.slane %v6725, 6
    %v6736 = vrot.slane %v6727, 6
    %v6741 = vsel %vm1643, %v6509, %v6733
    %v6742 = vsel %vm1643, %v6511, %v6734
    %v6743 = vsel %vm1643, %v6580, %v6735
    %v6744 = vsel %vm1643, %v6582, %v6736
    %v6749 = vcombine.low %v6741, %v6742
    %v6750 = vcombine.low %v6743, %v6744
    %v6753 = vadd.f32 %v6440, %v6749
    %v6754 = vadd.f32 %v6441, %v6750
    %v6755 = vxor.u32 %v6753, 2147483648
    %v6756 = vxor.u32 %v6754, 2147483648
    %v6757 = vmul.f32 %v6755, 1.442695
    %v6758 = vpow.pop %v6757
    %v6759 = vmul.f32 %v6756, 1.442695
    %v6760 = vpow.pop %v6759
    %v6761 = vadd.f32 %v6758, 1.0
    %v6762 = vadd.f32 %v6760, 1.0
    %v6763 = vrcp.pop %v6761
    %v6764 = vmul.f32 1.0, %v6763
    %v6765 = vrcp.pop %v6762
    %v6766 = vmul.f32 1.0, %v6765
    %v6768 = vrot.slane %v6754, 4
    %v6770 = vtanh.pop %v6768
    %v6772 = vrot.slane %v6764, 4
    %v6774 = vmul.f32 %v6772, %v6433
    %v6775 = vmul.f32 %v6764, %v6770
    %v6776 = vadd.f32 %v6774, %v6775
    %v6777 = vtanh.pop %v6776
    %v6778 = vmul.f32 %v6766, %v6777
    %s6779 = scalar_lea.vmem %s15, 12
    %6780 = vst [vmem:[%s6779] sm:$0x3] %v6778
    %s6781 = scalar_lea.vmem %s16, 2
    %6782 = vst [vmem:[%s6781 - $0x2] sm:$0xc] %v6778
    %v6783 = vld [vmem:[%s1204] sm:$0xff]
    %v6784 = vld [vmem:[%s1204 + $0x8] sm:$0xff]
    %6785 = vmatprep.subr.mxu0 %v4315
    %6786 = vmatpush1.msra.mxu0 %v4314
    %6787 = vmatprep.subr.mxu0 %v4311
    %6788 = vmatpush1.msra.mxu0 %v4310
    %6789 = vmatprep.subr.mxu0 %v4307
    %6790 = vmatpush1.msra.mxu0 %v4306
    %6791 = vmatprep.subr.mxu0 %v4303
    %6792 = vmatpush1.msra.mxu0 %v4302
    %6793 = vmatprep.subr.mxu0 %v4299
    %6794 = vmatpush1.msra.mxu0 %v4298
    %6795 = vmatprep.subr.mxu0 %v4295
    %6796 = vmatpush1.msra.mxu0 %v4294
    %6797 = vmatprep.subr.mxu0 %v4291
    %6798 = vmatpush1.msra.mxu0 %v4290
    %6799 = vmatprep.subr.mxu0 %v4287
    %6800 = vmatpush1.msra.mxu0 %v4286
    %6801 = vmatprep.subr.mxu0 %v4283
    %6802 = vmatpush1.msra.mxu0 %v4282
    %6803 = vmatprep.subr.mxu0 %v4279
    %6804 = vmatpush1.msra.mxu0 %v4278
    %6805 = vmatprep.subr.mxu0 %v4275
    %6806 = vmatpush1.msra.mxu0 %v4274
    %6807 = vmatprep.subr.mxu0 %v4271
    %6808 = vmatpush1.msra.mxu0 %v4270
    %6809 = vmatprep.subr.mxu0 %v4267
    %6810 = vmatpush1.msra.mxu0 %v4266
    %6811 = vmatprep.subr.mxu0 %v4263
    %6812 = vmatpush1.msra.mxu0 %v4262
    %6813 = vmatprep.subr.mxu0 %v4259
    %6814 = vmatpush1.msra.mxu0 %v4258
    %6815 = vmatprep.subr.mxu0 %v4255
    %6816 = vmatpush1.msra.mxu0 %v4254
    %6817 = vmatprep.subr.mxu0 0.0
    %6818 = vmatpush2.msra.mxu0 0.0
    %6819 = vmatprep.subr.mxu0 0.0
    %6820 = vmatpush2.msra.mxu0 0.0
    %6821 = vmatprep.subr.mxu0 0.0
    %6822 = vmatpush2.msra.mxu0 0.0
    %6823 = vmatprep.subr.mxu0 0.0
    %6824 = vmatpush2.msra.mxu0 0.0
    %6825 = vmatprep.subr.mxu0 0.0
    %6826 = vmatpush2.msra.mxu0 0.0
    %6827 = vmatprep.subr.mxu0 0.0
    %6828 = vmatpush2.msra.mxu0 0.0
    %6829 = vmatprep.subr.mxu0 0.0
    %6830 = vmatpush2.msra.mxu0 0.0
    %6831 = vmatprep.subr.mxu0 0.0
    %6832 = vmatpush2.msra.mxu0 0.0
    %6833 = vmatprep.subr.mxu0 0.0
    %6834 = vmatpush2.msra.mxu0 0.0
    %6835 = vmatprep.subr.mxu0 0.0
    %6836 = vmatpush2.msra.mxu0 0.0
    %6837 = vmatprep.subr.mxu0 0.0
    %6838 = vmatpush2.msra.mxu0 0.0
    %6839 = vmatprep.subr.mxu0 0.0
    %6840 = vmatpush2.msra.mxu0 0.0
    %6841 = vmatprep.subr.mxu0 0.0
    %6842 = vmatpush2.msra.mxu0 0.0
    %6843 = vmatprep.subr.mxu0 0.0
    %6844 = vmatpush2.msra.mxu0 0.0
    %6845 = vmatprep.subr.mxu0 0.0
    %6846 = vmatpush2.msra.mxu0 0.0
    %6847 = vmatprep.subr.mxu0 0.0
    %6848 = vmatpush2.msra.mxu0 0.0
    %6849 = vmatprep.mubr.f32.mxu0 0.0
    %6850 = vmatmul.mubr.f32.gmra.mxu0 %v6778
    %v6851 = vpop.f32.mrf.mxu0
    %v6852 = vadd.f32 0.0, %v6851
    %v6853 = vpop.f32.mrf.mxu0
    %v6854 = vadd.f32 0.0, %v6853
    %6855 = vdwg.mxu0
    %6856 = vmatprep.subr.mxu0 %v4317
    %6857 = vmatpush1.msra.mxu0 %v4316
    %6858 = vmatprep.subr.mxu0 %v4313
    %6859 = vmatpush1.msra.mxu0 %v4312
    %6860 = vmatprep.subr.mxu0 %v4309
    %6861 = vmatpush1.msra.mxu0 %v4308
    %6862 = vmatprep.subr.mxu0 %v4305
    %6863 = vmatpush1.msra.mxu0 %v4304
    %6864 = vmatprep.subr.mxu0 %v4301
    %6865 = vmatpush1.msra.mxu0 %v4300
    %6866 = vmatprep.subr.mxu0 %v4297
    %6867 = vmatpush1.msra.mxu0 %v4296
    %6868 = vmatprep.subr.mxu0 %v4293
    %6869 = vmatpush1.msra.mxu0 %v4292
    %6870 = vmatprep.subr.mxu0 %v4289
    %6871 = vmatpush1.msra.mxu0 %v4288
    %6872 = vmatprep.subr.mxu0 %v4285
    %6873 = vmatpush1.msra.mxu0 %v4284
    %6874 = vmatprep.subr.mxu0 %v4281
    %6875 = vmatpush1.msra.mxu0 %v4280
    %6876 = vmatprep.subr.mxu0 %v4277
    %6877 = vmatpush1.msra.mxu0 %v4276
    %6878 = vmatprep.subr.mxu0 %v4273
    %6879 = vmatpush1.msra.mxu0 %v4272
    %6880 = vmatprep.subr.mxu0 %v4269
    %6881 = vmatpush1.msra.mxu0 %v4268
    %6882 = vmatprep.subr.mxu0 %v4265
    %6883 = vmatpush1.msra.mxu0 %v4264
    %6884 = vmatprep.subr.mxu0 %v4261
    %6885 = vmatpush1.msra.mxu0 %v4260
    %6886 = vmatprep.subr.mxu0 %v4257
    %6887 = vmatpush1.msra.mxu0 %v4256
    %6888 = vmatprep.subr.mxu0 0.0
    %6889 = vmatpush2.msra.mxu0 0.0
    %6890 = vmatprep.subr.mxu0 0.0
    %6891 = vmatpush2.msra.mxu0 0.0
    %6892 = vmatprep.subr.mxu0 0.0
    %6893 = vmatpush2.msra.mxu0 0.0
    %6894 = vmatprep.subr.mxu0 0.0
    %6895 = vmatpush2.msra.mxu0 0.0
    %6896 = vmatprep.subr.mxu0 0.0
    %6897 = vmatpush2.msra.mxu0 0.0
    %6898 = vmatprep.subr.mxu0 0.0
    %6899 = vmatpush2.msra.mxu0 0.0
    %6900 = vmatprep.subr.mxu0 0.0
    %6901 = vmatpush2.msra.mxu0 0.0
    %6902 = vmatprep.subr.mxu0 0.0
    %6903 = vmatpush2.msra.mxu0 0.0
    %6904 = vmatprep.subr.mxu0 0.0
    %6905 = vmatpush2.msra.mxu0 0.0
    %6906 = vmatprep.subr.mxu0 0.0
    %6907 = vmatpush2.msra.mxu0 0.0
    %6908 = vmatprep.subr.mxu0 0.0
    %6909 = vmatpush2.msra.mxu0 0.0
    %6910 = vmatprep.subr.mxu0 0.0
    %6911 = vmatpush2.msra.mxu0 0.0
    %6912 = vmatprep.subr.mxu0 0.0
    %6913 = vmatpush2.msra.mxu0 0.0
    %6914 = vmatprep.subr.mxu0 0.0
    %6915 = vmatpush2.msra.mxu0 0.0
    %6916 = vmatprep.subr.mxu0 0.0
    %6917 = vmatpush2.msra.mxu0 0.0
    %6918 = vmatprep.subr.mxu0 0.0
    %6919 = vmatpush2.msra.mxu0 0.0
    %6920 = vmatprep.mubr.f32.mxu0 0.0
    %6921 = vmatmul.mubr.f32.gmra.mxu0 %v6778
    %v6922 = vpop.f32.mrf.mxu0
    %v6923 = vadd.f32 0.0, %v6922
    %v6924 = vpop.f32.mrf.mxu0
    %v6925 = vadd.f32 0.0, %v6924
    %6926 = vdwg.mxu0
    %v6928 = vrot.slane %v6778, 2
    %6930 = vmatprep.subr.mxu0 %v4380
    %6931 = vmatpush1.msra.mxu0 %v4379
    %6932 = vmatprep.subr.mxu0 %v4376
    %6933 = vmatpush1.msra.mxu0 %v4375
    %6934 = vmatprep.subr.mxu0 %v4372
    %6935 = vmatpush1.msra.mxu0 %v4371
    %6936 = vmatprep.subr.mxu0 %v4368
    %6937 = vmatpush1.msra.mxu0 %v4367
    %6938 = vmatprep.subr.mxu0 %v4364
    %6939 = vmatpush1.msra.mxu0 %v4363
    %6940 = vmatprep.subr.mxu0 %v4360
    %6941 = vmatpush1.msra.mxu0 %v4359
    %6942 = vmatprep.subr.mxu0 %v4356
    %6943 = vmatpush1.msra.mxu0 %v4355
    %6944 = vmatprep.subr.mxu0 %v4352
    %6945 = vmatpush1.msra.mxu0 %v4351
    %6946 = vmatprep.subr.mxu0 %v4348
    %6947 = vmatpush1.msra.mxu0 %v4347
    %6948 = vmatprep.subr.mxu0 %v4344
    %6949 = vmatpush1.msra.mxu0 %v4343
    %6950 = vmatprep.subr.mxu0 %v4340
    %6951 = vmatpush1.msra.mxu0 %v4339
    %6952 = vmatprep.subr.mxu0 %v4336
    %6953 = vmatpush1.msra.mxu0 %v4335
    %6954 = vmatprep.subr.mxu0 %v4332
    %6955 = vmatpush1.msra.mxu0 %v4331
    %6956 = vmatprep.subr.mxu0 %v4328
    %6957 = vmatpush1.msra.mxu0 %v4327
    %6958 = vmatprep.subr.mxu0 %v4324
    %6959 = vmatpush1.msra.mxu0 %v4323
    %6960 = vmatprep.subr.mxu0 %v4320
    %6961 = vmatpush1.msra.mxu0 %v4319
    %6962 = vmatprep.subr.mxu0 0.0
    %6963 = vmatpush2.msra.mxu0 0.0
    %6964 = vmatprep.subr.mxu0 0.0
    %6965 = vmatpush2.msra.mxu0 0.0
    %6966 = vmatprep.subr.mxu0 0.0
    %6967 = vmatpush2.msra.mxu0 0.0
    %6968 = vmatprep.subr.mxu0 0.0
    %6969 = vmatpush2.msra.mxu0 0.0
    %6970 = vmatprep.subr.mxu0 0.0
    %6971 = vmatpush2.msra.mxu0 0.0
    %6972 = vmatprep.subr.mxu0 0.0
    %6973 = vmatpush2.msra.mxu0 0.0
    %6974 = vmatprep.subr.mxu0 0.0
    %6975 = vmatpush2.msra.mxu0 0.0
    %6976 = vmatprep.subr.mxu0 0.0
    %6977 = vmatpush2.msra.mxu0 0.0
    %6978 = vmatprep.subr.mxu0 0.0
    %6979 = vmatpush2.msra.mxu0 0.0
    %6980 = vmatprep.subr.mxu0 0.0
    %6981 = vmatpush2.msra.mxu0 0.0
    %6982 = vmatprep.subr.mxu0 0.0
    %6983 = vmatpush2.msra.mxu0 0.0
    %6984 = vmatprep.subr.mxu0 0.0
    %6985 = vmatpush2.msra.mxu0 0.0
    %6986 = vmatprep.subr.mxu0 0.0
    %6987 = vmatpush2.msra.mxu0 0.0
    %6988 = vmatprep.subr.mxu0 0.0
    %6989 = vmatpush2.msra.mxu0 0.0
    %6990 = vmatprep.subr.mxu0 0.0
    %6991 = vmatpush2.msra.mxu0 0.0
    %6992 = vmatprep.subr.mxu0 0.0
    %6993 = vmatpush2.msra.mxu0 0.0
    %6994 = vmatprep.mubr.f32.mxu0 0.0
    %6995 = vmatmul.mubr.f32.gmra.mxu0 %v6928
    %v6996 = vpop.f32.mrf.mxu0
    %v6997 = vadd.f32 0.0, %v6996
    %v6998 = vpop.f32.mrf.mxu0
    %v6999 = vadd.f32 0.0, %v6998
    %7000 = vdwg.mxu0
    %7001 = vmatprep.subr.mxu0 %v4382
    %7002 = vmatpush1.msra.mxu0 %v4381
    %7003 = vmatprep.subr.mxu0 %v4378
    %7004 = vmatpush1.msra.mxu0 %v4377
    %7005 = vmatprep.subr.mxu0 %v4374
    %7006 = vmatpush1.msra.mxu0 %v4373
    %7007 = vmatprep.subr.mxu0 %v4370
    %7008 = vmatpush1.msra.mxu0 %v4369
    %7009 = vmatprep.subr.mxu0 %v4366
    %7010 = vmatpush1.msra.mxu0 %v4365
    %7011 = vmatprep.subr.mxu0 %v4362
    %7012 = vmatpush1.msra.mxu0 %v4361
    %7013 = vmatprep.subr.mxu0 %v4358
    %7014 = vmatpush1.msra.mxu0 %v4357
    %7015 = vmatprep.subr.mxu0 %v4354
    %7016 = vmatpush1.msra.mxu0 %v4353
    %7017 = vmatprep.subr.mxu0 %v4350
    %7018 = vmatpush1.msra.mxu0 %v4349
    %7019 = vmatprep.subr.mxu0 %v4346
    %7020 = vmatpush1.msra.mxu0 %v4345
    %7021 = vmatprep.subr.mxu0 %v4342
    %7022 = vmatpush1.msra.mxu0 %v4341
    %7023 = vmatprep.subr.mxu0 %v4338
    %7024 = vmatpush1.msra.mxu0 %v4337
    %7025 = vmatprep.subr.mxu0 %v4334
    %7026 = vmatpush1.msra.mxu0 %v4333
    %7027 = vmatprep.subr.mxu0 %v4330
    %7028 = vmatpush1.msra.mxu0 %v4329
    %7029 = vmatprep.subr.mxu0 %v4326
    %7030 = vmatpush1.msra.mxu0 %v4325
    %7031 = vmatprep.subr.mxu0 %v4322
    %7032 = vmatpush1.msra.mxu0 %v4321
    %7033 = vmatprep.subr.mxu0 0.0
    %7034 = vmatpush2.msra.mxu0 0.0
    %7035 = vmatprep.subr.mxu0 0.0
    %7036 = vmatpush2.msra.mxu0 0.0
    %7037 = vmatprep.subr.mxu0 0.0
    %7038 = vmatpush2.msra.mxu0 0.0
    %7039 = vmatprep.subr.mxu0 0.0
    %7040 = vmatpush2.msra.mxu0 0.0
    %7041 = vmatprep.subr.mxu0 0.0
    %7042 = vmatpush2.msra.mxu0 0.0
    %7043 = vmatprep.subr.mxu0 0.0
    %7044 = vmatpush2.msra.mxu0 0.0
    %7045 = vmatprep.subr.mxu0 0.0
    %7046 = vmatpush2.msra.mxu0 0.0
    %7047 = vmatprep.subr.mxu0 0.0
    %7048 = vmatpush2.msra.mxu0 0.0
    %7049 = vmatprep.subr.mxu0 0.0
    %7050 = vmatpush2.msra.mxu0 0.0
    %7051 = vmatprep.subr.mxu0 0.0
    %7052 = vmatpush2.msra.mxu0 0.0
    %7053 = vmatprep.subr.mxu0 0.0
    %7054 = vmatpush2.msra.mxu0 0.0
    %7055 = vmatprep.subr.mxu0 0.0
    %7056 = vmatpush2.msra.mxu0 0.0
    %7057 = vmatprep.subr.mxu0 0.0
    %7058 = vmatpush2.msra.mxu0 0.0
    %7059 = vmatprep.subr.mxu0 0.0
    %7060 = vmatpush2.msra.mxu0 0.0
    %7061 = vmatprep.subr.mxu0 0.0
    %7062 = vmatpush2.msra.mxu0 0.0
    %7063 = vmatprep.subr.mxu0 0.0
    %7064 = vmatpush2.msra.mxu0 0.0
    %7065 = vmatprep.mubr.f32.mxu0 0.0
    %7066 = vmatmul.mubr.f32.gmra.mxu0 %v6928
    %v7067 = vpop.f32.mrf.mxu0
    %v7068 = vadd.f32 0.0, %v7067
    %v7069 = vpop.f32.mrf.mxu0
    %v7070 = vadd.f32 0.0, %v7069
    %7071 = vdwg.mxu0
    %v7076 = vrot.slane %v6997, 6
    %v7077 = vrot.slane %v6999, 6
    %v7078 = vrot.slane %v7068, 6
    %v7079 = vrot.slane %v7070, 6
    %v7084 = vsel %vm1643, %v6852, %v7076
    %v7085 = vsel %vm1643, %v6854, %v7077
    %v7086 = vsel %vm1643, %v6923, %v7078
    %v7087 = vsel %vm1643, %v6925, %v7079
    %v7092 = vcombine.low %v7084, %v7085
    %v7093 = vcombine.low %v7086, %v7087
    %v7096 = vadd.f32 %v6783, %v7092
    %v7097 = vadd.f32 %v6784, %v7093
    %v7098 = vxor.u32 %v7096, 2147483648
    %v7099 = vxor.u32 %v7097, 2147483648
    %v7100 = vmul.f32 %v7098, 1.442695
    %v7101 = vpow.pop %v7100
    %v7102 = vmul.f32 %v7099, 1.442695
    %v7103 = vpow.pop %v7102
    %v7104 = vadd.f32 %v7101, 1.0
    %v7105 = vadd.f32 %v7103, 1.0
    %v7106 = vrcp.pop %v7104
    %v7107 = vmul.f32 1.0, %v7106
    %v7108 = vrcp.pop %v7105
    %v7109 = vmul.f32 1.0, %v7108
    %v7111 = vrot.slane %v7097, 4
    %v7113 = vtanh.pop %v7111
    %v7115 = vrot.slane %v7107, 4
    %v7117 = vmul.f32 %v7115, %v6776
    %v7118 = vmul.f32 %v7107, %v7113
    %v7119 = vadd.f32 %v7117, %v7118
    %v7120 = vtanh.pop %v7119
    %v7121 = vmul.f32 %v7109, %v7120
    %s7122 = scalar_lea.vmem %s15, 14
    %7123 = vst [vmem:[%s7122] sm:$0x3] %v7121
    %7124 = vst [vmem:[%s16 - $0x2] sm:$0xc] %v7121
    // Predicated region
    $region78: #{bilstm_vae_forward.1} parent=1 // pred_check
      _
    $region79: #{bilstm_vae_forward.1} parent=1 // pred_check_branch
      %7126 = sbr.rel (0) target = $region81
    $region80: #{bilstm_vae_forward.1} parent=1 // pred_region
      _
    $region81: #{bilstm_vae_forward.1} parent=1 // pred_fallthru
      _
    // Predicated region
    $region82: #{bilstm_vae_forward.1} parent=1 // pred_check
      _
    $region83: #{bilstm_vae_forward.1} parent=1 // pred_check_branch
      %7128 = sbr.rel (0) target = $region85
    $region84: #{bilstm_vae_forward.1} parent=1 // pred_region
      _
    $region85: #{bilstm_vae_forward.1} parent=1 // pred_fallthru
      _
    // Predicated region
    $region86: #{bilstm_vae_forward.1} parent=1 // pred_check
      _
    $region87: #{bilstm_vae_forward.1} parent=1 // pred_check_branch
      %7130 = sbr.rel (0) target = $region89
    $region88: #{bilstm_vae_forward.1} parent=1 // pred_region
      _
    $region89: #{bilstm_vae_forward.1} parent=1 // pred_fallthru
      _
    // Predicated region
    $region90: #{bilstm_vae_forward.1} parent=1 // pred_check
      _
    $region91: #{bilstm_vae_forward.1} parent=1 // pred_check_branch
      %7132 = sbr.rel (0) target = $region93
    $region92: #{bilstm_vae_forward.1} parent=1 // pred_region
      %s7134 = ssub.s32 64, 64
      %7135 = vsyncadd [#allocation6], %s7134
      %s7137 = sshll.u32 [#allocation12], 4
      %s7138 = int_to_ptr.vmem [resolvable:$true] %s7137
      %7140 = dma.vmem_to_hbm [thread:$0]  %s7138, 64, %s18, [#allocation6]
    $region93: #{bilstm_vae_forward.1} parent=1 // pred_fallthru
      _
    // Predicated region
    $region94: #{bilstm_vae_forward.1} parent=1 // pred_check
      _
    $region95: #{bilstm_vae_forward.1} parent=1 // pred_check_branch
      %7142 = sbr.rel (0) target = $region97
    $region96: #{bilstm_vae_forward.1} parent=1 // pred_region
      %s7144 = ssub.s32 64, 64
      %7145 = vsyncadd [#allocation14], %s7144
      %s7147 = sshll.u32 [#allocation13], 4
      %s7148 = int_to_ptr.vmem [resolvable:$true] %s7147
      %7150 = dma.vmem_to_hbm [thread:$0]  %s7148, 64, %s19, [#allocation14]
    $region97: #{bilstm_vae_forward.1} parent=1 // pred_fallthru
      _
    // Predicated region
    $region98: #{bilstm_vae_forward.1} parent=1 // pred_check
      _
    $region99: #{bilstm_vae_forward.1} parent=1 // pred_check_branch
      %7152 = sbr.rel (0) target = $region101
    $region100: #{bilstm_vae_forward.1} parent=1 // pred_region
      _
    $region101: #{bilstm_vae_forward.1} parent=1 // pred_fallthru
      _
    // Predicated region
    $region102: #{bilstm_vae_forward.1} parent=1 // pred_check
      _
    $region103: #{bilstm_vae_forward.1} parent=1 // pred_check_branch
      %7154 = sbr.rel (0) target = $region105
    $region104: #{bilstm_vae_forward.1} parent=1 // pred_region
      _
    $region105: #{bilstm_vae_forward.1} parent=1 // pred_fallthru
      _
    // Predicated region
    $region106: #{bilstm_vae_forward.1} parent=1 // pred_check
      _
    $region107: #{bilstm_vae_forward.1} parent=1 // pred_check_branch
      %7156 = sbr.rel (0) target = $region109
    $region108: #{bilstm_vae_forward.1} parent=1 // pred_region
      _
    $region109: #{bilstm_vae_forward.1} parent=1 // pred_fallthru
      _
    // Predicated region
    $region110: #{bilstm_vae_forward.1} parent=1 // pred_check
      _
    $region111: #{bilstm_vae_forward.1} parent=1 // pred_check_branch
      %7158 = sbr.rel (0) target = $region113
    $region112: #{bilstm_vae_forward.1} parent=1 // pred_region
      %7159 = dma.done [#allocation6], 64
    $region113: #{bilstm_vae_forward.1} parent=1 // pred_fallthru
      _
    // Predicated region
    $region114: #{bilstm_vae_forward.1} parent=1 // pred_check
      _
    $region115: #{bilstm_vae_forward.1} parent=1 // pred_check_branch
      %7161 = sbr.rel (0) target = $region117
    $region116: #{bilstm_vae_forward.1} parent=1 // pred_region
      %7162 = dma.done [#allocation14], 64
    $region117: #{bilstm_vae_forward.1} parent=1 // pred_fallthru
      _
    %7163 = vsyncpa [#allocation5], 1
    %7164 = vsyncpa [#allocation8], 1
    %7165 = vsyncpa [#allocation11], 1
    %7166 = vsyncpa [#allocation6], 1
    %7167 = vsyncpa [#allocation14], 1

</llo_original>
